<compile_context>
chip_gen: v6e
topology: v6e:2x2x1
jax: 0.10.0
libtpu: 0.0.40
codegen_flags: <defaults>
</compile_context>

<pallas_src>
import functools
import math

import numpy as np
import jax
import jax.numpy as jnp
from jax import lax
from jax.experimental import pallas as pl
from jax.experimental.pallas import tpu as pltpu


# ----------------------------- fused per-layer kernel ------------------------

def _encoder_layer_kernel(*refs, kind, H, inv_scale, add_pe, final_norm,
                          ln_eps, norm_eps, compute_dtype):
    refs = list(refs)
    out_ref = refs.pop()                 # single output ref (last positional)
    it = iter(refs)

    x_flow_ref = next(it)                                   # (S1, D)
    src2_ref = next(it) if kind == "cross" else None        # (S2, D)
    mask_ref = next(it)                                     # (1, Sk) int32
    pe_ref = next(it) if add_pe else None                   # (S1, D)

    ln1_g, ln1_b = next(it), next(it)
    wqkv, bqkv = next(it), next(it)                         # (D,3D), (1,3D)
    wo_s, bo_s = next(it), next(it)
    if kind == "cross":
        ln2_g, ln2_b = next(it), next(it)
        wq_c, bq_c = next(it), next(it)
        wkv_c, bkv_c = next(it), next(it)                   # (D,2D), (1,2D)
        wo_c, bo_c = next(it), next(it)
    lnf_g, lnf_b = next(it), next(it)
    w1, b1 = next(it), next(it)
    w2, b2 = next(it), next(it)
    if final_norm:
        na, nb = next(it), next(it)

    def layernorm(x, g_ref, b_ref):
        # torch.nn.LayerNorm: biased variance, eps inside sqrt
        mu = jnp.mean(x, axis=-1, keepdims=True)
        var = jnp.mean((x - mu) ** 2, axis=-1, keepdims=True)
        return (x - mu) * lax.rsqrt(var + ln_eps) * g_ref[...] + b_ref[...]

    def linear(x, w_ref, b_ref, relu=False):
        y = jnp.dot(x.astype(compute_dtype), w_ref[...],
                    preferred_element_type=jnp.float32) + b_ref[...]
        if relu:
            y = jnp.maximum(y, 0.0)
        return y

    def mha(q2d, k2d, v2d, mask_row):
        d_model = q2d.shape[-1]
        hd = d_model // H
        ctx = []
        for hh in range(H):                       # static unroll; all in VMEM
            sl = slice(hh * hd, (hh + 1) * hd)
            qh = q2d[:, sl].astype(compute_dtype)
            kh = k2d[:, sl].astype(compute_dtype)
            vh = v2d[:, sl].astype(compute_dtype)
            # q @ k^T without an explicit transpose (contract both minor dims)
            e = lax.dot_general(qh, kh, (((1,), (1,)), ((), ())),
                                preferred_element_type=jnp.float32) * inv_scale
            if mask_row is not None:
                e = jnp.where(mask_row == 0, jnp.float32(-1e10), e)
            e = e - jnp.max(e, axis=-1, keepdims=True)       # stable softmax
            p = jnp.exp(e)
            p = p * pl.reciprocal(jnp.sum(p, axis=-1, keepdims=True), approx=True)
            ctx.append(jnp.dot(p.astype(compute_dtype), vh,
                               preferred_element_type=jnp.float32))
        return jnp.concatenate(ctx, axis=-1)       # (Sq, D)

    x_flow = x_flow_ref[...].astype(jnp.float32)
    if add_pe:                                     # PE fused into the first layer
        x_flow = x_flow + pe_ref[...].astype(jnp.float32)

    # In cross mode the residual stream of the layer restarts from src2 (x_rgb);
    # x_flow (the running encoder stream) only feeds the cross-attention K/V.
    x = src2_ref[...].astype(jnp.float32) if kind == "cross" else x_flow
    D = x.shape[-1]
    mask_row = mask_ref[...]

    # --- residual sublayer 1: masked self-attention ---------------------------
    h = layernorm(x, ln1_g, ln1_b)
    qkv = linear(h, wqkv, bqkv)                              # fused QKV (S, 3D)
    a = mha(qkv[:, :D], qkv[:, D:2 * D], qkv[:, 2 * D:], mask_row)
    x = x + linear(a, wo_s, bo_s)

    # --- residual sublayer 2 (cross only): cross-attention, K/V from x_flow ---
    if kind == "cross":
        h = layernorm(x, ln2_g, ln2_b)
        q = linear(h, wq_c, bq_c)
        kv = linear(x_flow, wkv_c, bkv_c)                    # fused K/V (S1, 2D)
        a = mha(q, kv[:, :D], kv[:, D:], None)               # no mask (as in torch)
        x = x + linear(a, wo_c, bo_c)

    # --- residual sublayer: position-wise feed forward -------------------------
    h = layernorm(x, lnf_g, lnf_b)
    x = x + linear(linear(h, w1, b1, relu=True), w2, b2)

    # --- final custom Norm (unbiased std, eps added to std) fused in last layer
    if final_norm:
        mu = jnp.mean(x, axis=-1, keepdims=True)
        std = jnp.sqrt(jnp.sum((x - mu) ** 2, axis=-1, keepdims=True) / (D - 1))
        x = na[...] * (x - mu) / (std + norm_eps) + nb[...]

    out_ref[...] = x.astype(out_ref.dtype)


# ----------------------------- pallas_call wrapper ----------------------------

def _encoder_layer(kind, x_flow, src2, mask, pe, lp, norm_alpha, norm_bias, *,
                   H, add_pe, final_norm, compute_dtype):
    B, S1, D = x_flow.shape
    S_out = src2.shape[1] if kind == "cross" else S1
    Sm = mask.shape[-1]

    def wcast(w):          # matmul weights in compute dtype (bf16 halves HBM bytes)
        return w.astype(compute_dtype)

    def row(v):            # (X,) -> (1, X) for 2-D VMEM tiles
        return v.reshape(1, -1)

    def const_spec(shape):  # whole array, same block for every grid step
        return pl.BlockSpec(shape, lambda b, _n=len(shape): (0,) * _n)

    inputs, specs = [], []

    def add(arr, spec):
        inputs.append(arr)
        specs.append(spec)

    # activations: one batch element per grid step
    add(x_flow, pl.BlockSpec((None, S1, D), lambda b: (b, 0, 0)))
    if kind == "cross":
        add(src2, pl.BlockSpec((None, S_out, D), lambda b: (b, 0, 0)))
    add(mask, pl.BlockSpec((None, 1, Sm), lambda b: (b, 0, 0)))
    if add_pe:
        add(pe, const_spec((S1, D)))

    sa = lp["self_attn"]
    add(row(lp["ln1_g"]), const_spec((1, D)))
    add(row(lp["ln1_b"]), const_spec((1, D)))
    add(wcast(sa["wqkv"]), const_spec((D, 3 * D)))
    add(row(sa["bqkv"]), const_spec((1, 3 * D)))
    add(wcast(sa["wo"]), const_spec((D, D)))
    add(row(sa["bo"]), const_spec((1, D)))
    if kind == "cross":
        ca = lp["cross_attn"]
        add(row(lp["ln2_g"]), const_spec((1, D)))
        add(row(lp["ln2_b"]), const_spec((1, D)))
        add(wcast(ca["wq"]), const_spec((D, D)))
        add(row(ca["bq"]), const_spec((1, D)))
        add(wcast(ca["wkv"]), const_spec((D, 2 * D)))
        add(row(ca["bkv"]), const_spec((1, 2 * D)))
        add(wcast(ca["wo"]), const_spec((D, D)))
        add(row(ca["bo"]), const_spec((1, D)))
    ff = lp["ffn"]
    d_ff = ff["w1"].shape[1]
    add(row(lp["lnf_g"]), const_spec((1, D)))
    add(row(lp["lnf_b"]), const_spec((1, D)))
    add(wcast(ff["w1"]), const_spec((D, d_ff)))
    add(row(ff["b1"]), const_spec((1, d_ff)))
    add(wcast(ff["w2"]), const_spec((d_ff, D)))
    add(row(ff["b2"]), const_spec((1, D)))
    if final_norm:
        add(row(norm_alpha), const_spec((1, D)))
        add(row(norm_bias), const_spec((1, D)))

    kernel = functools.partial(
        _encoder_layer_kernel, kind=kind, H=H,
        inv_scale=float(1.0 / math.sqrt(D // H)),
        add_pe=add_pe, final_norm=final_norm,
        ln_eps=1e-5, norm_eps=1e-6, compute_dtype=compute_dtype)

    return pl.pallas_call(
        kernel,
        grid=(B,),
        in_specs=specs,
        out_specs=pl.BlockSpec((None, S_out, D), lambda b: (b, 0, 0)),
        out_shape=jax.ShapeDtypeStruct((B, S_out, D), x_flow.dtype),
        compiler_params=pltpu.CompilerParams(
            dimension_semantics=("parallel",),          # shard batch over TCs
            vmem_limit_bytes=32 * 1024 * 1024),
    )(*inputs)


def encoder_forward(params, src1, src2, src1_mask, *, flag, H,
                    compute_dtype=jnp.float32):
    B, S, D = src1.shape
    pe = params["pos_enc"][0, :S, :]
    n = len(params["layers"])
    x = src1                                # running stream (x_flow in cross mode)
    for li, lp in enumerate(params["layers"]):
        x = _encoder_layer(
            flag, x, src2, src1_mask, pe, lp,
            params["norm_alpha"], params["norm_bias"],
            H=H, add_pe=(li == 0), final_norm=(li == n - 1),
            compute_dtype=compute_dtype)
    return x


# ----------------------------- params -----------------------------------------

def init_params(key, seq_len, d_model, H, N, d_ff, flag):
    # positional encoding — exact replica of PositionalEncoder.__init__
    pe = np.zeros((seq_len, d_model), dtype=np.float64)
    odds = np.arange(0, d_model, 2)
    evens = np.arange(1, d_model, 2)
    for pos in range(seq_len):
        pe[pos, odds] = np.sin(pos / 10000 ** (odds / d_model))
        pe[pos, evens] = np.cos(pos / 10000 ** (evens / d_model))

    def linear_p(k, din, dout):
        kw, kb = jax.random.split(k)
        return (jax.random.normal(kw, (din, dout), jnp.float32) * 0.05,
                jax.random.normal(kb, (dout,), jnp.float32) * 0.05)

    def ln_p(k):
        kg, kb = jax.random.split(k)
        return (1.0 + 0.1 * jax.random.normal(kg, (d_model,), jnp.float32),
                0.1 * jax.random.normal(kb, (d_model,), jnp.float32))

    def self_attn_p(k):
        ks = jax.random.split(k, 4)
        wq, bq = linear_p(ks[0], d_model, d_model)
        wk, bk = linear_p(ks[1], d_model, d_model)
        wv, bv = linear_p(ks[2], d_model, d_model)
        wo, bo = linear_p(ks[3], d_model, d_model)
        return dict(wqkv=jnp.concatenate([wq, wk, wv], axis=1),
                    bqkv=jnp.concatenate([bq, bk, bv]),
                    wo=wo, bo=bo)

    def cross_attn_p(k):
        ks = jax.random.split(k, 4)
        wq, bq = linear_p(ks[0], d_model, d_model)
        wk, bk = linear_p(ks[1], d_model, d_model)
        wv, bv = linear_p(ks[2], d_model, d_model)
        wo, bo = linear_p(ks[3], d_model, d_model)
        return dict(wq=wq, bq=bq,
                    wkv=jnp.concatenate([wk, wv], axis=1),
                    bkv=jnp.concatenate([bk, bv]),
                    wo=wo, bo=bo)

    key, kn = jax.random.split(key)
    na, nb = ln_p(kn)
    params = {"pos_enc": jnp.asarray(pe[None], jnp.float32),
              "norm_alpha": na, "norm_bias": nb, "layers": []}
    for _ in range(N):
        key, ka, kc, kf, kl1, kl2, klf = jax.random.split(key, 7)
        kf1, kf2 = jax.random.split(kf)
        w1, b1 = linear_p(kf1, d_model, d_ff)
        w2, b2 = linear_p(kf2, d_ff, d_model)
        g1, bb1 = ln_p(kl1)
        gf, bbf = ln_p(klf)
        lp = {"ln1_g": g1, "ln1_b": bb1,
              "lnf_g": gf, "lnf_b": bbf,
              "self_attn": self_attn_p(ka),
              "ffn": dict(w1=w1, b1=b1, w2=w2, b2=b2)}
        if flag == "cross":
            lp["ln2_g"], lp["ln2_b"] = ln_p(kl2)
            lp["cross_attn"] = cross_attn_p(kc)
        params["layers"].append(lp)
    return params


# ----------------------------- plain-JAX reference (mirrors PyTorch) -----------

def _ref_encoder(params, src1, src2, src1_mask, *, flag, H):
    D = src1.shape[-1]

    def layernorm(x, g, b, eps=1e-5):
        m = x.mean(-1, keepdims=True)
        v = ((x - m) ** 2).mean(-1, keepdims=True)
        return (x - m) / jnp.sqrt(v + eps) * g + b

    def mha(wq, bq, wk, bk, wv, bv, wo, bo, q, k, v, m):
        B, Sq, _ = q.shape
        Sk = k.shape[1]
        hd = D // H
        Q = (q @ wq + bq).reshape(B, Sq, H, hd).transpose(0, 2, 1, 3)
        K = (k @ wk + bk).reshape(B, Sk, H, hd).transpose(0, 2, 1, 3)
        V = (v @ wv + bv).reshape(B, Sk, H, hd).transpose(0, 2, 1, 3)
        e = jnp.einsum("bhqd,bhkd->bhqk", Q, K) / jnp.sqrt(jnp.float32(hd))
        if m is not None:
            e = jnp.where(m[:, None] == 0, jnp.float32(-1e10), e)
        a = jax.nn.softmax(e, axis=-1)
        ctx = jnp.einsum("bhqk,bhkd->bhqd", a, V).transpose(0, 2, 1, 3).reshape(B, Sq, D)
        return ctx @ wo + bo

    def self_attn(p, q, k, v, m):
        wq, wk, wv = jnp.split(p["wqkv"], 3, axis=1)
        bq, bk, bv = jnp.split(p["bqkv"], 3)
        return mha(wq, bq, wk, bk, wv, bv, p["wo"], p["bo"], q, k, v, m)

    def cross_attn(p, q, k, v, m):
        wk, wv = jnp.split(p["wkv"], 2, axis=1)
        bk, bv = jnp.split(p["bkv"], 2)
        return mha(p["wq"], p["bq"], wk, bk, wv, bv, p["wo"], p["bo"], q, k, v, m)

    def ffn(p, x):
        return jnp.maximum(x @ p["w1"] + p["b1"], 0.0) @ p["w2"] + p["b2"]

    x = src1 + params["pos_enc"][:, :src1.shape[1], :]
    for lp in params["layers"]:
        if flag == "pure":
            h = layernorm(x, lp["ln1_g"], lp["ln1_b"])
            x = x + self_attn(lp["self_attn"], h, h, h, src1_mask)
            h = layernorm(x, lp["lnf_g"], lp["lnf_b"])
            x = x + ffn(lp["ffn"], h)
        else:
            # CrossEncoderLayer.forward(x_flow=x, x_rgb=src2, src_mask)
            x_flow = x
            h = layernorm(src2, lp["ln1_g"], lp["ln1_b"])
            y = src2 + self_attn(lp["self_attn"], h, h, h, src1_mask)
            h = layernorm(y, lp["ln2_g"], lp["ln2_b"])
            y = y + cross_attn(lp["cross_attn"], h, x_flow, x_flow, None)
            h = layernorm(y, lp["lnf_g"], lp["lnf_b"])
            x = y + ffn(lp["ffn"], h)
    m = x.mean(-1, keepdims=True)
    std = jnp.sqrt(((x - m) ** 2).sum(-1, keepdims=True) / (x.shape[-1] - 1))
    return params["norm_alpha"] * (x - m) / (std + 1e-6) + params["norm_bias"]


# ----------------------------- main --------------------------------------------

if __name__ == "__main__":
    B, seq_len, d_model, H, N, d_ff = 2, 8, 32, 4, 2, 64

    key = jax.random.PRNGKey(0)
    kp, k1, k2 = jax.random.split(key, 3)
    src1 = jax.random.normal(k1, (B, seq_len, d_model), jnp.float32)
    src2 = jax.random.normal(k2, (B, seq_len, d_model), jnp.float32)
    mask_np = np.ones((B, 1, seq_len), dtype=np.int32)
    mask_np[1, 0, -3:] = 0            # batch 1: last 3 positions are padding
    src1_mask = jnp.asarray(mask_np)

    for flag in ("cross", "pure"):
        params = init_params(kp, seq_len, d_model, H, N, d_ff, flag)
        fwd = jax.jit(functools.partial(encoder_forward, flag=flag, H=H))
        out = jax.block_until_ready(fwd(params, src1, src2, src1_mask))
        ref = jax.block_until_ready(
            _ref_encoder(params, src1, src2, src1_mask, flag=flag, H=H))
        np.testing.assert_allclose(np.asarray(out), np.asarray(ref),
                                   rtol=2e-3, atol=2e-3)

    print("KERNEL_OK")
</pallas_src>

<mosaic_0001>
module attributes {stable_mosaic.version = 11 : i64} {
  func.func @_encoder_layer_kernel(%arg0: i32, %arg1: memref<1x8x32xf32, #tpu.memory_space<vmem>>, %arg2: memref<1x8x32xf32, #tpu.memory_space<vmem>>, %arg3: memref<1x1x8xi32, #tpu.memory_space<vmem>>, %arg4: memref<1x32xf32, #tpu.memory_space<vmem>>, %arg5: memref<1x32xf32, #tpu.memory_space<vmem>>, %arg6: memref<32x96xf32, #tpu.memory_space<vmem>>, %arg7: memref<1x96xf32, #tpu.memory_space<vmem>>, %arg8: memref<32x32xf32, #tpu.memory_space<vmem>>, %arg9: memref<1x32xf32, #tpu.memory_space<vmem>>, %arg10: memref<1x32xf32, #tpu.memory_space<vmem>>, %arg11: memref<1x32xf32, #tpu.memory_space<vmem>>, %arg12: memref<32x32xf32, #tpu.memory_space<vmem>>, %arg13: memref<1x32xf32, #tpu.memory_space<vmem>>, %arg14: memref<32x64xf32, #tpu.memory_space<vmem>>, %arg15: memref<1x64xf32, #tpu.memory_space<vmem>>, %arg16: memref<32x32xf32, #tpu.memory_space<vmem>>, %arg17: memref<1x32xf32, #tpu.memory_space<vmem>>, %arg18: memref<1x32xf32, #tpu.memory_space<vmem>>, %arg19: memref<1x32xf32, #tpu.memory_space<vmem>>, %arg20: memref<32x64xf32, #tpu.memory_space<vmem>>, %arg21: memref<1x64xf32, #tpu.memory_space<vmem>>, %arg22: memref<64x32xf32, #tpu.memory_space<vmem>>, %arg23: memref<1x32xf32, #tpu.memory_space<vmem>>, %arg24: memref<1x32xf32, #tpu.memory_space<vmem>>, %arg25: memref<1x32xf32, #tpu.memory_space<vmem>>, %arg26: memref<1x8x32xf32, #tpu.memory_space<vmem>>) attributes {dimension_semantics = [#tpu.dimension_semantics<parallel>], iteration_bounds = array<i64: 2>, scalar_prefetch = 0 : i64, scratch_operands = 0 : i64, tpu.core_type = #tpu.core_type<tc>, window_params = [{transform_indices = @transform_0, window_bounds = array<i64: 1, 8, 32>}, {transform_indices = @transform_1, window_bounds = array<i64: 1, 8, 32>}, {transform_indices = @transform_2, window_bounds = array<i64: 1, 1, 8>}, {pipeline_mode = #tpu.pipeline_mode<synchronous>, transform_indices = @transform_3, window_bounds = array<i64: 1, 32>}, {pipeline_mode = #tpu.pipeline_mode<synchronous>, transform_indices = @transform_4, window_bounds = array<i64: 1, 32>}, {pipeline_mode = #tpu.pipeline_mode<synchronous>, transform_indices = @transform_5, window_bounds = array<i64: 32, 96>}, {pipeline_mode = #tpu.pipeline_mode<synchronous>, transform_indices = @transform_6, window_bounds = array<i64: 1, 96>}, {pipeline_mode = #tpu.pipeline_mode<synchronous>, transform_indices = @transform_7, window_bounds = array<i64: 32, 32>}, {pipeline_mode = #tpu.pipeline_mode<synchronous>, transform_indices = @transform_8, window_bounds = array<i64: 1, 32>}, {pipeline_mode = #tpu.pipeline_mode<synchronous>, transform_indices = @transform_9, window_bounds = array<i64: 1, 32>}, {pipeline_mode = #tpu.pipeline_mode<synchronous>, transform_indices = @transform_10, window_bounds = array<i64: 1, 32>}, {pipeline_mode = #tpu.pipeline_mode<synchronous>, transform_indices = @transform_11, window_bounds = array<i64: 32, 32>}, {pipeline_mode = #tpu.pipeline_mode<synchronous>, transform_indices = @transform_12, window_bounds = array<i64: 1, 32>}, {pipeline_mode = #tpu.pipeline_mode<synchronous>, transform_indices = @transform_13, window_bounds = array<i64: 32, 64>}, {pipeline_mode = #tpu.pipeline_mode<synchronous>, transform_indices = @transform_14, window_bounds = array<i64: 1, 64>}, {pipeline_mode = #tpu.pipeline_mode<synchronous>, transform_indices = @transform_15, window_bounds = array<i64: 32, 32>}, {pipeline_mode = #tpu.pipeline_mode<synchronous>, transform_indices = @transform_16, window_bounds = array<i64: 1, 32>}, {pipeline_mode = #tpu.pipeline_mode<synchronous>, transform_indices = @transform_17, window_bounds = array<i64: 1, 32>}, {pipeline_mode = #tpu.pipeline_mode<synchronous>, transform_indices = @transform_18, window_bounds = array<i64: 1, 32>}, {pipeline_mode = #tpu.pipeline_mode<synchronous>, transform_indices = @transform_19, window_bounds = array<i64: 32, 64>}, {pipeline_mode = #tpu.pipeline_mode<synchronous>, transform_indices = @transform_20, window_bounds = array<i64: 1, 64>}, {pipeline_mode = #tpu.pipeline_mode<synchronous>, transform_indices = @transform_21, window_bounds = array<i64: 64, 32>}, {pipeline_mode = #tpu.pipeline_mode<synchronous>, transform_indices = @transform_22, window_bounds = array<i64: 1, 32>}, {pipeline_mode = #tpu.pipeline_mode<synchronous>, transform_indices = @transform_23, window_bounds = array<i64: 1, 32>}, {pipeline_mode = #tpu.pipeline_mode<synchronous>, transform_indices = @transform_24, window_bounds = array<i64: 1, 32>}, {transform_indices = @transform_25, window_bounds = array<i64: 1, 8, 32>}]} {
    %c0 = arith.constant 0 : index
    %c0_0 = arith.constant 0 : index
    %c0_1 = arith.constant 0 : index
    %0 = vector.load %arg1[%c0, %c0_0, %c0_1] : memref<1x8x32xf32, #tpu.memory_space<vmem>>, vector<1x8x32xf32>
    %1 = vector.shape_cast %0 : vector<1x8x32xf32> to vector<8x32xf32>
    %c0_2 = arith.constant 0 : index
    %c0_3 = arith.constant 0 : index
    %c0_4 = arith.constant 0 : index
    %2 = vector.load %arg2[%c0_2, %c0_3, %c0_4] : memref<1x8x32xf32, #tpu.memory_space<vmem>>, vector<1x8x32xf32>
    %3 = vector.shape_cast %2 : vector<1x8x32xf32> to vector<8x32xf32>
    %c0_5 = arith.constant 0 : index
    %c0_6 = arith.constant 0 : index
    %c0_7 = arith.constant 0 : index
    %4 = vector.load %arg3[%c0_5, %c0_6, %c0_7] : memref<1x1x8xi32, #tpu.memory_space<vmem>>, vector<1x1x8xi32>
    %5 = vector.shape_cast %4 : vector<1x1x8xi32> to vector<1x8xi32>
    %cst = arith.constant dense<0.000000e+00> : vector<8xf32>
    %6 = vector.multi_reduction <add>, %3, %cst [1] : vector<8x32xf32> to vector<8xf32>
    %7 = vector.shape_cast %6 : vector<8xf32> to vector<8x1xf32>
    %cst_8 = arith.constant 3.200000e+01 : f32
    %8 = vector.broadcast %cst_8 : f32 to vector<8x1xf32>
    %9 = arith.divf %7, %8 : vector<8x1xf32>
    %10 = vector.broadcast %9 : vector<8x1xf32> to vector<8x32xf32>
    %11 = arith.subf %3, %10 : vector<8x32xf32>
    %12 = arith.mulf %11, %11 : vector<8x32xf32>
    %cst_9 = arith.constant dense<0.000000e+00> : vector<8xf32>
    %13 = vector.multi_reduction <add>, %12, %cst_9 [1] : vector<8x32xf32> to vector<8xf32>
    %14 = vector.shape_cast %13 : vector<8xf32> to vector<8x1xf32>
    %cst_10 = arith.constant 3.200000e+01 : f32
    %15 = vector.broadcast %cst_10 : f32 to vector<8x1xf32>
    %16 = arith.divf %14, %15 : vector<8x1xf32>
    %17 = vector.broadcast %9 : vector<8x1xf32> to vector<8x32xf32>
    %18 = arith.subf %3, %17 : vector<8x32xf32>
    %cst_11 = arith.constant 9.99999974E-6 : f32
    %19 = vector.broadcast %cst_11 : f32 to vector<8x1xf32>
    %20 = arith.addf %16, %19 : vector<8x1xf32>
    %21 = math.rsqrt %20 : vector<8x1xf32>
    %22 = vector.broadcast %21 : vector<8x1xf32> to vector<8x32xf32>
    %23 = arith.mulf %18, %22 : vector<8x32xf32>
    %c0_12 = arith.constant 0 : index
    %c0_13 = arith.constant 0 : index
    %24 = vector.load %arg4[%c0_12, %c0_13] : memref<1x32xf32, #tpu.memory_space<vmem>>, vector<1x32xf32>
    %25 = vector.broadcast %24 : vector<1x32xf32> to vector<8x32xf32>
    %26 = arith.mulf %23, %25 : vector<8x32xf32>
    %c0_14 = arith.constant 0 : index
    %c0_15 = arith.constant 0 : index
    %27 = vector.load %arg5[%c0_14, %c0_15] : memref<1x32xf32, #tpu.memory_space<vmem>>, vector<1x32xf32>
    %28 = vector.broadcast %27 : vector<1x32xf32> to vector<8x32xf32>
    %29 = arith.addf %26, %28 : vector<8x32xf32>
    %c0_16 = arith.constant 0 : index
    %c0_17 = arith.constant 0 : index
    %30 = vector.load %arg6[%c0_16, %c0_17] : memref<32x96xf32, #tpu.memory_space<vmem>>, vector<32x96xf32>
    %cst_18 = arith.constant dense<0.000000e+00> : vector<8x96xf32>
    %31 = tpu.matmul %29, %30, %cst_18 {dimension_numbers = #tpu.dot_dimension_numbers<[1], [0], [0], [1], [0, 0, 1, 1], [], []>} : vector<8x32xf32>, vector<32x96xf32>, vector<8x96xf32> -> vector<8x96xf32>
    %c0_19 = arith.constant 0 : index
    %c0_20 = arith.constant 0 : index
    %32 = vector.load %arg7[%c0_19, %c0_20] : memref<1x96xf32, #tpu.memory_space<vmem>>, vector<1x96xf32>
    %33 = vector.broadcast %32 : vector<1x96xf32> to vector<8x96xf32>
    %34 = arith.addf %31, %33 : vector<8x96xf32>
    %35 = vector.extract_strided_slice %34 {offsets = [0, 0], sizes = [8, 32], strides = [1, 1]} : vector<8x96xf32> to vector<8x32xf32>
    %36 = vector.extract_strided_slice %34 {offsets = [0, 32], sizes = [8, 32], strides = [1, 1]} : vector<8x96xf32> to vector<8x32xf32>
    %37 = vector.extract_strided_slice %34 {offsets = [0, 64], sizes = [8, 32], strides = [1, 1]} : vector<8x96xf32> to vector<8x32xf32>
    %38 = vector.extract_strided_slice %35 {offsets = [0, 0], sizes = [8, 8], strides = [1, 1]} : vector<8x32xf32> to vector<8x8xf32>
    %39 = vector.extract_strided_slice %36 {offsets = [0, 0], sizes = [8, 8], strides = [1, 1]} : vector<8x32xf32> to vector<8x8xf32>
    %40 = vector.extract_strided_slice %37 {offsets = [0, 0], sizes = [8, 8], strides = [1, 1]} : vector<8x32xf32> to vector<8x8xf32>
    %cst_21 = arith.constant dense<0.000000e+00> : vector<8x8xf32>
    %41 = tpu.matmul %38, %39, %cst_21 {dimension_numbers = #tpu.dot_dimension_numbers<[1], [1], [0], [0], [0, 0, 1, 0], [], []>} : vector<8x8xf32>, vector<8x8xf32>, vector<8x8xf32> -> vector<8x8xf32>
    %cst_22 = arith.constant 0.353553385 : f32
    %42 = vector.broadcast %cst_22 : f32 to vector<8x8xf32>
    %43 = arith.mulf %41, %42 : vector<8x8xf32>
    %c0_i32 = arith.constant 0 : i32
    %44 = vector.broadcast %c0_i32 : i32 to vector<1x8xi32>
    %45 = arith.cmpi eq, %5, %44 : vector<1x8xi32>
    %cst_23 = arith.constant -1.000000e+10 : f32
    %46 = vector.shape_cast %45 : vector<1x8xi1> to vector<1x8xi1>
    %47 = vector.broadcast %46 : vector<1x8xi1> to vector<8x8xi1>
    %48 = vector.broadcast %cst_23 : f32 to vector<8x8xf32>
    %49 = arith.select %47, %48, %43 : vector<8x8xi1>, vector<8x8xf32>
    %cst_24 = arith.constant dense<0xFF800000> : vector<8xf32>
    %50 = vector.multi_reduction <maximumf>, %49, %cst_24 [1] : vector<8x8xf32> to vector<8xf32>
    %51 = vector.shape_cast %50 : vector<8xf32> to vector<8x1xf32>
    %52 = vector.broadcast %51 : vector<8x1xf32> to vector<8x8xf32>
    %53 = arith.subf %49, %52 : vector<8x8xf32>
    %54 = math.exp %53 : vector<8x8xf32>
    %cst_25 = arith.constant dense<0.000000e+00> : vector<8xf32>
    %55 = vector.multi_reduction <add>, %54, %cst_25 [1] : vector<8x8xf32> to vector<8xf32>
    %56 = vector.shape_cast %55 : vector<8xf32> to vector<8x1xf32>
    %57 = tpu.reciprocal %56 {approx = true} : vector<8x1xf32> -> vector<8x1xf32>
    %58 = vector.broadcast %57 : vector<8x1xf32> to vector<8x8xf32>
    %59 = arith.mulf %54, %58 : vector<8x8xf32>
    %cst_26 = arith.constant dense<0.000000e+00> : vector<8x8xf32>
    %60 = tpu.matmul %59, %40, %cst_26 {dimension_numbers = #tpu.dot_dimension_numbers<[1], [0], [0], [1], [0, 0, 1, 1], [], []>} : vector<8x8xf32>, vector<8x8xf32>, vector<8x8xf32> -> vector<8x8xf32>
    %61 = vector.extract_strided_slice %35 {offsets = [0, 8], sizes = [8, 8], strides = [1, 1]} : vector<8x32xf32> to vector<8x8xf32>
    %62 = vector.extract_strided_slice %36 {offsets = [0, 8], sizes = [8, 8], strides = [1, 1]} : vector<8x32xf32> to vector<8x8xf32>
    %63 = vector.extract_strided_slice %37 {offsets = [0, 8], sizes = [8, 8], strides = [1, 1]} : vector<8x32xf32> to vector<8x8xf32>
    %cst_27 = arith.constant dense<0.000000e+00> : vector<8x8xf32>
    %64 = tpu.matmul %61, %62, %cst_27 {dimension_numbers = #tpu.dot_dimension_numbers<[1], [1], [0], [0], [0, 0, 1, 0], [], []>} : vector<8x8xf32>, vector<8x8xf32>, vector<8x8xf32> -> vector<8x8xf32>
    %cst_28 = arith.constant 0.353553385 : f32
    %65 = vector.broadcast %cst_28 : f32 to vector<8x8xf32>
    %66 = arith.mulf %64, %65 : vector<8x8xf32>
    %c0_i32_29 = arith.constant 0 : i32
    %67 = vector.broadcast %c0_i32_29 : i32 to vector<1x8xi32>
    %68 = arith.cmpi eq, %5, %67 : vector<1x8xi32>
    %cst_30 = arith.constant -1.000000e+10 : f32
    %69 = vector.shape_cast %68 : vector<1x8xi1> to vector<1x8xi1>
    %70 = vector.broadcast %69 : vector<1x8xi1> to vector<8x8xi1>
    %71 = vector.broadcast %cst_30 : f32 to vector<8x8xf32>
    %72 = arith.select %70, %71, %66 : vector<8x8xi1>, vector<8x8xf32>
    %cst_31 = arith.constant dense<0xFF800000> : vector<8xf32>
    %73 = vector.multi_reduction <maximumf>, %72, %cst_31 [1] : vector<8x8xf32> to vector<8xf32>
    %74 = vector.shape_cast %73 : vector<8xf32> to vector<8x1xf32>
    %75 = vector.broadcast %74 : vector<8x1xf32> to vector<8x8xf32>
    %76 = arith.subf %72, %75 : vector<8x8xf32>
    %77 = math.exp %76 : vector<8x8xf32>
    %cst_32 = arith.constant dense<0.000000e+00> : vector<8xf32>
    %78 = vector.multi_reduction <add>, %77, %cst_32 [1] : vector<8x8xf32> to vector<8xf32>
    %79 = vector.shape_cast %78 : vector<8xf32> to vector<8x1xf32>
    %80 = tpu.reciprocal %79 {approx = true} : vector<8x1xf32> -> vector<8x1xf32>
    %81 = vector.broadcast %80 : vector<8x1xf32> to vector<8x8xf32>
    %82 = arith.mulf %77, %81 : vector<8x8xf32>
    %cst_33 = arith.constant dense<0.000000e+00> : vector<8x8xf32>
    %83 = tpu.matmul %82, %63, %cst_33 {dimension_numbers = #tpu.dot_dimension_numbers<[1], [0], [0], [1], [0, 0, 1, 1], [], []>} : vector<8x8xf32>, vector<8x8xf32>, vector<8x8xf32> -> vector<8x8xf32>
    %84 = vector.extract_strided_slice %35 {offsets = [0, 16], sizes = [8, 8], strides = [1, 1]} : vector<8x32xf32> to vector<8x8xf32>
    %85 = vector.extract_strided_slice %36 {offsets = [0, 16], sizes = [8, 8], strides = [1, 1]} : vector<8x32xf32> to vector<8x8xf32>
    %86 = vector.extract_strided_slice %37 {offsets = [0, 16], sizes = [8, 8], strides = [1, 1]} : vector<8x32xf32> to vector<8x8xf32>
    %cst_34 = arith.constant dense<0.000000e+00> : vector<8x8xf32>
    %87 = tpu.matmul %84, %85, %cst_34 {dimension_numbers = #tpu.dot_dimension_numbers<[1], [1], [0], [0], [0, 0, 1, 0], [], []>} : vector<8x8xf32>, vector<8x8xf32>, vector<8x8xf32> -> vector<8x8xf32>
    %cst_35 = arith.constant 0.353553385 : f32
    %88 = vector.broadcast %cst_35 : f32 to vector<8x8xf32>
    %89 = arith.mulf %87, %88 : vector<8x8xf32>
    %c0_i32_36 = arith.constant 0 : i32
    %90 = vector.broadcast %c0_i32_36 : i32 to vector<1x8xi32>
    %91 = arith.cmpi eq, %5, %90 : vector<1x8xi32>
    %cst_37 = arith.constant -1.000000e+10 : f32
    %92 = vector.shape_cast %91 : vector<1x8xi1> to vector<1x8xi1>
    %93 = vector.broadcast %92 : vector<1x8xi1> to vector<8x8xi1>
    %94 = vector.broadcast %cst_37 : f32 to vector<8x8xf32>
    %95 = arith.select %93, %94, %89 : vector<8x8xi1>, vector<8x8xf32>
    %cst_38 = arith.constant dense<0xFF800000> : vector<8xf32>
    %96 = vector.multi_reduction <maximumf>, %95, %cst_38 [1] : vector<8x8xf32> to vector<8xf32>
    %97 = vector.shape_cast %96 : vector<8xf32> to vector<8x1xf32>
    %98 = vector.broadcast %97 : vector<8x1xf32> to vector<8x8xf32>
    %99 = arith.subf %95, %98 : vector<8x8xf32>
    %100 = math.exp %99 : vector<8x8xf32>
    %cst_39 = arith.constant dense<0.000000e+00> : vector<8xf32>
    %101 = vector.multi_reduction <add>, %100, %cst_39 [1] : vector<8x8xf32> to vector<8xf32>
    %102 = vector.shape_cast %101 : vector<8xf32> to vector<8x1xf32>
    %103 = tpu.reciprocal %102 {approx = true} : vector<8x1xf32> -> vector<8x1xf32>
    %104 = vector.broadcast %103 : vector<8x1xf32> to vector<8x8xf32>
    %105 = arith.mulf %100, %104 : vector<8x8xf32>
    %cst_40 = arith.constant dense<0.000000e+00> : vector<8x8xf32>
    %106 = tpu.matmul %105, %86, %cst_40 {dimension_numbers = #tpu.dot_dimension_numbers<[1], [0], [0], [1], [0, 0, 1, 1], [], []>} : vector<8x8xf32>, vector<8x8xf32>, vector<8x8xf32> -> vector<8x8xf32>
    %107 = vector.extract_strided_slice %35 {offsets = [0, 24], sizes = [8, 8], strides = [1, 1]} : vector<8x32xf32> to vector<8x8xf32>
    %108 = vector.extract_strided_slice %36 {offsets = [0, 24], sizes = [8, 8], strides = [1, 1]} : vector<8x32xf32> to vector<8x8xf32>
    %109 = vector.extract_strided_slice %37 {offsets = [0, 24], sizes = [8, 8], strides = [1, 1]} : vector<8x32xf32> to vector<8x8xf32>
    %cst_41 = arith.constant dense<0.000000e+00> : vector<8x8xf32>
    %110 = tpu.matmul %107, %108, %cst_41 {dimension_numbers = #tpu.dot_dimension_numbers<[1], [1], [0], [0], [0, 0, 1, 0], [], []>} : vector<8x8xf32>, vector<8x8xf32>, vector<8x8xf32> -> vector<8x8xf32>
    %cst_42 = arith.constant 0.353553385 : f32
    %111 = vector.broadcast %cst_42 : f32 to vector<8x8xf32>
    %112 = arith.mulf %110, %111 : vector<8x8xf32>
    %c0_i32_43 = arith.constant 0 : i32
    %113 = vector.broadcast %c0_i32_43 : i32 to vector<1x8xi32>
    %114 = arith.cmpi eq, %5, %113 : vector<1x8xi32>
    %cst_44 = arith.constant -1.000000e+10 : f32
    %115 = vector.shape_cast %114 : vector<1x8xi1> to vector<1x8xi1>
    %116 = vector.broadcast %115 : vector<1x8xi1> to vector<8x8xi1>
    %117 = vector.broadcast %cst_44 : f32 to vector<8x8xf32>
    %118 = arith.select %116, %117, %112 : vector<8x8xi1>, vector<8x8xf32>
    %cst_45 = arith.constant dense<0xFF800000> : vector<8xf32>
    %119 = vector.multi_reduction <maximumf>, %118, %cst_45 [1] : vector<8x8xf32> to vector<8xf32>
    %120 = vector.shape_cast %119 : vector<8xf32> to vector<8x1xf32>
    %121 = vector.broadcast %120 : vector<8x1xf32> to vector<8x8xf32>
    %122 = arith.subf %118, %121 : vector<8x8xf32>
    %123 = math.exp %122 : vector<8x8xf32>
    %cst_46 = arith.constant dense<0.000000e+00> : vector<8xf32>
    %124 = vector.multi_reduction <add>, %123, %cst_46 [1] : vector<8x8xf32> to vector<8xf32>
    %125 = vector.shape_cast %124 : vector<8xf32> to vector<8x1xf32>
    %126 = tpu.reciprocal %125 {approx = true} : vector<8x1xf32> -> vector<8x1xf32>
    %127 = vector.broadcast %126 : vector<8x1xf32> to vector<8x8xf32>
    %128 = arith.mulf %123, %127 : vector<8x8xf32>
    %cst_47 = arith.constant dense<0.000000e+00> : vector<8x8xf32>
    %129 = tpu.matmul %128, %109, %cst_47 {dimension_numbers = #tpu.dot_dimension_numbers<[1], [0], [0], [1], [0, 0, 1, 1], [], []>} : vector<8x8xf32>, vector<8x8xf32>, vector<8x8xf32> -> vector<8x8xf32>
    %130 = tpu.concatenate %60, %83, %106, %129 in 1 : vector<8x8xf32>, vector<8x8xf32>, vector<8x8xf32>, vector<8x8xf32> -> vector<8x32xf32>
    %c0_48 = arith.constant 0 : index
    %c0_49 = arith.constant 0 : index
    %131 = vector.load %arg8[%c0_48, %c0_49] : memref<32x32xf32, #tpu.memory_space<vmem>>, vector<32x32xf32>
    %cst_50 = arith.constant dense<0.000000e+00> : vector<8x32xf32>
    %132 = tpu.matmul %130, %131, %cst_50 {dimension_numbers = #tpu.dot_dimension_numbers<[1], [0], [0], [1], [0, 0, 1, 1], [], []>} : vector<8x32xf32>, vector<32x32xf32>, vector<8x32xf32> -> vector<8x32xf32>
    %c0_51 = arith.constant 0 : index
    %c0_52 = arith.constant 0 : index
    %133 = vector.load %arg9[%c0_51, %c0_52] : memref<1x32xf32, #tpu.memory_space<vmem>>, vector<1x32xf32>
    %134 = vector.broadcast %133 : vector<1x32xf32> to vector<8x32xf32>
    %135 = arith.addf %132, %134 : vector<8x32xf32>
    %136 = arith.addf %3, %135 : vector<8x32xf32>
    %cst_53 = arith.constant dense<0.000000e+00> : vector<8xf32>
    %137 = vector.multi_reduction <add>, %136, %cst_53 [1] : vector<8x32xf32> to vector<8xf32>
    %138 = vector.shape_cast %137 : vector<8xf32> to vector<8x1xf32>
    %cst_54 = arith.constant 3.200000e+01 : f32
    %139 = vector.broadcast %cst_54 : f32 to vector<8x1xf32>
    %140 = arith.divf %138, %139 : vector<8x1xf32>
    %141 = vector.broadcast %140 : vector<8x1xf32> to vector<8x32xf32>
    %142 = arith.subf %136, %141 : vector<8x32xf32>
    %143 = arith.mulf %142, %142 : vector<8x32xf32>
    %cst_55 = arith.constant dense<0.000000e+00> : vector<8xf32>
    %144 = vector.multi_reduction <add>, %143, %cst_55 [1] : vector<8x32xf32> to vector<8xf32>
    %145 = vector.shape_cast %144 : vector<8xf32> to vector<8x1xf32>
    %cst_56 = arith.constant 3.200000e+01 : f32
    %146 = vector.broadcast %cst_56 : f32 to vector<8x1xf32>
    %147 = arith.divf %145, %146 : vector<8x1xf32>
    %148 = vector.broadcast %140 : vector<8x1xf32> to vector<8x32xf32>
    %149 = arith.subf %136, %148 : vector<8x32xf32>
    %cst_57 = arith.constant 9.99999974E-6 : f32
    %150 = vector.broadcast %cst_57 : f32 to vector<8x1xf32>
    %151 = arith.addf %147, %150 : vector<8x1xf32>
    %152 = math.rsqrt %151 : vector<8x1xf32>
    %153 = vector.broadcast %152 : vector<8x1xf32> to vector<8x32xf32>
    %154 = arith.mulf %149, %153 : vector<8x32xf32>
    %c0_58 = arith.constant 0 : index
    %c0_59 = arith.constant 0 : index
    %155 = vector.load %arg10[%c0_58, %c0_59] : memref<1x32xf32, #tpu.memory_space<vmem>>, vector<1x32xf32>
    %156 = vector.broadcast %155 : vector<1x32xf32> to vector<8x32xf32>
    %157 = arith.mulf %154, %156 : vector<8x32xf32>
    %c0_60 = arith.constant 0 : index
    %c0_61 = arith.constant 0 : index
    %158 = vector.load %arg11[%c0_60, %c0_61] : memref<1x32xf32, #tpu.memory_space<vmem>>, vector<1x32xf32>
    %159 = vector.broadcast %158 : vector<1x32xf32> to vector<8x32xf32>
    %160 = arith.addf %157, %159 : vector<8x32xf32>
    %c0_62 = arith.constant 0 : index
    %c0_63 = arith.constant 0 : index
    %161 = vector.load %arg12[%c0_62, %c0_63] : memref<32x32xf32, #tpu.memory_space<vmem>>, vector<32x32xf32>
    %cst_64 = arith.constant dense<0.000000e+00> : vector<8x32xf32>
    %162 = tpu.matmul %160, %161, %cst_64 {dimension_numbers = #tpu.dot_dimension_numbers<[1], [0], [0], [1], [0, 0, 1, 1], [], []>} : vector<8x32xf32>, vector<32x32xf32>, vector<8x32xf32> -> vector<8x32xf32>
    %c0_65 = arith.constant 0 : index
    %c0_66 = arith.constant 0 : index
    %163 = vector.load %arg13[%c0_65, %c0_66] : memref<1x32xf32, #tpu.memory_space<vmem>>, vector<1x32xf32>
    %164 = vector.broadcast %163 : vector<1x32xf32> to vector<8x32xf32>
    %165 = arith.addf %162, %164 : vector<8x32xf32>
    %c0_67 = arith.constant 0 : index
    %c0_68 = arith.constant 0 : index
    %166 = vector.load %arg14[%c0_67, %c0_68] : memref<32x64xf32, #tpu.memory_space<vmem>>, vector<32x64xf32>
    %cst_69 = arith.constant dense<0.000000e+00> : vector<8x64xf32>
    %167 = tpu.matmul %1, %166, %cst_69 {dimension_numbers = #tpu.dot_dimension_numbers<[1], [0], [0], [1], [0, 0, 1, 1], [], []>} : vector<8x32xf32>, vector<32x64xf32>, vector<8x64xf32> -> vector<8x64xf32>
    %c0_70 = arith.constant 0 : index
    %c0_71 = arith.constant 0 : index
    %168 = vector.load %arg15[%c0_70, %c0_71] : memref<1x64xf32, #tpu.memory_space<vmem>>, vector<1x64xf32>
    %169 = vector.broadcast %168 : vector<1x64xf32> to vector<8x64xf32>
    %170 = arith.addf %167, %169 : vector<8x64xf32>
    %171 = vector.extract_strided_slice %170 {offsets = [0, 0], sizes = [8, 32], strides = [1, 1]} : vector<8x64xf32> to vector<8x32xf32>
    %172 = vector.extract_strided_slice %170 {offsets = [0, 32], sizes = [8, 32], strides = [1, 1]} : vector<8x64xf32> to vector<8x32xf32>
    %173 = vector.extract_strided_slice %165 {offsets = [0, 0], sizes = [8, 8], strides = [1, 1]} : vector<8x32xf32> to vector<8x8xf32>
    %174 = vector.extract_strided_slice %171 {offsets = [0, 0], sizes = [8, 8], strides = [1, 1]} : vector<8x32xf32> to vector<8x8xf32>
    %175 = vector.extract_strided_slice %172 {offsets = [0, 0], sizes = [8, 8], strides = [1, 1]} : vector<8x32xf32> to vector<8x8xf32>
    %cst_72 = arith.constant dense<0.000000e+00> : vector<8x8xf32>
    %176 = tpu.matmul %173, %174, %cst_72 {dimension_numbers = #tpu.dot_dimension_numbers<[1], [1], [0], [0], [0, 0, 1, 0], [], []>} : vector<8x8xf32>, vector<8x8xf32>, vector<8x8xf32> -> vector<8x8xf32>
    %cst_73 = arith.constant 0.353553385 : f32
    %177 = vector.broadcast %cst_73 : f32 to vector<8x8xf32>
    %178 = arith.mulf %176, %177 : vector<8x8xf32>
    %cst_74 = arith.constant dense<0xFF800000> : vector<8xf32>
    %179 = vector.multi_reduction <maximumf>, %178, %cst_74 [1] : vector<8x8xf32> to vector<8xf32>
    %180 = vector.shape_cast %179 : vector<8xf32> to vector<8x1xf32>
    %181 = vector.broadcast %180 : vector<8x1xf32> to vector<8x8xf32>
    %182 = arith.subf %178, %181 : vector<8x8xf32>
    %183 = math.exp %182 : vector<8x8xf32>
    %cst_75 = arith.constant dense<0.000000e+00> : vector<8xf32>
    %184 = vector.multi_reduction <add>, %183, %cst_75 [1] : vector<8x8xf32> to vector<8xf32>
    %185 = vector.shape_cast %184 : vector<8xf32> to vector<8x1xf32>
    %186 = tpu.reciprocal %185 {approx = true} : vector<8x1xf32> -> vector<8x1xf32>
    %187 = vector.broadcast %186 : vector<8x1xf32> to vector<8x8xf32>
    %188 = arith.mulf %183, %187 : vector<8x8xf32>
    %cst_76 = arith.constant dense<0.000000e+00> : vector<8x8xf32>
    %189 = tpu.matmul %188, %175, %cst_76 {dimension_numbers = #tpu.dot_dimension_numbers<[1], [0], [0], [1], [0, 0, 1, 1], [], []>} : vector<8x8xf32>, vector<8x8xf32>, vector<8x8xf32> -> vector<8x8xf32>
    %190 = vector.extract_strided_slice %165 {offsets = [0, 8], sizes = [8, 8], strides = [1, 1]} : vector<8x32xf32> to vector<8x8xf32>
    %191 = vector.extract_strided_slice %171 {offsets = [0, 8], sizes = [8, 8], strides = [1, 1]} : vector<8x32xf32> to vector<8x8xf32>
    %192 = vector.extract_strided_slice %172 {offsets = [0, 8], sizes = [8, 8], strides = [1, 1]} : vector<8x32xf32> to vector<8x8xf32>
    %cst_77 = arith.constant dense<0.000000e+00> : vector<8x8xf32>
    %193 = tpu.matmul %190, %191, %cst_77 {dimension_numbers = #tpu.dot_dimension_numbers<[1], [1], [0], [0], [0, 0, 1, 0], [], []>} : vector<8x8xf32>, vector<8x8xf32>, vector<8x8xf32> -> vector<8x8xf32>
    %cst_78 = arith.constant 0.353553385 : f32
    %194 = vector.broadcast %cst_78 : f32 to vector<8x8xf32>
    %195 = arith.mulf %193, %194 : vector<8x8xf32>
    %cst_79 = arith.constant dense<0xFF800000> : vector<8xf32>
    %196 = vector.multi_reduction <maximumf>, %195, %cst_79 [1] : vector<8x8xf32> to vector<8xf32>
    %197 = vector.shape_cast %196 : vector<8xf32> to vector<8x1xf32>
    %198 = vector.broadcast %197 : vector<8x1xf32> to vector<8x8xf32>
    %199 = arith.subf %195, %198 : vector<8x8xf32>
    %200 = math.exp %199 : vector<8x8xf32>
    %cst_80 = arith.constant dense<0.000000e+00> : vector<8xf32>
    %201 = vector.multi_reduction <add>, %200, %cst_80 [1] : vector<8x8xf32> to vector<8xf32>
    %202 = vector.shape_cast %201 : vector<8xf32> to vector<8x1xf32>
    %203 = tpu.reciprocal %202 {approx = true} : vector<8x1xf32> -> vector<8x1xf32>
    %204 = vector.broadcast %203 : vector<8x1xf32> to vector<8x8xf32>
    %205 = arith.mulf %200, %204 : vector<8x8xf32>
    %cst_81 = arith.constant dense<0.000000e+00> : vector<8x8xf32>
    %206 = tpu.matmul %205, %192, %cst_81 {dimension_numbers = #tpu.dot_dimension_numbers<[1], [0], [0], [1], [0, 0, 1, 1], [], []>} : vector<8x8xf32>, vector<8x8xf32>, vector<8x8xf32> -> vector<8x8xf32>
    %207 = vector.extract_strided_slice %165 {offsets = [0, 16], sizes = [8, 8], strides = [1, 1]} : vector<8x32xf32> to vector<8x8xf32>
    %208 = vector.extract_strided_slice %171 {offsets = [0, 16], sizes = [8, 8], strides = [1, 1]} : vector<8x32xf32> to vector<8x8xf32>
    %209 = vector.extract_strided_slice %172 {offsets = [0, 16], sizes = [8, 8], strides = [1, 1]} : vector<8x32xf32> to vector<8x8xf32>
    %cst_82 = arith.constant dense<0.000000e+00> : vector<8x8xf32>
    %210 = tpu.matmul %207, %208, %cst_82 {dimension_numbers = #tpu.dot_dimension_numbers<[1], [1], [0], [0], [0, 0, 1, 0], [], []>} : vector<8x8xf32>, vector<8x8xf32>, vector<8x8xf32> -> vector<8x8xf32>
    %cst_83 = arith.constant 0.353553385 : f32
    %211 = vector.broadcast %cst_83 : f32 to vector<8x8xf32>
    %212 = arith.mulf %210, %211 : vector<8x8xf32>
    %cst_84 = arith.constant dense<0xFF800000> : vector<8xf32>
    %213 = vector.multi_reduction <maximumf>, %212, %cst_84 [1] : vector<8x8xf32> to vector<8xf32>
    %214 = vector.shape_cast %213 : vector<8xf32> to vector<8x1xf32>
    %215 = vector.broadcast %214 : vector<8x1xf32> to vector<8x8xf32>
    %216 = arith.subf %212, %215 : vector<8x8xf32>
    %217 = math.exp %216 : vector<8x8xf32>
    %cst_85 = arith.constant dense<0.000000e+00> : vector<8xf32>
    %218 = vector.multi_reduction <add>, %217, %cst_85 [1] : vector<8x8xf32> to vector<8xf32>
    %219 = vector.shape_cast %218 : vector<8xf32> to vector<8x1xf32>
    %220 = tpu.reciprocal %219 {approx = true} : vector<8x1xf32> -> vector<8x1xf32>
    %221 = vector.broadcast %220 : vector<8x1xf32> to vector<8x8xf32>
    %222 = arith.mulf %217, %221 : vector<8x8xf32>
    %cst_86 = arith.constant dense<0.000000e+00> : vector<8x8xf32>
    %223 = tpu.matmul %222, %209, %cst_86 {dimension_numbers = #tpu.dot_dimension_numbers<[1], [0], [0], [1], [0, 0, 1, 1], [], []>} : vector<8x8xf32>, vector<8x8xf32>, vector<8x8xf32> -> vector<8x8xf32>
    %224 = vector.extract_strided_slice %165 {offsets = [0, 24], sizes = [8, 8], strides = [1, 1]} : vector<8x32xf32> to vector<8x8xf32>
    %225 = vector.extract_strided_slice %171 {offsets = [0, 24], sizes = [8, 8], strides = [1, 1]} : vector<8x32xf32> to vector<8x8xf32>
    %226 = vector.extract_strided_slice %172 {offsets = [0, 24], sizes = [8, 8], strides = [1, 1]} : vector<8x32xf32> to vector<8x8xf32>
    %cst_87 = arith.constant dense<0.000000e+00> : vector<8x8xf32>
    %227 = tpu.matmul %224, %225, %cst_87 {dimension_numbers = #tpu.dot_dimension_numbers<[1], [1], [0], [0], [0, 0, 1, 0], [], []>} : vector<8x8xf32>, vector<8x8xf32>, vector<8x8xf32> -> vector<8x8xf32>
    %cst_88 = arith.constant 0.353553385 : f32
    %228 = vector.broadcast %cst_88 : f32 to vector<8x8xf32>
    %229 = arith.mulf %227, %228 : vector<8x8xf32>
    %cst_89 = arith.constant dense<0xFF800000> : vector<8xf32>
    %230 = vector.multi_reduction <maximumf>, %229, %cst_89 [1] : vector<8x8xf32> to vector<8xf32>
    %231 = vector.shape_cast %230 : vector<8xf32> to vector<8x1xf32>
    %232 = vector.broadcast %231 : vector<8x1xf32> to vector<8x8xf32>
    %233 = arith.subf %229, %232 : vector<8x8xf32>
    %234 = math.exp %233 : vector<8x8xf32>
    %cst_90 = arith.constant dense<0.000000e+00> : vector<8xf32>
    %235 = vector.multi_reduction <add>, %234, %cst_90 [1] : vector<8x8xf32> to vector<8xf32>
    %236 = vector.shape_cast %235 : vector<8xf32> to vector<8x1xf32>
    %237 = tpu.reciprocal %236 {approx = true} : vector<8x1xf32> -> vector<8x1xf32>
    %238 = vector.broadcast %237 : vector<8x1xf32> to vector<8x8xf32>
    %239 = arith.mulf %234, %238 : vector<8x8xf32>
    %cst_91 = arith.constant dense<0.000000e+00> : vector<8x8xf32>
    %240 = tpu.matmul %239, %226, %cst_91 {dimension_numbers = #tpu.dot_dimension_numbers<[1], [0], [0], [1], [0, 0, 1, 1], [], []>} : vector<8x8xf32>, vector<8x8xf32>, vector<8x8xf32> -> vector<8x8xf32>
    %241 = tpu.concatenate %189, %206, %223, %240 in 1 : vector<8x8xf32>, vector<8x8xf32>, vector<8x8xf32>, vector<8x8xf32> -> vector<8x32xf32>
    %c0_92 = arith.constant 0 : index
    %c0_93 = arith.constant 0 : index
    %242 = vector.load %arg16[%c0_92, %c0_93] : memref<32x32xf32, #tpu.memory_space<vmem>>, vector<32x32xf32>
    %cst_94 = arith.constant dense<0.000000e+00> : vector<8x32xf32>
    %243 = tpu.matmul %241, %242, %cst_94 {dimension_numbers = #tpu.dot_dimension_numbers<[1], [0], [0], [1], [0, 0, 1, 1], [], []>} : vector<8x32xf32>, vector<32x32xf32>, vector<8x32xf32> -> vector<8x32xf32>
    %c0_95 = arith.constant 0 : index
    %c0_96 = arith.constant 0 : index
    %244 = vector.load %arg17[%c0_95, %c0_96] : memref<1x32xf32, #tpu.memory_space<vmem>>, vector<1x32xf32>
    %245 = vector.broadcast %244 : vector<1x32xf32> to vector<8x32xf32>
    %246 = arith.addf %243, %245 : vector<8x32xf32>
    %247 = arith.addf %136, %246 : vector<8x32xf32>
    %cst_97 = arith.constant dense<0.000000e+00> : vector<8xf32>
    %248 = vector.multi_reduction <add>, %247, %cst_97 [1] : vector<8x32xf32> to vector<8xf32>
    %249 = vector.shape_cast %248 : vector<8xf32> to vector<8x1xf32>
    %cst_98 = arith.constant 3.200000e+01 : f32
    %250 = vector.broadcast %cst_98 : f32 to vector<8x1xf32>
    %251 = arith.divf %249, %250 : vector<8x1xf32>
    %252 = vector.broadcast %251 : vector<8x1xf32> to vector<8x32xf32>
    %253 = arith.subf %247, %252 : vector<8x32xf32>
    %254 = arith.mulf %253, %253 : vector<8x32xf32>
    %cst_99 = arith.constant dense<0.000000e+00> : vector<8xf32>
    %255 = vector.multi_reduction <add>, %254, %cst_99 [1] : vector<8x32xf32> to vector<8xf32>
    %256 = vector.shape_cast %255 : vector<8xf32> to vector<8x1xf32>
    %cst_100 = arith.constant 3.200000e+01 : f32
    %257 = vector.broadcast %cst_100 : f32 to vector<8x1xf32>
    %258 = arith.divf %256, %257 : vector<8x1xf32>
    %259 = vector.broadcast %251 : vector<8x1xf32> to vector<8x32xf32>
    %260 = arith.subf %247, %259 : vector<8x32xf32>
    %cst_101 = arith.constant 9.99999974E-6 : f32
    %261 = vector.broadcast %cst_101 : f32 to vector<8x1xf32>
    %262 = arith.addf %258, %261 : vector<8x1xf32>
    %263 = math.rsqrt %262 : vector<8x1xf32>
    %264 = vector.broadcast %263 : vector<8x1xf32> to vector<8x32xf32>
    %265 = arith.mulf %260, %264 : vector<8x32xf32>
    %c0_102 = arith.constant 0 : index
    %c0_103 = arith.constant 0 : index
    %266 = vector.load %arg18[%c0_102, %c0_103] : memref<1x32xf32, #tpu.memory_space<vmem>>, vector<1x32xf32>
    %267 = vector.broadcast %266 : vector<1x32xf32> to vector<8x32xf32>
    %268 = arith.mulf %265, %267 : vector<8x32xf32>
    %c0_104 = arith.constant 0 : index
    %c0_105 = arith.constant 0 : index
    %269 = vector.load %arg19[%c0_104, %c0_105] : memref<1x32xf32, #tpu.memory_space<vmem>>, vector<1x32xf32>
    %270 = vector.broadcast %269 : vector<1x32xf32> to vector<8x32xf32>
    %271 = arith.addf %268, %270 : vector<8x32xf32>
    %c0_106 = arith.constant 0 : index
    %c0_107 = arith.constant 0 : index
    %272 = vector.load %arg20[%c0_106, %c0_107] : memref<32x64xf32, #tpu.memory_space<vmem>>, vector<32x64xf32>
    %cst_108 = arith.constant dense<0.000000e+00> : vector<8x64xf32>
    %273 = tpu.matmul %271, %272, %cst_108 {dimension_numbers = #tpu.dot_dimension_numbers<[1], [0], [0], [1], [0, 0, 1, 1], [], []>} : vector<8x32xf32>, vector<32x64xf32>, vector<8x64xf32> -> vector<8x64xf32>
    %c0_109 = arith.constant 0 : index
    %c0_110 = arith.constant 0 : index
    %274 = vector.load %arg21[%c0_109, %c0_110] : memref<1x64xf32, #tpu.memory_space<vmem>>, vector<1x64xf32>
    %275 = vector.broadcast %274 : vector<1x64xf32> to vector<8x64xf32>
    %276 = arith.addf %273, %275 : vector<8x64xf32>
    %cst_111 = arith.constant 0.000000e+00 : f32
    %277 = vector.broadcast %cst_111 : f32 to vector<8x64xf32>
    %278 = arith.maximumf %276, %277 : vector<8x64xf32>
    %c0_112 = arith.constant 0 : index
    %c0_113 = arith.constant 0 : index
    %279 = vector.load %arg22[%c0_112, %c0_113] : memref<64x32xf32, #tpu.memory_space<vmem>>, vector<64x32xf32>
    %cst_114 = arith.constant dense<0.000000e+00> : vector<8x32xf32>
    %280 = tpu.matmul %278, %279, %cst_114 {dimension_numbers = #tpu.dot_dimension_numbers<[1], [0], [0], [1], [0, 0, 1, 1], [], []>} : vector<8x64xf32>, vector<64x32xf32>, vector<8x32xf32> -> vector<8x32xf32>
    %c0_115 = arith.constant 0 : index
    %c0_116 = arith.constant 0 : index
    %281 = vector.load %arg23[%c0_115, %c0_116] : memref<1x32xf32, #tpu.memory_space<vmem>>, vector<1x32xf32>
    %282 = vector.broadcast %281 : vector<1x32xf32> to vector<8x32xf32>
    %283 = arith.addf %280, %282 : vector<8x32xf32>
    %284 = arith.addf %247, %283 : vector<8x32xf32>
    %cst_117 = arith.constant dense<0.000000e+00> : vector<8xf32>
    %285 = vector.multi_reduction <add>, %284, %cst_117 [1] : vector<8x32xf32> to vector<8xf32>
    %286 = vector.shape_cast %285 : vector<8xf32> to vector<8x1xf32>
    %cst_118 = arith.constant 3.200000e+01 : f32
    %287 = vector.broadcast %cst_118 : f32 to vector<8x1xf32>
    %288 = arith.divf %286, %287 : vector<8x1xf32>
    %289 = vector.broadcast %288 : vector<8x1xf32> to vector<8x32xf32>
    %290 = arith.subf %284, %289 : vector<8x32xf32>
    %291 = arith.mulf %290, %290 : vector<8x32xf32>
    %cst_119 = arith.constant dense<0.000000e+00> : vector<8xf32>
    %292 = vector.multi_reduction <add>, %291, %cst_119 [1] : vector<8x32xf32> to vector<8xf32>
    %293 = vector.shape_cast %292 : vector<8xf32> to vector<8x1xf32>
    %cst_120 = arith.constant 3.100000e+01 : f32
    %294 = vector.broadcast %cst_120 : f32 to vector<8x1xf32>
    %295 = arith.divf %293, %294 : vector<8x1xf32>
    %296 = math.sqrt %295 : vector<8x1xf32>
    %c0_121 = arith.constant 0 : index
    %c0_122 = arith.constant 0 : index
    %297 = vector.load %arg24[%c0_121, %c0_122] : memref<1x32xf32, #tpu.memory_space<vmem>>, vector<1x32xf32>
    %298 = vector.broadcast %288 : vector<8x1xf32> to vector<8x32xf32>
    %299 = arith.subf %284, %298 : vector<8x32xf32>
    %300 = vector.broadcast %297 : vector<1x32xf32> to vector<8x32xf32>
    %301 = arith.mulf %300, %299 : vector<8x32xf32>
    %cst_123 = arith.constant 9.99999997E-7 : f32
    %302 = vector.broadcast %cst_123 : f32 to vector<8x1xf32>
    %303 = arith.addf %296, %302 : vector<8x1xf32>
    %304 = vector.broadcast %303 : vector<8x1xf32> to vector<8x32xf32>
    %305 = arith.divf %301, %304 : vector<8x32xf32>
    %c0_124 = arith.constant 0 : index
    %c0_125 = arith.constant 0 : index
    %306 = vector.load %arg25[%c0_124, %c0_125] : memref<1x32xf32, #tpu.memory_space<vmem>>, vector<1x32xf32>
    %307 = vector.broadcast %306 : vector<1x32xf32> to vector<8x32xf32>
    %308 = arith.addf %305, %307 : vector<8x32xf32>
    %c0_126 = arith.constant 0 : index
    %c0_127 = arith.constant 0 : index
    %c0_128 = arith.constant 0 : index
    %309 = vector.load %arg26[%c0_126, %c0_127, %c0_128] : memref<1x8x32xf32, #tpu.memory_space<vmem>>, vector<1x8x32xf32>
    %310 = vector.shape_cast %309 : vector<1x8x32xf32> to vector<8x32xf32>
    %311 = vector.shape_cast %308 : vector<8x32xf32> to vector<1x8x32xf32>
    tpu.vector_store %arg26[%c0_126, %c0_127, %c0_128], %311 {strides = array<i32>} : memref<1x8x32xf32, #tpu.memory_space<vmem>>, vector<1x8x32xf32>,
    return
  }
  func.func @transform_0(%arg0: i32) -> (i32, i32, i32) {
    %c0_i32 = arith.constant 0 : i32
    %c0_i32_0 = arith.constant 0 : i32
    %c0_i32_1 = arith.constant 0 : i32
    return %arg0, %c0_i32, %c0_i32_0 : i32, i32, i32
  }
  func.func @transform_1(%arg0: i32) -> (i32, i32, i32) {
    %c0_i32 = arith.constant 0 : i32
    %c0_i32_0 = arith.constant 0 : i32
    %c0_i32_1 = arith.constant 0 : i32
    return %arg0, %c0_i32, %c0_i32_0 : i32, i32, i32
  }
  func.func @transform_2(%arg0: i32) -> (i32, i32, i32) {
    %c0_i32 = arith.constant 0 : i32
    %c0_i32_0 = arith.constant 0 : i32
    %c0_i32_1 = arith.constant 0 : i32
    return %arg0, %c0_i32, %c0_i32_0 : i32, i32, i32
  }
  func.func @transform_3(%arg0: i32) -> (i32, i32) {
    %c0_i32 = arith.constant 0 : i32
    %c0_i32_0 = arith.constant 0 : i32
    %c0_i32_1 = arith.constant 0 : i32
    return %c0_i32, %c0_i32_0 : i32, i32
  }
  func.func @transform_4(%arg0: i32) -> (i32, i32) {
    %c0_i32 = arith.constant 0 : i32
    %c0_i32_0 = arith.constant 0 : i32
    %c0_i32_1 = arith.constant 0 : i32
    return %c0_i32, %c0_i32_0 : i32, i32
  }
  func.func @transform_5(%arg0: i32) -> (i32, i32) {
    %c0_i32 = arith.constant 0 : i32
    %c0_i32_0 = arith.constant 0 : i32
    %c0_i32_1 = arith.constant 0 : i32
    return %c0_i32, %c0_i32_0 : i32, i32
  }
  func.func @transform_6(%arg0: i32) -> (i32, i32) {
    %c0_i32 = arith.constant 0 : i32
    %c0_i32_0 = arith.constant 0 : i32
    %c0_i32_1 = arith.constant 0 : i32
    return %c0_i32, %c0_i32_0 : i32, i32
  }
  func.func @transform_7(%arg0: i32) -> (i32, i32) {
    %c0_i32 = arith.constant 0 : i32
    %c0_i32_0 = arith.constant 0 : i32
    %c0_i32_1 = arith.constant 0 : i32
    return %c0_i32, %c0_i32_0 : i32, i32
  }
  func.func @transform_8(%arg0: i32) -> (i32, i32) {
    %c0_i32 = arith.constant 0 : i32
    %c0_i32_0 = arith.constant 0 : i32
    %c0_i32_1 = arith.constant 0 : i32
    return %c0_i32, %c0_i32_0 : i32, i32
  }
  func.func @transform_9(%arg0: i32) -> (i32, i32) {
    %c0_i32 = arith.constant 0 : i32
    %c0_i32_0 = arith.constant 0 : i32
    %c0_i32_1 = arith.constant 0 : i32
    return %c0_i32, %c0_i32_0 : i32, i32
  }
  func.func @transform_10(%arg0: i32) -> (i32, i32) {
    %c0_i32 = arith.constant 0 : i32
    %c0_i32_0 = arith.constant 0 : i32
    %c0_i32_1 = arith.constant 0 : i32
    return %c0_i32, %c0_i32_0 : i32, i32
  }
  func.func @transform_11(%arg0: i32) -> (i32, i32) {
    %c0_i32 = arith.constant 0 : i32
    %c0_i32_0 = arith.constant 0 : i32
    %c0_i32_1 = arith.constant 0 : i32
    return %c0_i32, %c0_i32_0 : i32, i32
  }
  func.func @transform_12(%arg0: i32) -> (i32, i32) {
    %c0_i32 = arith.constant 0 : i32
    %c0_i32_0 = arith.constant 0 : i32
    %c0_i32_1 = arith.constant 0 : i32
    return %c0_i32, %c0_i32_0 : i32, i32
  }
  func.func @transform_13(%arg0: i32) -> (i32, i32) {
    %c0_i32 = arith.constant 0 : i32
    %c0_i32_0 = arith.constant 0 : i32
    %c0_i32_1 = arith.constant 0 : i32
    return %c0_i32, %c0_i32_0 : i32, i32
  }
  func.func @transform_14(%arg0: i32) -> (i32, i32) {
    %c0_i32 = arith.constant 0 : i32
    %c0_i32_0 = arith.constant 0 : i32
    %c0_i32_1 = arith.constant 0 : i32
    return %c0_i32, %c0_i32_0 : i32, i32
  }
  func.func @transform_15(%arg0: i32) -> (i32, i32) {
    %c0_i32 = arith.constant 0 : i32
    %c0_i32_0 = arith.constant 0 : i32
    %c0_i32_1 = arith.constant 0 : i32
    return %c0_i32, %c0_i32_0 : i32, i32
  }
  func.func @transform_16(%arg0: i32) -> (i32, i32) {
    %c0_i32 = arith.constant 0 : i32
    %c0_i32_0 = arith.constant 0 : i32
    %c0_i32_1 = arith.constant 0 : i32
    return %c0_i32, %c0_i32_0 : i32, i32
  }
  func.func @transform_17(%arg0: i32) -> (i32, i32) {
    %c0_i32 = arith.constant 0 : i32
    %c0_i32_0 = arith.constant 0 : i32
    %c0_i32_1 = arith.constant 0 : i32
    return %c0_i32, %c0_i32_0 : i32, i32
  }
  func.func @transform_18(%arg0: i32) -> (i32, i32) {
    %c0_i32 = arith.constant 0 : i32
    %c0_i32_0 = arith.constant 0 : i32
    %c0_i32_1 = arith.constant 0 : i32
    return %c0_i32, %c0_i32_0 : i32, i32
  }
  func.func @transform_19(%arg0: i32) -> (i32, i32) {
    %c0_i32 = arith.constant 0 : i32
    %c0_i32_0 = arith.constant 0 : i32
    %c0_i32_1 = arith.constant 0 : i32
    return %c0_i32, %c0_i32_0 : i32, i32
  }
  func.func @transform_20(%arg0: i32) -> (i32, i32) {
    %c0_i32 = arith.constant 0 : i32
    %c0_i32_0 = arith.constant 0 : i32
    %c0_i32_1 = arith.constant 0 : i32
    return %c0_i32, %c0_i32_0 : i32, i32
  }
  func.func @transform_21(%arg0: i32) -> (i32, i32) {
    %c0_i32 = arith.constant 0 : i32
    %c0_i32_0 = arith.constant 0 : i32
    %c0_i32_1 = arith.constant 0 : i32
    return %c0_i32, %c0_i32_0 : i32, i32
  }
  func.func @transform_22(%arg0: i32) -> (i32, i32) {
    %c0_i32 = arith.constant 0 : i32
    %c0_i32_0 = arith.constant 0 : i32
    %c0_i32_1 = arith.constant 0 : i32
    return %c0_i32, %c0_i32_0 : i32, i32
  }
  func.func @transform_23(%arg0: i32) -> (i32, i32) {
    %c0_i32 = arith.constant 0 : i32
    %c0_i32_0 = arith.constant 0 : i32
    %c0_i32_1 = arith.constant 0 : i32
    return %c0_i32, %c0_i32_0 : i32, i32
  }
  func.func @transform_24(%arg0: i32) -> (i32, i32) {
    %c0_i32 = arith.constant 0 : i32
    %c0_i32_0 = arith.constant 0 : i32
    %c0_i32_1 = arith.constant 0 : i32
    return %c0_i32, %c0_i32_0 : i32, i32
  }
  func.func @transform_25(%arg0: i32) -> (i32, i32, i32) {
    %c0_i32 = arith.constant 0 : i32
    %c0_i32_0 = arith.constant 0 : i32
    %c0_i32_1 = arith.constant 0 : i32
    return %arg0, %c0_i32, %c0_i32_0 : i32, i32, i32
  }
}

module attributes {stable_mosaic.version = 11 : i64} {
  func.func @_encoder_layer_kernel(%arg0: i32, %arg1: memref<1x8x32xf32, #tpu.memory_space<vmem>>, %arg2: memref<1x8x32xf32, #tpu.memory_space<vmem>>, %arg3: memref<1x1x8xi32, #tpu.memory_space<vmem>>, %arg4: memref<8x32xf32, #tpu.memory_space<vmem>>, %arg5: memref<1x32xf32, #tpu.memory_space<vmem>>, %arg6: memref<1x32xf32, #tpu.memory_space<vmem>>, %arg7: memref<32x96xf32, #tpu.memory_space<vmem>>, %arg8: memref<1x96xf32, #tpu.memory_space<vmem>>, %arg9: memref<32x32xf32, #tpu.memory_space<vmem>>, %arg10: memref<1x32xf32, #tpu.memory_space<vmem>>, %arg11: memref<1x32xf32, #tpu.memory_space<vmem>>, %arg12: memref<1x32xf32, #tpu.memory_space<vmem>>, %arg13: memref<32x32xf32, #tpu.memory_space<vmem>>, %arg14: memref<1x32xf32, #tpu.memory_space<vmem>>, %arg15: memref<32x64xf32, #tpu.memory_space<vmem>>, %arg16: memref<1x64xf32, #tpu.memory_space<vmem>>, %arg17: memref<32x32xf32, #tpu.memory_space<vmem>>, %arg18: memref<1x32xf32, #tpu.memory_space<vmem>>, %arg19: memref<1x32xf32, #tpu.memory_space<vmem>>, %arg20: memref<1x32xf32, #tpu.memory_space<vmem>>, %arg21: memref<32x64xf32, #tpu.memory_space<vmem>>, %arg22: memref<1x64xf32, #tpu.memory_space<vmem>>, %arg23: memref<64x32xf32, #tpu.memory_space<vmem>>, %arg24: memref<1x32xf32, #tpu.memory_space<vmem>>, %arg25: memref<1x8x32xf32, #tpu.memory_space<vmem>>) attributes {dimension_semantics = [#tpu.dimension_semantics<parallel>], iteration_bounds = array<i64: 2>, scalar_prefetch = 0 : i64, scratch_operands = 0 : i64, tpu.core_type = #tpu.core_type<tc>, window_params = [{transform_indices = @transform_0, window_bounds = array<i64: 1, 8, 32>}, {transform_indices = @transform_1, window_bounds = array<i64: 1, 8, 32>}, {transform_indices = @transform_2, window_bounds = array<i64: 1, 1, 8>}, {pipeline_mode = #tpu.pipeline_mode<synchronous>, transform_indices = @transform_3, window_bounds = array<i64: 8, 32>}, {pipeline_mode = #tpu.pipeline_mode<synchronous>, transform_indices = @transform_4, window_bounds = array<i64: 1, 32>}, {pipeline_mode = #tpu.pipeline_mode<synchronous>, transform_indices = @transform_5, window_bounds = array<i64: 1, 32>}, {pipeline_mode = #tpu.pipeline_mode<synchronous>, transform_indices = @transform_6, window_bounds = array<i64: 32, 96>}, {pipeline_mode = #tpu.pipeline_mode<synchronous>, transform_indices = @transform_7, window_bounds = array<i64: 1, 96>}, {pipeline_mode = #tpu.pipeline_mode<synchronous>, transform_indices = @transform_8, window_bounds = array<i64: 32, 32>}, {pipeline_mode = #tpu.pipeline_mode<synchronous>, transform_indices = @transform_9, window_bounds = array<i64: 1, 32>}, {pipeline_mode = #tpu.pipeline_mode<synchronous>, transform_indices = @transform_10, window_bounds = array<i64: 1, 32>}, {pipeline_mode = #tpu.pipeline_mode<synchronous>, transform_indices = @transform_11, window_bounds = array<i64: 1, 32>}, {pipeline_mode = #tpu.pipeline_mode<synchronous>, transform_indices = @transform_12, window_bounds = array<i64: 32, 32>}, {pipeline_mode = #tpu.pipeline_mode<synchronous>, transform_indices = @transform_13, window_bounds = array<i64: 1, 32>}, {pipeline_mode = #tpu.pipeline_mode<synchronous>, transform_indices = @transform_14, window_bounds = array<i64: 32, 64>}, {pipeline_mode = #tpu.pipeline_mode<synchronous>, transform_indices = @transform_15, window_bounds = array<i64: 1, 64>}, {pipeline_mode = #tpu.pipeline_mode<synchronous>, transform_indices = @transform_16, window_bounds = array<i64: 32, 32>}, {pipeline_mode = #tpu.pipeline_mode<synchronous>, transform_indices = @transform_17, window_bounds = array<i64: 1, 32>}, {pipeline_mode = #tpu.pipeline_mode<synchronous>, transform_indices = @transform_18, window_bounds = array<i64: 1, 32>}, {pipeline_mode = #tpu.pipeline_mode<synchronous>, transform_indices = @transform_19, window_bounds = array<i64: 1, 32>}, {pipeline_mode = #tpu.pipeline_mode<synchronous>, transform_indices = @transform_20, window_bounds = array<i64: 32, 64>}, {pipeline_mode = #tpu.pipeline_mode<synchronous>, transform_indices = @transform_21, window_bounds = array<i64: 1, 64>}, {pipeline_mode = #tpu.pipeline_mode<synchronous>, transform_indices = @transform_22, window_bounds = array<i64: 64, 32>}, {pipeline_mode = #tpu.pipeline_mode<synchronous>, transform_indices = @transform_23, window_bounds = array<i64: 1, 32>}, {transform_indices = @transform_24, window_bounds = array<i64: 1, 8, 32>}]} {
    %c0 = arith.constant 0 : index
    %c0_0 = arith.constant 0 : index
    %c0_1 = arith.constant 0 : index
    %0 = vector.load %arg1[%c0, %c0_0, %c0_1] : memref<1x8x32xf32, #tpu.memory_space<vmem>>, vector<1x8x32xf32>
    %1 = vector.shape_cast %0 : vector<1x8x32xf32> to vector<8x32xf32>
    %c0_2 = arith.constant 0 : index
    %c0_3 = arith.constant 0 : index
    %2 = vector.load %arg4[%c0_2, %c0_3] : memref<8x32xf32, #tpu.memory_space<vmem>>, vector<8x32xf32>
    %3 = arith.addf %1, %2 : vector<8x32xf32>
    %c0_4 = arith.constant 0 : index
    %c0_5 = arith.constant 0 : index
    %c0_6 = arith.constant 0 : index
    %4 = vector.load %arg2[%c0_4, %c0_5, %c0_6] : memref<1x8x32xf32, #tpu.memory_space<vmem>>, vector<1x8x32xf32>
    %5 = vector.shape_cast %4 : vector<1x8x32xf32> to vector<8x32xf32>
    %c0_7 = arith.constant 0 : index
    %c0_8 = arith.constant 0 : index
    %c0_9 = arith.constant 0 : index
    %6 = vector.load %arg3[%c0_7, %c0_8, %c0_9] : memref<1x1x8xi32, #tpu.memory_space<vmem>>, vector<1x1x8xi32>
    %7 = vector.shape_cast %6 : vector<1x1x8xi32> to vector<1x8xi32>
    %cst = arith.constant dense<0.000000e+00> : vector<8xf32>
    %8 = vector.multi_reduction <add>, %5, %cst [1] : vector<8x32xf32> to vector<8xf32>
    %9 = vector.shape_cast %8 : vector<8xf32> to vector<8x1xf32>
    %cst_10 = arith.constant 3.200000e+01 : f32
    %10 = vector.broadcast %cst_10 : f32 to vector<8x1xf32>
    %11 = arith.divf %9, %10 : vector<8x1xf32>
    %12 = vector.broadcast %11 : vector<8x1xf32> to vector<8x32xf32>
    %13 = arith.subf %5, %12 : vector<8x32xf32>
    %14 = arith.mulf %13, %13 : vector<8x32xf32>
    %cst_11 = arith.constant dense<0.000000e+00> : vector<8xf32>
    %15 = vector.multi_reduction <add>, %14, %cst_11 [1] : vector<8x32xf32> to vector<8xf32>
    %16 = vector.shape_cast %15 : vector<8xf32> to vector<8x1xf32>
    %cst_12 = arith.constant 3.200000e+01 : f32
    %17 = vector.broadcast %cst_12 : f32 to vector<8x1xf32>
    %18 = arith.divf %16, %17 : vector<8x1xf32>
    %19 = vector.broadcast %11 : vector<8x1xf32> to vector<8x32xf32>
    %20 = arith.subf %5, %19 : vector<8x32xf32>
    %cst_13 = arith.constant 9.99999974E-6 : f32
    %21 = vector.broadcast %cst_13 : f32 to vector<8x1xf32>
    %22 = arith.addf %18, %21 : vector<8x1xf32>
    %23 = math.rsqrt %22 : vector<8x1xf32>
    %24 = vector.broadcast %23 : vector<8x1xf32> to vector<8x32xf32>
    %25 = arith.mulf %20, %24 : vector<8x32xf32>
    %c0_14 = arith.constant 0 : index
    %c0_15 = arith.constant 0 : index
    %26 = vector.load %arg5[%c0_14, %c0_15] : memref<1x32xf32, #tpu.memory_space<vmem>>, vector<1x32xf32>
    %27 = vector.broadcast %26 : vector<1x32xf32> to vector<8x32xf32>
    %28 = arith.mulf %25, %27 : vector<8x32xf32>
    %c0_16 = arith.constant 0 : index
    %c0_17 = arith.constant 0 : index
    %29 = vector.load %arg6[%c0_16, %c0_17] : memref<1x32xf32, #tpu.memory_space<vmem>>, vector<1x32xf32>
    %30 = vector.broadcast %29 : vector<1x32xf32> to vector<8x32xf32>
    %31 = arith.addf %28, %30 : vector<8x32xf32>
    %c0_18 = arith.constant 0 : index
    %c0_19 = arith.constant 0 : index
    %32 = vector.load %arg7[%c0_18, %c0_19] : memref<32x96xf32, #tpu.memory_space<vmem>>, vector<32x96xf32>
    %cst_20 = arith.constant dense<0.000000e+00> : vector<8x96xf32>
    %33 = tpu.matmul %31, %32, %cst_20 {dimension_numbers = #tpu.dot_dimension_numbers<[1], [0], [0], [1], [0, 0, 1, 1], [], []>} : vector<8x32xf32>, vector<32x96xf32>, vector<8x96xf32> -> vector<8x96xf32>
    %c0_21 = arith.constant 0 : index
    %c0_22 = arith.constant 0 : index
    %34 = vector.load %arg8[%c0_21, %c0_22] : memref<1x96xf32, #tpu.memory_space<vmem>>, vector<1x96xf32>
    %35 = vector.broadcast %34 : vector<1x96xf32> to vector<8x96xf32>
    %36 = arith.addf %33, %35 : vector<8x96xf32>
    %37 = vector.extract_strided_slice %36 {offsets = [0, 0], sizes = [8, 32], strides = [1, 1]} : vector<8x96xf32> to vector<8x32xf32>
    %38 = vector.extract_strided_slice %36 {offsets = [0, 32], sizes = [8, 32], strides = [1, 1]} : vector<8x96xf32> to vector<8x32xf32>
    %39 = vector.extract_strided_slice %36 {offsets = [0, 64], sizes = [8, 32], strides = [1, 1]} : vector<8x96xf32> to vector<8x32xf32>
    %40 = vector.extract_strided_slice %37 {offsets = [0, 0], sizes = [8, 8], strides = [1, 1]} : vector<8x32xf32> to vector<8x8xf32>
    %41 = vector.extract_strided_slice %38 {offsets = [0, 0], sizes = [8, 8], strides = [1, 1]} : vector<8x32xf32> to vector<8x8xf32>
    %42 = vector.extract_strided_slice %39 {offsets = [0, 0], sizes = [8, 8], strides = [1, 1]} : vector<8x32xf32> to vector<8x8xf32>
    %cst_23 = arith.constant dense<0.000000e+00> : vector<8x8xf32>
    %43 = tpu.matmul %40, %41, %cst_23 {dimension_numbers = #tpu.dot_dimension_numbers<[1], [1], [0], [0], [0, 0, 1, 0], [], []>} : vector<8x8xf32>, vector<8x8xf32>, vector<8x8xf32> -> vector<8x8xf32>
    %cst_24 = arith.constant 0.353553385 : f32
    %44 = vector.broadcast %cst_24 : f32 to vector<8x8xf32>
    %45 = arith.mulf %43, %44 : vector<8x8xf32>
    %c0_i32 = arith.constant 0 : i32
    %46 = vector.broadcast %c0_i32 : i32 to vector<1x8xi32>
    %47 = arith.cmpi eq, %7, %46 : vector<1x8xi32>
    %cst_25 = arith.constant -1.000000e+10 : f32
    %48 = vector.shape_cast %47 : vector<1x8xi1> to vector<1x8xi1>
    %49 = vector.broadcast %48 : vector<1x8xi1> to vector<8x8xi1>
    %50 = vector.broadcast %cst_25 : f32 to vector<8x8xf32>
    %51 = arith.select %49, %50, %45 : vector<8x8xi1>, vector<8x8xf32>
    %cst_26 = arith.constant dense<0xFF800000> : vector<8xf32>
    %52 = vector.multi_reduction <maximumf>, %51, %cst_26 [1] : vector<8x8xf32> to vector<8xf32>
    %53 = vector.shape_cast %52 : vector<8xf32> to vector<8x1xf32>
    %54 = vector.broadcast %53 : vector<8x1xf32> to vector<8x8xf32>
    %55 = arith.subf %51, %54 : vector<8x8xf32>
    %56 = math.exp %55 : vector<8x8xf32>
    %cst_27 = arith.constant dense<0.000000e+00> : vector<8xf32>
    %57 = vector.multi_reduction <add>, %56, %cst_27 [1] : vector<8x8xf32> to vector<8xf32>
    %58 = vector.shape_cast %57 : vector<8xf32> to vector<8x1xf32>
    %59 = tpu.reciprocal %58 {approx = true} : vector<8x1xf32> -> vector<8x1xf32>
    %60 = vector.broadcast %59 : vector<8x1xf32> to vector<8x8xf32>
    %61 = arith.mulf %56, %60 : vector<8x8xf32>
    %cst_28 = arith.constant dense<0.000000e+00> : vector<8x8xf32>
    %62 = tpu.matmul %61, %42, %cst_28 {dimension_numbers = #tpu.dot_dimension_numbers<[1], [0], [0], [1], [0, 0, 1, 1], [], []>} : vector<8x8xf32>, vector<8x8xf32>, vector<8x8xf32> -> vector<8x8xf32>
    %63 = vector.extract_strided_slice %37 {offsets = [0, 8], sizes = [8, 8], strides = [1, 1]} : vector<8x32xf32> to vector<8x8xf32>
    %64 = vector.extract_strided_slice %38 {offsets = [0, 8], sizes = [8, 8], strides = [1, 1]} : vector<8x32xf32> to vector<8x8xf32>
    %65 = vector.extract_strided_slice %39 {offsets = [0, 8], sizes = [8, 8], strides = [1, 1]} : vector<8x32xf32> to vector<8x8xf32>
    %cst_29 = arith.constant dense<0.000000e+00> : vector<8x8xf32>
    %66 = tpu.matmul %63, %64, %cst_29 {dimension_numbers = #tpu.dot_dimension_numbers<[1], [1], [0], [0], [0, 0, 1, 0], [], []>} : vector<8x8xf32>, vector<8x8xf32>, vector<8x8xf32> -> vector<8x8xf32>
    %cst_30 = arith.constant 0.353553385 : f32
    %67 = vector.broadcast %cst_30 : f32 to vector<8x8xf32>
    %68 = arith.mulf %66, %67 : vector<8x8xf32>
    %c0_i32_31 = arith.constant 0 : i32
    %69 = vector.broadcast %c0_i32_31 : i32 to vector<1x8xi32>
    %70 = arith.cmpi eq, %7, %69 : vector<1x8xi32>
    %cst_32 = arith.constant -1.000000e+10 : f32
    %71 = vector.shape_cast %70 : vector<1x8xi1> to vector<1x8xi1>
    %72 = vector.broadcast %71 : vector<1x8xi1> to vector<8x8xi1>
    %73 = vector.broadcast %cst_32 : f32 to vector<8x8xf32>
    %74 = arith.select %72, %73, %68 : vector<8x8xi1>, vector<8x8xf32>
    %cst_33 = arith.constant dense<0xFF800000> : vector<8xf32>
    %75 = vector.multi_reduction <maximumf>, %74, %cst_33 [1] : vector<8x8xf32> to vector<8xf32>
    %76 = vector.shape_cast %75 : vector<8xf32> to vector<8x1xf32>
    %77 = vector.broadcast %76 : vector<8x1xf32> to vector<8x8xf32>
    %78 = arith.subf %74, %77 : vector<8x8xf32>
    %79 = math.exp %78 : vector<8x8xf32>
    %cst_34 = arith.constant dense<0.000000e+00> : vector<8xf32>
    %80 = vector.multi_reduction <add>, %79, %cst_34 [1] : vector<8x8xf32> to vector<8xf32>
    %81 = vector.shape_cast %80 : vector<8xf32> to vector<8x1xf32>
    %82 = tpu.reciprocal %81 {approx = true} : vector<8x1xf32> -> vector<8x1xf32>
    %83 = vector.broadcast %82 : vector<8x1xf32> to vector<8x8xf32>
    %84 = arith.mulf %79, %83 : vector<8x8xf32>
    %cst_35 = arith.constant dense<0.000000e+00> : vector<8x8xf32>
    %85 = tpu.matmul %84, %65, %cst_35 {dimension_numbers = #tpu.dot_dimension_numbers<[1], [0], [0], [1], [0, 0, 1, 1], [], []>} : vector<8x8xf32>, vector<8x8xf32>, vector<8x8xf32> -> vector<8x8xf32>
    %86 = vector.extract_strided_slice %37 {offsets = [0, 16], sizes = [8, 8], strides = [1, 1]} : vector<8x32xf32> to vector<8x8xf32>
    %87 = vector.extract_strided_slice %38 {offsets = [0, 16], sizes = [8, 8], strides = [1, 1]} : vector<8x32xf32> to vector<8x8xf32>
    %88 = vector.extract_strided_slice %39 {offsets = [0, 16], sizes = [8, 8], strides = [1, 1]} : vector<8x32xf32> to vector<8x8xf32>
    %cst_36 = arith.constant dense<0.000000e+00> : vector<8x8xf32>
    %89 = tpu.matmul %86, %87, %cst_36 {dimension_numbers = #tpu.dot_dimension_numbers<[1], [1], [0], [0], [0, 0, 1, 0], [], []>} : vector<8x8xf32>, vector<8x8xf32>, vector<8x8xf32> -> vector<8x8xf32>
    %cst_37 = arith.constant 0.353553385 : f32
    %90 = vector.broadcast %cst_37 : f32 to vector<8x8xf32>
    %91 = arith.mulf %89, %90 : vector<8x8xf32>
    %c0_i32_38 = arith.constant 0 : i32
    %92 = vector.broadcast %c0_i32_38 : i32 to vector<1x8xi32>
    %93 = arith.cmpi eq, %7, %92 : vector<1x8xi32>
    %cst_39 = arith.constant -1.000000e+10 : f32
    %94 = vector.shape_cast %93 : vector<1x8xi1> to vector<1x8xi1>
    %95 = vector.broadcast %94 : vector<1x8xi1> to vector<8x8xi1>
    %96 = vector.broadcast %cst_39 : f32 to vector<8x8xf32>
    %97 = arith.select %95, %96, %91 : vector<8x8xi1>, vector<8x8xf32>
    %cst_40 = arith.constant dense<0xFF800000> : vector<8xf32>
    %98 = vector.multi_reduction <maximumf>, %97, %cst_40 [1] : vector<8x8xf32> to vector<8xf32>
    %99 = vector.shape_cast %98 : vector<8xf32> to vector<8x1xf32>
    %100 = vector.broadcast %99 : vector<8x1xf32> to vector<8x8xf32>
    %101 = arith.subf %97, %100 : vector<8x8xf32>
    %102 = math.exp %101 : vector<8x8xf32>
    %cst_41 = arith.constant dense<0.000000e+00> : vector<8xf32>
    %103 = vector.multi_reduction <add>, %102, %cst_41 [1] : vector<8x8xf32> to vector<8xf32>
    %104 = vector.shape_cast %103 : vector<8xf32> to vector<8x1xf32>
    %105 = tpu.reciprocal %104 {approx = true} : vector<8x1xf32> -> vector<8x1xf32>
    %106 = vector.broadcast %105 : vector<8x1xf32> to vector<8x8xf32>
    %107 = arith.mulf %102, %106 : vector<8x8xf32>
    %cst_42 = arith.constant dense<0.000000e+00> : vector<8x8xf32>
    %108 = tpu.matmul %107, %88, %cst_42 {dimension_numbers = #tpu.dot_dimension_numbers<[1], [0], [0], [1], [0, 0, 1, 1], [], []>} : vector<8x8xf32>, vector<8x8xf32>, vector<8x8xf32> -> vector<8x8xf32>
    %109 = vector.extract_strided_slice %37 {offsets = [0, 24], sizes = [8, 8], strides = [1, 1]} : vector<8x32xf32> to vector<8x8xf32>
    %110 = vector.extract_strided_slice %38 {offsets = [0, 24], sizes = [8, 8], strides = [1, 1]} : vector<8x32xf32> to vector<8x8xf32>
    %111 = vector.extract_strided_slice %39 {offsets = [0, 24], sizes = [8, 8], strides = [1, 1]} : vector<8x32xf32> to vector<8x8xf32>
    %cst_43 = arith.constant dense<0.000000e+00> : vector<8x8xf32>
    %112 = tpu.matmul %109, %110, %cst_43 {dimension_numbers = #tpu.dot_dimension_numbers<[1], [1], [0], [0], [0, 0, 1, 0], [], []>} : vector<8x8xf32>, vector<8x8xf32>, vector<8x8xf32> -> vector<8x8xf32>
    %cst_44 = arith.constant 0.353553385 : f32
    %113 = vector.broadcast %cst_44 : f32 to vector<8x8xf32>
    %114 = arith.mulf %112, %113 : vector<8x8xf32>
    %c0_i32_45 = arith.constant 0 : i32
    %115 = vector.broadcast %c0_i32_45 : i32 to vector<1x8xi32>
    %116 = arith.cmpi eq, %7, %115 : vector<1x8xi32>
    %cst_46 = arith.constant -1.000000e+10 : f32
    %117 = vector.shape_cast %116 : vector<1x8xi1> to vector<1x8xi1>
    %118 = vector.broadcast %117 : vector<1x8xi1> to vector<8x8xi1>
    %119 = vector.broadcast %cst_46 : f32 to vector<8x8xf32>
    %120 = arith.select %118, %119, %114 : vector<8x8xi1>, vector<8x8xf32>
    %cst_47 = arith.constant dense<0xFF800000> : vector<8xf32>
    %121 = vector.multi_reduction <maximumf>, %120, %cst_47 [1] : vector<8x8xf32> to vector<8xf32>
    %122 = vector.shape_cast %121 : vector<8xf32> to vector<8x1xf32>
    %123 = vector.broadcast %122 : vector<8x1xf32> to vector<8x8xf32>
    %124 = arith.subf %120, %123 : vector<8x8xf32>
    %125 = math.exp %124 : vector<8x8xf32>
    %cst_48 = arith.constant dense<0.000000e+00> : vector<8xf32>
    %126 = vector.multi_reduction <add>, %125, %cst_48 [1] : vector<8x8xf32> to vector<8xf32>
    %127 = vector.shape_cast %126 : vector<8xf32> to vector<8x1xf32>
    %128 = tpu.reciprocal %127 {approx = true} : vector<8x1xf32> -> vector<8x1xf32>
    %129 = vector.broadcast %128 : vector<8x1xf32> to vector<8x8xf32>
    %130 = arith.mulf %125, %129 : vector<8x8xf32>
    %cst_49 = arith.constant dense<0.000000e+00> : vector<8x8xf32>
    %131 = tpu.matmul %130, %111, %cst_49 {dimension_numbers = #tpu.dot_dimension_numbers<[1], [0], [0], [1], [0, 0, 1, 1], [], []>} : vector<8x8xf32>, vector<8x8xf32>, vector<8x8xf32> -> vector<8x8xf32>
    %132 = tpu.concatenate %62, %85, %108, %131 in 1 : vector<8x8xf32>, vector<8x8xf32>, vector<8x8xf32>, vector<8x8xf32> -> vector<8x32xf32>
    %c0_50 = arith.constant 0 : index
    %c0_51 = arith.constant 0 : index
    %133 = vector.load %arg9[%c0_50, %c0_51] : memref<32x32xf32, #tpu.memory_space<vmem>>, vector<32x32xf32>
    %cst_52 = arith.constant dense<0.000000e+00> : vector<8x32xf32>
    %134 = tpu.matmul %132, %133, %cst_52 {dimension_numbers = #tpu.dot_dimension_numbers<[1], [0], [0], [1], [0, 0, 1, 1], [], []>} : vector<8x32xf32>, vector<32x32xf32>, vector<8x32xf32> -> vector<8x32xf32>
    %c0_53 = arith.constant 0 : index
    %c0_54 = arith.constant 0 : index
    %135 = vector.load %arg10[%c0_53, %c0_54] : memref<1x32xf32, #tpu.memory_space<vmem>>, vector<1x32xf32>
    %136 = vector.broadcast %135 : vector<1x32xf32> to vector<8x32xf32>
    %137 = arith.addf %134, %136 : vector<8x32xf32>
    %138 = arith.addf %5, %137 : vector<8x32xf32>
    %cst_55 = arith.constant dense<0.000000e+00> : vector<8xf32>
    %139 = vector.multi_reduction <add>, %138, %cst_55 [1] : vector<8x32xf32> to vector<8xf32>
    %140 = vector.shape_cast %139 : vector<8xf32> to vector<8x1xf32>
    %cst_56 = arith.constant 3.200000e+01 : f32
    %141 = vector.broadcast %cst_56 : f32 to vector<8x1xf32>
    %142 = arith.divf %140, %141 : vector<8x1xf32>
    %143 = vector.broadcast %142 : vector<8x1xf32> to vector<8x32xf32>
    %144 = arith.subf %138, %143 : vector<8x32xf32>
    %145 = arith.mulf %144, %144 : vector<8x32xf32>
    %cst_57 = arith.constant dense<0.000000e+00> : vector<8xf32>
    %146 = vector.multi_reduction <add>, %145, %cst_57 [1] : vector<8x32xf32> to vector<8xf32>
    %147 = vector.shape_cast %146 : vector<8xf32> to vector<8x1xf32>
    %cst_58 = arith.constant 3.200000e+01 : f32
    %148 = vector.broadcast %cst_58 : f32 to vector<8x1xf32>
    %149 = arith.divf %147, %148 : vector<8x1xf32>
    %150 = vector.broadcast %142 : vector<8x1xf32> to vector<8x32xf32>
    %151 = arith.subf %138, %150 : vector<8x32xf32>
    %cst_59 = arith.constant 9.99999974E-6 : f32
    %152 = vector.broadcast %cst_59 : f32 to vector<8x1xf32>
    %153 = arith.addf %149, %152 : vector<8x1xf32>
    %154 = math.rsqrt %153 : vector<8x1xf32>
    %155 = vector.broadcast %154 : vector<8x1xf32> to vector<8x32xf32>
    %156 = arith.mulf %151, %155 : vector<8x32xf32>
    %c0_60 = arith.constant 0 : index
    %c0_61 = arith.constant 0 : index
    %157 = vector.load %arg11[%c0_60, %c0_61] : memref<1x32xf32, #tpu.memory_space<vmem>>, vector<1x32xf32>
    %158 = vector.broadcast %157 : vector<1x32xf32> to vector<8x32xf32>
    %159 = arith.mulf %156, %158 : vector<8x32xf32>
    %c0_62 = arith.constant 0 : index
    %c0_63 = arith.constant 0 : index
    %160 = vector.load %arg12[%c0_62, %c0_63] : memref<1x32xf32, #tpu.memory_space<vmem>>, vector<1x32xf32>
    %161 = vector.broadcast %160 : vector<1x32xf32> to vector<8x32xf32>
    %162 = arith.addf %159, %161 : vector<8x32xf32>
    %c0_64 = arith.constant 0 : index
    %c0_65 = arith.constant 0 : index
    %163 = vector.load %arg13[%c0_64, %c0_65] : memref<32x32xf32, #tpu.memory_space<vmem>>, vector<32x32xf32>
    %cst_66 = arith.constant dense<0.000000e+00> : vector<8x32xf32>
    %164 = tpu.matmul %162, %163, %cst_66 {dimension_numbers = #tpu.dot_dimension_numbers<[1], [0], [0], [1], [0, 0, 1, 1], [], []>} : vector<8x32xf32>, vector<32x32xf32>, vector<8x32xf32> -> vector<8x32xf32>
    %c0_67 = arith.constant 0 : index
    %c0_68 = arith.constant 0 : index
    %165 = vector.load %arg14[%c0_67, %c0_68] : memref<1x32xf32, #tpu.memory_space<vmem>>, vector<1x32xf32>
    %166 = vector.broadcast %165 : vector<1x32xf32> to vector<8x32xf32>
    %167 = arith.addf %164, %166 : vector<8x32xf32>
    %c0_69 = arith.constant 0 : index
    %c0_70 = arith.constant 0 : index
    %168 = vector.load %arg15[%c0_69, %c0_70] : memref<32x64xf32, #tpu.memory_space<vmem>>, vector<32x64xf32>
    %cst_71 = arith.constant dense<0.000000e+00> : vector<8x64xf32>
    %169 = tpu.matmul %3, %168, %cst_71 {dimension_numbers = #tpu.dot_dimension_numbers<[1], [0], [0], [1], [0, 0, 1, 1], [], []>} : vector<8x32xf32>, vector<32x64xf32>, vector<8x64xf32> -> vector<8x64xf32>
    %c0_72 = arith.constant 0 : index
    %c0_73 = arith.constant 0 : index
    %170 = vector.load %arg16[%c0_72, %c0_73] : memref<1x64xf32, #tpu.memory_space<vmem>>, vector<1x64xf32>
    %171 = vector.broadcast %170 : vector<1x64xf32> to vector<8x64xf32>
    %172 = arith.addf %169, %171 : vector<8x64xf32>
    %173 = vector.extract_strided_slice %172 {offsets = [0, 0], sizes = [8, 32], strides = [1, 1]} : vector<8x64xf32> to vector<8x32xf32>
    %174 = vector.extract_strided_slice %172 {offsets = [0, 32], sizes = [8, 32], strides = [1, 1]} : vector<8x64xf32> to vector<8x32xf32>
    %175 = vector.extract_strided_slice %167 {offsets = [0, 0], sizes = [8, 8], strides = [1, 1]} : vector<8x32xf32> to vector<8x8xf32>
    %176 = vector.extract_strided_slice %173 {offsets = [0, 0], sizes = [8, 8], strides = [1, 1]} : vector<8x32xf32> to vector<8x8xf32>
    %177 = vector.extract_strided_slice %174 {offsets = [0, 0], sizes = [8, 8], strides = [1, 1]} : vector<8x32xf32> to vector<8x8xf32>
    %cst_74 = arith.constant dense<0.000000e+00> : vector<8x8xf32>
    %178 = tpu.matmul %175, %176, %cst_74 {dimension_numbers = #tpu.dot_dimension_numbers<[1], [1], [0], [0], [0, 0, 1, 0], [], []>} : vector<8x8xf32>, vector<8x8xf32>, vector<8x8xf32> -> vector<8x8xf32>
    %cst_75 = arith.constant 0.353553385 : f32
    %179 = vector.broadcast %cst_75 : f32 to vector<8x8xf32>
    %180 = arith.mulf %178, %179 : vector<8x8xf32>
    %cst_76 = arith.constant dense<0xFF800000> : vector<8xf32>
    %181 = vector.multi_reduction <maximumf>, %180, %cst_76 [1] : vector<8x8xf32> to vector<8xf32>
    %182 = vector.shape_cast %181 : vector<8xf32> to vector<8x1xf32>
    %183 = vector.broadcast %182 : vector<8x1xf32> to vector<8x8xf32>
    %184 = arith.subf %180, %183 : vector<8x8xf32>
    %185 = math.exp %184 : vector<8x8xf32>
    %cst_77 = arith.constant dense<0.000000e+00> : vector<8xf32>
    %186 = vector.multi_reduction <add>, %185, %cst_77 [1] : vector<8x8xf32> to vector<8xf32>
    %187 = vector.shape_cast %186 : vector<8xf32> to vector<8x1xf32>
    %188 = tpu.reciprocal %187 {approx = true} : vector<8x1xf32> -> vector<8x1xf32>
    %189 = vector.broadcast %188 : vector<8x1xf32> to vector<8x8xf32>
    %190 = arith.mulf %185, %189 : vector<8x8xf32>
    %cst_78 = arith.constant dense<0.000000e+00> : vector<8x8xf32>
    %191 = tpu.matmul %190, %177, %cst_78 {dimension_numbers = #tpu.dot_dimension_numbers<[1], [0], [0], [1], [0, 0, 1, 1], [], []>} : vector<8x8xf32>, vector<8x8xf32>, vector<8x8xf32> -> vector<8x8xf32>
    %192 = vector.extract_strided_slice %167 {offsets = [0, 8], sizes = [8, 8], strides = [1, 1]} : vector<8x32xf32> to vector<8x8xf32>
    %193 = vector.extract_strided_slice %173 {offsets = [0, 8], sizes = [8, 8], strides = [1, 1]} : vector<8x32xf32> to vector<8x8xf32>
    %194 = vector.extract_strided_slice %174 {offsets = [0, 8], sizes = [8, 8], strides = [1, 1]} : vector<8x32xf32> to vector<8x8xf32>
    %cst_79 = arith.constant dense<0.000000e+00> : vector<8x8xf32>
    %195 = tpu.matmul %192, %193, %cst_79 {dimension_numbers = #tpu.dot_dimension_numbers<[1], [1], [0], [0], [0, 0, 1, 0], [], []>} : vector<8x8xf32>, vector<8x8xf32>, vector<8x8xf32> -> vector<8x8xf32>
    %cst_80 = arith.constant 0.353553385 : f32
    %196 = vector.broadcast %cst_80 : f32 to vector<8x8xf32>
    %197 = arith.mulf %195, %196 : vector<8x8xf32>
    %cst_81 = arith.constant dense<0xFF800000> : vector<8xf32>
    %198 = vector.multi_reduction <maximumf>, %197, %cst_81 [1] : vector<8x8xf32> to vector<8xf32>
    %199 = vector.shape_cast %198 : vector<8xf32> to vector<8x1xf32>
    %200 = vector.broadcast %199 : vector<8x1xf32> to vector<8x8xf32>
    %201 = arith.subf %197, %200 : vector<8x8xf32>
    %202 = math.exp %201 : vector<8x8xf32>
    %cst_82 = arith.constant dense<0.000000e+00> : vector<8xf32>
    %203 = vector.multi_reduction <add>, %202, %cst_82 [1] : vector<8x8xf32> to vector<8xf32>
    %204 = vector.shape_cast %203 : vector<8xf32> to vector<8x1xf32>
    %205 = tpu.reciprocal %204 {approx = true} : vector<8x1xf32> -> vector<8x1xf32>
    %206 = vector.broadcast %205 : vector<8x1xf32> to vector<8x8xf32>
    %207 = arith.mulf %202, %206 : vector<8x8xf32>
    %cst_83 = arith.constant dense<0.000000e+00> : vector<8x8xf32>
    %208 = tpu.matmul %207, %194, %cst_83 {dimension_numbers = #tpu.dot_dimension_numbers<[1], [0], [0], [1], [0, 0, 1, 1], [], []>} : vector<8x8xf32>, vector<8x8xf32>, vector<8x8xf32> -> vector<8x8xf32>
    %209 = vector.extract_strided_slice %167 {offsets = [0, 16], sizes = [8, 8], strides = [1, 1]} : vector<8x32xf32> to vector<8x8xf32>
    %210 = vector.extract_strided_slice %173 {offsets = [0, 16], sizes = [8, 8], strides = [1, 1]} : vector<8x32xf32> to vector<8x8xf32>
    %211 = vector.extract_strided_slice %174 {offsets = [0, 16], sizes = [8, 8], strides = [1, 1]} : vector<8x32xf32> to vector<8x8xf32>
    %cst_84 = arith.constant dense<0.000000e+00> : vector<8x8xf32>
    %212 = tpu.matmul %209, %210, %cst_84 {dimension_numbers = #tpu.dot_dimension_numbers<[1], [1], [0], [0], [0, 0, 1, 0], [], []>} : vector<8x8xf32>, vector<8x8xf32>, vector<8x8xf32> -> vector<8x8xf32>
    %cst_85 = arith.constant 0.353553385 : f32
    %213 = vector.broadcast %cst_85 : f32 to vector<8x8xf32>
    %214 = arith.mulf %212, %213 : vector<8x8xf32>
    %cst_86 = arith.constant dense<0xFF800000> : vector<8xf32>
    %215 = vector.multi_reduction <maximumf>, %214, %cst_86 [1] : vector<8x8xf32> to vector<8xf32>
    %216 = vector.shape_cast %215 : vector<8xf32> to vector<8x1xf32>
    %217 = vector.broadcast %216 : vector<8x1xf32> to vector<8x8xf32>
    %218 = arith.subf %214, %217 : vector<8x8xf32>
    %219 = math.exp %218 : vector<8x8xf32>
    %cst_87 = arith.constant dense<0.000000e+00> : vector<8xf32>
    %220 = vector.multi_reduction <add>, %219, %cst_87 [1] : vector<8x8xf32> to vector<8xf32>
    %221 = vector.shape_cast %220 : vector<8xf32> to vector<8x1xf32>
    %222 = tpu.reciprocal %221 {approx = true} : vector<8x1xf32> -> vector<8x1xf32>
    %223 = vector.broadcast %222 : vector<8x1xf32> to vector<8x8xf32>
    %224 = arith.mulf %219, %223 : vector<8x8xf32>
    %cst_88 = arith.constant dense<0.000000e+00> : vector<8x8xf32>
    %225 = tpu.matmul %224, %211, %cst_88 {dimension_numbers = #tpu.dot_dimension_numbers<[1], [0], [0], [1], [0, 0, 1, 1], [], []>} : vector<8x8xf32>, vector<8x8xf32>, vector<8x8xf32> -> vector<8x8xf32>
    %226 = vector.extract_strided_slice %167 {offsets = [0, 24], sizes = [8, 8], strides = [1, 1]} : vector<8x32xf32> to vector<8x8xf32>
    %227 = vector.extract_strided_slice %173 {offsets = [0, 24], sizes = [8, 8], strides = [1, 1]} : vector<8x32xf32> to vector<8x8xf32>
    %228 = vector.extract_strided_slice %174 {offsets = [0, 24], sizes = [8, 8], strides = [1, 1]} : vector<8x32xf32> to vector<8x8xf32>
    %cst_89 = arith.constant dense<0.000000e+00> : vector<8x8xf32>
    %229 = tpu.matmul %226, %227, %cst_89 {dimension_numbers = #tpu.dot_dimension_numbers<[1], [1], [0], [0], [0, 0, 1, 0], [], []>} : vector<8x8xf32>, vector<8x8xf32>, vector<8x8xf32> -> vector<8x8xf32>
    %cst_90 = arith.constant 0.353553385 : f32
    %230 = vector.broadcast %cst_90 : f32 to vector<8x8xf32>
    %231 = arith.mulf %229, %230 : vector<8x8xf32>
    %cst_91 = arith.constant dense<0xFF800000> : vector<8xf32>
    %232 = vector.multi_reduction <maximumf>, %231, %cst_91 [1] : vector<8x8xf32> to vector<8xf32>
    %233 = vector.shape_cast %232 : vector<8xf32> to vector<8x1xf32>
    %234 = vector.broadcast %233 : vector<8x1xf32> to vector<8x8xf32>
    %235 = arith.subf %231, %234 : vector<8x8xf32>
    %236 = math.exp %235 : vector<8x8xf32>
    %cst_92 = arith.constant dense<0.000000e+00> : vector<8xf32>
    %237 = vector.multi_reduction <add>, %236, %cst_92 [1] : vector<8x8xf32> to vector<8xf32>
    %238 = vector.shape_cast %237 : vector<8xf32> to vector<8x1xf32>
    %239 = tpu.reciprocal %238 {approx = true} : vector<8x1xf32> -> vector<8x1xf32>
    %240 = vector.broadcast %239 : vector<8x1xf32> to vector<8x8xf32>
    %241 = arith.mulf %236, %240 : vector<8x8xf32>
    %cst_93 = arith.constant dense<0.000000e+00> : vector<8x8xf32>
    %242 = tpu.matmul %241, %228, %cst_93 {dimension_numbers = #tpu.dot_dimension_numbers<[1], [0], [0], [1], [0, 0, 1, 1], [], []>} : vector<8x8xf32>, vector<8x8xf32>, vector<8x8xf32> -> vector<8x8xf32>
    %243 = tpu.concatenate %191, %208, %225, %242 in 1 : vector<8x8xf32>, vector<8x8xf32>, vector<8x8xf32>, vector<8x8xf32> -> vector<8x32xf32>
    %c0_94 = arith.constant 0 : index
    %c0_95 = arith.constant 0 : index
    %244 = vector.load %arg17[%c0_94, %c0_95] : memref<32x32xf32, #tpu.memory_space<vmem>>, vector<32x32xf32>
    %cst_96 = arith.constant dense<0.000000e+00> : vector<8x32xf32>
    %245 = tpu.matmul %243, %244, %cst_96 {dimension_numbers = #tpu.dot_dimension_numbers<[1], [0], [0], [1], [0, 0, 1, 1], [], []>} : vector<8x32xf32>, vector<32x32xf32>, vector<8x32xf32> -> vector<8x32xf32>
    %c0_97 = arith.constant 0 : index
    %c0_98 = arith.constant 0 : index
    %246 = vector.load %arg18[%c0_97, %c0_98] : memref<1x32xf32, #tpu.memory_space<vmem>>, vector<1x32xf32>
    %247 = vector.broadcast %246 : vector<1x32xf32> to vector<8x32xf32>
    %248 = arith.addf %245, %247 : vector<8x32xf32>
    %249 = arith.addf %138, %248 : vector<8x32xf32>
    %cst_99 = arith.constant dense<0.000000e+00> : vector<8xf32>
    %250 = vector.multi_reduction <add>, %249, %cst_99 [1] : vector<8x32xf32> to vector<8xf32>
    %251 = vector.shape_cast %250 : vector<8xf32> to vector<8x1xf32>
    %cst_100 = arith.constant 3.200000e+01 : f32
    %252 = vector.broadcast %cst_100 : f32 to vector<8x1xf32>
    %253 = arith.divf %251, %252 : vector<8x1xf32>
    %254 = vector.broadcast %253 : vector<8x1xf32> to vector<8x32xf32>
    %255 = arith.subf %249, %254 : vector<8x32xf32>
    %256 = arith.mulf %255, %255 : vector<8x32xf32>
    %cst_101 = arith.constant dense<0.000000e+00> : vector<8xf32>
    %257 = vector.multi_reduction <add>, %256, %cst_101 [1] : vector<8x32xf32> to vector<8xf32>
    %258 = vector.shape_cast %257 : vector<8xf32> to vector<8x1xf32>
    %cst_102 = arith.constant 3.200000e+01 : f32
    %259 = vector.broadcast %cst_102 : f32 to vector<8x1xf32>
    %260 = arith.divf %258, %259 : vector<8x1xf32>
    %261 = vector.broadcast %253 : vector<8x1xf32> to vector<8x32xf32>
    %262 = arith.subf %249, %261 : vector<8x32xf32>
    %cst_103 = arith.constant 9.99999974E-6 : f32
    %263 = vector.broadcast %cst_103 : f32 to vector<8x1xf32>
    %264 = arith.addf %260, %263 : vector<8x1xf32>
    %265 = math.rsqrt %264 : vector<8x1xf32>
    %266 = vector.broadcast %265 : vector<8x1xf32> to vector<8x32xf32>
    %267 = arith.mulf %262, %266 : vector<8x32xf32>
    %c0_104 = arith.constant 0 : index
    %c0_105 = arith.constant 0 : index
    %268 = vector.load %arg19[%c0_104, %c0_105] : memref<1x32xf32, #tpu.memory_space<vmem>>, vector<1x32xf32>
    %269 = vector.broadcast %268 : vector<1x32xf32> to vector<8x32xf32>
    %270 = arith.mulf %267, %269 : vector<8x32xf32>
    %c0_106 = arith.constant 0 : index
    %c0_107 = arith.constant 0 : index
    %271 = vector.load %arg20[%c0_106, %c0_107] : memref<1x32xf32, #tpu.memory_space<vmem>>, vector<1x32xf32>
    %272 = vector.broadcast %271 : vector<1x32xf32> to vector<8x32xf32>
    %273 = arith.addf %270, %272 : vector<8x32xf32>
    %c0_108 = arith.constant 0 : index
    %c0_109 = arith.constant 0 : index
    %274 = vector.load %arg21[%c0_108, %c0_109] : memref<32x64xf32, #tpu.memory_space<vmem>>, vector<32x64xf32>
    %cst_110 = arith.constant dense<0.000000e+00> : vector<8x64xf32>
    %275 = tpu.matmul %273, %274, %cst_110 {dimension_numbers = #tpu.dot_dimension_numbers<[1], [0], [0], [1], [0, 0, 1, 1], [], []>} : vector<8x32xf32>, vector<32x64xf32>, vector<8x64xf32> -> vector<8x64xf32>
    %c0_111 = arith.constant 0 : index
    %c0_112 = arith.constant 0 : index
    %276 = vector.load %arg22[%c0_111, %c0_112] : memref<1x64xf32, #tpu.memory_space<vmem>>, vector<1x64xf32>
    %277 = vector.broadcast %276 : vector<1x64xf32> to vector<8x64xf32>
    %278 = arith.addf %275, %277 : vector<8x64xf32>
    %cst_113 = arith.constant 0.000000e+00 : f32
    %279 = vector.broadcast %cst_113 : f32 to vector<8x64xf32>
    %280 = arith.maximumf %278, %279 : vector<8x64xf32>
    %c0_114 = arith.constant 0 : index
    %c0_115 = arith.constant 0 : index
    %281 = vector.load %arg23[%c0_114, %c0_115] : memref<64x32xf32, #tpu.memory_space<vmem>>, vector<64x32xf32>
    %cst_116 = arith.constant dense<0.000000e+00> : vector<8x32xf32>
    %282 = tpu.matmul %280, %281, %cst_116 {dimension_numbers = #tpu.dot_dimension_numbers<[1], [0], [0], [1], [0, 0, 1, 1], [], []>} : vector<8x64xf32>, vector<64x32xf32>, vector<8x32xf32> -> vector<8x32xf32>
    %c0_117 = arith.constant 0 : index
    %c0_118 = arith.constant 0 : index
    %283 = vector.load %arg24[%c0_117, %c0_118] : memref<1x32xf32, #tpu.memory_space<vmem>>, vector<1x32xf32>
    %284 = vector.broadcast %283 : vector<1x32xf32> to vector<8x32xf32>
    %285 = arith.addf %282, %284 : vector<8x32xf32>
    %286 = arith.addf %249, %285 : vector<8x32xf32>
    %c0_119 = arith.constant 0 : index
    %c0_120 = arith.constant 0 : index
    %c0_121 = arith.constant 0 : index
    %287 = vector.load %arg25[%c0_119, %c0_120, %c0_121] : memref<1x8x32xf32, #tpu.memory_space<vmem>>, vector<1x8x32xf32>
    %288 = vector.shape_cast %287 : vector<1x8x32xf32> to vector<8x32xf32>
    %289 = vector.shape_cast %286 : vector<8x32xf32> to vector<1x8x32xf32>
    tpu.vector_store %arg25[%c0_119, %c0_120, %c0_121], %289 {strides = array<i32>} : memref<1x8x32xf32, #tpu.memory_space<vmem>>, vector<1x8x32xf32>,
    return
  }
  func.func @transform_0(%arg0: i32) -> (i32, i32, i32) {
    %c0_i32 = arith.constant 0 : i32
    %c0_i32_0 = arith.constant 0 : i32
    %c0_i32_1 = arith.constant 0 : i32
    return %arg0, %c0_i32, %c0_i32_0 : i32, i32, i32
  }
  func.func @transform_1(%arg0: i32) -> (i32, i32, i32) {
    %c0_i32 = arith.constant 0 : i32
    %c0_i32_0 = arith.constant 0 : i32
    %c0_i32_1 = arith.constant 0 : i32
    return %arg0, %c0_i32, %c0_i32_0 : i32, i32, i32
  }
  func.func @transform_2(%arg0: i32) -> (i32, i32, i32) {
    %c0_i32 = arith.constant 0 : i32
    %c0_i32_0 = arith.constant 0 : i32
    %c0_i32_1 = arith.constant 0 : i32
    return %arg0, %c0_i32, %c0_i32_0 : i32, i32, i32
  }
  func.func @transform_3(%arg0: i32) -> (i32, i32) {
    %c0_i32 = arith.constant 0 : i32
    %c0_i32_0 = arith.constant 0 : i32
    %c0_i32_1 = arith.constant 0 : i32
    return %c0_i32, %c0_i32_0 : i32, i32
  }
  func.func @transform_4(%arg0: i32) -> (i32, i32) {
    %c0_i32 = arith.constant 0 : i32
    %c0_i32_0 = arith.constant 0 : i32
    %c0_i32_1 = arith.constant 0 : i32
    return %c0_i32, %c0_i32_0 : i32, i32
  }
  func.func @transform_5(%arg0: i32) -> (i32, i32) {
    %c0_i32 = arith.constant 0 : i32
    %c0_i32_0 = arith.constant 0 : i32
    %c0_i32_1 = arith.constant 0 : i32
    return %c0_i32, %c0_i32_0 : i32, i32
  }
  func.func @transform_6(%arg0: i32) -> (i32, i32) {
    %c0_i32 = arith.constant 0 : i32
    %c0_i32_0 = arith.constant 0 : i32
    %c0_i32_1 = arith.constant 0 : i32
    return %c0_i32, %c0_i32_0 : i32, i32
  }
  func.func @transform_7(%arg0: i32) -> (i32, i32) {
    %c0_i32 = arith.constant 0 : i32
    %c0_i32_0 = arith.constant 0 : i32
    %c0_i32_1 = arith.constant 0 : i32
    return %c0_i32, %c0_i32_0 : i32, i32
  }
  func.func @transform_8(%arg0: i32) -> (i32, i32) {
    %c0_i32 = arith.constant 0 : i32
    %c0_i32_0 = arith.constant 0 : i32
    %c0_i32_1 = arith.constant 0 : i32
    return %c0_i32, %c0_i32_0 : i32, i32
  }
  func.func @transform_9(%arg0: i32) -> (i32, i32) {
    %c0_i32 = arith.constant 0 : i32
    %c0_i32_0 = arith.constant 0 : i32
    %c0_i32_1 = arith.constant 0 : i32
    return %c0_i32, %c0_i32_0 : i32, i32
  }
  func.func @transform_10(%arg0: i32) -> (i32, i32) {
    %c0_i32 = arith.constant 0 : i32
    %c0_i32_0 = arith.constant 0 : i32
    %c0_i32_1 = arith.constant 0 : i32
    return %c0_i32, %c0_i32_0 : i32, i32
  }
  func.func @transform_11(%arg0: i32) -> (i32, i32) {
    %c0_i32 = arith.constant 0 : i32
    %c0_i32_0 = arith.constant 0 : i32
    %c0_i32_1 = arith.constant 0 : i32
    return %c0_i32, %c0_i32_0 : i32, i32
  }
  func.func @transform_12(%arg0: i32) -> (i32, i32) {
    %c0_i32 = arith.constant 0 : i32
    %c0_i32_0 = arith.constant 0 : i32
    %c0_i32_1 = arith.constant 0 : i32
    return %c0_i32, %c0_i32_0 : i32, i32
  }
  func.func @transform_13(%arg0: i32) -> (i32, i32) {
    %c0_i32 = arith.constant 0 : i32
    %c0_i32_0 = arith.constant 0 : i32
    %c0_i32_1 = arith.constant 0 : i32
    return %c0_i32, %c0_i32_0 : i32, i32
  }
  func.func @transform_14(%arg0: i32) -> (i32, i32) {
    %c0_i32 = arith.constant 0 : i32
    %c0_i32_0 = arith.constant 0 : i32
    %c0_i32_1 = arith.constant 0 : i32
    return %c0_i32, %c0_i32_0 : i32, i32
  }
  func.func @transform_15(%arg0: i32) -> (i32, i32) {
    %c0_i32 = arith.constant 0 : i32
    %c0_i32_0 = arith.constant 0 : i32
    %c0_i32_1 = arith.constant 0 : i32
    return %c0_i32, %c0_i32_0 : i32, i32
  }
  func.func @transform_16(%arg0: i32) -> (i32, i32) {
    %c0_i32 = arith.constant 0 : i32
    %c0_i32_0 = arith.constant 0 : i32
    %c0_i32_1 = arith.constant 0 : i32
    return %c0_i32, %c0_i32_0 : i32, i32
  }
  func.func @transform_17(%arg0: i32) -> (i32, i32) {
    %c0_i32 = arith.constant 0 : i32
    %c0_i32_0 = arith.constant 0 : i32
    %c0_i32_1 = arith.constant 0 : i32
    return %c0_i32, %c0_i32_0 : i32, i32
  }
  func.func @transform_18(%arg0: i32) -> (i32, i32) {
    %c0_i32 = arith.constant 0 : i32
    %c0_i32_0 = arith.constant 0 : i32
    %c0_i32_1 = arith.constant 0 : i32
    return %c0_i32, %c0_i32_0 : i32, i32
  }
  func.func @transform_19(%arg0: i32) -> (i32, i32) {
    %c0_i32 = arith.constant 0 : i32
    %c0_i32_0 = arith.constant 0 : i32
    %c0_i32_1 = arith.constant 0 : i32
    return %c0_i32, %c0_i32_0 : i32, i32
  }
  func.func @transform_20(%arg0: i32) -> (i32, i32) {
    %c0_i32 = arith.constant 0 : i32
    %c0_i32_0 = arith.constant 0 : i32
    %c0_i32_1 = arith.constant 0 : i32
    return %c0_i32, %c0_i32_0 : i32, i32
  }
  func.func @transform_21(%arg0: i32) -> (i32, i32) {
    %c0_i32 = arith.constant 0 : i32
    %c0_i32_0 = arith.constant 0 : i32
    %c0_i32_1 = arith.constant 0 : i32
    return %c0_i32, %c0_i32_0 : i32, i32
  }
  func.func @transform_22(%arg0: i32) -> (i32, i32) {
    %c0_i32 = arith.constant 0 : i32
    %c0_i32_0 = arith.constant 0 : i32
    %c0_i32_1 = arith.constant 0 : i32
    return %c0_i32, %c0_i32_0 : i32, i32
  }
  func.func @transform_23(%arg0: i32) -> (i32, i32) {
    %c0_i32 = arith.constant 0 : i32
    %c0_i32_0 = arith.constant 0 : i32
    %c0_i32_1 = arith.constant 0 : i32
    return %c0_i32, %c0_i32_0 : i32, i32
  }
  func.func @transform_24(%arg0: i32) -> (i32, i32, i32) {
    %c0_i32 = arith.constant 0 : i32
    %c0_i32_0 = arith.constant 0 : i32
    %c0_i32_1 = arith.constant 0 : i32
    return %arg0, %c0_i32, %c0_i32_0 : i32, i32, i32
  }
}

</mosaic_0001>

<llo_original>
// kernel: encoder_forward.3
$region0: #{encoder_forward.3}
  #allocation0 [shape = 'u32[]', space=smem, size = 0x4, offset = 0x4, fixed_abs, tag = 'smem constant byte address 0x4 - core index']
  #allocation1 [shape = 'u32[144,128]{1,0:T(1,128)}', space=vmem, size = 0x12000, scoped, tag = 'internal scratch']
  %s0 = inlined_call_operand.vmem [shape: f32[2,8,32], index: 0, kind: input, shape index: {}]
  %s1 = inlined_call_operand.vmem [shape: f32[2,8,32], index: 1, kind: input, shape index: {}]
  %s2 = inlined_call_operand.vmem [shape: s32[2,1,8], index: 2, kind: input, shape index: {}]
  %s3 = inlined_call_operand.vmem [shape: f32[1,32], index: 3, kind: input, shape index: {}]
  %s4 = inlined_call_operand.vmem [shape: f32[1,32], index: 4, kind: input, shape index: {}]
  %s5 = inlined_call_operand.vmem [shape: f32[32,96], index: 5, kind: input, shape index: {}]
  %s6 = inlined_call_operand.vmem [shape: f32[1,96], index: 6, kind: input, shape index: {}]
  %s7 = inlined_call_operand.vmem [shape: f32[32,32], index: 7, kind: input, shape index: {}]
  %s8 = inlined_call_operand.vmem [shape: f32[1,32], index: 8, kind: input, shape index: {}]
  %s9 = inlined_call_operand.vmem [shape: f32[1,32], index: 9, kind: input, shape index: {}]
  %s10 = inlined_call_operand.vmem [shape: f32[1,32], index: 10, kind: input, shape index: {}]
  %s11 = inlined_call_operand.vmem [shape: f32[32,32], index: 11, kind: input, shape index: {}]
  %s12 = inlined_call_operand.vmem [shape: f32[1,32], index: 12, kind: input, shape index: {}]
  %s13 = inlined_call_operand.vmem [shape: f32[32,64], index: 13, kind: input, shape index: {}]
  %s14 = inlined_call_operand.vmem [shape: f32[1,64], index: 14, kind: input, shape index: {}]
  %s15 = inlined_call_operand.vmem [shape: f32[32,32], index: 15, kind: input, shape index: {}]
  %s16 = inlined_call_operand.vmem [shape: f32[1,32], index: 16, kind: input, shape index: {}]
  %s17 = inlined_call_operand.vmem [shape: f32[1,32], index: 17, kind: input, shape index: {}]
  %s18 = inlined_call_operand.vmem [shape: f32[1,32], index: 18, kind: input, shape index: {}]
  %s19 = inlined_call_operand.vmem [shape: f32[32,64], index: 19, kind: input, shape index: {}]
  %s20 = inlined_call_operand.vmem [shape: f32[1,64], index: 20, kind: input, shape index: {}]
  %s21 = inlined_call_operand.vmem [shape: f32[64,32], index: 21, kind: input, shape index: {}]
  %s22 = inlined_call_operand.vmem [shape: f32[1,32], index: 22, kind: input, shape index: {}]
  %s23 = inlined_call_operand.vmem [shape: f32[1,32], index: 23, kind: input, shape index: {}]
  %s24 = inlined_call_operand.vmem [shape: f32[1,32], index: 24, kind: input, shape index: {}]
  %s25 = inlined_call_operand.hbm [shape: f32[2,8,32], index: 25, kind: output, shape index: {}]
  %s26 = sld [smem:[#allocation0]]
  $region133: #{encoder_forward.3} parent=0
    _
  %s28 = ssub.s32 1, %s26
  %s29 = scalar_select 0, %s28, %s26
  $region1: #{encoder_forward.3} parent=0
    #allocation2 [shape = 'u8[8192]{0}', space=vmem, size = 0x2000, scoped, tag = 'output window, operand 0']
    #allocation3 [shape = 's32[2]{0}', space=sflag, size = 0x8, scoped, tag = 'scoped memory for encoder_forward.3']
    %30 = vsyncpa [#allocation3], 0
    %s31 = scalar_lea.sflag [#allocation3], 1
    %32 = vsyncpa %s31, 0
    loop: start=0, step=1, limit=4
    $region2: #{encoder_forward.3} parent=1 // loop_pre_header
      _
    $region3: #{encoder_forward.3} parent=1 // loop_header
      %s34 = sphi 0, %s38
      %p35 = scmp.ge.s32.totalorder %s34, 4
      %s44 = sphi 0, %s46
      %s47 = sphi 0, %s44
      %s48 = sphi 0, %s47
      %s64 = sphi 0, %s48
      %s70 = sphi 0, %s72
      %s73 = sphi 0, %s70
      %s74 = sphi 0, %s73
      %s90 = sphi 0, %s74
      %s96 = sphi 0, %s98
      %s99 = sphi 0, %s96
      %s100 = sphi 0, %s99
      %s116 = sphi 0, %s100
      %s120 = sphi 0, %s120
      %s122 = sphi 0, %s120
      %s123 = sphi 0, %s122
      %s137 = sphi 0, %s123
      %s141 = sphi 0, %s141
      %s143 = sphi 0, %s141
      %s144 = sphi 0, %s143
      %s158 = sphi 0, %s144
      %s162 = sphi 0, %s162
      %s164 = sphi 0, %s162
      %s165 = sphi 0, %s164
      %s179 = sphi 0, %s165
      %s183 = sphi 0, %s183
      %s185 = sphi 0, %s183
      %s186 = sphi 0, %s185
      %s200 = sphi 0, %s186
      %s204 = sphi 0, %s204
      %s206 = sphi 0, %s204
      %s207 = sphi 0, %s206
      %s221 = sphi 0, %s207
      %s225 = sphi 0, %s225
      %s227 = sphi 0, %s225
      %s228 = sphi 0, %s227
      %s242 = sphi 0, %s228
      %s246 = sphi 0, %s246
      %s248 = sphi 0, %s246
      %s249 = sphi 0, %s248
      %s263 = sphi 0, %s249
      %s267 = sphi 0, %s267
      %s269 = sphi 0, %s267
      %s270 = sphi 0, %s269
      %s284 = sphi 0, %s270
      %s288 = sphi 0, %s288
      %s290 = sphi 0, %s288
      %s291 = sphi 0, %s290
      %s305 = sphi 0, %s291
      %s309 = sphi 0, %s309
      %s311 = sphi 0, %s309
      %s312 = sphi 0, %s311
      %s326 = sphi 0, %s312
      %s330 = sphi 0, %s330
      %s332 = sphi 0, %s330
      %s333 = sphi 0, %s332
      %s347 = sphi 0, %s333
      %s351 = sphi 0, %s351
      %s353 = sphi 0, %s351
      %s354 = sphi 0, %s353
      %s368 = sphi 0, %s354
      %s372 = sphi 0, %s372
      %s374 = sphi 0, %s372
      %s375 = sphi 0, %s374
      %s389 = sphi 0, %s375
      %s393 = sphi 0, %s393
      %s395 = sphi 0, %s393
      %s396 = sphi 0, %s395
      %s410 = sphi 0, %s396
      %s414 = sphi 0, %s414
      %s416 = sphi 0, %s414
      %s417 = sphi 0, %s416
      %s431 = sphi 0, %s417
      %s435 = sphi 0, %s435
      %s437 = sphi 0, %s435
      %s438 = sphi 0, %s437
      %s452 = sphi 0, %s438
      %s456 = sphi 0, %s456
      %s458 = sphi 0, %s456
      %s459 = sphi 0, %s458
      %s473 = sphi 0, %s459
      %s477 = sphi 0, %s477
      %s479 = sphi 0, %s477
      %s480 = sphi 0, %s479
      %s494 = sphi 0, %s480
      %s498 = sphi 0, %s498
      %s500 = sphi 0, %s498
      %s501 = sphi 0, %s500
      %s515 = sphi 0, %s501
      %s519 = sphi 0, %s519
      %s521 = sphi 0, %s519
      %s522 = sphi 0, %s521
      %s536 = sphi 0, %s522
      %s540 = sphi 0, %s540
      %s542 = sphi 0, %s540
      %s543 = sphi 0, %s542
      %s557 = sphi 0, %s543
      %s561 = sphi 0, %s561
      %s563 = sphi 0, %s561
      %s564 = sphi 0, %s563
      %s578 = sphi 0, %s564
      %s584 = sphi 0, %s586
      %s587 = sphi 0, %s584
      %s588 = sphi 0, %s587
      %s604 = sphi 0, %s588
    $region4: #{encoder_forward.3} parent=1 // loop_header_branch
      %37 = sbr.rel (%p35) target = $region8
    $region5: #{encoder_forward.3} parent=1 // loop_body
      %s39 = ssub.s32 %s34, 1
      %s40 = ssub.s32 %s34, 2
      %s41 = sadd.s32 %s34, 1
      %s42 = ssub.s32 %s34, %s41
      %p43 = scmp.eq.s32.totalorder %s42, 0
      %s45 = sadd.s32 %s44, 1
      %s46 = scalar_select %p43, %s44, %s45
      %p49 = pneg %p43
      %p50 = scmp.eq.s32.totalorder %s34, 1
      %p51 = por %p49, %p50
      %p52 = scmp.ne.s32.totalorder %s44, %s47
      %p53 = scmp.eq.s32.totalorder %s34, 0
      %p54 = por %p52, %p53
      %p55 = scmp.ne.s32.totalorder %s44, %s47
      %p56 = scmp.eq.s32.totalorder %s39, 1
      %p57 = por %p55, %p56
      %p58 = scmp.ne.s32.totalorder %s47, %s48
      %p59 = scmp.eq.s32.totalorder %s39, 0
      %p60 = por %p58, %p59
      %p61 = scmp.ne.s32.totalorder %s47, %s48
      %p62 = scmp.eq.s32.totalorder %s40, 1
      %p63 = por %p61, %p62
      %p65 = scmp.ne.s32.totalorder %s48, %s64
      %p66 = scmp.eq.s32.totalorder %s40, 0
      %p67 = por %p65, %p66
      %s68 = ssub.s32 %s34, %s41
      %p69 = scmp.eq.s32.totalorder %s68, 0
      %s71 = sadd.s32 %s70, 1
      %s72 = scalar_select %p69, %s70, %s71
      %p75 = pneg %p69
      %p76 = scmp.eq.s32.totalorder %s34, 1
      %p77 = por %p75, %p76
      %p78 = scmp.ne.s32.totalorder %s70, %s73
      %p79 = scmp.eq.s32.totalorder %s34, 0
      %p80 = por %p78, %p79
      %p81 = scmp.ne.s32.totalorder %s70, %s73
      %p82 = scmp.eq.s32.totalorder %s39, 1
      %p83 = por %p81, %p82
      %p84 = scmp.ne.s32.totalorder %s73, %s74
      %p85 = scmp.eq.s32.totalorder %s39, 0
      %p86 = por %p84, %p85
      %p87 = scmp.ne.s32.totalorder %s73, %s74
      %p88 = scmp.eq.s32.totalorder %s40, 1
      %p89 = por %p87, %p88
      %p91 = scmp.ne.s32.totalorder %s74, %s90
      %p92 = scmp.eq.s32.totalorder %s40, 0
      %p93 = por %p91, %p92
      %s94 = ssub.s32 %s34, %s41
      %p95 = scmp.eq.s32.totalorder %s94, 0
      %s97 = sadd.s32 %s96, 1
      %s98 = scalar_select %p95, %s96, %s97
      %p101 = pneg %p95
      %p102 = scmp.eq.s32.totalorder %s34, 1
      %p103 = por %p101, %p102
      %p104 = scmp.ne.s32.totalorder %s96, %s99
      %p105 = scmp.eq.s32.totalorder %s34, 0
      %p106 = por %p104, %p105
      %p107 = scmp.ne.s32.totalorder %s96, %s99
      %p108 = scmp.eq.s32.totalorder %s39, 1
      %p109 = por %p107, %p108
      %p110 = scmp.ne.s32.totalorder %s99, %s100
      %p111 = scmp.eq.s32.totalorder %s39, 0
      %p112 = por %p110, %p111
      %p113 = scmp.ne.s32.totalorder %s99, %s100
      %p114 = scmp.eq.s32.totalorder %s40, 1
      %p115 = por %p113, %p114
      %p117 = scmp.ne.s32.totalorder %s100, %s116
      %p118 = scmp.eq.s32.totalorder %s40, 0
      %p119 = por %p117, %p118
      %s121 = sadd.s32 %s120, 1
      %p124 = scmp.eq.s32.totalorder %s34, 1
      %p125 = scmp.ne.s32.totalorder %s120, %s122
      %p126 = scmp.eq.s32.totalorder %s34, 0
      %p127 = por %p125, %p126
      %p128 = scmp.ne.s32.totalorder %s120, %s122
      %p129 = scmp.eq.s32.totalorder %s39, 1
      %p130 = por %p128, %p129
      %p131 = scmp.ne.s32.totalorder %s122, %s123
      %p132 = scmp.eq.s32.totalorder %s39, 0
      %p133 = por %p131, %p132
      %p134 = scmp.ne.s32.totalorder %s122, %s123
      %p135 = scmp.eq.s32.totalorder %s40, 1
      %p136 = por %p134, %p135
      %p138 = scmp.ne.s32.totalorder %s123, %s137
      %p139 = scmp.eq.s32.totalorder %s40, 0
      %p140 = por %p138, %p139
      %s142 = sadd.s32 %s141, 1
      %p145 = scmp.eq.s32.totalorder %s34, 1
      %p146 = scmp.ne.s32.totalorder %s141, %s143
      %p147 = scmp.eq.s32.totalorder %s34, 0
      %p148 = por %p146, %p147
      %p149 = scmp.ne.s32.totalorder %s141, %s143
      %p150 = scmp.eq.s32.totalorder %s39, 1
      %p151 = por %p149, %p150
      %p152 = scmp.ne.s32.totalorder %s143, %s144
      %p153 = scmp.eq.s32.totalorder %s39, 0
      %p154 = por %p152, %p153
      %p155 = scmp.ne.s32.totalorder %s143, %s144
      %p156 = scmp.eq.s32.totalorder %s40, 1
      %p157 = por %p155, %p156
      %p159 = scmp.ne.s32.totalorder %s144, %s158
      %p160 = scmp.eq.s32.totalorder %s40, 0
      %p161 = por %p159, %p160
      %s163 = sadd.s32 %s162, 1
      %p166 = scmp.eq.s32.totalorder %s34, 1
      %p167 = scmp.ne.s32.totalorder %s162, %s164
      %p168 = scmp.eq.s32.totalorder %s34, 0
      %p169 = por %p167, %p168
      %p170 = scmp.ne.s32.totalorder %s162, %s164
      %p171 = scmp.eq.s32.totalorder %s39, 1
      %p172 = por %p170, %p171
      %p173 = scmp.ne.s32.totalorder %s164, %s165
      %p174 = scmp.eq.s32.totalorder %s39, 0
      %p175 = por %p173, %p174
      %p176 = scmp.ne.s32.totalorder %s164, %s165
      %p177 = scmp.eq.s32.totalorder %s40, 1
      %p178 = por %p176, %p177
      %p180 = scmp.ne.s32.totalorder %s165, %s179
      %p181 = scmp.eq.s32.totalorder %s40, 0
      %p182 = por %p180, %p181
      %s184 = sadd.s32 %s183, 1
      %p187 = scmp.eq.s32.totalorder %s34, 1
      %p188 = scmp.ne.s32.totalorder %s183, %s185
      %p189 = scmp.eq.s32.totalorder %s34, 0
      %p190 = por %p188, %p189
      %p191 = scmp.ne.s32.totalorder %s183, %s185
      %p192 = scmp.eq.s32.totalorder %s39, 1
      %p193 = por %p191, %p192
      %p194 = scmp.ne.s32.totalorder %s185, %s186
      %p195 = scmp.eq.s32.totalorder %s39, 0
      %p196 = por %p194, %p195
      %p197 = scmp.ne.s32.totalorder %s185, %s186
      %p198 = scmp.eq.s32.totalorder %s40, 1
      %p199 = por %p197, %p198
      %p201 = scmp.ne.s32.totalorder %s186, %s200
      %p202 = scmp.eq.s32.totalorder %s40, 0
      %p203 = por %p201, %p202
      %s205 = sadd.s32 %s204, 1
      %p208 = scmp.eq.s32.totalorder %s34, 1
      %p209 = scmp.ne.s32.totalorder %s204, %s206
      %p210 = scmp.eq.s32.totalorder %s34, 0
      %p211 = por %p209, %p210
      %p212 = scmp.ne.s32.totalorder %s204, %s206
      %p213 = scmp.eq.s32.totalorder %s39, 1
      %p214 = por %p212, %p213
      %p215 = scmp.ne.s32.totalorder %s206, %s207
      %p216 = scmp.eq.s32.totalorder %s39, 0
      %p217 = por %p215, %p216
      %p218 = scmp.ne.s32.totalorder %s206, %s207
      %p219 = scmp.eq.s32.totalorder %s40, 1
      %p220 = por %p218, %p219
      %p222 = scmp.ne.s32.totalorder %s207, %s221
      %p223 = scmp.eq.s32.totalorder %s40, 0
      %p224 = por %p222, %p223
      %s226 = sadd.s32 %s225, 1
      %p229 = scmp.eq.s32.totalorder %s34, 1
      %p230 = scmp.ne.s32.totalorder %s225, %s227
      %p231 = scmp.eq.s32.totalorder %s34, 0
      %p232 = por %p230, %p231
      %p233 = scmp.ne.s32.totalorder %s225, %s227
      %p234 = scmp.eq.s32.totalorder %s39, 1
      %p235 = por %p233, %p234
      %p236 = scmp.ne.s32.totalorder %s227, %s228
      %p237 = scmp.eq.s32.totalorder %s39, 0
      %p238 = por %p236, %p237
      %p239 = scmp.ne.s32.totalorder %s227, %s228
      %p240 = scmp.eq.s32.totalorder %s40, 1
      %p241 = por %p239, %p240
      %p243 = scmp.ne.s32.totalorder %s228, %s242
      %p244 = scmp.eq.s32.totalorder %s40, 0
      %p245 = por %p243, %p244
      %s247 = sadd.s32 %s246, 1
      %p250 = scmp.eq.s32.totalorder %s34, 1
      %p251 = scmp.ne.s32.totalorder %s246, %s248
      %p252 = scmp.eq.s32.totalorder %s34, 0
      %p253 = por %p251, %p252
      %p254 = scmp.ne.s32.totalorder %s246, %s248
      %p255 = scmp.eq.s32.totalorder %s39, 1
      %p256 = por %p254, %p255
      %p257 = scmp.ne.s32.totalorder %s248, %s249
      %p258 = scmp.eq.s32.totalorder %s39, 0
      %p259 = por %p257, %p258
      %p260 = scmp.ne.s32.totalorder %s248, %s249
      %p261 = scmp.eq.s32.totalorder %s40, 1
      %p262 = por %p260, %p261
      %p264 = scmp.ne.s32.totalorder %s249, %s263
      %p265 = scmp.eq.s32.totalorder %s40, 0
      %p266 = por %p264, %p265
      %s268 = sadd.s32 %s267, 1
      %p271 = scmp.eq.s32.totalorder %s34, 1
      %p272 = scmp.ne.s32.totalorder %s267, %s269
      %p273 = scmp.eq.s32.totalorder %s34, 0
      %p274 = por %p272, %p273
      %p275 = scmp.ne.s32.totalorder %s267, %s269
      %p276 = scmp.eq.s32.totalorder %s39, 1
      %p277 = por %p275, %p276
      %p278 = scmp.ne.s32.totalorder %s269, %s270
      %p279 = scmp.eq.s32.totalorder %s39, 0
      %p280 = por %p278, %p279
      %p281 = scmp.ne.s32.totalorder %s269, %s270
      %p282 = scmp.eq.s32.totalorder %s40, 1
      %p283 = por %p281, %p282
      %p285 = scmp.ne.s32.totalorder %s270, %s284
      %p286 = scmp.eq.s32.totalorder %s40, 0
      %p287 = por %p285, %p286
      %s289 = sadd.s32 %s288, 1
      %p292 = scmp.eq.s32.totalorder %s34, 1
      %p293 = scmp.ne.s32.totalorder %s288, %s290
      %p294 = scmp.eq.s32.totalorder %s34, 0
      %p295 = por %p293, %p294
      %p296 = scmp.ne.s32.totalorder %s288, %s290
      %p297 = scmp.eq.s32.totalorder %s39, 1
      %p298 = por %p296, %p297
      %p299 = scmp.ne.s32.totalorder %s290, %s291
      %p300 = scmp.eq.s32.totalorder %s39, 0
      %p301 = por %p299, %p300
      %p302 = scmp.ne.s32.totalorder %s290, %s291
      %p303 = scmp.eq.s32.totalorder %s40, 1
      %p304 = por %p302, %p303
      %p306 = scmp.ne.s32.totalorder %s291, %s305
      %p307 = scmp.eq.s32.totalorder %s40, 0
      %p308 = por %p306, %p307
      %s310 = sadd.s32 %s309, 1
      %p313 = scmp.eq.s32.totalorder %s34, 1
      %p314 = scmp.ne.s32.totalorder %s309, %s311
      %p315 = scmp.eq.s32.totalorder %s34, 0
      %p316 = por %p314, %p315
      %p317 = scmp.ne.s32.totalorder %s309, %s311
      %p318 = scmp.eq.s32.totalorder %s39, 1
      %p319 = por %p317, %p318
      %p320 = scmp.ne.s32.totalorder %s311, %s312
      %p321 = scmp.eq.s32.totalorder %s39, 0
      %p322 = por %p320, %p321
      %p323 = scmp.ne.s32.totalorder %s311, %s312
      %p324 = scmp.eq.s32.totalorder %s40, 1
      %p325 = por %p323, %p324
      %p327 = scmp.ne.s32.totalorder %s312, %s326
      %p328 = scmp.eq.s32.totalorder %s40, 0
      %p329 = por %p327, %p328
      %s331 = sadd.s32 %s330, 1
      %p334 = scmp.eq.s32.totalorder %s34, 1
      %p335 = scmp.ne.s32.totalorder %s330, %s332
      %p336 = scmp.eq.s32.totalorder %s34, 0
      %p337 = por %p335, %p336
      %p338 = scmp.ne.s32.totalorder %s330, %s332
      %p339 = scmp.eq.s32.totalorder %s39, 1
      %p340 = por %p338, %p339
      %p341 = scmp.ne.s32.totalorder %s332, %s333
      %p342 = scmp.eq.s32.totalorder %s39, 0
      %p343 = por %p341, %p342
      %p344 = scmp.ne.s32.totalorder %s332, %s333
      %p345 = scmp.eq.s32.totalorder %s40, 1
      %p346 = por %p344, %p345
      %p348 = scmp.ne.s32.totalorder %s333, %s347
      %p349 = scmp.eq.s32.totalorder %s40, 0
      %p350 = por %p348, %p349
      %s352 = sadd.s32 %s351, 1
      %p355 = scmp.eq.s32.totalorder %s34, 1
      %p356 = scmp.ne.s32.totalorder %s351, %s353
      %p357 = scmp.eq.s32.totalorder %s34, 0
      %p358 = por %p356, %p357
      %p359 = scmp.ne.s32.totalorder %s351, %s353
      %p360 = scmp.eq.s32.totalorder %s39, 1
      %p361 = por %p359, %p360
      %p362 = scmp.ne.s32.totalorder %s353, %s354
      %p363 = scmp.eq.s32.totalorder %s39, 0
      %p364 = por %p362, %p363
      %p365 = scmp.ne.s32.totalorder %s353, %s354
      %p366 = scmp.eq.s32.totalorder %s40, 1
      %p367 = por %p365, %p366
      %p369 = scmp.ne.s32.totalorder %s354, %s368
      %p370 = scmp.eq.s32.totalorder %s40, 0
      %p371 = por %p369, %p370
      %s373 = sadd.s32 %s372, 1
      %p376 = scmp.eq.s32.totalorder %s34, 1
      %p377 = scmp.ne.s32.totalorder %s372, %s374
      %p378 = scmp.eq.s32.totalorder %s34, 0
      %p379 = por %p377, %p378
      %p380 = scmp.ne.s32.totalorder %s372, %s374
      %p381 = scmp.eq.s32.totalorder %s39, 1
      %p382 = por %p380, %p381
      %p383 = scmp.ne.s32.totalorder %s374, %s375
      %p384 = scmp.eq.s32.totalorder %s39, 0
      %p385 = por %p383, %p384
      %p386 = scmp.ne.s32.totalorder %s374, %s375
      %p387 = scmp.eq.s32.totalorder %s40, 1
      %p388 = por %p386, %p387
      %p390 = scmp.ne.s32.totalorder %s375, %s389
      %p391 = scmp.eq.s32.totalorder %s40, 0
      %p392 = por %p390, %p391
      %s394 = sadd.s32 %s393, 1
      %p397 = scmp.eq.s32.totalorder %s34, 1
      %p398 = scmp.ne.s32.totalorder %s393, %s395
      %p399 = scmp.eq.s32.totalorder %s34, 0
      %p400 = por %p398, %p399
      %p401 = scmp.ne.s32.totalorder %s393, %s395
      %p402 = scmp.eq.s32.totalorder %s39, 1
      %p403 = por %p401, %p402
      %p404 = scmp.ne.s32.totalorder %s395, %s396
      %p405 = scmp.eq.s32.totalorder %s39, 0
      %p406 = por %p404, %p405
      %p407 = scmp.ne.s32.totalorder %s395, %s396
      %p408 = scmp.eq.s32.totalorder %s40, 1
      %p409 = por %p407, %p408
      %p411 = scmp.ne.s32.totalorder %s396, %s410
      %p412 = scmp.eq.s32.totalorder %s40, 0
      %p413 = por %p411, %p412
      %s415 = sadd.s32 %s414, 1
      %p418 = scmp.eq.s32.totalorder %s34, 1
      %p419 = scmp.ne.s32.totalorder %s414, %s416
      %p420 = scmp.eq.s32.totalorder %s34, 0
      %p421 = por %p419, %p420
      %p422 = scmp.ne.s32.totalorder %s414, %s416
      %p423 = scmp.eq.s32.totalorder %s39, 1
      %p424 = por %p422, %p423
      %p425 = scmp.ne.s32.totalorder %s416, %s417
      %p426 = scmp.eq.s32.totalorder %s39, 0
      %p427 = por %p425, %p426
      %p428 = scmp.ne.s32.totalorder %s416, %s417
      %p429 = scmp.eq.s32.totalorder %s40, 1
      %p430 = por %p428, %p429
      %p432 = scmp.ne.s32.totalorder %s417, %s431
      %p433 = scmp.eq.s32.totalorder %s40, 0
      %p434 = por %p432, %p433
      %s436 = sadd.s32 %s435, 1
      %p439 = scmp.eq.s32.totalorder %s34, 1
      %p440 = scmp.ne.s32.totalorder %s435, %s437
      %p441 = scmp.eq.s32.totalorder %s34, 0
      %p442 = por %p440, %p441
      %p443 = scmp.ne.s32.totalorder %s435, %s437
      %p444 = scmp.eq.s32.totalorder %s39, 1
      %p445 = por %p443, %p444
      %p446 = scmp.ne.s32.totalorder %s437, %s438
      %p447 = scmp.eq.s32.totalorder %s39, 0
      %p448 = por %p446, %p447
      %p449 = scmp.ne.s32.totalorder %s437, %s438
      %p450 = scmp.eq.s32.totalorder %s40, 1
      %p451 = por %p449, %p450
      %p453 = scmp.ne.s32.totalorder %s438, %s452
      %p454 = scmp.eq.s32.totalorder %s40, 0
      %p455 = por %p453, %p454
      %s457 = sadd.s32 %s456, 1
      %p460 = scmp.eq.s32.totalorder %s34, 1
      %p461 = scmp.ne.s32.totalorder %s456, %s458
      %p462 = scmp.eq.s32.totalorder %s34, 0
      %p463 = por %p461, %p462
      %p464 = scmp.ne.s32.totalorder %s456, %s458
      %p465 = scmp.eq.s32.totalorder %s39, 1
      %p466 = por %p464, %p465
      %p467 = scmp.ne.s32.totalorder %s458, %s459
      %p468 = scmp.eq.s32.totalorder %s39, 0
      %p469 = por %p467, %p468
      %p470 = scmp.ne.s32.totalorder %s458, %s459
      %p471 = scmp.eq.s32.totalorder %s40, 1
      %p472 = por %p470, %p471
      %p474 = scmp.ne.s32.totalorder %s459, %s473
      %p475 = scmp.eq.s32.totalorder %s40, 0
      %p476 = por %p474, %p475
      %s478 = sadd.s32 %s477, 1
      %p481 = scmp.eq.s32.totalorder %s34, 1
      %p482 = scmp.ne.s32.totalorder %s477, %s479
      %p483 = scmp.eq.s32.totalorder %s34, 0
      %p484 = por %p482, %p483
      %p485 = scmp.ne.s32.totalorder %s477, %s479
      %p486 = scmp.eq.s32.totalorder %s39, 1
      %p487 = por %p485, %p486
      %p488 = scmp.ne.s32.totalorder %s479, %s480
      %p489 = scmp.eq.s32.totalorder %s39, 0
      %p490 = por %p488, %p489
      %p491 = scmp.ne.s32.totalorder %s479, %s480
      %p492 = scmp.eq.s32.totalorder %s40, 1
      %p493 = por %p491, %p492
      %p495 = scmp.ne.s32.totalorder %s480, %s494
      %p496 = scmp.eq.s32.totalorder %s40, 0
      %p497 = por %p495, %p496
      %s499 = sadd.s32 %s498, 1
      %p502 = scmp.eq.s32.totalorder %s34, 1
      %p503 = scmp.ne.s32.totalorder %s498, %s500
      %p504 = scmp.eq.s32.totalorder %s34, 0
      %p505 = por %p503, %p504
      %p506 = scmp.ne.s32.totalorder %s498, %s500
      %p507 = scmp.eq.s32.totalorder %s39, 1
      %p508 = por %p506, %p507
      %p509 = scmp.ne.s32.totalorder %s500, %s501
      %p510 = scmp.eq.s32.totalorder %s39, 0
      %p511 = por %p509, %p510
      %p512 = scmp.ne.s32.totalorder %s500, %s501
      %p513 = scmp.eq.s32.totalorder %s40, 1
      %p514 = por %p512, %p513
      %p516 = scmp.ne.s32.totalorder %s501, %s515
      %p517 = scmp.eq.s32.totalorder %s40, 0
      %p518 = por %p516, %p517
      %s520 = sadd.s32 %s519, 1
      %p523 = scmp.eq.s32.totalorder %s34, 1
      %p524 = scmp.ne.s32.totalorder %s519, %s521
      %p525 = scmp.eq.s32.totalorder %s34, 0
      %p526 = por %p524, %p525
      %p527 = scmp.ne.s32.totalorder %s519, %s521
      %p528 = scmp.eq.s32.totalorder %s39, 1
      %p529 = por %p527, %p528
      %p530 = scmp.ne.s32.totalorder %s521, %s522
      %p531 = scmp.eq.s32.totalorder %s39, 0
      %p532 = por %p530, %p531
      %p533 = scmp.ne.s32.totalorder %s521, %s522
      %p534 = scmp.eq.s32.totalorder %s40, 1
      %p535 = por %p533, %p534
      %p537 = scmp.ne.s32.totalorder %s522, %s536
      %p538 = scmp.eq.s32.totalorder %s40, 0
      %p539 = por %p537, %p538
      %s541 = sadd.s32 %s540, 1
      %p544 = scmp.eq.s32.totalorder %s34, 1
      %p545 = scmp.ne.s32.totalorder %s540, %s542
      %p546 = scmp.eq.s32.totalorder %s34, 0
      %p547 = por %p545, %p546
      %p548 = scmp.ne.s32.totalorder %s540, %s542
      %p549 = scmp.eq.s32.totalorder %s39, 1
      %p550 = por %p548, %p549
      %p551 = scmp.ne.s32.totalorder %s542, %s543
      %p552 = scmp.eq.s32.totalorder %s39, 0
      %p553 = por %p551, %p552
      %p554 = scmp.ne.s32.totalorder %s542, %s543
      %p555 = scmp.eq.s32.totalorder %s40, 1
      %p556 = por %p554, %p555
      %p558 = scmp.ne.s32.totalorder %s543, %s557
      %p559 = scmp.eq.s32.totalorder %s40, 0
      %p560 = por %p558, %p559
      %s562 = sadd.s32 %s561, 1
      %p565 = scmp.eq.s32.totalorder %s34, 1
      %p566 = scmp.ne.s32.totalorder %s561, %s563
      %p567 = scmp.eq.s32.totalorder %s34, 0
      %p568 = por %p566, %p567
      %p569 = scmp.ne.s32.totalorder %s561, %s563
      %p570 = scmp.eq.s32.totalorder %s39, 1
      %p571 = por %p569, %p570
      %p572 = scmp.ne.s32.totalorder %s563, %s564
      %p573 = scmp.eq.s32.totalorder %s39, 0
      %p574 = por %p572, %p573
      %p575 = scmp.ne.s32.totalorder %s563, %s564
      %p576 = scmp.eq.s32.totalorder %s40, 1
      %p577 = por %p575, %p576
      %p579 = scmp.ne.s32.totalorder %s564, %s578
      %p580 = scmp.eq.s32.totalorder %s40, 0
      %p581 = por %p579, %p580
      %s582 = ssub.s32 %s34, %s41
      %p583 = scmp.eq.s32.totalorder %s582, 0
      %s585 = sadd.s32 %s584, 1
      %s586 = scalar_select %p583, %s584, %s585
      %p589 = pneg %p583
      %p590 = scmp.eq.s32.totalorder %s34, 1
      %p591 = por %p589, %p590
      %p592 = scmp.ne.s32.totalorder %s584, %s587
      %p593 = scmp.eq.s32.totalorder %s34, 0
      %p594 = por %p592, %p593
      %p595 = scmp.ne.s32.totalorder %s584, %s587
      %p596 = scmp.eq.s32.totalorder %s39, 1
      %p597 = por %p595, %p596
      %p598 = scmp.ne.s32.totalorder %s587, %s588
      %p599 = scmp.eq.s32.totalorder %s39, 0
      %p600 = por %p598, %p599
      %p601 = scmp.ne.s32.totalorder %s587, %s588
      %p602 = scmp.eq.s32.totalorder %s40, 1
      %p603 = por %p601, %p602
      %p605 = scmp.ne.s32.totalorder %s588, %s604
      %p606 = scmp.eq.s32.totalorder %s40, 0
      %p607 = por %p605, %p606
      %p608 = scmp.le.s32.totalorder 1, %s34
      %p609 = scmp.lt.s32.totalorder %s34, 3
      %p610 = pnand %p608, %p609
      %p611 = pneg %p610
      // Predicated region
      $region9: #{encoder_forward.3} parent=5 // pred_check
        _
      $region10: #{encoder_forward.3} parent=5 // pred_check_branch
        %613 = sbr.rel (%p610) target = $region12
      $region11: #{encoder_forward.3} parent=5 // pred_region
        %s614 = ssub.s32 %s34, 1
        // Predicated region
        $region13: #{encoder_forward.3} parent=11 // pred_check
          %p615 = pneg %p133
        $region14: #{encoder_forward.3} parent=11 // pred_check_branch
          %617 = sbr.rel (%p615) target = $region16
        $region15: #{encoder_forward.3} parent=11 // pred_region
          _
        $region16: #{encoder_forward.3} parent=11 // pred_fallthru
          _
        // Predicated region
        $region17: #{encoder_forward.3} parent=11 // pred_check
          %p618 = pneg %p154
        $region18: #{encoder_forward.3} parent=11 // pred_check_branch
          %620 = sbr.rel (%p618) target = $region20
        $region19: #{encoder_forward.3} parent=11 // pred_region
          _
        $region20: #{encoder_forward.3} parent=11 // pred_fallthru
          _
        // Predicated region
        $region21: #{encoder_forward.3} parent=11 // pred_check
          %p621 = pneg %p175
        $region22: #{encoder_forward.3} parent=11 // pred_check_branch
          %623 = sbr.rel (%p621) target = $region24
        $region23: #{encoder_forward.3} parent=11 // pred_region
          _
        $region24: #{encoder_forward.3} parent=11 // pred_fallthru
          _
        // Predicated region
        $region25: #{encoder_forward.3} parent=11 // pred_check
          %p624 = pneg %p196
        $region26: #{encoder_forward.3} parent=11 // pred_check_branch
          %626 = sbr.rel (%p624) target = $region28
        $region27: #{encoder_forward.3} parent=11 // pred_region
          _
        $region28: #{encoder_forward.3} parent=11 // pred_fallthru
          _
        // Predicated region
        $region29: #{encoder_forward.3} parent=11 // pred_check
          %p627 = pneg %p217
        $region30: #{encoder_forward.3} parent=11 // pred_check_branch
          %629 = sbr.rel (%p627) target = $region32
        $region31: #{encoder_forward.3} parent=11 // pred_region
          _
        $region32: #{encoder_forward.3} parent=11 // pred_fallthru
          _
        // Predicated region
        $region33: #{encoder_forward.3} parent=11 // pred_check
          %p630 = pneg %p238
        $region34: #{encoder_forward.3} parent=11 // pred_check_branch
          %632 = sbr.rel (%p630) target = $region36
        $region35: #{encoder_forward.3} parent=11 // pred_region
          _
        $region36: #{encoder_forward.3} parent=11 // pred_fallthru
          _
        // Predicated region
        $region37: #{encoder_forward.3} parent=11 // pred_check
          %p633 = pneg %p259
        $region38: #{encoder_forward.3} parent=11 // pred_check_branch
          %635 = sbr.rel (%p633) target = $region40
        $region39: #{encoder_forward.3} parent=11 // pred_region
          _
        $region40: #{encoder_forward.3} parent=11 // pred_fallthru
          _
        // Predicated region
        $region41: #{encoder_forward.3} parent=11 // pred_check
          %p636 = pneg %p280
        $region42: #{encoder_forward.3} parent=11 // pred_check_branch
          %638 = sbr.rel (%p636) target = $region44
        $region43: #{encoder_forward.3} parent=11 // pred_region
          _
        $region44: #{encoder_forward.3} parent=11 // pred_fallthru
          _
        // Predicated region
        $region45: #{encoder_forward.3} parent=11 // pred_check
          %p639 = pneg %p301
        $region46: #{encoder_forward.3} parent=11 // pred_check_branch
          %641 = sbr.rel (%p639) target = $region48
        $region47: #{encoder_forward.3} parent=11 // pred_region
          _
        $region48: #{encoder_forward.3} parent=11 // pred_fallthru
          _
        // Predicated region
        $region49: #{encoder_forward.3} parent=11 // pred_check
          %p642 = pneg %p322
        $region50: #{encoder_forward.3} parent=11 // pred_check_branch
          %644 = sbr.rel (%p642) target = $region52
        $region51: #{encoder_forward.3} parent=11 // pred_region
          _
        $region52: #{encoder_forward.3} parent=11 // pred_fallthru
          _
        // Predicated region
        $region53: #{encoder_forward.3} parent=11 // pred_check
          %p645 = pneg %p343
        $region54: #{encoder_forward.3} parent=11 // pred_check_branch
          %647 = sbr.rel (%p645) target = $region56
        $region55: #{encoder_forward.3} parent=11 // pred_region
          _
        $region56: #{encoder_forward.3} parent=11 // pred_fallthru
          _
        // Predicated region
        $region57: #{encoder_forward.3} parent=11 // pred_check
          %p648 = pneg %p364
        $region58: #{encoder_forward.3} parent=11 // pred_check_branch
          %650 = sbr.rel (%p648) target = $region60
        $region59: #{encoder_forward.3} parent=11 // pred_region
          _
        $region60: #{encoder_forward.3} parent=11 // pred_fallthru
          _
        // Predicated region
        $region61: #{encoder_forward.3} parent=11 // pred_check
          %p651 = pneg %p385
        $region62: #{encoder_forward.3} parent=11 // pred_check_branch
          %653 = sbr.rel (%p651) target = $region64
        $region63: #{encoder_forward.3} parent=11 // pred_region
          _
        $region64: #{encoder_forward.3} parent=11 // pred_fallthru
          _
        // Predicated region
        $region65: #{encoder_forward.3} parent=11 // pred_check
          %p654 = pneg %p406
        $region66: #{encoder_forward.3} parent=11 // pred_check_branch
          %656 = sbr.rel (%p654) target = $region68
        $region67: #{encoder_forward.3} parent=11 // pred_region
          _
        $region68: #{encoder_forward.3} parent=11 // pred_fallthru
          _
        // Predicated region
        $region69: #{encoder_forward.3} parent=11 // pred_check
          %p657 = pneg %p427
        $region70: #{encoder_forward.3} parent=11 // pred_check_branch
          %659 = sbr.rel (%p657) target = $region72
        $region71: #{encoder_forward.3} parent=11 // pred_region
          _
        $region72: #{encoder_forward.3} parent=11 // pred_fallthru
          _
        // Predicated region
        $region73: #{encoder_forward.3} parent=11 // pred_check
          %p660 = pneg %p448
        $region74: #{encoder_forward.3} parent=11 // pred_check_branch
          %662 = sbr.rel (%p660) target = $region76
        $region75: #{encoder_forward.3} parent=11 // pred_region
          _
        $region76: #{encoder_forward.3} parent=11 // pred_fallthru
          _
        // Predicated region
        $region77: #{encoder_forward.3} parent=11 // pred_check
          %p663 = pneg %p469
        $region78: #{encoder_forward.3} parent=11 // pred_check_branch
          %665 = sbr.rel (%p663) target = $region80
        $region79: #{encoder_forward.3} parent=11 // pred_region
          _
        $region80: #{encoder_forward.3} parent=11 // pred_fallthru
          _
        // Predicated region
        $region81: #{encoder_forward.3} parent=11 // pred_check
          %p666 = pneg %p490
        $region82: #{encoder_forward.3} parent=11 // pred_check_branch
          %668 = sbr.rel (%p666) target = $region84
        $region83: #{encoder_forward.3} parent=11 // pred_region
          _
        $region84: #{encoder_forward.3} parent=11 // pred_fallthru
          _
        // Predicated region
        $region85: #{encoder_forward.3} parent=11 // pred_check
          %p669 = pneg %p511
        $region86: #{encoder_forward.3} parent=11 // pred_check_branch
          %671 = sbr.rel (%p669) target = $region88
        $region87: #{encoder_forward.3} parent=11 // pred_region
          _
        $region88: #{encoder_forward.3} parent=11 // pred_fallthru
          _
        // Predicated region
        $region89: #{encoder_forward.3} parent=11 // pred_check
          %p672 = pneg %p532
        $region90: #{encoder_forward.3} parent=11 // pred_check_branch
          %674 = sbr.rel (%p672) target = $region92
        $region91: #{encoder_forward.3} parent=11 // pred_region
          _
        $region92: #{encoder_forward.3} parent=11 // pred_fallthru
          _
        // Predicated region
        $region93: #{encoder_forward.3} parent=11 // pred_check
          %p675 = pneg %p553
        $region94: #{encoder_forward.3} parent=11 // pred_check_branch
          %677 = sbr.rel (%p675) target = $region96
        $region95: #{encoder_forward.3} parent=11 // pred_region
          _
        $region96: #{encoder_forward.3} parent=11 // pred_fallthru
          _
        // Predicated region
        $region97: #{encoder_forward.3} parent=11 // pred_check
          %p678 = pneg %p574
        $region98: #{encoder_forward.3} parent=11 // pred_check_branch
          %680 = sbr.rel (%p678) target = $region100
        $region99: #{encoder_forward.3} parent=11 // pred_region
          _
        $region100: #{encoder_forward.3} parent=11 // pred_fallthru
          _
      $region12: #{encoder_forward.3} parent=5 // pred_fallthru
        _
      %p681 = scmp.lt.s32.totalorder %s34, 2
      // Predicated region
      $region101: #{encoder_forward.3} parent=5 // pred_check
        %p682 = pneg %p681
      $region102: #{encoder_forward.3} parent=5 // pred_check_branch
        %684 = sbr.rel (%p682) target = $region104
      $region103: #{encoder_forward.3} parent=5 // pred_region
        // Predicated region
        $region105: #{encoder_forward.3} parent=103 // pred_check
          %p685 = pneg %p54
        $region106: #{encoder_forward.3} parent=103 // pred_check_branch
          %687 = sbr.rel (%p685) target = $region108
        $region107: #{encoder_forward.3} parent=103 // pred_region
          %p688 = scmp.lt.s32.totalorder %s34, 1
          %s689 = scalar_select %p688, %s34, 1
          %s690 = smul.addr %s689, 8
          %s691 = scalar_lea.vmem %s0, %s690
        $region108: #{encoder_forward.3} parent=103 // pred_fallthru
          _
        // Predicated region
        $region109: #{encoder_forward.3} parent=103 // pred_check
          %p692 = pneg %p80
        $region110: #{encoder_forward.3} parent=103 // pred_check_branch
          %694 = sbr.rel (%p692) target = $region112
        $region111: #{encoder_forward.3} parent=103 // pred_region
          %p695 = scmp.lt.s32.totalorder %s34, 1
          %s696 = scalar_select %p695, %s34, 1
          %s697 = smul.addr %s696, 8
          %s698 = scalar_lea.vmem %s1, %s697
        $region112: #{encoder_forward.3} parent=103 // pred_fallthru
          _
        // Predicated region
        $region113: #{encoder_forward.3} parent=103 // pred_check
          %p699 = pneg %p106
        $region114: #{encoder_forward.3} parent=103 // pred_check_branch
          %701 = sbr.rel (%p699) target = $region116
        $region115: #{encoder_forward.3} parent=103 // pred_region
          %p702 = scmp.lt.s32.totalorder %s34, 1
          %s703 = scalar_select %p702, %s34, 1
          %s704 = scalar_lea.vmem %s2, %s703
        $region116: #{encoder_forward.3} parent=103 // pred_fallthru
          _
      $region104: #{encoder_forward.3} parent=5 // pred_fallthru
        _
      %p705 = scmp.le.s32.totalorder 1, %s34
      %p706 = scmp.lt.s32.totalorder %s34, 3
      %p707 = pnand %p705, %p706
      %p708 = pneg %p707
      // Predicated region
      $region117: #{encoder_forward.3} parent=5 // pred_check
        _
      $region118: #{encoder_forward.3} parent=5 // pred_check_branch
        %710 = sbr.rel (%p707) target = $region120
      $region119: #{encoder_forward.3} parent=5 // pred_region
        %s711 = ssub.s32 %s34, 1
        %p712 = scmp.lt.s32.totalorder %s39, 1
        %s713 = scalar_select %p712, %s39, 1
        %s714 = smul.addr %s713, 8
        %s715 = scalar_lea.vmem %s0, %s714
        %p716 = pneg %p60
        %p717 = pneg %p57
        %p718 = scmp.lt.s32.totalorder %s39, 1
        %s719 = scalar_select %p718, %s39, 1
        %s720 = smul.addr %s719, 8
        %s721 = scalar_lea.vmem %s1, %s720
        %p722 = pneg %p86
        %p723 = pneg %p83
        %p724 = scmp.lt.s32.totalorder %s39, 1
        %s725 = scalar_select %p724, %s39, 1
        %s726 = scalar_lea.vmem %s2, %s725
        %p727 = pneg %p112
        %p728 = pneg %p109
        %p729 = pneg %p133
        %p730 = pneg %p130
        %p731 = pneg %p154
        %p732 = pneg %p151
        %p733 = pneg %p175
        %p734 = pneg %p172
        %p735 = pneg %p196
        %p736 = pneg %p193
        %p737 = pneg %p217
        %p738 = pneg %p214
        %p739 = pneg %p238
        %p740 = pneg %p235
        %p741 = pneg %p259
        %p742 = pneg %p256
        %p743 = pneg %p280
        %p744 = pneg %p277
        %p745 = pneg %p301
        %p746 = pneg %p298
        %p747 = pneg %p322
        %p748 = pneg %p319
        %p749 = pneg %p343
        %p750 = pneg %p340
        %p751 = pneg %p364
        %p752 = pneg %p361
        %p753 = pneg %p385
        %p754 = pneg %p382
        %p755 = pneg %p406
        %p756 = pneg %p403
        %p757 = pneg %p427
        %p758 = pneg %p424
        %p759 = pneg %p448
        %p760 = pneg %p445
        %p761 = pneg %p469
        %p762 = pneg %p466
        %p763 = pneg %p490
        %p764 = pneg %p487
        %p765 = pneg %p511
        %p766 = pneg %p508
        %p767 = pneg %p532
        %p768 = pneg %p529
        %p769 = pneg %p553
        %p770 = pneg %p550
        %p771 = pneg %p574
        %p772 = pneg %p571
        %p773 = pneg %p600
        %p774 = pneg %p597
        %s775 = sand.u32 %s587, 1
        %s776 = scalar_lea.sflag [#allocation3], %s775
        %s777 = sand.u32 %s587, 1
        %s778 = smul.addr %s777, 8
        %s779 = scalar_lea.vmem [#allocation2], %s778
        %p780 = scmp.lt.s32.totalorder %s39, 1
        %s781 = scalar_select %p780, %s39, 1
        %s782 = smul.addr %s781, 8
        %s783 = scalar_lea.vmem %s0, %s782
        %p784 = scmp.lt.s32.totalorder %s39, 1
        %s785 = scalar_select %p784, %s39, 1
        %s786 = smul.addr %s785, 8
        %s787 = scalar_lea.vmem %s1, %s786
        %p788 = scmp.lt.s32.totalorder %s39, 1
        %s789 = scalar_select %p788, %s39, 1
        %s790 = scalar_lea.vmem %s2, %s789
        %v791 = vld [vmem:[%s783] sm:$0xff]
        %v792 = vld [vmem:[%s787] sm:$0xff]
        %v793 = vld [vmem:[%s790] sm:$0x1]
        %vm794 = vcmask 261120
        %v795 = vsel %vm794, %v792, 0.0
        %796 = vadd.xlane.f32.xlu0 %v795
        %v797 = vpop.xlane.xlu0 %796
        %v798 = vrcp.pop 32.0
        %v799 = vmul.f32 %v797, %v798
        %v800 = vsub.f32 %v792, %v799
        %v801 = vmul.f32 %v800, %v800
        %v802 = vsel %vm794, %v801, 0.0
        %803 = vadd.xlane.f32.xlu0 %v802
        %v804 = vpop.xlane.xlu0 %803
        %v805 = vmul.f32 %v804, %v798
        %v806 = vadd.f32 %v805, 1e-05
        %v807 = vrsqrt.pop %v806
        %v808 = vmul.f32 %v800, %v807
        %v809 = vld [vmem:[%s3] sm:$0x1]
        %v811 = vlaneseq
        %v812 = vshrl.u32 %v811, 7
        %v813 = vsub.s32 0, %v812
        %v814 = vrot.slane %v809, %v813
        %v816 = vmul.f32 %v808, %v814
        %v817 = vld [vmem:[%s4] sm:$0x1]
        %v819 = vlaneseq
        %v820 = vshrl.u32 %v819, 7
        %v821 = vsub.s32 0, %v820
        %v822 = vrot.slane %v817, %v821
        %v824 = vadd.f32 %v816, %v822
        %v825 = vld [vmem:[%s5] sm:$0xff]
        %v826 = vld [vmem:[%s5 + $0x8] sm:$0xff]
        %v827 = vld [vmem:[%s5 + $0x10] sm:$0xff]
        %v828 = vld [vmem:[%s5 + $0x18] sm:$0xff]
        %v829 = vld [vmem:[%s6] sm:$0x1]
        %v831 = vlaneseq
        %v832 = vshrl.u32 %v831, 7
        %v833 = vsub.s32 0, %v832
        %v834 = vrot.slane %v829, %v833
        %v837 = vsel %vm794, %v824, 0
        %839 = vmatprep.subr.mxu0 0.0
        %840 = vmatpush1.msra.mxu0 0.0
        %841 = vmatprep.subr.mxu0 0.0
        %842 = vmatpush1.msra.mxu0 0.0
        %843 = vmatprep.subr.mxu0 0.0
        %844 = vmatpush1.msra.mxu0 0.0
        %845 = vmatprep.subr.mxu0 0.0
        %846 = vmatpush1.msra.mxu0 0.0
        %847 = vmatprep.subr.mxu0 0.0
        %848 = vmatpush1.msra.mxu0 0.0
        %849 = vmatprep.subr.mxu0 0.0
        %850 = vmatpush1.msra.mxu0 0.0
        %851 = vmatprep.subr.mxu0 0.0
        %852 = vmatpush1.msra.mxu0 0.0
        %853 = vmatprep.subr.mxu0 0.0
        %854 = vmatpush1.msra.mxu0 0.0
        %855 = vmatprep.subr.mxu0 0.0
        %856 = vmatpush1.msra.mxu0 0.0
        %857 = vmatprep.subr.mxu0 0.0
        %858 = vmatpush1.msra.mxu0 0.0
        %859 = vmatprep.subr.mxu0 0.0
        %860 = vmatpush1.msra.mxu0 0.0
        %861 = vmatprep.subr.mxu0 0.0
        %862 = vmatpush1.msra.mxu0 0.0
        %863 = vmatprep.subr.mxu0 0.0
        %864 = vmatpush1.msra.mxu0 %v828
        %865 = vmatprep.subr.mxu0 0.0
        %866 = vmatpush1.msra.mxu0 %v827
        %867 = vmatprep.subr.mxu0 0.0
        %868 = vmatpush1.msra.mxu0 %v826
        %869 = vmatprep.subr.mxu0 0.0
        %870 = vmatpush1.msra.mxu0 %v825
        %871 = vmatprep.subr.mxu0 0.0
        %872 = vmatpush2.msra.mxu0 0.0
        %873 = vmatprep.subr.mxu0 0.0
        %874 = vmatpush2.msra.mxu0 0.0
        %875 = vmatprep.subr.mxu0 0.0
        %876 = vmatpush2.msra.mxu0 0.0
        %877 = vmatprep.subr.mxu0 0.0
        %878 = vmatpush2.msra.mxu0 0.0
        %879 = vmatprep.subr.mxu0 0.0
        %880 = vmatpush2.msra.mxu0 0.0
        %881 = vmatprep.subr.mxu0 0.0
        %882 = vmatpush2.msra.mxu0 0.0
        %883 = vmatprep.subr.mxu0 0.0
        %884 = vmatpush2.msra.mxu0 0.0
        %885 = vmatprep.subr.mxu0 0.0
        %886 = vmatpush2.msra.mxu0 0.0
        %887 = vmatprep.subr.mxu0 0.0
        %888 = vmatpush2.msra.mxu0 0.0
        %889 = vmatprep.subr.mxu0 0.0
        %890 = vmatpush2.msra.mxu0 0.0
        %891 = vmatprep.subr.mxu0 0.0
        %892 = vmatpush2.msra.mxu0 0.0
        %893 = vmatprep.subr.mxu0 0.0
        %894 = vmatpush2.msra.mxu0 0.0
        %895 = vmatprep.subr.mxu0 0.0
        %896 = vmatpush2.msra.mxu0 0.0
        %897 = vmatprep.subr.mxu0 0.0
        %898 = vmatpush2.msra.mxu0 0.0
        %899 = vmatprep.subr.mxu0 0.0
        %900 = vmatpush2.msra.mxu0 0.0
        %901 = vmatprep.subr.mxu0 0.0
        %902 = vmatpush2.msra.mxu0 0.0
        %903 = vmatprep.mubr.f32.mxu0 0.0
        %904 = vmatmul.mubr.f32.gmra.mxu0 %v837
        %v905 = vpop.f32.mrf.mxu0
        %v906 = vadd.f32 %v834, %v905
        %v907 = vpop.f32.mrf.mxu0
        %908 = vdwg.mxu0
        %910 = vrot.lane.b32.xlu0 %v906, 96
        %v911 = vpop.permute.xlu0 %910
        %vm912 = vcmask 64512
        %v913 = vsel %vm912, %v906, 0
        %v915 = vsel %vm912, %v911, 0
        %917 = vmatprep.subr.mxu0 0.0
        %918 = vmatpush1.xpose.msra.mxu0 0.0
        %919 = vmatprep.subr.mxu0 0.0
        %920 = vmatpush1.xpose.msra.mxu0 0.0
        %921 = vmatprep.subr.mxu0 0.0
        %922 = vmatpush1.xpose.msra.mxu0 0.0
        %923 = vmatprep.subr.mxu0 0.0
        %924 = vmatpush1.xpose.msra.mxu0 0.0
        %925 = vmatprep.subr.mxu0 0.0
        %926 = vmatpush1.xpose.msra.mxu0 0.0
        %927 = vmatprep.subr.mxu0 0.0
        %928 = vmatpush1.xpose.msra.mxu0 0.0
        %929 = vmatprep.subr.mxu0 0.0
        %930 = vmatpush1.xpose.msra.mxu0 0.0
        %931 = vmatprep.subr.mxu0 0.0
        %932 = vmatpush1.xpose.msra.mxu0 0.0
        %933 = vmatprep.subr.mxu0 0.0
        %934 = vmatpush1.xpose.msra.mxu0 0.0
        %935 = vmatprep.subr.mxu0 0.0
        %936 = vmatpush1.xpose.msra.mxu0 0.0
        %937 = vmatprep.subr.mxu0 0.0
        %938 = vmatpush1.xpose.msra.mxu0 0.0
        %939 = vmatprep.subr.mxu0 0.0
        %940 = vmatpush1.xpose.msra.mxu0 0.0
        %941 = vmatprep.subr.mxu0 0.0
        %942 = vmatpush1.xpose.msra.mxu0 0.0
        %943 = vmatprep.subr.mxu0 0.0
        %944 = vmatpush1.xpose.msra.mxu0 0.0
        %945 = vmatprep.subr.mxu0 0.0
        %946 = vmatpush1.xpose.msra.mxu0 0.0
        %947 = vmatprep.subr.mxu0 0.0
        %948 = vmatpush1.xpose.msra.mxu0 %v915
        %949 = vmatprep.subr.mxu0 0.0
        %950 = vmatpush2.xpose.msra.mxu0 0.0
        %951 = vmatprep.subr.mxu0 0.0
        %952 = vmatpush2.xpose.msra.mxu0 0.0
        %953 = vmatprep.subr.mxu0 0.0
        %954 = vmatpush2.xpose.msra.mxu0 0.0
        %955 = vmatprep.subr.mxu0 0.0
        %956 = vmatpush2.xpose.msra.mxu0 0.0
        %957 = vmatprep.subr.mxu0 0.0
        %958 = vmatpush2.xpose.msra.mxu0 0.0
        %959 = vmatprep.subr.mxu0 0.0
        %960 = vmatpush2.xpose.msra.mxu0 0.0
        %961 = vmatprep.subr.mxu0 0.0
        %962 = vmatpush2.xpose.msra.mxu0 0.0
        %963 = vmatprep.subr.mxu0 0.0
        %964 = vmatpush2.xpose.msra.mxu0 0.0
        %965 = vmatprep.subr.mxu0 0.0
        %966 = vmatpush2.xpose.msra.mxu0 0.0
        %967 = vmatprep.subr.mxu0 0.0
        %968 = vmatpush2.xpose.msra.mxu0 0.0
        %969 = vmatprep.subr.mxu0 0.0
        %970 = vmatpush2.xpose.msra.mxu0 0.0
        %971 = vmatprep.subr.mxu0 0.0
        %972 = vmatpush2.xpose.msra.mxu0 0.0
        %973 = vmatprep.subr.mxu0 0.0
        %974 = vmatpush2.xpose.msra.mxu0 0.0
        %975 = vmatprep.subr.mxu0 0.0
        %976 = vmatpush2.xpose.msra.mxu0 0.0
        %977 = vmatprep.subr.mxu0 0.0
        %978 = vmatpush2.xpose.msra.mxu0 0.0
        %979 = vmatprep.subr.mxu0 0.0
        %980 = vmatpush2.xpose.msra.mxu0 0.0
        %981 = vmatprep.mubr.f32.mxu0 0.0
        %982 = vmatmul.mubr.f32.gmra.mxu0 %v913
        %v983 = vpop.f32.mrf.mxu0
        %v984 = vadd.f32 0.0, %v983
        %v985 = vpop.f32.mrf.mxu0
        %986 = vdwg.mxu0
        %v987 = vmul.f32 %v984, 0.35355338
        %vm988 = vcmp.eq.s32.totalorder %v793, 0
        %v989 = vsel %vm988, 1, 0
        %v990 = vlaneseq
        %v991 = vshrl.u32 %v990, 7
        %v992 = vsub.s32 0, %v991
        %v993 = vrot.slane %v989, %v992
        %vm994 = vcmp.eq.s32.totalorder %v993, 1
        %v995 = vsel %vm994, -1e+10, %v987
        %v996 = vsel %vm912, %v995, -inf
        %997 = vmax.xlane.f32.xlu0 %v996
        %v998 = vpop.xlane.xlu0 %997
        %v999 = vsub.f32 %v995, %v998
        %v1000 = vmul.f32 %v999, 1.442695
        %v1001 = vpow.pop %v1000
        %v1002 = vsel %vm912, %v1001, 0.0
        %1003 = vadd.xlane.f32.xlu0 %v1002
        %v1004 = vpop.xlane.xlu0 %1003
        %v1005 = vrcp.pop %v1004
        %v1006 = vmul.f32 %v1001, %v1005
        %1007 = vrot.lane.b32.xlu0 %v906, 64
        %v1008 = vpop.permute.xlu0 %1007
        %v1011 = vsel %vm912, %v1006, 0
        %1013 = vmatprep.subr.mxu0 0.0
        %1014 = vmatpush1.msra.mxu0 0.0
        %1015 = vmatprep.subr.mxu0 0.0
        %1016 = vmatpush1.msra.mxu0 0.0
        %1017 = vmatprep.subr.mxu0 0.0
        %1018 = vmatpush1.msra.mxu0 0.0
        %1019 = vmatprep.subr.mxu0 0.0
        %1020 = vmatpush1.msra.mxu0 0.0
        %1021 = vmatprep.subr.mxu0 0.0
        %1022 = vmatpush1.msra.mxu0 0.0
        %1023 = vmatprep.subr.mxu0 0.0
        %1024 = vmatpush1.msra.mxu0 0.0
        %1025 = vmatprep.subr.mxu0 0.0
        %1026 = vmatpush1.msra.mxu0 0.0
        %1027 = vmatprep.subr.mxu0 0.0
        %1028 = vmatpush1.msra.mxu0 0.0
        %1029 = vmatprep.subr.mxu0 0.0
        %1030 = vmatpush1.msra.mxu0 0.0
        %1031 = vmatprep.subr.mxu0 0.0
        %1032 = vmatpush1.msra.mxu0 0.0
        %1033 = vmatprep.subr.mxu0 0.0
        %1034 = vmatpush1.msra.mxu0 0.0
        %1035 = vmatprep.subr.mxu0 0.0
        %1036 = vmatpush1.msra.mxu0 0.0
        %1037 = vmatprep.subr.mxu0 0.0
        %1038 = vmatpush1.msra.mxu0 0.0
        %1039 = vmatprep.subr.mxu0 0.0
        %1040 = vmatpush1.msra.mxu0 0.0
        %1041 = vmatprep.subr.mxu0 0.0
        %1042 = vmatpush1.msra.mxu0 0.0
        %1043 = vmatprep.subr.mxu0 0.0
        %1044 = vmatpush1.msra.mxu0 %v1008
        %1045 = vmatprep.subr.mxu0 0.0
        %1046 = vmatpush2.msra.mxu0 0.0
        %1047 = vmatprep.subr.mxu0 0.0
        %1048 = vmatpush2.msra.mxu0 0.0
        %1049 = vmatprep.subr.mxu0 0.0
        %1050 = vmatpush2.msra.mxu0 0.0
        %1051 = vmatprep.subr.mxu0 0.0
        %1052 = vmatpush2.msra.mxu0 0.0
        %1053 = vmatprep.subr.mxu0 0.0
        %1054 = vmatpush2.msra.mxu0 0.0
        %1055 = vmatprep.subr.mxu0 0.0
        %1056 = vmatpush2.msra.mxu0 0.0
        %1057 = vmatprep.subr.mxu0 0.0
        %1058 = vmatpush2.msra.mxu0 0.0
        %1059 = vmatprep.subr.mxu0 0.0
        %1060 = vmatpush2.msra.mxu0 0.0
        %1061 = vmatprep.subr.mxu0 0.0
        %1062 = vmatpush2.msra.mxu0 0.0
        %1063 = vmatprep.subr.mxu0 0.0
        %1064 = vmatpush2.msra.mxu0 0.0
        %1065 = vmatprep.subr.mxu0 0.0
        %1066 = vmatpush2.msra.mxu0 0.0
        %1067 = vmatprep.subr.mxu0 0.0
        %1068 = vmatpush2.msra.mxu0 0.0
        %1069 = vmatprep.subr.mxu0 0.0
        %1070 = vmatpush2.msra.mxu0 0.0
        %1071 = vmatprep.subr.mxu0 0.0
        %1072 = vmatpush2.msra.mxu0 0.0
        %1073 = vmatprep.subr.mxu0 0.0
        %1074 = vmatpush2.msra.mxu0 0.0
        %1075 = vmatprep.subr.mxu0 0.0
        %1076 = vmatpush2.msra.mxu0 0.0
        %1077 = vmatprep.mubr.f32.mxu0 0.0
        %1078 = vmatmul.mubr.f32.gmra.mxu0 %v1011
        %v1079 = vpop.f32.mrf.mxu0
        %v1080 = vadd.f32 0.0, %v1079
        %v1081 = vpop.f32.mrf.mxu0
        %1082 = vdwg.mxu0
        %1083 = vrot.lane.b32.xlu0 %v906, 120
        %v1084 = vpop.permute.xlu0 %1083
        %1085 = vrot.lane.b32.xlu0 %v906, 88
        %v1086 = vpop.permute.xlu0 %1085
        %v1087 = vsel %vm912, %v1084, 0
        %v1089 = vsel %vm912, %v1086, 0
        %1091 = vmatprep.subr.mxu0 0.0
        %1092 = vmatpush1.xpose.msra.mxu0 0.0
        %1093 = vmatprep.subr.mxu0 0.0
        %1094 = vmatpush1.xpose.msra.mxu0 0.0
        %1095 = vmatprep.subr.mxu0 0.0
        %1096 = vmatpush1.xpose.msra.mxu0 0.0
        %1097 = vmatprep.subr.mxu0 0.0
        %1098 = vmatpush1.xpose.msra.mxu0 0.0
        %1099 = vmatprep.subr.mxu0 0.0
        %1100 = vmatpush1.xpose.msra.mxu0 0.0
        %1101 = vmatprep.subr.mxu0 0.0
        %1102 = vmatpush1.xpose.msra.mxu0 0.0
        %1103 = vmatprep.subr.mxu0 0.0
        %1104 = vmatpush1.xpose.msra.mxu0 0.0
        %1105 = vmatprep.subr.mxu0 0.0
        %1106 = vmatpush1.xpose.msra.mxu0 0.0
        %1107 = vmatprep.subr.mxu0 0.0
        %1108 = vmatpush1.xpose.msra.mxu0 0.0
        %1109 = vmatprep.subr.mxu0 0.0
        %1110 = vmatpush1.xpose.msra.mxu0 0.0
        %1111 = vmatprep.subr.mxu0 0.0
        %1112 = vmatpush1.xpose.msra.mxu0 0.0
        %1113 = vmatprep.subr.mxu0 0.0
        %1114 = vmatpush1.xpose.msra.mxu0 0.0
        %1115 = vmatprep.subr.mxu0 0.0
        %1116 = vmatpush1.xpose.msra.mxu0 0.0
        %1117 = vmatprep.subr.mxu0 0.0
        %1118 = vmatpush1.xpose.msra.mxu0 0.0
        %1119 = vmatprep.subr.mxu0 0.0
        %1120 = vmatpush1.xpose.msra.mxu0 0.0
        %1121 = vmatprep.subr.mxu0 0.0
        %1122 = vmatpush1.xpose.msra.mxu0 %v1089
        %1123 = vmatprep.subr.mxu0 0.0
        %1124 = vmatpush2.xpose.msra.mxu0 0.0
        %1125 = vmatprep.subr.mxu0 0.0
        %1126 = vmatpush2.xpose.msra.mxu0 0.0
        %1127 = vmatprep.subr.mxu0 0.0
        %1128 = vmatpush2.xpose.msra.mxu0 0.0
        %1129 = vmatprep.subr.mxu0 0.0
        %1130 = vmatpush2.xpose.msra.mxu0 0.0
        %1131 = vmatprep.subr.mxu0 0.0
        %1132 = vmatpush2.xpose.msra.mxu0 0.0
        %1133 = vmatprep.subr.mxu0 0.0
        %1134 = vmatpush2.xpose.msra.mxu0 0.0
        %1135 = vmatprep.subr.mxu0 0.0
        %1136 = vmatpush2.xpose.msra.mxu0 0.0
        %1137 = vmatprep.subr.mxu0 0.0
        %1138 = vmatpush2.xpose.msra.mxu0 0.0
        %1139 = vmatprep.subr.mxu0 0.0
        %1140 = vmatpush2.xpose.msra.mxu0 0.0
        %1141 = vmatprep.subr.mxu0 0.0
        %1142 = vmatpush2.xpose.msra.mxu0 0.0
        %1143 = vmatprep.subr.mxu0 0.0
        %1144 = vmatpush2.xpose.msra.mxu0 0.0
        %1145 = vmatprep.subr.mxu0 0.0
        %1146 = vmatpush2.xpose.msra.mxu0 0.0
        %1147 = vmatprep.subr.mxu0 0.0
        %1148 = vmatpush2.xpose.msra.mxu0 0.0
        %1149 = vmatprep.subr.mxu0 0.0
        %1150 = vmatpush2.xpose.msra.mxu0 0.0
        %1151 = vmatprep.subr.mxu0 0.0
        %1152 = vmatpush2.xpose.msra.mxu0 0.0
        %1153 = vmatprep.subr.mxu0 0.0
        %1154 = vmatpush2.xpose.msra.mxu0 0.0
        %1155 = vmatprep.mubr.f32.mxu0 0.0
        %1156 = vmatmul.mubr.f32.gmra.mxu0 %v1087
        %v1157 = vpop.f32.mrf.mxu0
        %v1158 = vadd.f32 0.0, %v1157
        %v1159 = vpop.f32.mrf.mxu0
        %1160 = vdwg.mxu0
        %v1161 = vmul.f32 %v1158, 0.35355338
        %v1162 = vsel %vm994, -1e+10, %v1161
        %v1163 = vsel %vm912, %v1162, -inf
        %1164 = vmax.xlane.f32.xlu0 %v1163
        %v1165 = vpop.xlane.xlu0 %1164
        %v1166 = vsub.f32 %v1162, %v1165
        %v1167 = vmul.f32 %v1166, 1.442695
        %v1168 = vpow.pop %v1167
        %v1169 = vsel %vm912, %v1168, 0.0
        %1170 = vadd.xlane.f32.xlu0 %v1169
        %v1171 = vpop.xlane.xlu0 %1170
        %v1172 = vrcp.pop %v1171
        %v1173 = vmul.f32 %v1168, %v1172
        %1174 = vrot.lane.b32.xlu0 %v906, 56
        %v1175 = vpop.permute.xlu0 %1174
        %v1178 = vsel %vm912, %v1173, 0
        %1180 = vmatprep.subr.mxu0 0.0
        %1181 = vmatpush1.msra.mxu0 0.0
        %1182 = vmatprep.subr.mxu0 0.0
        %1183 = vmatpush1.msra.mxu0 0.0
        %1184 = vmatprep.subr.mxu0 0.0
        %1185 = vmatpush1.msra.mxu0 0.0
        %1186 = vmatprep.subr.mxu0 0.0
        %1187 = vmatpush1.msra.mxu0 0.0
        %1188 = vmatprep.subr.mxu0 0.0
        %1189 = vmatpush1.msra.mxu0 0.0
        %1190 = vmatprep.subr.mxu0 0.0
        %1191 = vmatpush1.msra.mxu0 0.0
        %1192 = vmatprep.subr.mxu0 0.0
        %1193 = vmatpush1.msra.mxu0 0.0
        %1194 = vmatprep.subr.mxu0 0.0
        %1195 = vmatpush1.msra.mxu0 0.0
        %1196 = vmatprep.subr.mxu0 0.0
        %1197 = vmatpush1.msra.mxu0 0.0
        %1198 = vmatprep.subr.mxu0 0.0
        %1199 = vmatpush1.msra.mxu0 0.0
        %1200 = vmatprep.subr.mxu0 0.0
        %1201 = vmatpush1.msra.mxu0 0.0
        %1202 = vmatprep.subr.mxu0 0.0
        %1203 = vmatpush1.msra.mxu0 0.0
        %1204 = vmatprep.subr.mxu0 0.0
        %1205 = vmatpush1.msra.mxu0 0.0
        %1206 = vmatprep.subr.mxu0 0.0
        %1207 = vmatpush1.msra.mxu0 0.0
        %1208 = vmatprep.subr.mxu0 0.0
        %1209 = vmatpush1.msra.mxu0 0.0
        %1210 = vmatprep.subr.mxu0 0.0
        %1211 = vmatpush1.msra.mxu0 %v1175
        %1212 = vmatprep.subr.mxu0 0.0
        %1213 = vmatpush2.msra.mxu0 0.0
        %1214 = vmatprep.subr.mxu0 0.0
        %1215 = vmatpush2.msra.mxu0 0.0
        %1216 = vmatprep.subr.mxu0 0.0
        %1217 = vmatpush2.msra.mxu0 0.0
        %1218 = vmatprep.subr.mxu0 0.0
        %1219 = vmatpush2.msra.mxu0 0.0
        %1220 = vmatprep.subr.mxu0 0.0
        %1221 = vmatpush2.msra.mxu0 0.0
        %1222 = vmatprep.subr.mxu0 0.0
        %1223 = vmatpush2.msra.mxu0 0.0
        %1224 = vmatprep.subr.mxu0 0.0
        %1225 = vmatpush2.msra.mxu0 0.0
        %1226 = vmatprep.subr.mxu0 0.0
        %1227 = vmatpush2.msra.mxu0 0.0
        %1228 = vmatprep.subr.mxu0 0.0
        %1229 = vmatpush2.msra.mxu0 0.0
        %1230 = vmatprep.subr.mxu0 0.0
        %1231 = vmatpush2.msra.mxu0 0.0
        %1232 = vmatprep.subr.mxu0 0.0
        %1233 = vmatpush2.msra.mxu0 0.0
        %1234 = vmatprep.subr.mxu0 0.0
        %1235 = vmatpush2.msra.mxu0 0.0
        %1236 = vmatprep.subr.mxu0 0.0
        %1237 = vmatpush2.msra.mxu0 0.0
        %1238 = vmatprep.subr.mxu0 0.0
        %1239 = vmatpush2.msra.mxu0 0.0
        %1240 = vmatprep.subr.mxu0 0.0
        %1241 = vmatpush2.msra.mxu0 0.0
        %1242 = vmatprep.subr.mxu0 0.0
        %1243 = vmatpush2.msra.mxu0 0.0
        %1244 = vmatprep.mubr.f32.mxu0 0.0
        %1245 = vmatmul.mubr.f32.gmra.mxu0 %v1178
        %v1246 = vpop.f32.mrf.mxu0
        %v1247 = vadd.f32 0.0, %v1246
        %v1248 = vpop.f32.mrf.mxu0
        %1249 = vdwg.mxu0
        %1250 = vrot.lane.b32.xlu0 %v906, 112
        %v1251 = vpop.permute.xlu0 %1250
        %1252 = vrot.lane.b32.xlu0 %v906, 80
        %v1253 = vpop.permute.xlu0 %1252
        %v1254 = vsel %vm912, %v1251, 0
        %v1256 = vsel %vm912, %v1253, 0
        %1258 = vmatprep.subr.mxu0 0.0
        %1259 = vmatpush1.xpose.msra.mxu0 0.0
        %1260 = vmatprep.subr.mxu0 0.0
        %1261 = vmatpush1.xpose.msra.mxu0 0.0
        %1262 = vmatprep.subr.mxu0 0.0
        %1263 = vmatpush1.xpose.msra.mxu0 0.0
        %1264 = vmatprep.subr.mxu0 0.0
        %1265 = vmatpush1.xpose.msra.mxu0 0.0
        %1266 = vmatprep.subr.mxu0 0.0
        %1267 = vmatpush1.xpose.msra.mxu0 0.0
        %1268 = vmatprep.subr.mxu0 0.0
        %1269 = vmatpush1.xpose.msra.mxu0 0.0
        %1270 = vmatprep.subr.mxu0 0.0
        %1271 = vmatpush1.xpose.msra.mxu0 0.0
        %1272 = vmatprep.subr.mxu0 0.0
        %1273 = vmatpush1.xpose.msra.mxu0 0.0
        %1274 = vmatprep.subr.mxu0 0.0
        %1275 = vmatpush1.xpose.msra.mxu0 0.0
        %1276 = vmatprep.subr.mxu0 0.0
        %1277 = vmatpush1.xpose.msra.mxu0 0.0
        %1278 = vmatprep.subr.mxu0 0.0
        %1279 = vmatpush1.xpose.msra.mxu0 0.0
        %1280 = vmatprep.subr.mxu0 0.0
        %1281 = vmatpush1.xpose.msra.mxu0 0.0
        %1282 = vmatprep.subr.mxu0 0.0
        %1283 = vmatpush1.xpose.msra.mxu0 0.0
        %1284 = vmatprep.subr.mxu0 0.0
        %1285 = vmatpush1.xpose.msra.mxu0 0.0
        %1286 = vmatprep.subr.mxu0 0.0
        %1287 = vmatpush1.xpose.msra.mxu0 0.0
        %1288 = vmatprep.subr.mxu0 0.0
        %1289 = vmatpush1.xpose.msra.mxu0 %v1256
        %1290 = vmatprep.subr.mxu0 0.0
        %1291 = vmatpush2.xpose.msra.mxu0 0.0
        %1292 = vmatprep.subr.mxu0 0.0
        %1293 = vmatpush2.xpose.msra.mxu0 0.0
        %1294 = vmatprep.subr.mxu0 0.0
        %1295 = vmatpush2.xpose.msra.mxu0 0.0
        %1296 = vmatprep.subr.mxu0 0.0
        %1297 = vmatpush2.xpose.msra.mxu0 0.0
        %1298 = vmatprep.subr.mxu0 0.0
        %1299 = vmatpush2.xpose.msra.mxu0 0.0
        %1300 = vmatprep.subr.mxu0 0.0
        %1301 = vmatpush2.xpose.msra.mxu0 0.0
        %1302 = vmatprep.subr.mxu0 0.0
        %1303 = vmatpush2.xpose.msra.mxu0 0.0
        %1304 = vmatprep.subr.mxu0 0.0
        %1305 = vmatpush2.xpose.msra.mxu0 0.0
        %1306 = vmatprep.subr.mxu0 0.0
        %1307 = vmatpush2.xpose.msra.mxu0 0.0
        %1308 = vmatprep.subr.mxu0 0.0
        %1309 = vmatpush2.xpose.msra.mxu0 0.0
        %1310 = vmatprep.subr.mxu0 0.0
        %1311 = vmatpush2.xpose.msra.mxu0 0.0
        %1312 = vmatprep.subr.mxu0 0.0
        %1313 = vmatpush2.xpose.msra.mxu0 0.0
        %1314 = vmatprep.subr.mxu0 0.0
        %1315 = vmatpush2.xpose.msra.mxu0 0.0
        %1316 = vmatprep.subr.mxu0 0.0
        %1317 = vmatpush2.xpose.msra.mxu0 0.0
        %1318 = vmatprep.subr.mxu0 0.0
        %1319 = vmatpush2.xpose.msra.mxu0 0.0
        %1320 = vmatprep.subr.mxu0 0.0
        %1321 = vmatpush2.xpose.msra.mxu0 0.0
        %1322 = vmatprep.mubr.f32.mxu0 0.0
        %1323 = vmatmul.mubr.f32.gmra.mxu0 %v1254
        %v1324 = vpop.f32.mrf.mxu0
        %v1325 = vadd.f32 0.0, %v1324
        %v1326 = vpop.f32.mrf.mxu0
        %1327 = vdwg.mxu0
        %v1328 = vmul.f32 %v1325, 0.35355338
        %v1329 = vsel %vm994, -1e+10, %v1328
        %v1330 = vsel %vm912, %v1329, -inf
        %1331 = vmax.xlane.f32.xlu0 %v1330
        %v1332 = vpop.xlane.xlu0 %1331
        %v1333 = vsub.f32 %v1329, %v1332
        %v1334 = vmul.f32 %v1333, 1.442695
        %v1335 = vpow.pop %v1334
        %v1336 = vsel %vm912, %v1335, 0.0
        %1337 = vadd.xlane.f32.xlu0 %v1336
        %v1338 = vpop.xlane.xlu0 %1337
        %v1339 = vrcp.pop %v1338
        %v1340 = vmul.f32 %v1335, %v1339
        %1341 = vrot.lane.b32.xlu0 %v906, 48
        %v1342 = vpop.permute.xlu0 %1341
        %v1345 = vsel %vm912, %v1340, 0
        %1347 = vmatprep.subr.mxu0 0.0
        %1348 = vmatpush1.msra.mxu0 0.0
        %1349 = vmatprep.subr.mxu0 0.0
        %1350 = vmatpush1.msra.mxu0 0.0
        %1351 = vmatprep.subr.mxu0 0.0
        %1352 = vmatpush1.msra.mxu0 0.0
        %1353 = vmatprep.subr.mxu0 0.0
        %1354 = vmatpush1.msra.mxu0 0.0
        %1355 = vmatprep.subr.mxu0 0.0
        %1356 = vmatpush1.msra.mxu0 0.0
        %1357 = vmatprep.subr.mxu0 0.0
        %1358 = vmatpush1.msra.mxu0 0.0
        %1359 = vmatprep.subr.mxu0 0.0
        %1360 = vmatpush1.msra.mxu0 0.0
        %1361 = vmatprep.subr.mxu0 0.0
        %1362 = vmatpush1.msra.mxu0 0.0
        %1363 = vmatprep.subr.mxu0 0.0
        %1364 = vmatpush1.msra.mxu0 0.0
        %1365 = vmatprep.subr.mxu0 0.0
        %1366 = vmatpush1.msra.mxu0 0.0
        %1367 = vmatprep.subr.mxu0 0.0
        %1368 = vmatpush1.msra.mxu0 0.0
        %1369 = vmatprep.subr.mxu0 0.0
        %1370 = vmatpush1.msra.mxu0 0.0
        %1371 = vmatprep.subr.mxu0 0.0
        %1372 = vmatpush1.msra.mxu0 0.0
        %1373 = vmatprep.subr.mxu0 0.0
        %1374 = vmatpush1.msra.mxu0 0.0
        %1375 = vmatprep.subr.mxu0 0.0
        %1376 = vmatpush1.msra.mxu0 0.0
        %1377 = vmatprep.subr.mxu0 0.0
        %1378 = vmatpush1.msra.mxu0 %v1342
        %1379 = vmatprep.subr.mxu0 0.0
        %1380 = vmatpush2.msra.mxu0 0.0
        %1381 = vmatprep.subr.mxu0 0.0
        %1382 = vmatpush2.msra.mxu0 0.0
        %1383 = vmatprep.subr.mxu0 0.0
        %1384 = vmatpush2.msra.mxu0 0.0
        %1385 = vmatprep.subr.mxu0 0.0
        %1386 = vmatpush2.msra.mxu0 0.0
        %1387 = vmatprep.subr.mxu0 0.0
        %1388 = vmatpush2.msra.mxu0 0.0
        %1389 = vmatprep.subr.mxu0 0.0
        %1390 = vmatpush2.msra.mxu0 0.0
        %1391 = vmatprep.subr.mxu0 0.0
        %1392 = vmatpush2.msra.mxu0 0.0
        %1393 = vmatprep.subr.mxu0 0.0
        %1394 = vmatpush2.msra.mxu0 0.0
        %1395 = vmatprep.subr.mxu0 0.0
        %1396 = vmatpush2.msra.mxu0 0.0
        %1397 = vmatprep.subr.mxu0 0.0
        %1398 = vmatpush2.msra.mxu0 0.0
        %1399 = vmatprep.subr.mxu0 0.0
        %1400 = vmatpush2.msra.mxu0 0.0
        %1401 = vmatprep.subr.mxu0 0.0
        %1402 = vmatpush2.msra.mxu0 0.0
        %1403 = vmatprep.subr.mxu0 0.0
        %1404 = vmatpush2.msra.mxu0 0.0
        %1405 = vmatprep.subr.mxu0 0.0
        %1406 = vmatpush2.msra.mxu0 0.0
        %1407 = vmatprep.subr.mxu0 0.0
        %1408 = vmatpush2.msra.mxu0 0.0
        %1409 = vmatprep.subr.mxu0 0.0
        %1410 = vmatpush2.msra.mxu0 0.0
        %1411 = vmatprep.mubr.f32.mxu0 0.0
        %1412 = vmatmul.mubr.f32.gmra.mxu0 %v1345
        %v1413 = vpop.f32.mrf.mxu0
        %v1414 = vadd.f32 0.0, %v1413
        %v1415 = vpop.f32.mrf.mxu0
        %1416 = vdwg.mxu0
        %1417 = vrot.lane.b32.xlu0 %v906, 104
        %v1418 = vpop.permute.xlu0 %1417
        %1419 = vrot.lane.b32.xlu0 %v906, 72
        %v1420 = vpop.permute.xlu0 %1419
        %v1421 = vsel %vm912, %v1418, 0
        %v1423 = vsel %vm912, %v1420, 0
        %1425 = vmatprep.subr.mxu0 0.0
        %1426 = vmatpush1.xpose.msra.mxu0 0.0
        %1427 = vmatprep.subr.mxu0 0.0
        %1428 = vmatpush1.xpose.msra.mxu0 0.0
        %1429 = vmatprep.subr.mxu0 0.0
        %1430 = vmatpush1.xpose.msra.mxu0 0.0
        %1431 = vmatprep.subr.mxu0 0.0
        %1432 = vmatpush1.xpose.msra.mxu0 0.0
        %1433 = vmatprep.subr.mxu0 0.0
        %1434 = vmatpush1.xpose.msra.mxu0 0.0
        %1435 = vmatprep.subr.mxu0 0.0
        %1436 = vmatpush1.xpose.msra.mxu0 0.0
        %1437 = vmatprep.subr.mxu0 0.0
        %1438 = vmatpush1.xpose.msra.mxu0 0.0
        %1439 = vmatprep.subr.mxu0 0.0
        %1440 = vmatpush1.xpose.msra.mxu0 0.0
        %1441 = vmatprep.subr.mxu0 0.0
        %1442 = vmatpush1.xpose.msra.mxu0 0.0
        %1443 = vmatprep.subr.mxu0 0.0
        %1444 = vmatpush1.xpose.msra.mxu0 0.0
        %1445 = vmatprep.subr.mxu0 0.0
        %1446 = vmatpush1.xpose.msra.mxu0 0.0
        %1447 = vmatprep.subr.mxu0 0.0
        %1448 = vmatpush1.xpose.msra.mxu0 0.0
        %1449 = vmatprep.subr.mxu0 0.0
        %1450 = vmatpush1.xpose.msra.mxu0 0.0
        %1451 = vmatprep.subr.mxu0 0.0
        %1452 = vmatpush1.xpose.msra.mxu0 0.0
        %1453 = vmatprep.subr.mxu0 0.0
        %1454 = vmatpush1.xpose.msra.mxu0 0.0
        %1455 = vmatprep.subr.mxu0 0.0
        %1456 = vmatpush1.xpose.msra.mxu0 %v1423
        %1457 = vmatprep.subr.mxu0 0.0
        %1458 = vmatpush2.xpose.msra.mxu0 0.0
        %1459 = vmatprep.subr.mxu0 0.0
        %1460 = vmatpush2.xpose.msra.mxu0 0.0
        %1461 = vmatprep.subr.mxu0 0.0
        %1462 = vmatpush2.xpose.msra.mxu0 0.0
        %1463 = vmatprep.subr.mxu0 0.0
        %1464 = vmatpush2.xpose.msra.mxu0 0.0
        %1465 = vmatprep.subr.mxu0 0.0
        %1466 = vmatpush2.xpose.msra.mxu0 0.0
        %1467 = vmatprep.subr.mxu0 0.0
        %1468 = vmatpush2.xpose.msra.mxu0 0.0
        %1469 = vmatprep.subr.mxu0 0.0
        %1470 = vmatpush2.xpose.msra.mxu0 0.0
        %1471 = vmatprep.subr.mxu0 0.0
        %1472 = vmatpush2.xpose.msra.mxu0 0.0
        %1473 = vmatprep.subr.mxu0 0.0
        %1474 = vmatpush2.xpose.msra.mxu0 0.0
        %1475 = vmatprep.subr.mxu0 0.0
        %1476 = vmatpush2.xpose.msra.mxu0 0.0
        %1477 = vmatprep.subr.mxu0 0.0
        %1478 = vmatpush2.xpose.msra.mxu0 0.0
        %1479 = vmatprep.subr.mxu0 0.0
        %1480 = vmatpush2.xpose.msra.mxu0 0.0
        %1481 = vmatprep.subr.mxu0 0.0
        %1482 = vmatpush2.xpose.msra.mxu0 0.0
        %1483 = vmatprep.subr.mxu0 0.0
        %1484 = vmatpush2.xpose.msra.mxu0 0.0
        %1485 = vmatprep.subr.mxu0 0.0
        %1486 = vmatpush2.xpose.msra.mxu0 0.0
        %1487 = vmatprep.subr.mxu0 0.0
        %1488 = vmatpush2.xpose.msra.mxu0 0.0
        %1489 = vmatprep.mubr.f32.mxu0 0.0
        %1490 = vmatmul.mubr.f32.gmra.mxu0 %v1421
        %v1491 = vpop.f32.mrf.mxu0
        %v1492 = vadd.f32 0.0, %v1491
        %v1493 = vpop.f32.mrf.mxu0
        %1494 = vdwg.mxu0
        %v1495 = vmul.f32 %v1492, 0.35355338
        %v1496 = vsel %vm994, -1e+10, %v1495
        %v1497 = vsel %vm912, %v1496, -inf
        %1498 = vmax.xlane.f32.xlu0 %v1497
        %v1499 = vpop.xlane.xlu0 %1498
        %v1500 = vsub.f32 %v1496, %v1499
        %v1501 = vmul.f32 %v1500, 1.442695
        %v1502 = vpow.pop %v1501
        %v1503 = vsel %vm912, %v1502, 0.0
        %1504 = vadd.xlane.f32.xlu0 %v1503
        %v1505 = vpop.xlane.xlu0 %1504
        %v1506 = vrcp.pop %v1505
        %v1507 = vmul.f32 %v1502, %v1506
        %1508 = vrot.lane.b32.xlu0 %v906, 40
        %v1509 = vpop.permute.xlu0 %1508
        %v1512 = vsel %vm912, %v1507, 0
        %1514 = vmatprep.subr.mxu0 0.0
        %1515 = vmatpush1.msra.mxu0 0.0
        %1516 = vmatprep.subr.mxu0 0.0
        %1517 = vmatpush1.msra.mxu0 0.0
        %1518 = vmatprep.subr.mxu0 0.0
        %1519 = vmatpush1.msra.mxu0 0.0
        %1520 = vmatprep.subr.mxu0 0.0
        %1521 = vmatpush1.msra.mxu0 0.0
        %1522 = vmatprep.subr.mxu0 0.0
        %1523 = vmatpush1.msra.mxu0 0.0
        %1524 = vmatprep.subr.mxu0 0.0
        %1525 = vmatpush1.msra.mxu0 0.0
        %1526 = vmatprep.subr.mxu0 0.0
        %1527 = vmatpush1.msra.mxu0 0.0
        %1528 = vmatprep.subr.mxu0 0.0
        %1529 = vmatpush1.msra.mxu0 0.0
        %1530 = vmatprep.subr.mxu0 0.0
        %1531 = vmatpush1.msra.mxu0 0.0
        %1532 = vmatprep.subr.mxu0 0.0
        %1533 = vmatpush1.msra.mxu0 0.0
        %1534 = vmatprep.subr.mxu0 0.0
        %1535 = vmatpush1.msra.mxu0 0.0
        %1536 = vmatprep.subr.mxu0 0.0
        %1537 = vmatpush1.msra.mxu0 0.0
        %1538 = vmatprep.subr.mxu0 0.0
        %1539 = vmatpush1.msra.mxu0 0.0
        %1540 = vmatprep.subr.mxu0 0.0
        %1541 = vmatpush1.msra.mxu0 0.0
        %1542 = vmatprep.subr.mxu0 0.0
        %1543 = vmatpush1.msra.mxu0 0.0
        %1544 = vmatprep.subr.mxu0 0.0
        %1545 = vmatpush1.msra.mxu0 %v1509
        %1546 = vmatprep.subr.mxu0 0.0
        %1547 = vmatpush2.msra.mxu0 0.0
        %1548 = vmatprep.subr.mxu0 0.0
        %1549 = vmatpush2.msra.mxu0 0.0
        %1550 = vmatprep.subr.mxu0 0.0
        %1551 = vmatpush2.msra.mxu0 0.0
        %1552 = vmatprep.subr.mxu0 0.0
        %1553 = vmatpush2.msra.mxu0 0.0
        %1554 = vmatprep.subr.mxu0 0.0
        %1555 = vmatpush2.msra.mxu0 0.0
        %1556 = vmatprep.subr.mxu0 0.0
        %1557 = vmatpush2.msra.mxu0 0.0
        %1558 = vmatprep.subr.mxu0 0.0
        %1559 = vmatpush2.msra.mxu0 0.0
        %1560 = vmatprep.subr.mxu0 0.0
        %1561 = vmatpush2.msra.mxu0 0.0
        %1562 = vmatprep.subr.mxu0 0.0
        %1563 = vmatpush2.msra.mxu0 0.0
        %1564 = vmatprep.subr.mxu0 0.0
        %1565 = vmatpush2.msra.mxu0 0.0
        %1566 = vmatprep.subr.mxu0 0.0
        %1567 = vmatpush2.msra.mxu0 0.0
        %1568 = vmatprep.subr.mxu0 0.0
        %1569 = vmatpush2.msra.mxu0 0.0
        %1570 = vmatprep.subr.mxu0 0.0
        %1571 = vmatpush2.msra.mxu0 0.0
        %1572 = vmatprep.subr.mxu0 0.0
        %1573 = vmatpush2.msra.mxu0 0.0
        %1574 = vmatprep.subr.mxu0 0.0
        %1575 = vmatpush2.msra.mxu0 0.0
        %1576 = vmatprep.subr.mxu0 0.0
        %1577 = vmatpush2.msra.mxu0 0.0
        %1578 = vmatprep.mubr.f32.mxu0 0.0
        %1579 = vmatmul.mubr.f32.gmra.mxu0 %v1512
        %v1580 = vpop.f32.mrf.mxu0
        %v1581 = vadd.f32 0.0, %v1580
        %v1582 = vpop.f32.mrf.mxu0
        %1583 = vdwg.mxu0
        %1585 = vrot.lane.b32.xlu0 %v1247, 8
        %v1586 = vpop.permute.xlu0 %1585
        %1589 = vrot.lane.b32.xlu0 %v1414, 16
        %v1590 = vpop.permute.xlu0 %1589
        %1593 = vrot.lane.b32.xlu0 %v1581, 24
        %v1594 = vpop.permute.xlu0 %1593
        %v1596 = vsel %vm912, %v1080, %v1586
        %vm1597 = vcmask 130048
        %v1598 = vsel %vm1597, %v1596, %v1590
        %vm1599 = vcmask 195584
        %v1600 = vsel %vm1599, %v1598, %v1594
        %v1601 = vld [vmem:[%s7] sm:$0xff]
        %v1602 = vld [vmem:[%s7 + $0x8] sm:$0xff]
        %v1603 = vld [vmem:[%s7 + $0x10] sm:$0xff]
        %v1604 = vld [vmem:[%s7 + $0x18] sm:$0xff]
        %v1605 = vld [vmem:[%s8] sm:$0x1]
        %v1607 = vlaneseq
        %v1608 = vshrl.u32 %v1607, 7
        %v1609 = vsub.s32 0, %v1608
        %v1610 = vrot.slane %v1605, %v1609
        %v1613 = vsel %vm794, %v1600, 0
        %1615 = vmatprep.subr.mxu0 0.0
        %1616 = vmatpush1.msra.mxu0 0.0
        %1617 = vmatprep.subr.mxu0 0.0
        %1618 = vmatpush1.msra.mxu0 0.0
        %1619 = vmatprep.subr.mxu0 0.0
        %1620 = vmatpush1.msra.mxu0 0.0
        %1621 = vmatprep.subr.mxu0 0.0
        %1622 = vmatpush1.msra.mxu0 0.0
        %1623 = vmatprep.subr.mxu0 0.0
        %1624 = vmatpush1.msra.mxu0 0.0
        %1625 = vmatprep.subr.mxu0 0.0
        %1626 = vmatpush1.msra.mxu0 0.0
        %1627 = vmatprep.subr.mxu0 0.0
        %1628 = vmatpush1.msra.mxu0 0.0
        %1629 = vmatprep.subr.mxu0 0.0
        %1630 = vmatpush1.msra.mxu0 0.0
        %1631 = vmatprep.subr.mxu0 0.0
        %1632 = vmatpush1.msra.mxu0 0.0
        %1633 = vmatprep.subr.mxu0 0.0
        %1634 = vmatpush1.msra.mxu0 0.0
        %1635 = vmatprep.subr.mxu0 0.0
        %1636 = vmatpush1.msra.mxu0 0.0
        %1637 = vmatprep.subr.mxu0 0.0
        %1638 = vmatpush1.msra.mxu0 0.0
        %1639 = vmatprep.subr.mxu0 0.0
        %1640 = vmatpush1.msra.mxu0 %v1604
        %1641 = vmatprep.subr.mxu0 0.0
        %1642 = vmatpush1.msra.mxu0 %v1603
        %1643 = vmatprep.subr.mxu0 0.0
        %1644 = vmatpush1.msra.mxu0 %v1602
        %1645 = vmatprep.subr.mxu0 0.0
        %1646 = vmatpush1.msra.mxu0 %v1601
        %1647 = vmatprep.subr.mxu0 0.0
        %1648 = vmatpush2.msra.mxu0 0.0
        %1649 = vmatprep.subr.mxu0 0.0
        %1650 = vmatpush2.msra.mxu0 0.0
        %1651 = vmatprep.subr.mxu0 0.0
        %1652 = vmatpush2.msra.mxu0 0.0
        %1653 = vmatprep.subr.mxu0 0.0
        %1654 = vmatpush2.msra.mxu0 0.0
        %1655 = vmatprep.subr.mxu0 0.0
        %1656 = vmatpush2.msra.mxu0 0.0
        %1657 = vmatprep.subr.mxu0 0.0
        %1658 = vmatpush2.msra.mxu0 0.0
        %1659 = vmatprep.subr.mxu0 0.0
        %1660 = vmatpush2.msra.mxu0 0.0
        %1661 = vmatprep.subr.mxu0 0.0
        %1662 = vmatpush2.msra.mxu0 0.0
        %1663 = vmatprep.subr.mxu0 0.0
        %1664 = vmatpush2.msra.mxu0 0.0
        %1665 = vmatprep.subr.mxu0 0.0
        %1666 = vmatpush2.msra.mxu0 0.0
        %1667 = vmatprep.subr.mxu0 0.0
        %1668 = vmatpush2.msra.mxu0 0.0
        %1669 = vmatprep.subr.mxu0 0.0
        %1670 = vmatpush2.msra.mxu0 0.0
        %1671 = vmatprep.subr.mxu0 0.0
        %1672 = vmatpush2.msra.mxu0 0.0
        %1673 = vmatprep.subr.mxu0 0.0
        %1674 = vmatpush2.msra.mxu0 0.0
        %1675 = vmatprep.subr.mxu0 0.0
        %1676 = vmatpush2.msra.mxu0 0.0
        %1677 = vmatprep.subr.mxu0 0.0
        %1678 = vmatpush2.msra.mxu0 0.0
        %1679 = vmatprep.mubr.f32.mxu0 0.0
        %1680 = vmatmul.mubr.f32.gmra.mxu0 %v1613
        %v1681 = vpop.f32.mrf.mxu0
        %v1682 = vadd.f32 %v1610, %v1681
        %v1683 = vpop.f32.mrf.mxu0
        %1684 = vdwg.mxu0
        %v1685 = vadd.f32 %v792, %v1682
        %v1686 = vsel %vm794, %v1685, 0.0
        %1687 = vadd.xlane.f32.xlu0 %v1686
        %v1688 = vpop.xlane.xlu0 %1687
        %v1689 = vmul.f32 %v1688, %v798
        %v1690 = vsub.f32 %v1685, %v1689
        %v1691 = vmul.f32 %v1690, %v1690
        %v1692 = vsel %vm794, %v1691, 0.0
        %1693 = vadd.xlane.f32.xlu0 %v1692
        %v1694 = vpop.xlane.xlu0 %1693
        %v1695 = vmul.f32 %v1694, %v798
        %v1696 = vadd.f32 %v1695, 1e-05
        %v1697 = vrsqrt.pop %v1696
        %v1698 = vmul.f32 %v1690, %v1697
        %v1699 = vld [vmem:[%s9] sm:$0x1]
        %v1701 = vlaneseq
        %v1702 = vshrl.u32 %v1701, 7
        %v1703 = vsub.s32 0, %v1702
        %v1704 = vrot.slane %v1699, %v1703
        %v1706 = vmul.f32 %v1698, %v1704
        %v1707 = vld [vmem:[%s10] sm:$0x1]
        %v1709 = vlaneseq
        %v1710 = vshrl.u32 %v1709, 7
        %v1711 = vsub.s32 0, %v1710
        %v1712 = vrot.slane %v1707, %v1711
        %v1714 = vadd.f32 %v1706, %v1712
        %v1715 = vld [vmem:[%s11] sm:$0xff]
        %v1716 = vld [vmem:[%s11 + $0x8] sm:$0xff]
        %v1717 = vld [vmem:[%s11 + $0x10] sm:$0xff]
        %v1718 = vld [vmem:[%s11 + $0x18] sm:$0xff]
        %v1719 = vld [vmem:[%s12] sm:$0x1]
        %v1721 = vlaneseq
        %v1722 = vshrl.u32 %v1721, 7
        %v1723 = vsub.s32 0, %v1722
        %v1724 = vrot.slane %v1719, %v1723
        %v1727 = vsel %vm794, %v1714, 0
        %1729 = vmatprep.subr.mxu0 0.0
        %1730 = vmatpush1.msra.mxu0 0.0
        %1731 = vmatprep.subr.mxu0 0.0
        %1732 = vmatpush1.msra.mxu0 0.0
        %1733 = vmatprep.subr.mxu0 0.0
        %1734 = vmatpush1.msra.mxu0 0.0
        %1735 = vmatprep.subr.mxu0 0.0
        %1736 = vmatpush1.msra.mxu0 0.0
        %1737 = vmatprep.subr.mxu0 0.0
        %1738 = vmatpush1.msra.mxu0 0.0
        %1739 = vmatprep.subr.mxu0 0.0
        %1740 = vmatpush1.msra.mxu0 0.0
        %1741 = vmatprep.subr.mxu0 0.0
        %1742 = vmatpush1.msra.mxu0 0.0
        %1743 = vmatprep.subr.mxu0 0.0
        %1744 = vmatpush1.msra.mxu0 0.0
        %1745 = vmatprep.subr.mxu0 0.0
        %1746 = vmatpush1.msra.mxu0 0.0
        %1747 = vmatprep.subr.mxu0 0.0
        %1748 = vmatpush1.msra.mxu0 0.0
        %1749 = vmatprep.subr.mxu0 0.0
        %1750 = vmatpush1.msra.mxu0 0.0
        %1751 = vmatprep.subr.mxu0 0.0
        %1752 = vmatpush1.msra.mxu0 0.0
        %1753 = vmatprep.subr.mxu0 0.0
        %1754 = vmatpush1.msra.mxu0 %v1718
        %1755 = vmatprep.subr.mxu0 0.0
        %1756 = vmatpush1.msra.mxu0 %v1717
        %1757 = vmatprep.subr.mxu0 0.0
        %1758 = vmatpush1.msra.mxu0 %v1716
        %1759 = vmatprep.subr.mxu0 0.0
        %1760 = vmatpush1.msra.mxu0 %v1715
        %1761 = vmatprep.subr.mxu0 0.0
        %1762 = vmatpush2.msra.mxu0 0.0
        %1763 = vmatprep.subr.mxu0 0.0
        %1764 = vmatpush2.msra.mxu0 0.0
        %1765 = vmatprep.subr.mxu0 0.0
        %1766 = vmatpush2.msra.mxu0 0.0
        %1767 = vmatprep.subr.mxu0 0.0
        %1768 = vmatpush2.msra.mxu0 0.0
        %1769 = vmatprep.subr.mxu0 0.0
        %1770 = vmatpush2.msra.mxu0 0.0
        %1771 = vmatprep.subr.mxu0 0.0
        %1772 = vmatpush2.msra.mxu0 0.0
        %1773 = vmatprep.subr.mxu0 0.0
        %1774 = vmatpush2.msra.mxu0 0.0
        %1775 = vmatprep.subr.mxu0 0.0
        %1776 = vmatpush2.msra.mxu0 0.0
        %1777 = vmatprep.subr.mxu0 0.0
        %1778 = vmatpush2.msra.mxu0 0.0
        %1779 = vmatprep.subr.mxu0 0.0
        %1780 = vmatpush2.msra.mxu0 0.0
        %1781 = vmatprep.subr.mxu0 0.0
        %1782 = vmatpush2.msra.mxu0 0.0
        %1783 = vmatprep.subr.mxu0 0.0
        %1784 = vmatpush2.msra.mxu0 0.0
        %1785 = vmatprep.subr.mxu0 0.0
        %1786 = vmatpush2.msra.mxu0 0.0
        %1787 = vmatprep.subr.mxu0 0.0
        %1788 = vmatpush2.msra.mxu0 0.0
        %1789 = vmatprep.subr.mxu0 0.0
        %1790 = vmatpush2.msra.mxu0 0.0
        %1791 = vmatprep.subr.mxu0 0.0
        %1792 = vmatpush2.msra.mxu0 0.0
        %1793 = vmatprep.mubr.f32.mxu0 0.0
        %1794 = vmatmul.mubr.f32.gmra.mxu0 %v1727
        %v1795 = vpop.f32.mrf.mxu0
        %v1796 = vadd.f32 %v1724, %v1795
        %v1797 = vpop.f32.mrf.mxu0
        %1798 = vdwg.mxu0
        %v1799 = vld [vmem:[%s13] sm:$0xff]
        %v1800 = vld [vmem:[%s13 + $0x8] sm:$0xff]
        %v1801 = vld [vmem:[%s13 + $0x10] sm:$0xff]
        %v1802 = vld [vmem:[%s13 + $0x18] sm:$0xff]
        %v1803 = vld [vmem:[%s14] sm:$0x1]
        %v1805 = vlaneseq
        %v1806 = vshrl.u32 %v1805, 7
        %v1807 = vsub.s32 0, %v1806
        %v1808 = vrot.slane %v1803, %v1807
        %v1811 = vsel %vm794, %v791, 0
        %1813 = vmatprep.subr.mxu0 0.0
        %1814 = vmatpush1.msra.mxu0 0.0
        %1815 = vmatprep.subr.mxu0 0.0
        %1816 = vmatpush1.msra.mxu0 0.0
        %1817 = vmatprep.subr.mxu0 0.0
        %1818 = vmatpush1.msra.mxu0 0.0
        %1819 = vmatprep.subr.mxu0 0.0
        %1820 = vmatpush1.msra.mxu0 0.0
        %1821 = vmatprep.subr.mxu0 0.0
        %1822 = vmatpush1.msra.mxu0 0.0
        %1823 = vmatprep.subr.mxu0 0.0
        %1824 = vmatpush1.msra.mxu0 0.0
        %1825 = vmatprep.subr.mxu0 0.0
        %1826 = vmatpush1.msra.mxu0 0.0
        %1827 = vmatprep.subr.mxu0 0.0
        %1828 = vmatpush1.msra.mxu0 0.0
        %1829 = vmatprep.subr.mxu0 0.0
        %1830 = vmatpush1.msra.mxu0 0.0
        %1831 = vmatprep.subr.mxu0 0.0
        %1832 = vmatpush1.msra.mxu0 0.0
        %1833 = vmatprep.subr.mxu0 0.0
        %1834 = vmatpush1.msra.mxu0 0.0
        %1835 = vmatprep.subr.mxu0 0.0
        %1836 = vmatpush1.msra.mxu0 0.0
        %1837 = vmatprep.subr.mxu0 0.0
        %1838 = vmatpush1.msra.mxu0 %v1802
        %1839 = vmatprep.subr.mxu0 0.0
        %1840 = vmatpush1.msra.mxu0 %v1801
        %1841 = vmatprep.subr.mxu0 0.0
        %1842 = vmatpush1.msra.mxu0 %v1800
        %1843 = vmatprep.subr.mxu0 0.0
        %1844 = vmatpush1.msra.mxu0 %v1799
        %1845 = vmatprep.subr.mxu0 0.0
        %1846 = vmatpush2.msra.mxu0 0.0
        %1847 = vmatprep.subr.mxu0 0.0
        %1848 = vmatpush2.msra.mxu0 0.0
        %1849 = vmatprep.subr.mxu0 0.0
        %1850 = vmatpush2.msra.mxu0 0.0
        %1851 = vmatprep.subr.mxu0 0.0
        %1852 = vmatpush2.msra.mxu0 0.0
        %1853 = vmatprep.subr.mxu0 0.0
        %1854 = vmatpush2.msra.mxu0 0.0
        %1855 = vmatprep.subr.mxu0 0.0
        %1856 = vmatpush2.msra.mxu0 0.0
        %1857 = vmatprep.subr.mxu0 0.0
        %1858 = vmatpush2.msra.mxu0 0.0
        %1859 = vmatprep.subr.mxu0 0.0
        %1860 = vmatpush2.msra.mxu0 0.0
        %1861 = vmatprep.subr.mxu0 0.0
        %1862 = vmatpush2.msra.mxu0 0.0
        %1863 = vmatprep.subr.mxu0 0.0
        %1864 = vmatpush2.msra.mxu0 0.0
        %1865 = vmatprep.subr.mxu0 0.0
        %1866 = vmatpush2.msra.mxu0 0.0
        %1867 = vmatprep.subr.mxu0 0.0
        %1868 = vmatpush2.msra.mxu0 0.0
        %1869 = vmatprep.subr.mxu0 0.0
        %1870 = vmatpush2.msra.mxu0 0.0
        %1871 = vmatprep.subr.mxu0 0.0
        %1872 = vmatpush2.msra.mxu0 0.0
        %1873 = vmatprep.subr.mxu0 0.0
        %1874 = vmatpush2.msra.mxu0 0.0
        %1875 = vmatprep.subr.mxu0 0.0
        %1876 = vmatpush2.msra.mxu0 0.0
        %1877 = vmatprep.mubr.f32.mxu0 0.0
        %1878 = vmatmul.mubr.f32.gmra.mxu0 %v1811
        %v1879 = vpop.f32.mrf.mxu0
        %v1880 = vadd.f32 %v1808, %v1879
        %v1881 = vpop.f32.mrf.mxu0
        %1882 = vdwg.mxu0
        %v1884 = vsel %vm912, %v1796, 0
        %v1887 = vsel %vm912, %v1880, 0
        %1889 = vmatprep.subr.mxu0 0.0
        %1890 = vmatpush1.xpose.msra.mxu0 0.0
        %1891 = vmatprep.subr.mxu0 0.0
        %1892 = vmatpush1.xpose.msra.mxu0 0.0
        %1893 = vmatprep.subr.mxu0 0.0
        %1894 = vmatpush1.xpose.msra.mxu0 0.0
        %1895 = vmatprep.subr.mxu0 0.0
        %1896 = vmatpush1.xpose.msra.mxu0 0.0
        %1897 = vmatprep.subr.mxu0 0.0
        %1898 = vmatpush1.xpose.msra.mxu0 0.0
        %1899 = vmatprep.subr.mxu0 0.0
        %1900 = vmatpush1.xpose.msra.mxu0 0.0
        %1901 = vmatprep.subr.mxu0 0.0
        %1902 = vmatpush1.xpose.msra.mxu0 0.0
        %1903 = vmatprep.subr.mxu0 0.0
        %1904 = vmatpush1.xpose.msra.mxu0 0.0
        %1905 = vmatprep.subr.mxu0 0.0
        %1906 = vmatpush1.xpose.msra.mxu0 0.0
        %1907 = vmatprep.subr.mxu0 0.0
        %1908 = vmatpush1.xpose.msra.mxu0 0.0
        %1909 = vmatprep.subr.mxu0 0.0
        %1910 = vmatpush1.xpose.msra.mxu0 0.0
        %1911 = vmatprep.subr.mxu0 0.0
        %1912 = vmatpush1.xpose.msra.mxu0 0.0
        %1913 = vmatprep.subr.mxu0 0.0
        %1914 = vmatpush1.xpose.msra.mxu0 0.0
        %1915 = vmatprep.subr.mxu0 0.0
        %1916 = vmatpush1.xpose.msra.mxu0 0.0
        %1917 = vmatprep.subr.mxu0 0.0
        %1918 = vmatpush1.xpose.msra.mxu0 0.0
        %1919 = vmatprep.subr.mxu0 0.0
        %1920 = vmatpush1.xpose.msra.mxu0 %v1887
        %1921 = vmatprep.subr.mxu0 0.0
        %1922 = vmatpush2.xpose.msra.mxu0 0.0
        %1923 = vmatprep.subr.mxu0 0.0
        %1924 = vmatpush2.xpose.msra.mxu0 0.0
        %1925 = vmatprep.subr.mxu0 0.0
        %1926 = vmatpush2.xpose.msra.mxu0 0.0
        %1927 = vmatprep.subr.mxu0 0.0
        %1928 = vmatpush2.xpose.msra.mxu0 0.0
        %1929 = vmatprep.subr.mxu0 0.0
        %1930 = vmatpush2.xpose.msra.mxu0 0.0
        %1931 = vmatprep.subr.mxu0 0.0
        %1932 = vmatpush2.xpose.msra.mxu0 0.0
        %1933 = vmatprep.subr.mxu0 0.0
        %1934 = vmatpush2.xpose.msra.mxu0 0.0
        %1935 = vmatprep.subr.mxu0 0.0
        %1936 = vmatpush2.xpose.msra.mxu0 0.0
        %1937 = vmatprep.subr.mxu0 0.0
        %1938 = vmatpush2.xpose.msra.mxu0 0.0
        %1939 = vmatprep.subr.mxu0 0.0
        %1940 = vmatpush2.xpose.msra.mxu0 0.0
        %1941 = vmatprep.subr.mxu0 0.0
        %1942 = vmatpush2.xpose.msra.mxu0 0.0
        %1943 = vmatprep.subr.mxu0 0.0
        %1944 = vmatpush2.xpose.msra.mxu0 0.0
        %1945 = vmatprep.subr.mxu0 0.0
        %1946 = vmatpush2.xpose.msra.mxu0 0.0
        %1947 = vmatprep.subr.mxu0 0.0
        %1948 = vmatpush2.xpose.msra.mxu0 0.0
        %1949 = vmatprep.subr.mxu0 0.0
        %1950 = vmatpush2.xpose.msra.mxu0 0.0
        %1951 = vmatprep.subr.mxu0 0.0
        %1952 = vmatpush2.xpose.msra.mxu0 0.0
        %1953 = vmatprep.mubr.f32.mxu0 0.0
        %1954 = vmatmul.mubr.f32.gmra.mxu0 %v1884
        %v1955 = vpop.f32.mrf.mxu0
        %v1956 = vadd.f32 0.0, %v1955
        %v1957 = vpop.f32.mrf.mxu0
        %1958 = vdwg.mxu0
        %v1959 = vmul.f32 %v1956, 0.35355338
        %v1960 = vsel %vm912, %v1959, -inf
        %1961 = vmax.xlane.f32.xlu0 %v1960
        %v1962 = vpop.xlane.xlu0 %1961
        %v1963 = vsub.f32 %v1959, %v1962
        %v1964 = vmul.f32 %v1963, 1.442695
        %v1965 = vpow.pop %v1964
        %v1966 = vsel %vm912, %v1965, 0.0
        %1967 = vadd.xlane.f32.xlu0 %v1966
        %v1968 = vpop.xlane.xlu0 %1967
        %v1969 = vrcp.pop %v1968
        %v1970 = vmul.f32 %v1965, %v1969
        %1971 = vrot.lane.b32.xlu0 %v1880, 96
        %v1972 = vpop.permute.xlu0 %1971
        %v1975 = vsel %vm912, %v1970, 0
        %1977 = vmatprep.subr.mxu0 0.0
        %1978 = vmatpush1.msra.mxu0 0.0
        %1979 = vmatprep.subr.mxu0 0.0
        %1980 = vmatpush1.msra.mxu0 0.0
        %1981 = vmatprep.subr.mxu0 0.0
        %1982 = vmatpush1.msra.mxu0 0.0
        %1983 = vmatprep.subr.mxu0 0.0
        %1984 = vmatpush1.msra.mxu0 0.0
        %1985 = vmatprep.subr.mxu0 0.0
        %1986 = vmatpush1.msra.mxu0 0.0
        %1987 = vmatprep.subr.mxu0 0.0
        %1988 = vmatpush1.msra.mxu0 0.0
        %1989 = vmatprep.subr.mxu0 0.0
        %1990 = vmatpush1.msra.mxu0 0.0
        %1991 = vmatprep.subr.mxu0 0.0
        %1992 = vmatpush1.msra.mxu0 0.0
        %1993 = vmatprep.subr.mxu0 0.0
        %1994 = vmatpush1.msra.mxu0 0.0
        %1995 = vmatprep.subr.mxu0 0.0
        %1996 = vmatpush1.msra.mxu0 0.0
        %1997 = vmatprep.subr.mxu0 0.0
        %1998 = vmatpush1.msra.mxu0 0.0
        %1999 = vmatprep.subr.mxu0 0.0
        %2000 = vmatpush1.msra.mxu0 0.0
        %2001 = vmatprep.subr.mxu0 0.0
        %2002 = vmatpush1.msra.mxu0 0.0
        %2003 = vmatprep.subr.mxu0 0.0
        %2004 = vmatpush1.msra.mxu0 0.0
        %2005 = vmatprep.subr.mxu0 0.0
        %2006 = vmatpush1.msra.mxu0 0.0
        %2007 = vmatprep.subr.mxu0 0.0
        %2008 = vmatpush1.msra.mxu0 %v1972
        %2009 = vmatprep.subr.mxu0 0.0
        %2010 = vmatpush2.msra.mxu0 0.0
        %2011 = vmatprep.subr.mxu0 0.0
        %2012 = vmatpush2.msra.mxu0 0.0
        %2013 = vmatprep.subr.mxu0 0.0
        %2014 = vmatpush2.msra.mxu0 0.0
        %2015 = vmatprep.subr.mxu0 0.0
        %2016 = vmatpush2.msra.mxu0 0.0
        %2017 = vmatprep.subr.mxu0 0.0
        %2018 = vmatpush2.msra.mxu0 0.0
        %2019 = vmatprep.subr.mxu0 0.0
        %2020 = vmatpush2.msra.mxu0 0.0
        %2021 = vmatprep.subr.mxu0 0.0
        %2022 = vmatpush2.msra.mxu0 0.0
        %2023 = vmatprep.subr.mxu0 0.0
        %2024 = vmatpush2.msra.mxu0 0.0
        %2025 = vmatprep.subr.mxu0 0.0
        %2026 = vmatpush2.msra.mxu0 0.0
        %2027 = vmatprep.subr.mxu0 0.0
        %2028 = vmatpush2.msra.mxu0 0.0
        %2029 = vmatprep.subr.mxu0 0.0
        %2030 = vmatpush2.msra.mxu0 0.0
        %2031 = vmatprep.subr.mxu0 0.0
        %2032 = vmatpush2.msra.mxu0 0.0
        %2033 = vmatprep.subr.mxu0 0.0
        %2034 = vmatpush2.msra.mxu0 0.0
        %2035 = vmatprep.subr.mxu0 0.0
        %2036 = vmatpush2.msra.mxu0 0.0
        %2037 = vmatprep.subr.mxu0 0.0
        %2038 = vmatpush2.msra.mxu0 0.0
        %2039 = vmatprep.subr.mxu0 0.0
        %2040 = vmatpush2.msra.mxu0 0.0
        %2041 = vmatprep.mubr.f32.mxu0 0.0
        %2042 = vmatmul.mubr.f32.gmra.mxu0 %v1975
        %v2043 = vpop.f32.mrf.mxu0
        %v2044 = vadd.f32 0.0, %v2043
        %v2045 = vpop.f32.mrf.mxu0
        %2046 = vdwg.mxu0
        %2047 = vrot.lane.b32.xlu0 %v1796, 120
        %v2048 = vpop.permute.xlu0 %2047
        %2049 = vrot.lane.b32.xlu0 %v1880, 120
        %v2050 = vpop.permute.xlu0 %2049
        %v2051 = vsel %vm912, %v2048, 0
        %v2053 = vsel %vm912, %v2050, 0
        %2055 = vmatprep.subr.mxu0 0.0
        %2056 = vmatpush1.xpose.msra.mxu0 0.0
        %2057 = vmatprep.subr.mxu0 0.0
        %2058 = vmatpush1.xpose.msra.mxu0 0.0
        %2059 = vmatprep.subr.mxu0 0.0
        %2060 = vmatpush1.xpose.msra.mxu0 0.0
        %2061 = vmatprep.subr.mxu0 0.0
        %2062 = vmatpush1.xpose.msra.mxu0 0.0
        %2063 = vmatprep.subr.mxu0 0.0
        %2064 = vmatpush1.xpose.msra.mxu0 0.0
        %2065 = vmatprep.subr.mxu0 0.0
        %2066 = vmatpush1.xpose.msra.mxu0 0.0
        %2067 = vmatprep.subr.mxu0 0.0
        %2068 = vmatpush1.xpose.msra.mxu0 0.0
        %2069 = vmatprep.subr.mxu0 0.0
        %2070 = vmatpush1.xpose.msra.mxu0 0.0
        %2071 = vmatprep.subr.mxu0 0.0
        %2072 = vmatpush1.xpose.msra.mxu0 0.0
        %2073 = vmatprep.subr.mxu0 0.0
        %2074 = vmatpush1.xpose.msra.mxu0 0.0
        %2075 = vmatprep.subr.mxu0 0.0
        %2076 = vmatpush1.xpose.msra.mxu0 0.0
        %2077 = vmatprep.subr.mxu0 0.0
        %2078 = vmatpush1.xpose.msra.mxu0 0.0
        %2079 = vmatprep.subr.mxu0 0.0
        %2080 = vmatpush1.xpose.msra.mxu0 0.0
        %2081 = vmatprep.subr.mxu0 0.0
        %2082 = vmatpush1.xpose.msra.mxu0 0.0
        %2083 = vmatprep.subr.mxu0 0.0
        %2084 = vmatpush1.xpose.msra.mxu0 0.0
        %2085 = vmatprep.subr.mxu0 0.0
        %2086 = vmatpush1.xpose.msra.mxu0 %v2053
        %2087 = vmatprep.subr.mxu0 0.0
        %2088 = vmatpush2.xpose.msra.mxu0 0.0
        %2089 = vmatprep.subr.mxu0 0.0
        %2090 = vmatpush2.xpose.msra.mxu0 0.0
        %2091 = vmatprep.subr.mxu0 0.0
        %2092 = vmatpush2.xpose.msra.mxu0 0.0
        %2093 = vmatprep.subr.mxu0 0.0
        %2094 = vmatpush2.xpose.msra.mxu0 0.0
        %2095 = vmatprep.subr.mxu0 0.0
        %2096 = vmatpush2.xpose.msra.mxu0 0.0
        %2097 = vmatprep.subr.mxu0 0.0
        %2098 = vmatpush2.xpose.msra.mxu0 0.0
        %2099 = vmatprep.subr.mxu0 0.0
        %2100 = vmatpush2.xpose.msra.mxu0 0.0
        %2101 = vmatprep.subr.mxu0 0.0
        %2102 = vmatpush2.xpose.msra.mxu0 0.0
        %2103 = vmatprep.subr.mxu0 0.0
        %2104 = vmatpush2.xpose.msra.mxu0 0.0
        %2105 = vmatprep.subr.mxu0 0.0
        %2106 = vmatpush2.xpose.msra.mxu0 0.0
        %2107 = vmatprep.subr.mxu0 0.0
        %2108 = vmatpush2.xpose.msra.mxu0 0.0
        %2109 = vmatprep.subr.mxu0 0.0
        %2110 = vmatpush2.xpose.msra.mxu0 0.0
        %2111 = vmatprep.subr.mxu0 0.0
        %2112 = vmatpush2.xpose.msra.mxu0 0.0
        %2113 = vmatprep.subr.mxu0 0.0
        %2114 = vmatpush2.xpose.msra.mxu0 0.0
        %2115 = vmatprep.subr.mxu0 0.0
        %2116 = vmatpush2.xpose.msra.mxu0 0.0
        %2117 = vmatprep.subr.mxu0 0.0
        %2118 = vmatpush2.xpose.msra.mxu0 0.0
        %2119 = vmatprep.mubr.f32.mxu0 0.0
        %2120 = vmatmul.mubr.f32.gmra.mxu0 %v2051
        %v2121 = vpop.f32.mrf.mxu0
        %v2122 = vadd.f32 0.0, %v2121
        %v2123 = vpop.f32.mrf.mxu0
        %2124 = vdwg.mxu0
        %v2125 = vmul.f32 %v2122, 0.35355338
        %v2126 = vsel %vm912, %v2125, -inf
        %2127 = vmax.xlane.f32.xlu0 %v2126
        %v2128 = vpop.xlane.xlu0 %2127
        %v2129 = vsub.f32 %v2125, %v2128
        %v2130 = vmul.f32 %v2129, 1.442695
        %v2131 = vpow.pop %v2130
        %v2132 = vsel %vm912, %v2131, 0.0
        %2133 = vadd.xlane.f32.xlu0 %v2132
        %v2134 = vpop.xlane.xlu0 %2133
        %v2135 = vrcp.pop %v2134
        %v2136 = vmul.f32 %v2131, %v2135
        %2137 = vrot.lane.b32.xlu0 %v1880, 88
        %v2138 = vpop.permute.xlu0 %2137
        %v2141 = vsel %vm912, %v2136, 0
        %2143 = vmatprep.subr.mxu0 0.0
        %2144 = vmatpush1.msra.mxu0 0.0
        %2145 = vmatprep.subr.mxu0 0.0
        %2146 = vmatpush1.msra.mxu0 0.0
        %2147 = vmatprep.subr.mxu0 0.0
        %2148 = vmatpush1.msra.mxu0 0.0
        %2149 = vmatprep.subr.mxu0 0.0
        %2150 = vmatpush1.msra.mxu0 0.0
        %2151 = vmatprep.subr.mxu0 0.0
        %2152 = vmatpush1.msra.mxu0 0.0
        %2153 = vmatprep.subr.mxu0 0.0
        %2154 = vmatpush1.msra.mxu0 0.0
        %2155 = vmatprep.subr.mxu0 0.0
        %2156 = vmatpush1.msra.mxu0 0.0
        %2157 = vmatprep.subr.mxu0 0.0
        %2158 = vmatpush1.msra.mxu0 0.0
        %2159 = vmatprep.subr.mxu0 0.0
        %2160 = vmatpush1.msra.mxu0 0.0
        %2161 = vmatprep.subr.mxu0 0.0
        %2162 = vmatpush1.msra.mxu0 0.0
        %2163 = vmatprep.subr.mxu0 0.0
        %2164 = vmatpush1.msra.mxu0 0.0
        %2165 = vmatprep.subr.mxu0 0.0
        %2166 = vmatpush1.msra.mxu0 0.0
        %2167 = vmatprep.subr.mxu0 0.0
        %2168 = vmatpush1.msra.mxu0 0.0
        %2169 = vmatprep.subr.mxu0 0.0
        %2170 = vmatpush1.msra.mxu0 0.0
        %2171 = vmatprep.subr.mxu0 0.0
        %2172 = vmatpush1.msra.mxu0 0.0
        %2173 = vmatprep.subr.mxu0 0.0
        %2174 = vmatpush1.msra.mxu0 %v2138
        %2175 = vmatprep.subr.mxu0 0.0
        %2176 = vmatpush2.msra.mxu0 0.0
        %2177 = vmatprep.subr.mxu0 0.0
        %2178 = vmatpush2.msra.mxu0 0.0
        %2179 = vmatprep.subr.mxu0 0.0
        %2180 = vmatpush2.msra.mxu0 0.0
        %2181 = vmatprep.subr.mxu0 0.0
        %2182 = vmatpush2.msra.mxu0 0.0
        %2183 = vmatprep.subr.mxu0 0.0
        %2184 = vmatpush2.msra.mxu0 0.0
        %2185 = vmatprep.subr.mxu0 0.0
        %2186 = vmatpush2.msra.mxu0 0.0
        %2187 = vmatprep.subr.mxu0 0.0
        %2188 = vmatpush2.msra.mxu0 0.0
        %2189 = vmatprep.subr.mxu0 0.0
        %2190 = vmatpush2.msra.mxu0 0.0
        %2191 = vmatprep.subr.mxu0 0.0
        %2192 = vmatpush2.msra.mxu0 0.0
        %2193 = vmatprep.subr.mxu0 0.0
        %2194 = vmatpush2.msra.mxu0 0.0
        %2195 = vmatprep.subr.mxu0 0.0
        %2196 = vmatpush2.msra.mxu0 0.0
        %2197 = vmatprep.subr.mxu0 0.0
        %2198 = vmatpush2.msra.mxu0 0.0
        %2199 = vmatprep.subr.mxu0 0.0
        %2200 = vmatpush2.msra.mxu0 0.0
        %2201 = vmatprep.subr.mxu0 0.0
        %2202 = vmatpush2.msra.mxu0 0.0
        %2203 = vmatprep.subr.mxu0 0.0
        %2204 = vmatpush2.msra.mxu0 0.0
        %2205 = vmatprep.subr.mxu0 0.0
        %2206 = vmatpush2.msra.mxu0 0.0
        %2207 = vmatprep.mubr.f32.mxu0 0.0
        %2208 = vmatmul.mubr.f32.gmra.mxu0 %v2141
        %v2209 = vpop.f32.mrf.mxu0
        %v2210 = vadd.f32 0.0, %v2209
        %v2211 = vpop.f32.mrf.mxu0
        %2212 = vdwg.mxu0
        %2213 = vrot.lane.b32.xlu0 %v1796, 112
        %v2214 = vpop.permute.xlu0 %2213
        %2215 = vrot.lane.b32.xlu0 %v1880, 112
        %v2216 = vpop.permute.xlu0 %2215
        %v2217 = vsel %vm912, %v2214, 0
        %v2219 = vsel %vm912, %v2216, 0
        %2221 = vmatprep.subr.mxu0 0.0
        %2222 = vmatpush1.xpose.msra.mxu0 0.0
        %2223 = vmatprep.subr.mxu0 0.0
        %2224 = vmatpush1.xpose.msra.mxu0 0.0
        %2225 = vmatprep.subr.mxu0 0.0
        %2226 = vmatpush1.xpose.msra.mxu0 0.0
        %2227 = vmatprep.subr.mxu0 0.0
        %2228 = vmatpush1.xpose.msra.mxu0 0.0
        %2229 = vmatprep.subr.mxu0 0.0
        %2230 = vmatpush1.xpose.msra.mxu0 0.0
        %2231 = vmatprep.subr.mxu0 0.0
        %2232 = vmatpush1.xpose.msra.mxu0 0.0
        %2233 = vmatprep.subr.mxu0 0.0
        %2234 = vmatpush1.xpose.msra.mxu0 0.0
        %2235 = vmatprep.subr.mxu0 0.0
        %2236 = vmatpush1.xpose.msra.mxu0 0.0
        %2237 = vmatprep.subr.mxu0 0.0
        %2238 = vmatpush1.xpose.msra.mxu0 0.0
        %2239 = vmatprep.subr.mxu0 0.0
        %2240 = vmatpush1.xpose.msra.mxu0 0.0
        %2241 = vmatprep.subr.mxu0 0.0
        %2242 = vmatpush1.xpose.msra.mxu0 0.0
        %2243 = vmatprep.subr.mxu0 0.0
        %2244 = vmatpush1.xpose.msra.mxu0 0.0
        %2245 = vmatprep.subr.mxu0 0.0
        %2246 = vmatpush1.xpose.msra.mxu0 0.0
        %2247 = vmatprep.subr.mxu0 0.0
        %2248 = vmatpush1.xpose.msra.mxu0 0.0
        %2249 = vmatprep.subr.mxu0 0.0
        %2250 = vmatpush1.xpose.msra.mxu0 0.0
        %2251 = vmatprep.subr.mxu0 0.0
        %2252 = vmatpush1.xpose.msra.mxu0 %v2219
        %2253 = vmatprep.subr.mxu0 0.0
        %2254 = vmatpush2.xpose.msra.mxu0 0.0
        %2255 = vmatprep.subr.mxu0 0.0
        %2256 = vmatpush2.xpose.msra.mxu0 0.0
        %2257 = vmatprep.subr.mxu0 0.0
        %2258 = vmatpush2.xpose.msra.mxu0 0.0
        %2259 = vmatprep.subr.mxu0 0.0
        %2260 = vmatpush2.xpose.msra.mxu0 0.0
        %2261 = vmatprep.subr.mxu0 0.0
        %2262 = vmatpush2.xpose.msra.mxu0 0.0
        %2263 = vmatprep.subr.mxu0 0.0
        %2264 = vmatpush2.xpose.msra.mxu0 0.0
        %2265 = vmatprep.subr.mxu0 0.0
        %2266 = vmatpush2.xpose.msra.mxu0 0.0
        %2267 = vmatprep.subr.mxu0 0.0
        %2268 = vmatpush2.xpose.msra.mxu0 0.0
        %2269 = vmatprep.subr.mxu0 0.0
        %2270 = vmatpush2.xpose.msra.mxu0 0.0
        %2271 = vmatprep.subr.mxu0 0.0
        %2272 = vmatpush2.xpose.msra.mxu0 0.0
        %2273 = vmatprep.subr.mxu0 0.0
        %2274 = vmatpush2.xpose.msra.mxu0 0.0
        %2275 = vmatprep.subr.mxu0 0.0
        %2276 = vmatpush2.xpose.msra.mxu0 0.0
        %2277 = vmatprep.subr.mxu0 0.0
        %2278 = vmatpush2.xpose.msra.mxu0 0.0
        %2279 = vmatprep.subr.mxu0 0.0
        %2280 = vmatpush2.xpose.msra.mxu0 0.0
        %2281 = vmatprep.subr.mxu0 0.0
        %2282 = vmatpush2.xpose.msra.mxu0 0.0
        %2283 = vmatprep.subr.mxu0 0.0
        %2284 = vmatpush2.xpose.msra.mxu0 0.0
        %2285 = vmatprep.mubr.f32.mxu0 0.0
        %2286 = vmatmul.mubr.f32.gmra.mxu0 %v2217
        %v2287 = vpop.f32.mrf.mxu0
        %v2288 = vadd.f32 0.0, %v2287
        %v2289 = vpop.f32.mrf.mxu0
        %2290 = vdwg.mxu0
        %v2291 = vmul.f32 %v2288, 0.35355338
        %v2292 = vsel %vm912, %v2291, -inf
        %2293 = vmax.xlane.f32.xlu0 %v2292
        %v2294 = vpop.xlane.xlu0 %2293
        %v2295 = vsub.f32 %v2291, %v2294
        %v2296 = vmul.f32 %v2295, 1.442695
        %v2297 = vpow.pop %v2296
        %v2298 = vsel %vm912, %v2297, 0.0
        %2299 = vadd.xlane.f32.xlu0 %v2298
        %v2300 = vpop.xlane.xlu0 %2299
        %v2301 = vrcp.pop %v2300
        %v2302 = vmul.f32 %v2297, %v2301
        %2303 = vrot.lane.b32.xlu0 %v1880, 80
        %v2304 = vpop.permute.xlu0 %2303
        %v2307 = vsel %vm912, %v2302, 0
        %2309 = vmatprep.subr.mxu0 0.0
        %2310 = vmatpush1.msra.mxu0 0.0
        %2311 = vmatprep.subr.mxu0 0.0
        %2312 = vmatpush1.msra.mxu0 0.0
        %2313 = vmatprep.subr.mxu0 0.0
        %2314 = vmatpush1.msra.mxu0 0.0
        %2315 = vmatprep.subr.mxu0 0.0
        %2316 = vmatpush1.msra.mxu0 0.0
        %2317 = vmatprep.subr.mxu0 0.0
        %2318 = vmatpush1.msra.mxu0 0.0
        %2319 = vmatprep.subr.mxu0 0.0
        %2320 = vmatpush1.msra.mxu0 0.0
        %2321 = vmatprep.subr.mxu0 0.0
        %2322 = vmatpush1.msra.mxu0 0.0
        %2323 = vmatprep.subr.mxu0 0.0
        %2324 = vmatpush1.msra.mxu0 0.0
        %2325 = vmatprep.subr.mxu0 0.0
        %2326 = vmatpush1.msra.mxu0 0.0
        %2327 = vmatprep.subr.mxu0 0.0
        %2328 = vmatpush1.msra.mxu0 0.0
        %2329 = vmatprep.subr.mxu0 0.0
        %2330 = vmatpush1.msra.mxu0 0.0
        %2331 = vmatprep.subr.mxu0 0.0
        %2332 = vmatpush1.msra.mxu0 0.0
        %2333 = vmatprep.subr.mxu0 0.0
        %2334 = vmatpush1.msra.mxu0 0.0
        %2335 = vmatprep.subr.mxu0 0.0
        %2336 = vmatpush1.msra.mxu0 0.0
        %2337 = vmatprep.subr.mxu0 0.0
        %2338 = vmatpush1.msra.mxu0 0.0
        %2339 = vmatprep.subr.mxu0 0.0
        %2340 = vmatpush1.msra.mxu0 %v2304
        %2341 = vmatprep.subr.mxu0 0.0
        %2342 = vmatpush2.msra.mxu0 0.0
        %2343 = vmatprep.subr.mxu0 0.0
        %2344 = vmatpush2.msra.mxu0 0.0
        %2345 = vmatprep.subr.mxu0 0.0
        %2346 = vmatpush2.msra.mxu0 0.0
        %2347 = vmatprep.subr.mxu0 0.0
        %2348 = vmatpush2.msra.mxu0 0.0
        %2349 = vmatprep.subr.mxu0 0.0
        %2350 = vmatpush2.msra.mxu0 0.0
        %2351 = vmatprep.subr.mxu0 0.0
        %2352 = vmatpush2.msra.mxu0 0.0
        %2353 = vmatprep.subr.mxu0 0.0
        %2354 = vmatpush2.msra.mxu0 0.0
        %2355 = vmatprep.subr.mxu0 0.0
        %2356 = vmatpush2.msra.mxu0 0.0
        %2357 = vmatprep.subr.mxu0 0.0
        %2358 = vmatpush2.msra.mxu0 0.0
        %2359 = vmatprep.subr.mxu0 0.0
        %2360 = vmatpush2.msra.mxu0 0.0
        %2361 = vmatprep.subr.mxu0 0.0
        %2362 = vmatpush2.msra.mxu0 0.0
        %2363 = vmatprep.subr.mxu0 0.0
        %2364 = vmatpush2.msra.mxu0 0.0
        %2365 = vmatprep.subr.mxu0 0.0
        %2366 = vmatpush2.msra.mxu0 0.0
        %2367 = vmatprep.subr.mxu0 0.0
        %2368 = vmatpush2.msra.mxu0 0.0
        %2369 = vmatprep.subr.mxu0 0.0
        %2370 = vmatpush2.msra.mxu0 0.0
        %2371 = vmatprep.subr.mxu0 0.0
        %2372 = vmatpush2.msra.mxu0 0.0
        %2373 = vmatprep.mubr.f32.mxu0 0.0
        %2374 = vmatmul.mubr.f32.gmra.mxu0 %v2307
        %v2375 = vpop.f32.mrf.mxu0
        %v2376 = vadd.f32 0.0, %v2375
        %v2377 = vpop.f32.mrf.mxu0
        %2378 = vdwg.mxu0
        %2379 = vrot.lane.b32.xlu0 %v1796, 104
        %v2380 = vpop.permute.xlu0 %2379
        %2381 = vrot.lane.b32.xlu0 %v1880, 104
        %v2382 = vpop.permute.xlu0 %2381
        %v2383 = vsel %vm912, %v2380, 0
        %v2385 = vsel %vm912, %v2382, 0
        %2387 = vmatprep.subr.mxu0 0.0
        %2388 = vmatpush1.xpose.msra.mxu0 0.0
        %2389 = vmatprep.subr.mxu0 0.0
        %2390 = vmatpush1.xpose.msra.mxu0 0.0
        %2391 = vmatprep.subr.mxu0 0.0
        %2392 = vmatpush1.xpose.msra.mxu0 0.0
        %2393 = vmatprep.subr.mxu0 0.0
        %2394 = vmatpush1.xpose.msra.mxu0 0.0
        %2395 = vmatprep.subr.mxu0 0.0
        %2396 = vmatpush1.xpose.msra.mxu0 0.0
        %2397 = vmatprep.subr.mxu0 0.0
        %2398 = vmatpush1.xpose.msra.mxu0 0.0
        %2399 = vmatprep.subr.mxu0 0.0
        %2400 = vmatpush1.xpose.msra.mxu0 0.0
        %2401 = vmatprep.subr.mxu0 0.0
        %2402 = vmatpush1.xpose.msra.mxu0 0.0
        %2403 = vmatprep.subr.mxu0 0.0
        %2404 = vmatpush1.xpose.msra.mxu0 0.0
        %2405 = vmatprep.subr.mxu0 0.0
        %2406 = vmatpush1.xpose.msra.mxu0 0.0
        %2407 = vmatprep.subr.mxu0 0.0
        %2408 = vmatpush1.xpose.msra.mxu0 0.0
        %2409 = vmatprep.subr.mxu0 0.0
        %2410 = vmatpush1.xpose.msra.mxu0 0.0
        %2411 = vmatprep.subr.mxu0 0.0
        %2412 = vmatpush1.xpose.msra.mxu0 0.0
        %2413 = vmatprep.subr.mxu0 0.0
        %2414 = vmatpush1.xpose.msra.mxu0 0.0
        %2415 = vmatprep.subr.mxu0 0.0
        %2416 = vmatpush1.xpose.msra.mxu0 0.0
        %2417 = vmatprep.subr.mxu0 0.0
        %2418 = vmatpush1.xpose.msra.mxu0 %v2385
        %2419 = vmatprep.subr.mxu0 0.0
        %2420 = vmatpush2.xpose.msra.mxu0 0.0
        %2421 = vmatprep.subr.mxu0 0.0
        %2422 = vmatpush2.xpose.msra.mxu0 0.0
        %2423 = vmatprep.subr.mxu0 0.0
        %2424 = vmatpush2.xpose.msra.mxu0 0.0
        %2425 = vmatprep.subr.mxu0 0.0
        %2426 = vmatpush2.xpose.msra.mxu0 0.0
        %2427 = vmatprep.subr.mxu0 0.0
        %2428 = vmatpush2.xpose.msra.mxu0 0.0
        %2429 = vmatprep.subr.mxu0 0.0
        %2430 = vmatpush2.xpose.msra.mxu0 0.0
        %2431 = vmatprep.subr.mxu0 0.0
        %2432 = vmatpush2.xpose.msra.mxu0 0.0
        %2433 = vmatprep.subr.mxu0 0.0
        %2434 = vmatpush2.xpose.msra.mxu0 0.0
        %2435 = vmatprep.subr.mxu0 0.0
        %2436 = vmatpush2.xpose.msra.mxu0 0.0
        %2437 = vmatprep.subr.mxu0 0.0
        %2438 = vmatpush2.xpose.msra.mxu0 0.0
        %2439 = vmatprep.subr.mxu0 0.0
        %2440 = vmatpush2.xpose.msra.mxu0 0.0
        %2441 = vmatprep.subr.mxu0 0.0
        %2442 = vmatpush2.xpose.msra.mxu0 0.0
        %2443 = vmatprep.subr.mxu0 0.0
        %2444 = vmatpush2.xpose.msra.mxu0 0.0
        %2445 = vmatprep.subr.mxu0 0.0
        %2446 = vmatpush2.xpose.msra.mxu0 0.0
        %2447 = vmatprep.subr.mxu0 0.0
        %2448 = vmatpush2.xpose.msra.mxu0 0.0
        %2449 = vmatprep.subr.mxu0 0.0
        %2450 = vmatpush2.xpose.msra.mxu0 0.0
        %2451 = vmatprep.mubr.f32.mxu0 0.0
        %2452 = vmatmul.mubr.f32.gmra.mxu0 %v2383
        %v2453 = vpop.f32.mrf.mxu0
        %v2454 = vadd.f32 0.0, %v2453
        %v2455 = vpop.f32.mrf.mxu0
        %2456 = vdwg.mxu0
        %v2457 = vmul.f32 %v2454, 0.35355338
        %v2458 = vsel %vm912, %v2457, -inf
        %2459 = vmax.xlane.f32.xlu0 %v2458
        %v2460 = vpop.xlane.xlu0 %2459
        %v2461 = vsub.f32 %v2457, %v2460
        %v2462 = vmul.f32 %v2461, 1.442695
        %v2463 = vpow.pop %v2462
        %v2464 = vsel %vm912, %v2463, 0.0
        %2465 = vadd.xlane.f32.xlu0 %v2464
        %v2466 = vpop.xlane.xlu0 %2465
        %v2467 = vrcp.pop %v2466
        %v2468 = vmul.f32 %v2463, %v2467
        %2469 = vrot.lane.b32.xlu0 %v1880, 72
        %v2470 = vpop.permute.xlu0 %2469
        %v2473 = vsel %vm912, %v2468, 0
        %2475 = vmatprep.subr.mxu0 0.0
        %2476 = vmatpush1.msra.mxu0 0.0
        %2477 = vmatprep.subr.mxu0 0.0
        %2478 = vmatpush1.msra.mxu0 0.0
        %2479 = vmatprep.subr.mxu0 0.0
        %2480 = vmatpush1.msra.mxu0 0.0
        %2481 = vmatprep.subr.mxu0 0.0
        %2482 = vmatpush1.msra.mxu0 0.0
        %2483 = vmatprep.subr.mxu0 0.0
        %2484 = vmatpush1.msra.mxu0 0.0
        %2485 = vmatprep.subr.mxu0 0.0
        %2486 = vmatpush1.msra.mxu0 0.0
        %2487 = vmatprep.subr.mxu0 0.0
        %2488 = vmatpush1.msra.mxu0 0.0
        %2489 = vmatprep.subr.mxu0 0.0
        %2490 = vmatpush1.msra.mxu0 0.0
        %2491 = vmatprep.subr.mxu0 0.0
        %2492 = vmatpush1.msra.mxu0 0.0
        %2493 = vmatprep.subr.mxu0 0.0
        %2494 = vmatpush1.msra.mxu0 0.0
        %2495 = vmatprep.subr.mxu0 0.0
        %2496 = vmatpush1.msra.mxu0 0.0
        %2497 = vmatprep.subr.mxu0 0.0
        %2498 = vmatpush1.msra.mxu0 0.0
        %2499 = vmatprep.subr.mxu0 0.0
        %2500 = vmatpush1.msra.mxu0 0.0
        %2501 = vmatprep.subr.mxu0 0.0
        %2502 = vmatpush1.msra.mxu0 0.0
        %2503 = vmatprep.subr.mxu0 0.0
        %2504 = vmatpush1.msra.mxu0 0.0
        %2505 = vmatprep.subr.mxu0 0.0
        %2506 = vmatpush1.msra.mxu0 %v2470
        %2507 = vmatprep.subr.mxu0 0.0
        %2508 = vmatpush2.msra.mxu0 0.0
        %2509 = vmatprep.subr.mxu0 0.0
        %2510 = vmatpush2.msra.mxu0 0.0
        %2511 = vmatprep.subr.mxu0 0.0
        %2512 = vmatpush2.msra.mxu0 0.0
        %2513 = vmatprep.subr.mxu0 0.0
        %2514 = vmatpush2.msra.mxu0 0.0
        %2515 = vmatprep.subr.mxu0 0.0
        %2516 = vmatpush2.msra.mxu0 0.0
        %2517 = vmatprep.subr.mxu0 0.0
        %2518 = vmatpush2.msra.mxu0 0.0
        %2519 = vmatprep.subr.mxu0 0.0
        %2520 = vmatpush2.msra.mxu0 0.0
        %2521 = vmatprep.subr.mxu0 0.0
        %2522 = vmatpush2.msra.mxu0 0.0
        %2523 = vmatprep.subr.mxu0 0.0
        %2524 = vmatpush2.msra.mxu0 0.0
        %2525 = vmatprep.subr.mxu0 0.0
        %2526 = vmatpush2.msra.mxu0 0.0
        %2527 = vmatprep.subr.mxu0 0.0
        %2528 = vmatpush2.msra.mxu0 0.0
        %2529 = vmatprep.subr.mxu0 0.0
        %2530 = vmatpush2.msra.mxu0 0.0
        %2531 = vmatprep.subr.mxu0 0.0
        %2532 = vmatpush2.msra.mxu0 0.0
        %2533 = vmatprep.subr.mxu0 0.0
        %2534 = vmatpush2.msra.mxu0 0.0
        %2535 = vmatprep.subr.mxu0 0.0
        %2536 = vmatpush2.msra.mxu0 0.0
        %2537 = vmatprep.subr.mxu0 0.0
        %2538 = vmatpush2.msra.mxu0 0.0
        %2539 = vmatprep.mubr.f32.mxu0 0.0
        %2540 = vmatmul.mubr.f32.gmra.mxu0 %v2473
        %v2541 = vpop.f32.mrf.mxu0
        %v2542 = vadd.f32 0.0, %v2541
        %v2543 = vpop.f32.mrf.mxu0
        %2544 = vdwg.mxu0
        %2546 = vrot.lane.b32.xlu0 %v2210, 8
        %v2547 = vpop.permute.xlu0 %2546
        %2550 = vrot.lane.b32.xlu0 %v2376, 16
        %v2551 = vpop.permute.xlu0 %2550
        %2554 = vrot.lane.b32.xlu0 %v2542, 24
        %v2555 = vpop.permute.xlu0 %2554
        %v2557 = vsel %vm912, %v2044, %v2547
        %v2558 = vsel %vm1597, %v2557, %v2551
        %v2559 = vsel %vm1599, %v2558, %v2555
        %v2560 = vld [vmem:[%s15] sm:$0xff]
        %v2561 = vld [vmem:[%s15 + $0x8] sm:$0xff]
        %v2562 = vld [vmem:[%s15 + $0x10] sm:$0xff]
        %v2563 = vld [vmem:[%s15 + $0x18] sm:$0xff]
        %v2564 = vld [vmem:[%s16] sm:$0x1]
        %v2566 = vlaneseq
        %v2567 = vshrl.u32 %v2566, 7
        %v2568 = vsub.s32 0, %v2567
        %v2569 = vrot.slane %v2564, %v2568
        %v2572 = vsel %vm794, %v2559, 0
        %2574 = vmatprep.subr.mxu0 0.0
        %2575 = vmatpush1.msra.mxu0 0.0
        %2576 = vmatprep.subr.mxu0 0.0
        %2577 = vmatpush1.msra.mxu0 0.0
        %2578 = vmatprep.subr.mxu0 0.0
        %2579 = vmatpush1.msra.mxu0 0.0
        %2580 = vmatprep.subr.mxu0 0.0
        %2581 = vmatpush1.msra.mxu0 0.0
        %2582 = vmatprep.subr.mxu0 0.0
        %2583 = vmatpush1.msra.mxu0 0.0
        %2584 = vmatprep.subr.mxu0 0.0
        %2585 = vmatpush1.msra.mxu0 0.0
        %2586 = vmatprep.subr.mxu0 0.0
        %2587 = vmatpush1.msra.mxu0 0.0
        %2588 = vmatprep.subr.mxu0 0.0
        %2589 = vmatpush1.msra.mxu0 0.0
        %2590 = vmatprep.subr.mxu0 0.0
        %2591 = vmatpush1.msra.mxu0 0.0
        %2592 = vmatprep.subr.mxu0 0.0
        %2593 = vmatpush1.msra.mxu0 0.0
        %2594 = vmatprep.subr.mxu0 0.0
        %2595 = vmatpush1.msra.mxu0 0.0
        %2596 = vmatprep.subr.mxu0 0.0
        %2597 = vmatpush1.msra.mxu0 0.0
        %2598 = vmatprep.subr.mxu0 0.0
        %2599 = vmatpush1.msra.mxu0 %v2563
        %2600 = vmatprep.subr.mxu0 0.0
        %2601 = vmatpush1.msra.mxu0 %v2562
        %2602 = vmatprep.subr.mxu0 0.0
        %2603 = vmatpush1.msra.mxu0 %v2561
        %2604 = vmatprep.subr.mxu0 0.0
        %2605 = vmatpush1.msra.mxu0 %v2560
        %2606 = vmatprep.subr.mxu0 0.0
        %2607 = vmatpush2.msra.mxu0 0.0
        %2608 = vmatprep.subr.mxu0 0.0
        %2609 = vmatpush2.msra.mxu0 0.0
        %2610 = vmatprep.subr.mxu0 0.0
        %2611 = vmatpush2.msra.mxu0 0.0
        %2612 = vmatprep.subr.mxu0 0.0
        %2613 = vmatpush2.msra.mxu0 0.0
        %2614 = vmatprep.subr.mxu0 0.0
        %2615 = vmatpush2.msra.mxu0 0.0
        %2616 = vmatprep.subr.mxu0 0.0
        %2617 = vmatpush2.msra.mxu0 0.0
        %2618 = vmatprep.subr.mxu0 0.0
        %2619 = vmatpush2.msra.mxu0 0.0
        %2620 = vmatprep.subr.mxu0 0.0
        %2621 = vmatpush2.msra.mxu0 0.0
        %2622 = vmatprep.subr.mxu0 0.0
        %2623 = vmatpush2.msra.mxu0 0.0
        %2624 = vmatprep.subr.mxu0 0.0
        %2625 = vmatpush2.msra.mxu0 0.0
        %2626 = vmatprep.subr.mxu0 0.0
        %2627 = vmatpush2.msra.mxu0 0.0
        %2628 = vmatprep.subr.mxu0 0.0
        %2629 = vmatpush2.msra.mxu0 0.0
        %2630 = vmatprep.subr.mxu0 0.0
        %2631 = vmatpush2.msra.mxu0 0.0
        %2632 = vmatprep.subr.mxu0 0.0
        %2633 = vmatpush2.msra.mxu0 0.0
        %2634 = vmatprep.subr.mxu0 0.0
        %2635 = vmatpush2.msra.mxu0 0.0
        %2636 = vmatprep.subr.mxu0 0.0
        %2637 = vmatpush2.msra.mxu0 0.0
        %2638 = vmatprep.mubr.f32.mxu0 0.0
        %2639 = vmatmul.mubr.f32.gmra.mxu0 %v2572
        %v2640 = vpop.f32.mrf.mxu0
        %v2641 = vadd.f32 %v2569, %v2640
        %v2642 = vpop.f32.mrf.mxu0
        %2643 = vdwg.mxu0
        %v2644 = vadd.f32 %v1685, %v2641
        %v2645 = vsel %vm794, %v2644, 0.0
        %2646 = vadd.xlane.f32.xlu0 %v2645
        %v2647 = vpop.xlane.xlu0 %2646
        %v2648 = vmul.f32 %v2647, %v798
        %v2649 = vsub.f32 %v2644, %v2648
        %v2650 = vmul.f32 %v2649, %v2649
        %v2651 = vsel %vm794, %v2650, 0.0
        %2652 = vadd.xlane.f32.xlu0 %v2651
        %v2653 = vpop.xlane.xlu0 %2652
        %v2654 = vmul.f32 %v2653, %v798
        %v2655 = vadd.f32 %v2654, 1e-05
        %v2656 = vrsqrt.pop %v2655
        %v2657 = vmul.f32 %v2649, %v2656
        %v2658 = vld [vmem:[%s17] sm:$0x1]
        %v2660 = vlaneseq
        %v2661 = vshrl.u32 %v2660, 7
        %v2662 = vsub.s32 0, %v2661
        %v2663 = vrot.slane %v2658, %v2662
        %v2665 = vmul.f32 %v2657, %v2663
        %v2666 = vld [vmem:[%s18] sm:$0x1]
        %v2668 = vlaneseq
        %v2669 = vshrl.u32 %v2668, 7
        %v2670 = vsub.s32 0, %v2669
        %v2671 = vrot.slane %v2666, %v2670
        %v2673 = vadd.f32 %v2665, %v2671
        %v2674 = vld [vmem:[%s19] sm:$0xff]
        %v2675 = vld [vmem:[%s19 + $0x8] sm:$0xff]
        %v2676 = vld [vmem:[%s19 + $0x10] sm:$0xff]
        %v2677 = vld [vmem:[%s19 + $0x18] sm:$0xff]
        %v2678 = vld [vmem:[%s20] sm:$0x1]
        %v2680 = vlaneseq
        %v2681 = vshrl.u32 %v2680, 7
        %v2682 = vsub.s32 0, %v2681
        %v2683 = vrot.slane %v2678, %v2682
        %v2686 = vsel %vm794, %v2673, 0
        %2688 = vmatprep.subr.mxu0 0.0
        %2689 = vmatpush1.msra.mxu0 0.0
        %2690 = vmatprep.subr.mxu0 0.0
        %2691 = vmatpush1.msra.mxu0 0.0
        %2692 = vmatprep.subr.mxu0 0.0
        %2693 = vmatpush1.msra.mxu0 0.0
        %2694 = vmatprep.subr.mxu0 0.0
        %2695 = vmatpush1.msra.mxu0 0.0
        %2696 = vmatprep.subr.mxu0 0.0
        %2697 = vmatpush1.msra.mxu0 0.0
        %2698 = vmatprep.subr.mxu0 0.0
        %2699 = vmatpush1.msra.mxu0 0.0
        %2700 = vmatprep.subr.mxu0 0.0
        %2701 = vmatpush1.msra.mxu0 0.0
        %2702 = vmatprep.subr.mxu0 0.0
        %2703 = vmatpush1.msra.mxu0 0.0
        %2704 = vmatprep.subr.mxu0 0.0
        %2705 = vmatpush1.msra.mxu0 0.0
        %2706 = vmatprep.subr.mxu0 0.0
        %2707 = vmatpush1.msra.mxu0 0.0
        %2708 = vmatprep.subr.mxu0 0.0
        %2709 = vmatpush1.msra.mxu0 0.0
        %2710 = vmatprep.subr.mxu0 0.0
        %2711 = vmatpush1.msra.mxu0 0.0
        %2712 = vmatprep.subr.mxu0 0.0
        %2713 = vmatpush1.msra.mxu0 %v2677
        %2714 = vmatprep.subr.mxu0 0.0
        %2715 = vmatpush1.msra.mxu0 %v2676
        %2716 = vmatprep.subr.mxu0 0.0
        %2717 = vmatpush1.msra.mxu0 %v2675
        %2718 = vmatprep.subr.mxu0 0.0
        %2719 = vmatpush1.msra.mxu0 %v2674
        %2720 = vmatprep.subr.mxu0 0.0
        %2721 = vmatpush2.msra.mxu0 0.0
        %2722 = vmatprep.subr.mxu0 0.0
        %2723 = vmatpush2.msra.mxu0 0.0
        %2724 = vmatprep.subr.mxu0 0.0
        %2725 = vmatpush2.msra.mxu0 0.0
        %2726 = vmatprep.subr.mxu0 0.0
        %2727 = vmatpush2.msra.mxu0 0.0
        %2728 = vmatprep.subr.mxu0 0.0
        %2729 = vmatpush2.msra.mxu0 0.0
        %2730 = vmatprep.subr.mxu0 0.0
        %2731 = vmatpush2.msra.mxu0 0.0
        %2732 = vmatprep.subr.mxu0 0.0
        %2733 = vmatpush2.msra.mxu0 0.0
        %2734 = vmatprep.subr.mxu0 0.0
        %2735 = vmatpush2.msra.mxu0 0.0
        %2736 = vmatprep.subr.mxu0 0.0
        %2737 = vmatpush2.msra.mxu0 0.0
        %2738 = vmatprep.subr.mxu0 0.0
        %2739 = vmatpush2.msra.mxu0 0.0
        %2740 = vmatprep.subr.mxu0 0.0
        %2741 = vmatpush2.msra.mxu0 0.0
        %2742 = vmatprep.subr.mxu0 0.0
        %2743 = vmatpush2.msra.mxu0 0.0
        %2744 = vmatprep.subr.mxu0 0.0
        %2745 = vmatpush2.msra.mxu0 0.0
        %2746 = vmatprep.subr.mxu0 0.0
        %2747 = vmatpush2.msra.mxu0 0.0
        %2748 = vmatprep.subr.mxu0 0.0
        %2749 = vmatpush2.msra.mxu0 0.0
        %2750 = vmatprep.subr.mxu0 0.0
        %2751 = vmatpush2.msra.mxu0 0.0
        %2752 = vmatprep.mubr.f32.mxu0 0.0
        %2753 = vmatmul.mubr.f32.gmra.mxu0 %v2686
        %v2754 = vpop.f32.mrf.mxu0
        %v2755 = vadd.f32 %v2683, %v2754
        %v2756 = vpop.f32.mrf.mxu0
        %2757 = vdwg.mxu0
        %v2758 = vmax.f32 %v2755, 0.0
        %v2759 = vld [vmem:[%s21] sm:$0xff]
        %v2760 = vld [vmem:[%s21 + $0x8] sm:$0xff]
        %v2761 = vld [vmem:[%s21 + $0x10] sm:$0xff]
        %v2762 = vld [vmem:[%s21 + $0x18] sm:$0xff]
        %v2763 = vld [vmem:[%s21 + $0x20] sm:$0xff]
        %v2764 = vld [vmem:[%s21 + $0x28] sm:$0xff]
        %v2765 = vld [vmem:[%s21 + $0x30] sm:$0xff]
        %v2766 = vld [vmem:[%s21 + $0x38] sm:$0xff]
        %v2767 = vld [vmem:[%s22] sm:$0x1]
        %v2769 = vlaneseq
        %v2770 = vshrl.u32 %v2769, 7
        %v2771 = vsub.s32 0, %v2770
        %v2772 = vrot.slane %v2767, %v2771
        %vm2774 = vcmask 523264
        %v2776 = vsel %vm2774, %v2758, 0
        %2778 = vmatprep.subr.mxu0 0.0
        %2779 = vmatpush1.msra.mxu0 0.0
        %2780 = vmatprep.subr.mxu0 0.0
        %2781 = vmatpush1.msra.mxu0 0.0
        %2782 = vmatprep.subr.mxu0 0.0
        %2783 = vmatpush1.msra.mxu0 0.0
        %2784 = vmatprep.subr.mxu0 0.0
        %2785 = vmatpush1.msra.mxu0 0.0
        %2786 = vmatprep.subr.mxu0 0.0
        %2787 = vmatpush1.msra.mxu0 0.0
        %2788 = vmatprep.subr.mxu0 0.0
        %2789 = vmatpush1.msra.mxu0 0.0
        %2790 = vmatprep.subr.mxu0 0.0
        %2791 = vmatpush1.msra.mxu0 0.0
        %2792 = vmatprep.subr.mxu0 0.0
        %2793 = vmatpush1.msra.mxu0 0.0
        %2794 = vmatprep.subr.mxu0 0.0
        %2795 = vmatpush1.msra.mxu0 %v2766
        %2796 = vmatprep.subr.mxu0 0.0
        %2797 = vmatpush1.msra.mxu0 %v2765
        %2798 = vmatprep.subr.mxu0 0.0
        %2799 = vmatpush1.msra.mxu0 %v2764
        %2800 = vmatprep.subr.mxu0 0.0
        %2801 = vmatpush1.msra.mxu0 %v2763
        %2802 = vmatprep.subr.mxu0 0.0
        %2803 = vmatpush1.msra.mxu0 %v2762
        %2804 = vmatprep.subr.mxu0 0.0
        %2805 = vmatpush1.msra.mxu0 %v2761
        %2806 = vmatprep.subr.mxu0 0.0
        %2807 = vmatpush1.msra.mxu0 %v2760
        %2808 = vmatprep.subr.mxu0 0.0
        %2809 = vmatpush1.msra.mxu0 %v2759
        %2810 = vmatprep.subr.mxu0 0.0
        %2811 = vmatpush2.msra.mxu0 0.0
        %2812 = vmatprep.subr.mxu0 0.0
        %2813 = vmatpush2.msra.mxu0 0.0
        %2814 = vmatprep.subr.mxu0 0.0
        %2815 = vmatpush2.msra.mxu0 0.0
        %2816 = vmatprep.subr.mxu0 0.0
        %2817 = vmatpush2.msra.mxu0 0.0
        %2818 = vmatprep.subr.mxu0 0.0
        %2819 = vmatpush2.msra.mxu0 0.0
        %2820 = vmatprep.subr.mxu0 0.0
        %2821 = vmatpush2.msra.mxu0 0.0
        %2822 = vmatprep.subr.mxu0 0.0
        %2823 = vmatpush2.msra.mxu0 0.0
        %2824 = vmatprep.subr.mxu0 0.0
        %2825 = vmatpush2.msra.mxu0 0.0
        %2826 = vmatprep.subr.mxu0 0.0
        %2827 = vmatpush2.msra.mxu0 0.0
        %2828 = vmatprep.subr.mxu0 0.0
        %2829 = vmatpush2.msra.mxu0 0.0
        %2830 = vmatprep.subr.mxu0 0.0
        %2831 = vmatpush2.msra.mxu0 0.0
        %2832 = vmatprep.subr.mxu0 0.0
        %2833 = vmatpush2.msra.mxu0 0.0
        %2834 = vmatprep.subr.mxu0 0.0
        %2835 = vmatpush2.msra.mxu0 0.0
        %2836 = vmatprep.subr.mxu0 0.0
        %2837 = vmatpush2.msra.mxu0 0.0
        %2838 = vmatprep.subr.mxu0 0.0
        %2839 = vmatpush2.msra.mxu0 0.0
        %2840 = vmatprep.subr.mxu0 0.0
        %2841 = vmatpush2.msra.mxu0 0.0
        %2842 = vmatprep.mubr.f32.mxu0 0.0
        %2843 = vmatmul.mubr.f32.gmra.mxu0 %v2776
        %v2844 = vpop.f32.mrf.mxu0
        %v2845 = vadd.f32 %v2772, %v2844
        %v2846 = vpop.f32.mrf.mxu0
        %2847 = vdwg.mxu0
        %v2848 = vadd.f32 %v2644, %v2845
        %v2849 = vsel %vm794, %v2848, 0.0
        %2850 = vadd.xlane.f32.xlu0 %v2849
        %v2851 = vpop.xlane.xlu0 %2850
        %v2852 = vmul.f32 %v2851, %v798
        %v2853 = vsub.f32 %v2848, %v2852
        %v2854 = vmul.f32 %v2853, %v2853
        %v2855 = vsel %vm794, %v2854, 0.0
        %2856 = vadd.xlane.f32.xlu0 %v2855
        %v2857 = vpop.xlane.xlu0 %2856
        %v2858 = vrcp.pop 31.0
        %v2859 = vmul.f32 %v2857, %v2858
        %v2860 = vrsqrt.pop %v2859
        %v2861 = vmul.f32 %v2859, %v2860
        %vm2862 = vcmp.eq.f32.partialorder %v2859, inf
        %v2863 = vsel %vm2862, %v2859, %v2861
        %vm2864 = vcmp.eq.f32.partialorder %v2859, 0.0
        %v2865 = vand.u32 %v2859, 2147483648
        %v2866 = vsel %vm2864, %v2865, %v2863
        %v2867 = vld [vmem:[%s23] sm:$0x1]
        %v2869 = vlaneseq
        %v2870 = vshrl.u32 %v2869, 7
        %v2871 = vsub.s32 0, %v2870
        %v2872 = vrot.slane %v2867, %v2871
        %v2874 = vmul.f32 %v2872, %v2853
        %v2875 = vadd.f32 %v2866, 1e-06
        %v2876 = vrcp.pop %v2875
        %v2877 = vmul.f32 %v2874, %v2876
        %v2878 = vld [vmem:[%s24] sm:$0x1]
        %v2880 = vlaneseq
        %v2881 = vshrl.u32 %v2880, 7
        %v2882 = vsub.s32 0, %v2881
        %v2883 = vrot.slane %v2878, %v2882
        %v2885 = vadd.f32 %v2877, %v2883
        %2886 = vst.msk [vmem:[%s779] sm:$0xff] %vm794, %v2885
        %s2887 = sand.u32 %s587, 1
        %s2888 = scalar_lea.sflag [#allocation3], %s2887
        %s2889 = sand.u32 %s587, 1
        %s2890 = smul.addr %s2889, 8
        %s2891 = scalar_lea.vmem [#allocation2], %s2890
        // Predicated region
        $region121: #{encoder_forward.3} parent=119 // pred_check
          %p2892 = pneg %p597
        $region122: #{encoder_forward.3} parent=119 // pred_check_branch
          %2894 = sbr.rel (%p2892) target = $region124
        $region123: #{encoder_forward.3} parent=119 // pred_region
          %s2896 = ssub.s32 128, 128
          %2897 = vsyncadd %s2888, %s2896
          %s2898 = smul.addr %s39, 128
          %s2899 = scalar_lea.hbm %s25, %s2898
          %s2901 = sshll.u32 %s2891, 4
          %s2902 = int_to_ptr.vmem [resolvable:$true] %s2901
          %2904 = dma.vmem_to_hbm [thread:$0]  %s2902, 128, %s2899, %s2888
        $region124: #{encoder_forward.3} parent=119 // pred_fallthru
          _
      $region120: #{encoder_forward.3} parent=5 // pred_fallthru
        _
      %p2905 = scmp.le.s32.totalorder 2, %s34
      // Predicated region
      $region125: #{encoder_forward.3} parent=5 // pred_check
        %p2906 = pneg %p2905
      $region126: #{encoder_forward.3} parent=5 // pred_check_branch
        %2908 = sbr.rel (%p2906) target = $region128
      $region127: #{encoder_forward.3} parent=5 // pred_region
        %s2909 = ssub.s32 %s34, 2
        // Predicated region
        $region129: #{encoder_forward.3} parent=127 // pred_check
          %p2910 = pneg %p603
        $region130: #{encoder_forward.3} parent=127 // pred_check_branch
          %2912 = sbr.rel (%p2910) target = $region132
        $region131: #{encoder_forward.3} parent=127 // pred_region
          %s2913 = sand.u32 %s588, 1
          %s2914 = scalar_lea.sflag [#allocation3], %s2913
          %s2915 = sand.u32 %s588, 1
          %s2916 = smul.addr %s2915, 8
          %s2917 = scalar_lea.vmem [#allocation2], %s2916
          %2918 = dma.done %s2914, 128
        $region132: #{encoder_forward.3} parent=127 // pred_fallthru
          _
      $region128: #{encoder_forward.3} parent=5 // pred_fallthru
        _
    $region6: #{encoder_forward.3} parent=1 // loop_footer
      %s38 = sadd.s32 1, %s34
    $region7: #{encoder_forward.3} parent=1 // loop_footer_branch
      %33 = sbr.rel target = $region3
    $region8: #{encoder_forward.3} parent=1 // loop_exit
      _
    %2919 = vsyncpa [#allocation3], 1
    %s2920 = scalar_lea.sflag [#allocation3], 1
    %2921 = vsyncpa %s2920, 1

// kernel: encoder_forward.2
$region0: #{encoder_forward.2}
  #allocation0 [shape = 'u32[]', space=smem, size = 0x4, offset = 0x4, fixed_abs, tag = 'smem constant byte address 0x4 - core index']
  #allocation1 [shape = 'u32[144,128]{1,0:T(1,128)}', space=vmem, size = 0x12000, scoped, tag = 'internal scratch']
  %s0 = inlined_call_operand.vmem [shape: f32[2,8,32], index: 0, kind: input, shape index: {}]
  %s1 = inlined_call_operand.vmem [shape: f32[2,8,32], index: 1, kind: input, shape index: {}]
  %s2 = inlined_call_operand.vmem [shape: s32[2,1,8], index: 2, kind: input, shape index: {}]
  %s3 = inlined_call_operand.vmem [shape: f32[8,32], index: 3, kind: input, shape index: {}]
  %s4 = inlined_call_operand.vmem [shape: f32[1,32], index: 4, kind: input, shape index: {}]
  %s5 = inlined_call_operand.hbm [shape: f32[1,32], index: 5, kind: input, shape index: {}]
  %s6 = inlined_call_operand.vmem [shape: f32[32,96], index: 6, kind: input, shape index: {}]
  %s7 = inlined_call_operand.vmem [shape: f32[1,96], index: 7, kind: input, shape index: {}]
  %s8 = inlined_call_operand.vmem [shape: f32[32,32], index: 8, kind: input, shape index: {}]
  %s9 = inlined_call_operand.vmem [shape: f32[1,32], index: 9, kind: input, shape index: {}]
  %s10 = inlined_call_operand.hbm [shape: f32[1,32], index: 10, kind: input, shape index: {}]
  %s11 = inlined_call_operand.hbm [shape: f32[1,32], index: 11, kind: input, shape index: {}]
  %s12 = inlined_call_operand.vmem [shape: f32[32,32], index: 12, kind: input, shape index: {}]
  %s13 = inlined_call_operand.hbm [shape: f32[1,32], index: 13, kind: input, shape index: {}]
  %s14 = inlined_call_operand.hbm [shape: f32[32,64], index: 14, kind: input, shape index: {}]
  %s15 = inlined_call_operand.hbm [shape: f32[1,64], index: 15, kind: input, shape index: {}]
  %s16 = inlined_call_operand.hbm [shape: f32[32,32], index: 16, kind: input, shape index: {}]
  %s17 = inlined_call_operand.hbm [shape: f32[1,32], index: 17, kind: input, shape index: {}]
  %s18 = inlined_call_operand.vmem [shape: f32[1,32], index: 18, kind: input, shape index: {}]
  %s19 = inlined_call_operand.hbm [shape: f32[1,32], index: 19, kind: input, shape index: {}]
  %s20 = inlined_call_operand.hbm [shape: f32[32,64], index: 20, kind: input, shape index: {}]
  %s21 = inlined_call_operand.hbm [shape: f32[1,64], index: 21, kind: input, shape index: {}]
  %s22 = inlined_call_operand.vmem [shape: f32[64,32], index: 22, kind: input, shape index: {}]
  %s23 = inlined_call_operand.hbm [shape: f32[1,32], index: 23, kind: input, shape index: {}]
  %s24 = inlined_call_operand.vmem [shape: f32[2,8,32], index: 24, kind: output, shape index: {}]
  %s25 = sld [smem:[#allocation0]]
  $region177: #{encoder_forward.2} parent=0
    _
  %s27 = ssub.s32 1, %s25
  %s28 = scalar_select 0, %s27, %s25
  $region1: #{encoder_forward.2} parent=0
    #allocation2 [shape = 'u8[512]{0}', space=vmem, size = 0x400, scoped, tag = 'input window, operand 5, single buffered']
    #allocation3 [shape = 's32[2]{0}', space=sflag, size = 0x8, scoped, tag = 'scoped memory for encoder_forward.2']
    #allocation4 [shape = 'u8[512]{0}', space=vmem, size = 0x400, scoped, tag = 'input window, operand 10, single buffered']
    #allocation5 [shape = 's32[1]{0}', space=sflag, size = 0x4, scoped, tag = 'scoped memory for encoder_forward.2']
    #allocation6 [shape = 'u8[512]{0}', space=vmem, size = 0x400, scoped, tag = 'input window, operand 11, single buffered']
    #allocation7 [shape = 'u8[512]{0}', space=vmem, size = 0x400, scoped, tag = 'input window, operand 13, single buffered']
    #allocation8 [shape = 's32[1]{0}', space=sflag, size = 0x4, scoped, tag = 'scoped memory for encoder_forward.2']
    #allocation9 [shape = 'u8[16384]{0}', space=vmem, size = 0x4000, scoped, tag = 'input window, operand 14, single buffered']
    #allocation10 [shape = 'u8[512]{0}', space=vmem, size = 0x400, scoped, tag = 'input window, operand 15, single buffered']
    #allocation11 [shape = 's32[1]{0}', space=sflag, size = 0x4, scoped, tag = 'scoped memory for encoder_forward.2']
    #allocation12 [shape = 'u8[16384]{0}', space=vmem, size = 0x4000, scoped, tag = 'input window, operand 16, single buffered']
    #allocation13 [shape = 'u8[512]{0}', space=vmem, size = 0x400, scoped, tag = 'input window, operand 17, single buffered']
    #allocation14 [shape = 's32[1]{0}', space=sflag, size = 0x4, scoped, tag = 'scoped memory for encoder_forward.2']
    #allocation15 [shape = 'u8[512]{0}', space=vmem, size = 0x400, scoped, tag = 'input window, operand 19, single buffered']
    #allocation16 [shape = 'u8[16384]{0}', space=vmem, size = 0x4000, scoped, tag = 'input window, operand 20, single buffered']
    #allocation17 [shape = 's32[1]{0}', space=sflag, size = 0x4, scoped, tag = 'scoped memory for encoder_forward.2']
    #allocation18 [shape = 'u8[512]{0}', space=vmem, size = 0x400, scoped, tag = 'input window, operand 21, single buffered']
    #allocation19 [shape = 'u8[512]{0}', space=vmem, size = 0x400, scoped, tag = 'input window, operand 23, single buffered']
    #allocation20 [shape = 's32[1]{0}', space=sflag, size = 0x4, scoped, tag = 'scoped memory for encoder_forward.2']
    %29 = vsyncpa [#allocation3], 0
    %30 = vsyncpa [#allocation5], 0
    %31 = vsyncpa [#allocation8], 0
    %32 = vsyncpa [#allocation11], 0
    %33 = vsyncpa [#allocation14], 0
    %34 = vsyncpa [#allocation17], 0
    %35 = vsyncpa [#allocation20], 0
    loop: start=0, step=1, limit=4
    $region2: #{encoder_forward.2} parent=1 // loop_pre_header
      _
    $region3: #{encoder_forward.2} parent=1 // loop_header
      %s37 = sphi 0, %s41
      %p38 = scmp.ge.s32.totalorder %s37, 4
      %s47 = sphi 0, %s49
      %s50 = sphi 0, %s47
      %s51 = sphi 0, %s50
      %s67 = sphi 0, %s51
      %s73 = sphi 0, %s75
      %s76 = sphi 0, %s73
      %s77 = sphi 0, %s76
      %s93 = sphi 0, %s77
      %s99 = sphi 0, %s101
      %s102 = sphi 0, %s99
      %s103 = sphi 0, %s102
      %s119 = sphi 0, %s103
      %s123 = sphi 0, %s123
      %s125 = sphi 0, %s123
      %s126 = sphi 0, %s125
      %s140 = sphi 0, %s126
      %s144 = sphi 0, %s144
      %s146 = sphi 0, %s144
      %s147 = sphi 0, %s146
      %s161 = sphi 0, %s147
      %s165 = sphi 0, %s165
      %s167 = sphi 0, %s165
      %s168 = sphi 0, %s167
      %s182 = sphi 0, %s168
      %s186 = sphi 0, %s186
      %s188 = sphi 0, %s186
      %s189 = sphi 0, %s188
      %s203 = sphi 0, %s189
      %s207 = sphi 0, %s207
      %s209 = sphi 0, %s207
      %s210 = sphi 0, %s209
      %s224 = sphi 0, %s210
      %s228 = sphi 0, %s228
      %s230 = sphi 0, %s228
      %s231 = sphi 0, %s230
      %s245 = sphi 0, %s231
      %s249 = sphi 0, %s249
      %s251 = sphi 0, %s249
      %s252 = sphi 0, %s251
      %s266 = sphi 0, %s252
      %s270 = sphi 0, %s270
      %s272 = sphi 0, %s270
      %s273 = sphi 0, %s272
      %s287 = sphi 0, %s273
      %s291 = sphi 0, %s291
      %s293 = sphi 0, %s291
      %s294 = sphi 0, %s293
      %s308 = sphi 0, %s294
      %s312 = sphi 0, %s312
      %s314 = sphi 0, %s312
      %s315 = sphi 0, %s314
      %s329 = sphi 0, %s315
      %s333 = sphi 0, %s333
      %s335 = sphi 0, %s333
      %s336 = sphi 0, %s335
      %s350 = sphi 0, %s336
      %s354 = sphi 0, %s354
      %s356 = sphi 0, %s354
      %s357 = sphi 0, %s356
      %s371 = sphi 0, %s357
      %s375 = sphi 0, %s375
      %s377 = sphi 0, %s375
      %s378 = sphi 0, %s377
      %s392 = sphi 0, %s378
      %s396 = sphi 0, %s396
      %s398 = sphi 0, %s396
      %s399 = sphi 0, %s398
      %s413 = sphi 0, %s399
      %s417 = sphi 0, %s417
      %s419 = sphi 0, %s417
      %s420 = sphi 0, %s419
      %s434 = sphi 0, %s420
      %s438 = sphi 0, %s438
      %s440 = sphi 0, %s438
      %s441 = sphi 0, %s440
      %s455 = sphi 0, %s441
      %s459 = sphi 0, %s459
      %s461 = sphi 0, %s459
      %s462 = sphi 0, %s461
      %s476 = sphi 0, %s462
      %s480 = sphi 0, %s480
      %s482 = sphi 0, %s480
      %s483 = sphi 0, %s482
      %s497 = sphi 0, %s483
      %s501 = sphi 0, %s501
      %s503 = sphi 0, %s501
      %s504 = sphi 0, %s503
      %s518 = sphi 0, %s504
      %s522 = sphi 0, %s522
      %s524 = sphi 0, %s522
      %s525 = sphi 0, %s524
      %s539 = sphi 0, %s525
      %s543 = sphi 0, %s543
      %s545 = sphi 0, %s543
      %s546 = sphi 0, %s545
      %s560 = sphi 0, %s546
      %s566 = sphi 0, %s568
      %s569 = sphi 0, %s566
      %s570 = sphi 0, %s569
      %s586 = sphi 0, %s570
    $region4: #{encoder_forward.2} parent=1 // loop_header_branch
      %40 = sbr.rel (%p38) target = $region8
    $region5: #{encoder_forward.2} parent=1 // loop_body
      %s42 = ssub.s32 %s37, 1
      %s43 = ssub.s32 %s37, 2
      %s44 = sadd.s32 %s37, 1
      %s45 = ssub.s32 %s37, %s44
      %p46 = scmp.eq.s32.totalorder %s45, 0
      %s48 = sadd.s32 %s47, 1
      %s49 = scalar_select %p46, %s47, %s48
      %p52 = pneg %p46
      %p53 = scmp.eq.s32.totalorder %s37, 1
      %p54 = por %p52, %p53
      %p55 = scmp.ne.s32.totalorder %s47, %s50
      %p56 = scmp.eq.s32.totalorder %s37, 0
      %p57 = por %p55, %p56
      %p58 = scmp.ne.s32.totalorder %s47, %s50
      %p59 = scmp.eq.s32.totalorder %s42, 1
      %p60 = por %p58, %p59
      %p61 = scmp.ne.s32.totalorder %s50, %s51
      %p62 = scmp.eq.s32.totalorder %s42, 0
      %p63 = por %p61, %p62
      %p64 = scmp.ne.s32.totalorder %s50, %s51
      %p65 = scmp.eq.s32.totalorder %s43, 1
      %p66 = por %p64, %p65
      %p68 = scmp.ne.s32.totalorder %s51, %s67
      %p69 = scmp.eq.s32.totalorder %s43, 0
      %p70 = por %p68, %p69
      %s71 = ssub.s32 %s37, %s44
      %p72 = scmp.eq.s32.totalorder %s71, 0
      %s74 = sadd.s32 %s73, 1
      %s75 = scalar_select %p72, %s73, %s74
      %p78 = pneg %p72
      %p79 = scmp.eq.s32.totalorder %s37, 1
      %p80 = por %p78, %p79
      %p81 = scmp.ne.s32.totalorder %s73, %s76
      %p82 = scmp.eq.s32.totalorder %s37, 0
      %p83 = por %p81, %p82
      %p84 = scmp.ne.s32.totalorder %s73, %s76
      %p85 = scmp.eq.s32.totalorder %s42, 1
      %p86 = por %p84, %p85
      %p87 = scmp.ne.s32.totalorder %s76, %s77
      %p88 = scmp.eq.s32.totalorder %s42, 0
      %p89 = por %p87, %p88
      %p90 = scmp.ne.s32.totalorder %s76, %s77
      %p91 = scmp.eq.s32.totalorder %s43, 1
      %p92 = por %p90, %p91
      %p94 = scmp.ne.s32.totalorder %s77, %s93
      %p95 = scmp.eq.s32.totalorder %s43, 0
      %p96 = por %p94, %p95
      %s97 = ssub.s32 %s37, %s44
      %p98 = scmp.eq.s32.totalorder %s97, 0
      %s100 = sadd.s32 %s99, 1
      %s101 = scalar_select %p98, %s99, %s100
      %p104 = pneg %p98
      %p105 = scmp.eq.s32.totalorder %s37, 1
      %p106 = por %p104, %p105
      %p107 = scmp.ne.s32.totalorder %s99, %s102
      %p108 = scmp.eq.s32.totalorder %s37, 0
      %p109 = por %p107, %p108
      %p110 = scmp.ne.s32.totalorder %s99, %s102
      %p111 = scmp.eq.s32.totalorder %s42, 1
      %p112 = por %p110, %p111
      %p113 = scmp.ne.s32.totalorder %s102, %s103
      %p114 = scmp.eq.s32.totalorder %s42, 0
      %p115 = por %p113, %p114
      %p116 = scmp.ne.s32.totalorder %s102, %s103
      %p117 = scmp.eq.s32.totalorder %s43, 1
      %p118 = por %p116, %p117
      %p120 = scmp.ne.s32.totalorder %s103, %s119
      %p121 = scmp.eq.s32.totalorder %s43, 0
      %p122 = por %p120, %p121
      %s124 = sadd.s32 %s123, 1
      %p127 = scmp.eq.s32.totalorder %s37, 1
      %p128 = scmp.ne.s32.totalorder %s123, %s125
      %p129 = scmp.eq.s32.totalorder %s37, 0
      %p130 = por %p128, %p129
      %p131 = scmp.ne.s32.totalorder %s123, %s125
      %p132 = scmp.eq.s32.totalorder %s42, 1
      %p133 = por %p131, %p132
      %p134 = scmp.ne.s32.totalorder %s125, %s126
      %p135 = scmp.eq.s32.totalorder %s42, 0
      %p136 = por %p134, %p135
      %p137 = scmp.ne.s32.totalorder %s125, %s126
      %p138 = scmp.eq.s32.totalorder %s43, 1
      %p139 = por %p137, %p138
      %p141 = scmp.ne.s32.totalorder %s126, %s140
      %p142 = scmp.eq.s32.totalorder %s43, 0
      %p143 = por %p141, %p142
      %s145 = sadd.s32 %s144, 1
      %p148 = scmp.eq.s32.totalorder %s37, 1
      %p149 = scmp.ne.s32.totalorder %s144, %s146
      %p150 = scmp.eq.s32.totalorder %s37, 0
      %p151 = por %p149, %p150
      %p152 = scmp.ne.s32.totalorder %s144, %s146
      %p153 = scmp.eq.s32.totalorder %s42, 1
      %p154 = por %p152, %p153
      %p155 = scmp.ne.s32.totalorder %s146, %s147
      %p156 = scmp.eq.s32.totalorder %s42, 0
      %p157 = por %p155, %p156
      %p158 = scmp.ne.s32.totalorder %s146, %s147
      %p159 = scmp.eq.s32.totalorder %s43, 1
      %p160 = por %p158, %p159
      %p162 = scmp.ne.s32.totalorder %s147, %s161
      %p163 = scmp.eq.s32.totalorder %s43, 0
      %p164 = por %p162, %p163
      %s166 = sadd.s32 %s165, 1
      %p169 = scmp.eq.s32.totalorder %s37, 1
      %p170 = scmp.ne.s32.totalorder %s165, %s167
      %p171 = scmp.eq.s32.totalorder %s37, 0
      %p172 = por %p170, %p171
      %p173 = scmp.ne.s32.totalorder %s165, %s167
      %p174 = scmp.eq.s32.totalorder %s42, 1
      %p175 = por %p173, %p174
      %p176 = scmp.ne.s32.totalorder %s167, %s168
      %p177 = scmp.eq.s32.totalorder %s42, 0
      %p178 = por %p176, %p177
      %p179 = scmp.ne.s32.totalorder %s167, %s168
      %p180 = scmp.eq.s32.totalorder %s43, 1
      %p181 = por %p179, %p180
      %p183 = scmp.ne.s32.totalorder %s168, %s182
      %p184 = scmp.eq.s32.totalorder %s43, 0
      %p185 = por %p183, %p184
      %s187 = sadd.s32 %s186, 1
      %p190 = scmp.eq.s32.totalorder %s37, 1
      %p191 = scmp.ne.s32.totalorder %s186, %s188
      %p192 = scmp.eq.s32.totalorder %s37, 0
      %p193 = por %p191, %p192
      %p194 = scmp.ne.s32.totalorder %s186, %s188
      %p195 = scmp.eq.s32.totalorder %s42, 1
      %p196 = por %p194, %p195
      %p197 = scmp.ne.s32.totalorder %s188, %s189
      %p198 = scmp.eq.s32.totalorder %s42, 0
      %p199 = por %p197, %p198
      %p200 = scmp.ne.s32.totalorder %s188, %s189
      %p201 = scmp.eq.s32.totalorder %s43, 1
      %p202 = por %p200, %p201
      %p204 = scmp.ne.s32.totalorder %s189, %s203
      %p205 = scmp.eq.s32.totalorder %s43, 0
      %p206 = por %p204, %p205
      %s208 = sadd.s32 %s207, 1
      %p211 = scmp.eq.s32.totalorder %s37, 1
      %p212 = scmp.ne.s32.totalorder %s207, %s209
      %p213 = scmp.eq.s32.totalorder %s37, 0
      %p214 = por %p212, %p213
      %p215 = scmp.ne.s32.totalorder %s207, %s209
      %p216 = scmp.eq.s32.totalorder %s42, 1
      %p217 = por %p215, %p216
      %p218 = scmp.ne.s32.totalorder %s209, %s210
      %p219 = scmp.eq.s32.totalorder %s42, 0
      %p220 = por %p218, %p219
      %p221 = scmp.ne.s32.totalorder %s209, %s210
      %p222 = scmp.eq.s32.totalorder %s43, 1
      %p223 = por %p221, %p222
      %p225 = scmp.ne.s32.totalorder %s210, %s224
      %p226 = scmp.eq.s32.totalorder %s43, 0
      %p227 = por %p225, %p226
      %s229 = sadd.s32 %s228, 1
      %p232 = scmp.eq.s32.totalorder %s37, 1
      %p233 = scmp.ne.s32.totalorder %s228, %s230
      %p234 = scmp.eq.s32.totalorder %s37, 0
      %p235 = por %p233, %p234
      %p236 = scmp.ne.s32.totalorder %s228, %s230
      %p237 = scmp.eq.s32.totalorder %s42, 1
      %p238 = por %p236, %p237
      %p239 = scmp.ne.s32.totalorder %s230, %s231
      %p240 = scmp.eq.s32.totalorder %s42, 0
      %p241 = por %p239, %p240
      %p242 = scmp.ne.s32.totalorder %s230, %s231
      %p243 = scmp.eq.s32.totalorder %s43, 1
      %p244 = por %p242, %p243
      %p246 = scmp.ne.s32.totalorder %s231, %s245
      %p247 = scmp.eq.s32.totalorder %s43, 0
      %p248 = por %p246, %p247
      %s250 = sadd.s32 %s249, 1
      %p253 = scmp.eq.s32.totalorder %s37, 1
      %p254 = scmp.ne.s32.totalorder %s249, %s251
      %p255 = scmp.eq.s32.totalorder %s37, 0
      %p256 = por %p254, %p255
      %p257 = scmp.ne.s32.totalorder %s249, %s251
      %p258 = scmp.eq.s32.totalorder %s42, 1
      %p259 = por %p257, %p258
      %p260 = scmp.ne.s32.totalorder %s251, %s252
      %p261 = scmp.eq.s32.totalorder %s42, 0
      %p262 = por %p260, %p261
      %p263 = scmp.ne.s32.totalorder %s251, %s252
      %p264 = scmp.eq.s32.totalorder %s43, 1
      %p265 = por %p263, %p264
      %p267 = scmp.ne.s32.totalorder %s252, %s266
      %p268 = scmp.eq.s32.totalorder %s43, 0
      %p269 = por %p267, %p268
      %s271 = sadd.s32 %s270, 1
      %p274 = scmp.eq.s32.totalorder %s37, 1
      %p275 = scmp.ne.s32.totalorder %s270, %s272
      %p276 = scmp.eq.s32.totalorder %s37, 0
      %p277 = por %p275, %p276
      %p278 = scmp.ne.s32.totalorder %s270, %s272
      %p279 = scmp.eq.s32.totalorder %s42, 1
      %p280 = por %p278, %p279
      %p281 = scmp.ne.s32.totalorder %s272, %s273
      %p282 = scmp.eq.s32.totalorder %s42, 0
      %p283 = por %p281, %p282
      %p284 = scmp.ne.s32.totalorder %s272, %s273
      %p285 = scmp.eq.s32.totalorder %s43, 1
      %p286 = por %p284, %p285
      %p288 = scmp.ne.s32.totalorder %s273, %s287
      %p289 = scmp.eq.s32.totalorder %s43, 0
      %p290 = por %p288, %p289
      %s292 = sadd.s32 %s291, 1
      %p295 = scmp.eq.s32.totalorder %s37, 1
      %p296 = scmp.ne.s32.totalorder %s291, %s293
      %p297 = scmp.eq.s32.totalorder %s37, 0
      %p298 = por %p296, %p297
      %p299 = scmp.ne.s32.totalorder %s291, %s293
      %p300 = scmp.eq.s32.totalorder %s42, 1
      %p301 = por %p299, %p300
      %p302 = scmp.ne.s32.totalorder %s293, %s294
      %p303 = scmp.eq.s32.totalorder %s42, 0
      %p304 = por %p302, %p303
      %p305 = scmp.ne.s32.totalorder %s293, %s294
      %p306 = scmp.eq.s32.totalorder %s43, 1
      %p307 = por %p305, %p306
      %p309 = scmp.ne.s32.totalorder %s294, %s308
      %p310 = scmp.eq.s32.totalorder %s43, 0
      %p311 = por %p309, %p310
      %s313 = sadd.s32 %s312, 1
      %p316 = scmp.eq.s32.totalorder %s37, 1
      %p317 = scmp.ne.s32.totalorder %s312, %s314
      %p318 = scmp.eq.s32.totalorder %s37, 0
      %p319 = por %p317, %p318
      %p320 = scmp.ne.s32.totalorder %s312, %s314
      %p321 = scmp.eq.s32.totalorder %s42, 1
      %p322 = por %p320, %p321
      %p323 = scmp.ne.s32.totalorder %s314, %s315
      %p324 = scmp.eq.s32.totalorder %s42, 0
      %p325 = por %p323, %p324
      %p326 = scmp.ne.s32.totalorder %s314, %s315
      %p327 = scmp.eq.s32.totalorder %s43, 1
      %p328 = por %p326, %p327
      %p330 = scmp.ne.s32.totalorder %s315, %s329
      %p331 = scmp.eq.s32.totalorder %s43, 0
      %p332 = por %p330, %p331
      %s334 = sadd.s32 %s333, 1
      %p337 = scmp.eq.s32.totalorder %s37, 1
      %p338 = scmp.ne.s32.totalorder %s333, %s335
      %p339 = scmp.eq.s32.totalorder %s37, 0
      %p340 = por %p338, %p339
      %p341 = scmp.ne.s32.totalorder %s333, %s335
      %p342 = scmp.eq.s32.totalorder %s42, 1
      %p343 = por %p341, %p342
      %p344 = scmp.ne.s32.totalorder %s335, %s336
      %p345 = scmp.eq.s32.totalorder %s42, 0
      %p346 = por %p344, %p345
      %p347 = scmp.ne.s32.totalorder %s335, %s336
      %p348 = scmp.eq.s32.totalorder %s43, 1
      %p349 = por %p347, %p348
      %p351 = scmp.ne.s32.totalorder %s336, %s350
      %p352 = scmp.eq.s32.totalorder %s43, 0
      %p353 = por %p351, %p352
      %s355 = sadd.s32 %s354, 1
      %p358 = scmp.eq.s32.totalorder %s37, 1
      %p359 = scmp.ne.s32.totalorder %s354, %s356
      %p360 = scmp.eq.s32.totalorder %s37, 0
      %p361 = por %p359, %p360
      %p362 = scmp.ne.s32.totalorder %s354, %s356
      %p363 = scmp.eq.s32.totalorder %s42, 1
      %p364 = por %p362, %p363
      %p365 = scmp.ne.s32.totalorder %s356, %s357
      %p366 = scmp.eq.s32.totalorder %s42, 0
      %p367 = por %p365, %p366
      %p368 = scmp.ne.s32.totalorder %s356, %s357
      %p369 = scmp.eq.s32.totalorder %s43, 1
      %p370 = por %p368, %p369
      %p372 = scmp.ne.s32.totalorder %s357, %s371
      %p373 = scmp.eq.s32.totalorder %s43, 0
      %p374 = por %p372, %p373
      %s376 = sadd.s32 %s375, 1
      %p379 = scmp.eq.s32.totalorder %s37, 1
      %p380 = scmp.ne.s32.totalorder %s375, %s377
      %p381 = scmp.eq.s32.totalorder %s37, 0
      %p382 = por %p380, %p381
      %p383 = scmp.ne.s32.totalorder %s375, %s377
      %p384 = scmp.eq.s32.totalorder %s42, 1
      %p385 = por %p383, %p384
      %p386 = scmp.ne.s32.totalorder %s377, %s378
      %p387 = scmp.eq.s32.totalorder %s42, 0
      %p388 = por %p386, %p387
      %p389 = scmp.ne.s32.totalorder %s377, %s378
      %p390 = scmp.eq.s32.totalorder %s43, 1
      %p391 = por %p389, %p390
      %p393 = scmp.ne.s32.totalorder %s378, %s392
      %p394 = scmp.eq.s32.totalorder %s43, 0
      %p395 = por %p393, %p394
      %s397 = sadd.s32 %s396, 1
      %p400 = scmp.eq.s32.totalorder %s37, 1
      %p401 = scmp.ne.s32.totalorder %s396, %s398
      %p402 = scmp.eq.s32.totalorder %s37, 0
      %p403 = por %p401, %p402
      %p404 = scmp.ne.s32.totalorder %s396, %s398
      %p405 = scmp.eq.s32.totalorder %s42, 1
      %p406 = por %p404, %p405
      %p407 = scmp.ne.s32.totalorder %s398, %s399
      %p408 = scmp.eq.s32.totalorder %s42, 0
      %p409 = por %p407, %p408
      %p410 = scmp.ne.s32.totalorder %s398, %s399
      %p411 = scmp.eq.s32.totalorder %s43, 1
      %p412 = por %p410, %p411
      %p414 = scmp.ne.s32.totalorder %s399, %s413
      %p415 = scmp.eq.s32.totalorder %s43, 0
      %p416 = por %p414, %p415
      %s418 = sadd.s32 %s417, 1
      %p421 = scmp.eq.s32.totalorder %s37, 1
      %p422 = scmp.ne.s32.totalorder %s417, %s419
      %p423 = scmp.eq.s32.totalorder %s37, 0
      %p424 = por %p422, %p423
      %p425 = scmp.ne.s32.totalorder %s417, %s419
      %p426 = scmp.eq.s32.totalorder %s42, 1
      %p427 = por %p425, %p426
      %p428 = scmp.ne.s32.totalorder %s419, %s420
      %p429 = scmp.eq.s32.totalorder %s42, 0
      %p430 = por %p428, %p429
      %p431 = scmp.ne.s32.totalorder %s419, %s420
      %p432 = scmp.eq.s32.totalorder %s43, 1
      %p433 = por %p431, %p432
      %p435 = scmp.ne.s32.totalorder %s420, %s434
      %p436 = scmp.eq.s32.totalorder %s43, 0
      %p437 = por %p435, %p436
      %s439 = sadd.s32 %s438, 1
      %p442 = scmp.eq.s32.totalorder %s37, 1
      %p443 = scmp.ne.s32.totalorder %s438, %s440
      %p444 = scmp.eq.s32.totalorder %s37, 0
      %p445 = por %p443, %p444
      %p446 = scmp.ne.s32.totalorder %s438, %s440
      %p447 = scmp.eq.s32.totalorder %s42, 1
      %p448 = por %p446, %p447
      %p449 = scmp.ne.s32.totalorder %s440, %s441
      %p450 = scmp.eq.s32.totalorder %s42, 0
      %p451 = por %p449, %p450
      %p452 = scmp.ne.s32.totalorder %s440, %s441
      %p453 = scmp.eq.s32.totalorder %s43, 1
      %p454 = por %p452, %p453
      %p456 = scmp.ne.s32.totalorder %s441, %s455
      %p457 = scmp.eq.s32.totalorder %s43, 0
      %p458 = por %p456, %p457
      %s460 = sadd.s32 %s459, 1
      %p463 = scmp.eq.s32.totalorder %s37, 1
      %p464 = scmp.ne.s32.totalorder %s459, %s461
      %p465 = scmp.eq.s32.totalorder %s37, 0
      %p466 = por %p464, %p465
      %p467 = scmp.ne.s32.totalorder %s459, %s461
      %p468 = scmp.eq.s32.totalorder %s42, 1
      %p469 = por %p467, %p468
      %p470 = scmp.ne.s32.totalorder %s461, %s462
      %p471 = scmp.eq.s32.totalorder %s42, 0
      %p472 = por %p470, %p471
      %p473 = scmp.ne.s32.totalorder %s461, %s462
      %p474 = scmp.eq.s32.totalorder %s43, 1
      %p475 = por %p473, %p474
      %p477 = scmp.ne.s32.totalorder %s462, %s476
      %p478 = scmp.eq.s32.totalorder %s43, 0
      %p479 = por %p477, %p478
      %s481 = sadd.s32 %s480, 1
      %p484 = scmp.eq.s32.totalorder %s37, 1
      %p485 = scmp.ne.s32.totalorder %s480, %s482
      %p486 = scmp.eq.s32.totalorder %s37, 0
      %p487 = por %p485, %p486
      %p488 = scmp.ne.s32.totalorder %s480, %s482
      %p489 = scmp.eq.s32.totalorder %s42, 1
      %p490 = por %p488, %p489
      %p491 = scmp.ne.s32.totalorder %s482, %s483
      %p492 = scmp.eq.s32.totalorder %s42, 0
      %p493 = por %p491, %p492
      %p494 = scmp.ne.s32.totalorder %s482, %s483
      %p495 = scmp.eq.s32.totalorder %s43, 1
      %p496 = por %p494, %p495
      %p498 = scmp.ne.s32.totalorder %s483, %s497
      %p499 = scmp.eq.s32.totalorder %s43, 0
      %p500 = por %p498, %p499
      %s502 = sadd.s32 %s501, 1
      %p505 = scmp.eq.s32.totalorder %s37, 1
      %p506 = scmp.ne.s32.totalorder %s501, %s503
      %p507 = scmp.eq.s32.totalorder %s37, 0
      %p508 = por %p506, %p507
      %p509 = scmp.ne.s32.totalorder %s501, %s503
      %p510 = scmp.eq.s32.totalorder %s42, 1
      %p511 = por %p509, %p510
      %p512 = scmp.ne.s32.totalorder %s503, %s504
      %p513 = scmp.eq.s32.totalorder %s42, 0
      %p514 = por %p512, %p513
      %p515 = scmp.ne.s32.totalorder %s503, %s504
      %p516 = scmp.eq.s32.totalorder %s43, 1
      %p517 = por %p515, %p516
      %p519 = scmp.ne.s32.totalorder %s504, %s518
      %p520 = scmp.eq.s32.totalorder %s43, 0
      %p521 = por %p519, %p520
      %s523 = sadd.s32 %s522, 1
      %p526 = scmp.eq.s32.totalorder %s37, 1
      %p527 = scmp.ne.s32.totalorder %s522, %s524
      %p528 = scmp.eq.s32.totalorder %s37, 0
      %p529 = por %p527, %p528
      %p530 = scmp.ne.s32.totalorder %s522, %s524
      %p531 = scmp.eq.s32.totalorder %s42, 1
      %p532 = por %p530, %p531
      %p533 = scmp.ne.s32.totalorder %s524, %s525
      %p534 = scmp.eq.s32.totalorder %s42, 0
      %p535 = por %p533, %p534
      %p536 = scmp.ne.s32.totalorder %s524, %s525
      %p537 = scmp.eq.s32.totalorder %s43, 1
      %p538 = por %p536, %p537
      %p540 = scmp.ne.s32.totalorder %s525, %s539
      %p541 = scmp.eq.s32.totalorder %s43, 0
      %p542 = por %p540, %p541
      %s544 = sadd.s32 %s543, 1
      %p547 = scmp.eq.s32.totalorder %s37, 1
      %p548 = scmp.ne.s32.totalorder %s543, %s545
      %p549 = scmp.eq.s32.totalorder %s37, 0
      %p550 = por %p548, %p549
      %p551 = scmp.ne.s32.totalorder %s543, %s545
      %p552 = scmp.eq.s32.totalorder %s42, 1
      %p553 = por %p551, %p552
      %p554 = scmp.ne.s32.totalorder %s545, %s546
      %p555 = scmp.eq.s32.totalorder %s42, 0
      %p556 = por %p554, %p555
      %p557 = scmp.ne.s32.totalorder %s545, %s546
      %p558 = scmp.eq.s32.totalorder %s43, 1
      %p559 = por %p557, %p558
      %p561 = scmp.ne.s32.totalorder %s546, %s560
      %p562 = scmp.eq.s32.totalorder %s43, 0
      %p563 = por %p561, %p562
      %s564 = ssub.s32 %s37, %s44
      %p565 = scmp.eq.s32.totalorder %s564, 0
      %s567 = sadd.s32 %s566, 1
      %s568 = scalar_select %p565, %s566, %s567
      %p571 = pneg %p565
      %p572 = scmp.eq.s32.totalorder %s37, 1
      %p573 = por %p571, %p572
      %p574 = scmp.ne.s32.totalorder %s566, %s569
      %p575 = scmp.eq.s32.totalorder %s37, 0
      %p576 = por %p574, %p575
      %p577 = scmp.ne.s32.totalorder %s566, %s569
      %p578 = scmp.eq.s32.totalorder %s42, 1
      %p579 = por %p577, %p578
      %p580 = scmp.ne.s32.totalorder %s569, %s570
      %p581 = scmp.eq.s32.totalorder %s42, 0
      %p582 = por %p580, %p581
      %p583 = scmp.ne.s32.totalorder %s569, %s570
      %p584 = scmp.eq.s32.totalorder %s43, 1
      %p585 = por %p583, %p584
      %p587 = scmp.ne.s32.totalorder %s570, %s586
      %p588 = scmp.eq.s32.totalorder %s43, 0
      %p589 = por %p587, %p588
      %p590 = scmp.le.s32.totalorder 1, %s37
      %p591 = scmp.lt.s32.totalorder %s37, 3
      %p592 = pnand %p590, %p591
      %p593 = pneg %p592
      // Predicated region
      $region9: #{encoder_forward.2} parent=5 // pred_check
        _
      $region10: #{encoder_forward.2} parent=5 // pred_check_branch
        %595 = sbr.rel (%p592) target = $region12
      $region11: #{encoder_forward.2} parent=5 // pred_region
        %s596 = ssub.s32 %s37, 1
        // Predicated region
        $region13: #{encoder_forward.2} parent=11 // pred_check
          %p597 = pneg %p136
        $region14: #{encoder_forward.2} parent=11 // pred_check_branch
          %599 = sbr.rel (%p597) target = $region16
        $region15: #{encoder_forward.2} parent=11 // pred_region
          _
        $region16: #{encoder_forward.2} parent=11 // pred_fallthru
          _
        // Predicated region
        $region17: #{encoder_forward.2} parent=11 // pred_check
          %p600 = pneg %p157
        $region18: #{encoder_forward.2} parent=11 // pred_check_branch
          %602 = sbr.rel (%p600) target = $region20
        $region19: #{encoder_forward.2} parent=11 // pred_region
          _
        $region20: #{encoder_forward.2} parent=11 // pred_fallthru
          _
        // Predicated region
        $region21: #{encoder_forward.2} parent=11 // pred_check
          %p603 = pneg %p178
        $region22: #{encoder_forward.2} parent=11 // pred_check_branch
          %605 = sbr.rel (%p603) target = $region24
        $region23: #{encoder_forward.2} parent=11 // pred_region
          %s607 = ssub.s32 16, 16
          %608 = vsyncadd [#allocation3], %s607
          %s610 = sshll.u32 [#allocation2], 4
          %s611 = int_to_ptr.vmem [resolvable:$true] %s610
          %613 = dma.hbm_to_vmem [thread:$0]  %s5, 16, %s611, [#allocation3]
        $region24: #{encoder_forward.2} parent=11 // pred_fallthru
          _
        // Predicated region
        $region25: #{encoder_forward.2} parent=11 // pred_check
          %p614 = pneg %p199
        $region26: #{encoder_forward.2} parent=11 // pred_check_branch
          %616 = sbr.rel (%p614) target = $region28
        $region27: #{encoder_forward.2} parent=11 // pred_region
          _
        $region28: #{encoder_forward.2} parent=11 // pred_fallthru
          _
        // Predicated region
        $region29: #{encoder_forward.2} parent=11 // pred_check
          %p617 = pneg %p220
        $region30: #{encoder_forward.2} parent=11 // pred_check_branch
          %619 = sbr.rel (%p617) target = $region32
        $region31: #{encoder_forward.2} parent=11 // pred_region
          _
        $region32: #{encoder_forward.2} parent=11 // pred_fallthru
          _
        // Predicated region
        $region33: #{encoder_forward.2} parent=11 // pred_check
          %p620 = pneg %p241
        $region34: #{encoder_forward.2} parent=11 // pred_check_branch
          %622 = sbr.rel (%p620) target = $region36
        $region35: #{encoder_forward.2} parent=11 // pred_region
          _
        $region36: #{encoder_forward.2} parent=11 // pred_fallthru
          _
        // Predicated region
        $region37: #{encoder_forward.2} parent=11 // pred_check
          %p623 = pneg %p262
        $region38: #{encoder_forward.2} parent=11 // pred_check_branch
          %625 = sbr.rel (%p623) target = $region40
        $region39: #{encoder_forward.2} parent=11 // pred_region
          _
        $region40: #{encoder_forward.2} parent=11 // pred_fallthru
          _
        // Predicated region
        $region41: #{encoder_forward.2} parent=11 // pred_check
          %p626 = pneg %p283
        $region42: #{encoder_forward.2} parent=11 // pred_check_branch
          %628 = sbr.rel (%p626) target = $region44
        $region43: #{encoder_forward.2} parent=11 // pred_region
          %s630 = ssub.s32 16, 16
          %631 = vsyncadd [#allocation5], %s630
          %s633 = sshll.u32 [#allocation4], 4
          %s634 = int_to_ptr.vmem [resolvable:$true] %s633
          %636 = dma.hbm_to_vmem [thread:$0]  %s10, 16, %s634, [#allocation5]
        $region44: #{encoder_forward.2} parent=11 // pred_fallthru
          _
        // Predicated region
        $region45: #{encoder_forward.2} parent=11 // pred_check
          %p637 = pneg %p304
        $region46: #{encoder_forward.2} parent=11 // pred_check_branch
          %639 = sbr.rel (%p637) target = $region48
        $region47: #{encoder_forward.2} parent=11 // pred_region
          %s641 = ssub.s32 16, 16
          %642 = vsyncadd [#allocation5], %s641
          %s644 = sshll.u32 [#allocation6], 4
          %s645 = int_to_ptr.vmem [resolvable:$true] %s644
          %647 = dma.hbm_to_vmem [thread:$0]  %s11, 16, %s645, [#allocation5]
        $region48: #{encoder_forward.2} parent=11 // pred_fallthru
          _
        // Predicated region
        $region49: #{encoder_forward.2} parent=11 // pred_check
          %p648 = pneg %p325
        $region50: #{encoder_forward.2} parent=11 // pred_check_branch
          %650 = sbr.rel (%p648) target = $region52
        $region51: #{encoder_forward.2} parent=11 // pred_region
          _
        $region52: #{encoder_forward.2} parent=11 // pred_fallthru
          _
        // Predicated region
        $region53: #{encoder_forward.2} parent=11 // pred_check
          %p651 = pneg %p346
        $region54: #{encoder_forward.2} parent=11 // pred_check_branch
          %653 = sbr.rel (%p651) target = $region56
        $region55: #{encoder_forward.2} parent=11 // pred_region
          %s655 = ssub.s32 16, 16
          %656 = vsyncadd [#allocation8], %s655
          %s658 = sshll.u32 [#allocation7], 4
          %s659 = int_to_ptr.vmem [resolvable:$true] %s658
          %661 = dma.hbm_to_vmem [thread:$0]  %s13, 16, %s659, [#allocation8]
        $region56: #{encoder_forward.2} parent=11 // pred_fallthru
          _
        // Predicated region
        $region57: #{encoder_forward.2} parent=11 // pred_check
          %p662 = pneg %p367
        $region58: #{encoder_forward.2} parent=11 // pred_check_branch
          %664 = sbr.rel (%p662) target = $region60
        $region59: #{encoder_forward.2} parent=11 // pred_region
          %s666 = ssub.s32 512, 512
          %667 = vsyncadd [#allocation8], %s666
          %s668 = sshll.u32 [#allocation9], 4
          %s669 = int_to_ptr.vmem [resolvable:$true] %s668
          %674 = dma.hbm_to_vmem [thread:$0]  %s14, 512, %s669, [#allocation8], 128, 128, 8
        $region60: #{encoder_forward.2} parent=11 // pred_fallthru
          _
        // Predicated region
        $region61: #{encoder_forward.2} parent=11 // pred_check
          %p675 = pneg %p388
        $region62: #{encoder_forward.2} parent=11 // pred_check_branch
          %677 = sbr.rel (%p675) target = $region64
        $region63: #{encoder_forward.2} parent=11 // pred_region
          %s679 = ssub.s32 16, 16
          %680 = vsyncadd [#allocation11], %s679
          %s682 = sshll.u32 [#allocation10], 4
          %s683 = int_to_ptr.vmem [resolvable:$true] %s682
          %685 = dma.hbm_to_vmem [thread:$0]  %s15, 16, %s683, [#allocation11]
        $region64: #{encoder_forward.2} parent=11 // pred_fallthru
          _
        // Predicated region
        $region65: #{encoder_forward.2} parent=11 // pred_check
          %p686 = pneg %p409
        $region66: #{encoder_forward.2} parent=11 // pred_check_branch
          %688 = sbr.rel (%p686) target = $region68
        $region67: #{encoder_forward.2} parent=11 // pred_region
          %s690 = ssub.s32 512, 512
          %691 = vsyncadd [#allocation11], %s690
          %s692 = sshll.u32 [#allocation12], 4
          %s693 = int_to_ptr.vmem [resolvable:$true] %s692
          %698 = dma.hbm_to_vmem [thread:$0]  %s16, 512, %s693, [#allocation11], 128, 128, 8
        $region68: #{encoder_forward.2} parent=11 // pred_fallthru
          _
        // Predicated region
        $region69: #{encoder_forward.2} parent=11 // pred_check
          %p699 = pneg %p430
        $region70: #{encoder_forward.2} parent=11 // pred_check_branch
          %701 = sbr.rel (%p699) target = $region72
        $region71: #{encoder_forward.2} parent=11 // pred_region
          %s703 = ssub.s32 16, 16
          %704 = vsyncadd [#allocation14], %s703
          %s706 = sshll.u32 [#allocation13], 4
          %s707 = int_to_ptr.vmem [resolvable:$true] %s706
          %709 = dma.hbm_to_vmem [thread:$0]  %s17, 16, %s707, [#allocation14]
        $region72: #{encoder_forward.2} parent=11 // pred_fallthru
          _
        // Predicated region
        $region73: #{encoder_forward.2} parent=11 // pred_check
          %p710 = pneg %p451
        $region74: #{encoder_forward.2} parent=11 // pred_check_branch
          %712 = sbr.rel (%p710) target = $region76
        $region75: #{encoder_forward.2} parent=11 // pred_region
          _
        $region76: #{encoder_forward.2} parent=11 // pred_fallthru
          _
        // Predicated region
        $region77: #{encoder_forward.2} parent=11 // pred_check
          %p713 = pneg %p472
        $region78: #{encoder_forward.2} parent=11 // pred_check_branch
          %715 = sbr.rel (%p713) target = $region80
        $region79: #{encoder_forward.2} parent=11 // pred_region
          %s717 = ssub.s32 16, 16
          %718 = vsyncadd [#allocation14], %s717
          %s720 = sshll.u32 [#allocation15], 4
          %s721 = int_to_ptr.vmem [resolvable:$true] %s720
          %723 = dma.hbm_to_vmem [thread:$0]  %s19, 16, %s721, [#allocation14]
        $region80: #{encoder_forward.2} parent=11 // pred_fallthru
          _
        // Predicated region
        $region81: #{encoder_forward.2} parent=11 // pred_check
          %p724 = pneg %p493
        $region82: #{encoder_forward.2} parent=11 // pred_check_branch
          %726 = sbr.rel (%p724) target = $region84
        $region83: #{encoder_forward.2} parent=11 // pred_region
          %s728 = ssub.s32 512, 512
          %729 = vsyncadd [#allocation17], %s728
          %s730 = sshll.u32 [#allocation16], 4
          %s731 = int_to_ptr.vmem [resolvable:$true] %s730
          %736 = dma.hbm_to_vmem [thread:$0]  %s20, 512, %s731, [#allocation17], 128, 128, 8
        $region84: #{encoder_forward.2} parent=11 // pred_fallthru
          _
        // Predicated region
        $region85: #{encoder_forward.2} parent=11 // pred_check
          %p737 = pneg %p514
        $region86: #{encoder_forward.2} parent=11 // pred_check_branch
          %739 = sbr.rel (%p737) target = $region88
        $region87: #{encoder_forward.2} parent=11 // pred_region
          %s741 = ssub.s32 16, 16
          %742 = vsyncadd [#allocation17], %s741
          %s744 = sshll.u32 [#allocation18], 4
          %s745 = int_to_ptr.vmem [resolvable:$true] %s744
          %747 = dma.hbm_to_vmem [thread:$0]  %s21, 16, %s745, [#allocation17]
        $region88: #{encoder_forward.2} parent=11 // pred_fallthru
          _
        // Predicated region
        $region89: #{encoder_forward.2} parent=11 // pred_check
          %p748 = pneg %p535
        $region90: #{encoder_forward.2} parent=11 // pred_check_branch
          %750 = sbr.rel (%p748) target = $region92
        $region91: #{encoder_forward.2} parent=11 // pred_region
          _
        $region92: #{encoder_forward.2} parent=11 // pred_fallthru
          _
        // Predicated region
        $region93: #{encoder_forward.2} parent=11 // pred_check
          %p751 = pneg %p556
        $region94: #{encoder_forward.2} parent=11 // pred_check_branch
          %753 = sbr.rel (%p751) target = $region96
        $region95: #{encoder_forward.2} parent=11 // pred_region
          %s755 = ssub.s32 16, 16
          %756 = vsyncadd [#allocation20], %s755
          %s758 = sshll.u32 [#allocation19], 4
          %s759 = int_to_ptr.vmem [resolvable:$true] %s758
          %761 = dma.hbm_to_vmem [thread:$0]  %s23, 16, %s759, [#allocation20]
        $region96: #{encoder_forward.2} parent=11 // pred_fallthru
          _
      $region12: #{encoder_forward.2} parent=5 // pred_fallthru
        _
      %p762 = scmp.lt.s32.totalorder %s37, 2
      // Predicated region
      $region97: #{encoder_forward.2} parent=5 // pred_check
        %p763 = pneg %p762
      $region98: #{encoder_forward.2} parent=5 // pred_check_branch
        %765 = sbr.rel (%p763) target = $region100
      $region99: #{encoder_forward.2} parent=5 // pred_region
        // Predicated region
        $region101: #{encoder_forward.2} parent=99 // pred_check
          %p766 = pneg %p57
        $region102: #{encoder_forward.2} parent=99 // pred_check_branch
          %768 = sbr.rel (%p766) target = $region104
        $region103: #{encoder_forward.2} parent=99 // pred_region
          %p769 = scmp.lt.s32.totalorder %s37, 1
          %s770 = scalar_select %p769, %s37, 1
          %s771 = smul.addr %s770, 8
          %s772 = scalar_lea.vmem %s0, %s771
        $region104: #{encoder_forward.2} parent=99 // pred_fallthru
          _
        // Predicated region
        $region105: #{encoder_forward.2} parent=99 // pred_check
          %p773 = pneg %p83
        $region106: #{encoder_forward.2} parent=99 // pred_check_branch
          %775 = sbr.rel (%p773) target = $region108
        $region107: #{encoder_forward.2} parent=99 // pred_region
          %p776 = scmp.lt.s32.totalorder %s37, 1
          %s777 = scalar_select %p776, %s37, 1
          %s778 = smul.addr %s777, 8
          %s779 = scalar_lea.vmem %s1, %s778
        $region108: #{encoder_forward.2} parent=99 // pred_fallthru
          _
        // Predicated region
        $region109: #{encoder_forward.2} parent=99 // pred_check
          %p780 = pneg %p109
        $region110: #{encoder_forward.2} parent=99 // pred_check_branch
          %782 = sbr.rel (%p780) target = $region112
        $region111: #{encoder_forward.2} parent=99 // pred_region
          %p783 = scmp.lt.s32.totalorder %s37, 1
          %s784 = scalar_select %p783, %s37, 1
          %s785 = scalar_lea.vmem %s2, %s784
        $region112: #{encoder_forward.2} parent=99 // pred_fallthru
          _
      $region100: #{encoder_forward.2} parent=5 // pred_fallthru
        _
      %p786 = scmp.le.s32.totalorder 1, %s37
      %p787 = scmp.lt.s32.totalorder %s37, 3
      %p788 = pnand %p786, %p787
      %p789 = pneg %p788
      // Predicated region
      $region113: #{encoder_forward.2} parent=5 // pred_check
        _
      $region114: #{encoder_forward.2} parent=5 // pred_check_branch
        %791 = sbr.rel (%p788) target = $region116
      $region115: #{encoder_forward.2} parent=5 // pred_region
        %s792 = ssub.s32 %s37, 1
        // Predicated region
        $region117: #{encoder_forward.2} parent=115 // pred_check
          %p793 = pneg %p178
        $region118: #{encoder_forward.2} parent=115 // pred_check_branch
          %795 = sbr.rel (%p793) target = $region120
        $region119: #{encoder_forward.2} parent=115 // pred_region
          %796 = dma.done [#allocation3], 16
        $region120: #{encoder_forward.2} parent=115 // pred_fallthru
          _
        // Predicated region
        $region121: #{encoder_forward.2} parent=115 // pred_check
          %p797 = pneg %p283
        $region122: #{encoder_forward.2} parent=115 // pred_check_branch
          %799 = sbr.rel (%p797) target = $region124
        $region123: #{encoder_forward.2} parent=115 // pred_region
          %800 = dma.done [#allocation5], 16
        $region124: #{encoder_forward.2} parent=115 // pred_fallthru
          _
        // Predicated region
        $region125: #{encoder_forward.2} parent=115 // pred_check
          %p801 = pneg %p304
        $region126: #{encoder_forward.2} parent=115 // pred_check_branch
          %803 = sbr.rel (%p801) target = $region128
        $region127: #{encoder_forward.2} parent=115 // pred_region
          %804 = dma.done [#allocation5], 16
        $region128: #{encoder_forward.2} parent=115 // pred_fallthru
          _
        // Predicated region
        $region129: #{encoder_forward.2} parent=115 // pred_check
          %p805 = pneg %p346
        $region130: #{encoder_forward.2} parent=115 // pred_check_branch
          %807 = sbr.rel (%p805) target = $region132
        $region131: #{encoder_forward.2} parent=115 // pred_region
          %808 = dma.done [#allocation8], 16
        $region132: #{encoder_forward.2} parent=115 // pred_fallthru
          _
        // Predicated region
        $region133: #{encoder_forward.2} parent=115 // pred_check
          %p809 = pneg %p367
        $region134: #{encoder_forward.2} parent=115 // pred_check_branch
          %811 = sbr.rel (%p809) target = $region136
        $region135: #{encoder_forward.2} parent=115 // pred_region
          %812 = dma.done [#allocation8], 512
        $region136: #{encoder_forward.2} parent=115 // pred_fallthru
          _
        // Predicated region
        $region137: #{encoder_forward.2} parent=115 // pred_check
          %p813 = pneg %p388
        $region138: #{encoder_forward.2} parent=115 // pred_check_branch
          %815 = sbr.rel (%p813) target = $region140
        $region139: #{encoder_forward.2} parent=115 // pred_region
          %816 = dma.done [#allocation11], 16
        $region140: #{encoder_forward.2} parent=115 // pred_fallthru
          _
        // Predicated region
        $region141: #{encoder_forward.2} parent=115 // pred_check
          %p817 = pneg %p409
        $region142: #{encoder_forward.2} parent=115 // pred_check_branch
          %819 = sbr.rel (%p817) target = $region144
        $region143: #{encoder_forward.2} parent=115 // pred_region
          %820 = dma.done [#allocation11], 512
        $region144: #{encoder_forward.2} parent=115 // pred_fallthru
          _
        // Predicated region
        $region145: #{encoder_forward.2} parent=115 // pred_check
          %p821 = pneg %p430
        $region146: #{encoder_forward.2} parent=115 // pred_check_branch
          %823 = sbr.rel (%p821) target = $region148
        $region147: #{encoder_forward.2} parent=115 // pred_region
          %824 = dma.done [#allocation14], 16
        $region148: #{encoder_forward.2} parent=115 // pred_fallthru
          _
        // Predicated region
        $region149: #{encoder_forward.2} parent=115 // pred_check
          %p825 = pneg %p472
        $region150: #{encoder_forward.2} parent=115 // pred_check_branch
          %827 = sbr.rel (%p825) target = $region152
        $region151: #{encoder_forward.2} parent=115 // pred_region
          %828 = dma.done [#allocation14], 16
        $region152: #{encoder_forward.2} parent=115 // pred_fallthru
          _
        // Predicated region
        $region153: #{encoder_forward.2} parent=115 // pred_check
          %p829 = pneg %p493
        $region154: #{encoder_forward.2} parent=115 // pred_check_branch
          %831 = sbr.rel (%p829) target = $region156
        $region155: #{encoder_forward.2} parent=115 // pred_region
          %832 = dma.done [#allocation17], 512
        $region156: #{encoder_forward.2} parent=115 // pred_fallthru
          _
        // Predicated region
        $region157: #{encoder_forward.2} parent=115 // pred_check
          %p833 = pneg %p514
        $region158: #{encoder_forward.2} parent=115 // pred_check_branch
          %835 = sbr.rel (%p833) target = $region160
        $region159: #{encoder_forward.2} parent=115 // pred_region
          %836 = dma.done [#allocation17], 16
        $region160: #{encoder_forward.2} parent=115 // pred_fallthru
          _
        // Predicated region
        $region161: #{encoder_forward.2} parent=115 // pred_check
          %p837 = pneg %p556
        $region162: #{encoder_forward.2} parent=115 // pred_check_branch
          %839 = sbr.rel (%p837) target = $region164
        $region163: #{encoder_forward.2} parent=115 // pred_region
          %840 = dma.done [#allocation20], 16
        $region164: #{encoder_forward.2} parent=115 // pred_fallthru
          _
        %p841 = scmp.lt.s32.totalorder %s42, 1
        %s842 = scalar_select %p841, %s42, 1
        %s843 = smul.addr %s842, 8
        %s844 = scalar_lea.vmem %s0, %s843
        %p845 = pneg %p63
        %p846 = pneg %p60
        %p847 = scmp.lt.s32.totalorder %s42, 1
        %s848 = scalar_select %p847, %s42, 1
        %s849 = smul.addr %s848, 8
        %s850 = scalar_lea.vmem %s1, %s849
        %p851 = pneg %p89
        %p852 = pneg %p86
        %p853 = scmp.lt.s32.totalorder %s42, 1
        %s854 = scalar_select %p853, %s42, 1
        %s855 = scalar_lea.vmem %s2, %s854
        %p856 = pneg %p115
        %p857 = pneg %p112
        %p858 = pneg %p136
        %p859 = pneg %p133
        %p860 = pneg %p157
        %p861 = pneg %p154
        %p862 = pneg %p178
        %p863 = pneg %p175
        %p864 = pneg %p199
        %p865 = pneg %p196
        %p866 = pneg %p220
        %p867 = pneg %p217
        %p868 = pneg %p241
        %p869 = pneg %p238
        %p870 = pneg %p262
        %p871 = pneg %p259
        %p872 = pneg %p283
        %p873 = pneg %p280
        %p874 = pneg %p304
        %p875 = pneg %p301
        %p876 = pneg %p325
        %p877 = pneg %p322
        %p878 = pneg %p346
        %p879 = pneg %p343
        %p880 = pneg %p367
        %p881 = pneg %p364
        %p882 = pneg %p388
        %p883 = pneg %p385
        %p884 = pneg %p409
        %p885 = pneg %p406
        %p886 = pneg %p430
        %p887 = pneg %p427
        %p888 = pneg %p451
        %p889 = pneg %p448
        %p890 = pneg %p472
        %p891 = pneg %p469
        %p892 = pneg %p493
        %p893 = pneg %p490
        %p894 = pneg %p514
        %p895 = pneg %p511
        %p896 = pneg %p535
        %p897 = pneg %p532
        %p898 = pneg %p556
        %p899 = pneg %p553
        %p900 = pneg %p582
        %p901 = pneg %p579
        %p902 = scmp.lt.s32.totalorder %s42, 1
        %s903 = scalar_select %p902, %s42, 1
        %s904 = smul.addr %s903, 8
        %s905 = scalar_lea.vmem %s24, %s904
        %p906 = scmp.lt.s32.totalorder %s42, 1
        %s907 = scalar_select %p906, %s42, 1
        %s908 = smul.addr %s907, 8
        %s909 = scalar_lea.vmem %s0, %s908
        %p910 = scmp.lt.s32.totalorder %s42, 1
        %s911 = scalar_select %p910, %s42, 1
        %s912 = smul.addr %s911, 8
        %s913 = scalar_lea.vmem %s1, %s912
        %p914 = scmp.lt.s32.totalorder %s42, 1
        %s915 = scalar_select %p914, %s42, 1
        %s916 = scalar_lea.vmem %s2, %s915
        %p917 = scmp.lt.s32.totalorder %s42, 1
        %s918 = scalar_select %p917, %s42, 1
        %s919 = smul.addr %s918, 8
        %s920 = scalar_lea.vmem %s24, %s919
        %v921 = vld [vmem:[%s909] sm:$0xff]
        %v922 = vld [vmem:[%s3] sm:$0xff]
        %v923 = vadd.f32 %v921, %v922
        %v924 = vld [vmem:[%s913] sm:$0xff]
        %v925 = vld [vmem:[%s916] sm:$0x1]
        %vm926 = vcmask 261120
        %v927 = vsel %vm926, %v924, 0.0
        %928 = vadd.xlane.f32.xlu0 %v927
        %v929 = vpop.xlane.xlu0 %928
        %v930 = vrcp.pop 32.0
        %v931 = vmul.f32 %v929, %v930
        %v932 = vsub.f32 %v924, %v931
        %v933 = vmul.f32 %v932, %v932
        %v934 = vsel %vm926, %v933, 0.0
        %935 = vadd.xlane.f32.xlu0 %v934
        %v936 = vpop.xlane.xlu0 %935
        %v937 = vmul.f32 %v936, %v930
        %v938 = vadd.f32 %v937, 1e-05
        %v939 = vrsqrt.pop %v938
        %v940 = vmul.f32 %v932, %v939
        %v941 = vld [vmem:[%s4] sm:$0x1]
        %v943 = vlaneseq
        %v944 = vshrl.u32 %v943, 7
        %v945 = vsub.s32 0, %v944
        %v946 = vrot.slane %v941, %v945
        %v948 = vmul.f32 %v940, %v946
        %v949 = vld [vmem:[#allocation2] sm:$0x1]
        %v951 = vlaneseq
        %v952 = vshrl.u32 %v951, 7
        %v953 = vsub.s32 0, %v952
        %v954 = vrot.slane %v949, %v953
        %v956 = vadd.f32 %v948, %v954
        %v957 = vld [vmem:[%s6] sm:$0xff]
        %v958 = vld [vmem:[%s6 + $0x8] sm:$0xff]
        %v959 = vld [vmem:[%s6 + $0x10] sm:$0xff]
        %v960 = vld [vmem:[%s6 + $0x18] sm:$0xff]
        %v961 = vld [vmem:[%s7] sm:$0x1]
        %v963 = vlaneseq
        %v964 = vshrl.u32 %v963, 7
        %v965 = vsub.s32 0, %v964
        %v966 = vrot.slane %v961, %v965
        %v969 = vsel %vm926, %v956, 0
        %971 = vmatprep.subr.mxu0 0.0
        %972 = vmatpush1.msra.mxu0 0.0
        %973 = vmatprep.subr.mxu0 0.0
        %974 = vmatpush1.msra.mxu0 0.0
        %975 = vmatprep.subr.mxu0 0.0
        %976 = vmatpush1.msra.mxu0 0.0
        %977 = vmatprep.subr.mxu0 0.0
        %978 = vmatpush1.msra.mxu0 0.0
        %979 = vmatprep.subr.mxu0 0.0
        %980 = vmatpush1.msra.mxu0 0.0
        %981 = vmatprep.subr.mxu0 0.0
        %982 = vmatpush1.msra.mxu0 0.0
        %983 = vmatprep.subr.mxu0 0.0
        %984 = vmatpush1.msra.mxu0 0.0
        %985 = vmatprep.subr.mxu0 0.0
        %986 = vmatpush1.msra.mxu0 0.0
        %987 = vmatprep.subr.mxu0 0.0
        %988 = vmatpush1.msra.mxu0 0.0
        %989 = vmatprep.subr.mxu0 0.0
        %990 = vmatpush1.msra.mxu0 0.0
        %991 = vmatprep.subr.mxu0 0.0
        %992 = vmatpush1.msra.mxu0 0.0
        %993 = vmatprep.subr.mxu0 0.0
        %994 = vmatpush1.msra.mxu0 0.0
        %995 = vmatprep.subr.mxu0 0.0
        %996 = vmatpush1.msra.mxu0 %v960
        %997 = vmatprep.subr.mxu0 0.0
        %998 = vmatpush1.msra.mxu0 %v959
        %999 = vmatprep.subr.mxu0 0.0
        %1000 = vmatpush1.msra.mxu0 %v958
        %1001 = vmatprep.subr.mxu0 0.0
        %1002 = vmatpush1.msra.mxu0 %v957
        %1003 = vmatprep.subr.mxu0 0.0
        %1004 = vmatpush2.msra.mxu0 0.0
        %1005 = vmatprep.subr.mxu0 0.0
        %1006 = vmatpush2.msra.mxu0 0.0
        %1007 = vmatprep.subr.mxu0 0.0
        %1008 = vmatpush2.msra.mxu0 0.0
        %1009 = vmatprep.subr.mxu0 0.0
        %1010 = vmatpush2.msra.mxu0 0.0
        %1011 = vmatprep.subr.mxu0 0.0
        %1012 = vmatpush2.msra.mxu0 0.0
        %1013 = vmatprep.subr.mxu0 0.0
        %1014 = vmatpush2.msra.mxu0 0.0
        %1015 = vmatprep.subr.mxu0 0.0
        %1016 = vmatpush2.msra.mxu0 0.0
        %1017 = vmatprep.subr.mxu0 0.0
        %1018 = vmatpush2.msra.mxu0 0.0
        %1019 = vmatprep.subr.mxu0 0.0
        %1020 = vmatpush2.msra.mxu0 0.0
        %1021 = vmatprep.subr.mxu0 0.0
        %1022 = vmatpush2.msra.mxu0 0.0
        %1023 = vmatprep.subr.mxu0 0.0
        %1024 = vmatpush2.msra.mxu0 0.0
        %1025 = vmatprep.subr.mxu0 0.0
        %1026 = vmatpush2.msra.mxu0 0.0
        %1027 = vmatprep.subr.mxu0 0.0
        %1028 = vmatpush2.msra.mxu0 0.0
        %1029 = vmatprep.subr.mxu0 0.0
        %1030 = vmatpush2.msra.mxu0 0.0
        %1031 = vmatprep.subr.mxu0 0.0
        %1032 = vmatpush2.msra.mxu0 0.0
        %1033 = vmatprep.subr.mxu0 0.0
        %1034 = vmatpush2.msra.mxu0 0.0
        %1035 = vmatprep.mubr.f32.mxu0 0.0
        %1036 = vmatmul.mubr.f32.gmra.mxu0 %v969
        %v1037 = vpop.f32.mrf.mxu0
        %v1038 = vadd.f32 %v966, %v1037
        %v1039 = vpop.f32.mrf.mxu0
        %1040 = vdwg.mxu0
        %1042 = vrot.lane.b32.xlu0 %v1038, 96
        %v1043 = vpop.permute.xlu0 %1042
        %vm1044 = vcmask 64512
        %v1045 = vsel %vm1044, %v1038, 0
        %v1047 = vsel %vm1044, %v1043, 0
        %1049 = vmatprep.subr.mxu0 0.0
        %1050 = vmatpush1.xpose.msra.mxu0 0.0
        %1051 = vmatprep.subr.mxu0 0.0
        %1052 = vmatpush1.xpose.msra.mxu0 0.0
        %1053 = vmatprep.subr.mxu0 0.0
        %1054 = vmatpush1.xpose.msra.mxu0 0.0
        %1055 = vmatprep.subr.mxu0 0.0
        %1056 = vmatpush1.xpose.msra.mxu0 0.0
        %1057 = vmatprep.subr.mxu0 0.0
        %1058 = vmatpush1.xpose.msra.mxu0 0.0
        %1059 = vmatprep.subr.mxu0 0.0
        %1060 = vmatpush1.xpose.msra.mxu0 0.0
        %1061 = vmatprep.subr.mxu0 0.0
        %1062 = vmatpush1.xpose.msra.mxu0 0.0
        %1063 = vmatprep.subr.mxu0 0.0
        %1064 = vmatpush1.xpose.msra.mxu0 0.0
        %1065 = vmatprep.subr.mxu0 0.0
        %1066 = vmatpush1.xpose.msra.mxu0 0.0
        %1067 = vmatprep.subr.mxu0 0.0
        %1068 = vmatpush1.xpose.msra.mxu0 0.0
        %1069 = vmatprep.subr.mxu0 0.0
        %1070 = vmatpush1.xpose.msra.mxu0 0.0
        %1071 = vmatprep.subr.mxu0 0.0
        %1072 = vmatpush1.xpose.msra.mxu0 0.0
        %1073 = vmatprep.subr.mxu0 0.0
        %1074 = vmatpush1.xpose.msra.mxu0 0.0
        %1075 = vmatprep.subr.mxu0 0.0
        %1076 = vmatpush1.xpose.msra.mxu0 0.0
        %1077 = vmatprep.subr.mxu0 0.0
        %1078 = vmatpush1.xpose.msra.mxu0 0.0
        %1079 = vmatprep.subr.mxu0 0.0
        %1080 = vmatpush1.xpose.msra.mxu0 %v1047
        %1081 = vmatprep.subr.mxu0 0.0
        %1082 = vmatpush2.xpose.msra.mxu0 0.0
        %1083 = vmatprep.subr.mxu0 0.0
        %1084 = vmatpush2.xpose.msra.mxu0 0.0
        %1085 = vmatprep.subr.mxu0 0.0
        %1086 = vmatpush2.xpose.msra.mxu0 0.0
        %1087 = vmatprep.subr.mxu0 0.0
        %1088 = vmatpush2.xpose.msra.mxu0 0.0
        %1089 = vmatprep.subr.mxu0 0.0
        %1090 = vmatpush2.xpose.msra.mxu0 0.0
        %1091 = vmatprep.subr.mxu0 0.0
        %1092 = vmatpush2.xpose.msra.mxu0 0.0
        %1093 = vmatprep.subr.mxu0 0.0
        %1094 = vmatpush2.xpose.msra.mxu0 0.0
        %1095 = vmatprep.subr.mxu0 0.0
        %1096 = vmatpush2.xpose.msra.mxu0 0.0
        %1097 = vmatprep.subr.mxu0 0.0
        %1098 = vmatpush2.xpose.msra.mxu0 0.0
        %1099 = vmatprep.subr.mxu0 0.0
        %1100 = vmatpush2.xpose.msra.mxu0 0.0
        %1101 = vmatprep.subr.mxu0 0.0
        %1102 = vmatpush2.xpose.msra.mxu0 0.0
        %1103 = vmatprep.subr.mxu0 0.0
        %1104 = vmatpush2.xpose.msra.mxu0 0.0
        %1105 = vmatprep.subr.mxu0 0.0
        %1106 = vmatpush2.xpose.msra.mxu0 0.0
        %1107 = vmatprep.subr.mxu0 0.0
        %1108 = vmatpush2.xpose.msra.mxu0 0.0
        %1109 = vmatprep.subr.mxu0 0.0
        %1110 = vmatpush2.xpose.msra.mxu0 0.0
        %1111 = vmatprep.subr.mxu0 0.0
        %1112 = vmatpush2.xpose.msra.mxu0 0.0
        %1113 = vmatprep.mubr.f32.mxu0 0.0
        %1114 = vmatmul.mubr.f32.gmra.mxu0 %v1045
        %v1115 = vpop.f32.mrf.mxu0
        %v1116 = vadd.f32 0.0, %v1115
        %v1117 = vpop.f32.mrf.mxu0
        %1118 = vdwg.mxu0
        %v1119 = vmul.f32 %v1116, 0.35355338
        %vm1120 = vcmp.eq.s32.totalorder %v925, 0
        %v1121 = vsel %vm1120, 1, 0
        %v1122 = vlaneseq
        %v1123 = vshrl.u32 %v1122, 7
        %v1124 = vsub.s32 0, %v1123
        %v1125 = vrot.slane %v1121, %v1124
        %vm1126 = vcmp.eq.s32.totalorder %v1125, 1
        %v1127 = vsel %vm1126, -1e+10, %v1119
        %v1128 = vsel %vm1044, %v1127, -inf
        %1129 = vmax.xlane.f32.xlu0 %v1128
        %v1130 = vpop.xlane.xlu0 %1129
        %v1131 = vsub.f32 %v1127, %v1130
        %v1132 = vmul.f32 %v1131, 1.442695
        %v1133 = vpow.pop %v1132
        %v1134 = vsel %vm1044, %v1133, 0.0
        %1135 = vadd.xlane.f32.xlu0 %v1134
        %v1136 = vpop.xlane.xlu0 %1135
        %v1137 = vrcp.pop %v1136
        %v1138 = vmul.f32 %v1133, %v1137
        %1139 = vrot.lane.b32.xlu0 %v1038, 64
        %v1140 = vpop.permute.xlu0 %1139
        %v1143 = vsel %vm1044, %v1138, 0
        %1145 = vmatprep.subr.mxu0 0.0
        %1146 = vmatpush1.msra.mxu0 0.0
        %1147 = vmatprep.subr.mxu0 0.0
        %1148 = vmatpush1.msra.mxu0 0.0
        %1149 = vmatprep.subr.mxu0 0.0
        %1150 = vmatpush1.msra.mxu0 0.0
        %1151 = vmatprep.subr.mxu0 0.0
        %1152 = vmatpush1.msra.mxu0 0.0
        %1153 = vmatprep.subr.mxu0 0.0
        %1154 = vmatpush1.msra.mxu0 0.0
        %1155 = vmatprep.subr.mxu0 0.0
        %1156 = vmatpush1.msra.mxu0 0.0
        %1157 = vmatprep.subr.mxu0 0.0
        %1158 = vmatpush1.msra.mxu0 0.0
        %1159 = vmatprep.subr.mxu0 0.0
        %1160 = vmatpush1.msra.mxu0 0.0
        %1161 = vmatprep.subr.mxu0 0.0
        %1162 = vmatpush1.msra.mxu0 0.0
        %1163 = vmatprep.subr.mxu0 0.0
        %1164 = vmatpush1.msra.mxu0 0.0
        %1165 = vmatprep.subr.mxu0 0.0
        %1166 = vmatpush1.msra.mxu0 0.0
        %1167 = vmatprep.subr.mxu0 0.0
        %1168 = vmatpush1.msra.mxu0 0.0
        %1169 = vmatprep.subr.mxu0 0.0
        %1170 = vmatpush1.msra.mxu0 0.0
        %1171 = vmatprep.subr.mxu0 0.0
        %1172 = vmatpush1.msra.mxu0 0.0
        %1173 = vmatprep.subr.mxu0 0.0
        %1174 = vmatpush1.msra.mxu0 0.0
        %1175 = vmatprep.subr.mxu0 0.0
        %1176 = vmatpush1.msra.mxu0 %v1140
        %1177 = vmatprep.subr.mxu0 0.0
        %1178 = vmatpush2.msra.mxu0 0.0
        %1179 = vmatprep.subr.mxu0 0.0
        %1180 = vmatpush2.msra.mxu0 0.0
        %1181 = vmatprep.subr.mxu0 0.0
        %1182 = vmatpush2.msra.mxu0 0.0
        %1183 = vmatprep.subr.mxu0 0.0
        %1184 = vmatpush2.msra.mxu0 0.0
        %1185 = vmatprep.subr.mxu0 0.0
        %1186 = vmatpush2.msra.mxu0 0.0
        %1187 = vmatprep.subr.mxu0 0.0
        %1188 = vmatpush2.msra.mxu0 0.0
        %1189 = vmatprep.subr.mxu0 0.0
        %1190 = vmatpush2.msra.mxu0 0.0
        %1191 = vmatprep.subr.mxu0 0.0
        %1192 = vmatpush2.msra.mxu0 0.0
        %1193 = vmatprep.subr.mxu0 0.0
        %1194 = vmatpush2.msra.mxu0 0.0
        %1195 = vmatprep.subr.mxu0 0.0
        %1196 = vmatpush2.msra.mxu0 0.0
        %1197 = vmatprep.subr.mxu0 0.0
        %1198 = vmatpush2.msra.mxu0 0.0
        %1199 = vmatprep.subr.mxu0 0.0
        %1200 = vmatpush2.msra.mxu0 0.0
        %1201 = vmatprep.subr.mxu0 0.0
        %1202 = vmatpush2.msra.mxu0 0.0
        %1203 = vmatprep.subr.mxu0 0.0
        %1204 = vmatpush2.msra.mxu0 0.0
        %1205 = vmatprep.subr.mxu0 0.0
        %1206 = vmatpush2.msra.mxu0 0.0
        %1207 = vmatprep.subr.mxu0 0.0
        %1208 = vmatpush2.msra.mxu0 0.0
        %1209 = vmatprep.mubr.f32.mxu0 0.0
        %1210 = vmatmul.mubr.f32.gmra.mxu0 %v1143
        %v1211 = vpop.f32.mrf.mxu0
        %v1212 = vadd.f32 0.0, %v1211
        %v1213 = vpop.f32.mrf.mxu0
        %1214 = vdwg.mxu0
        %1215 = vrot.lane.b32.xlu0 %v1038, 120
        %v1216 = vpop.permute.xlu0 %1215
        %1217 = vrot.lane.b32.xlu0 %v1038, 88
        %v1218 = vpop.permute.xlu0 %1217
        %v1219 = vsel %vm1044, %v1216, 0
        %v1221 = vsel %vm1044, %v1218, 0
        %1223 = vmatprep.subr.mxu0 0.0
        %1224 = vmatpush1.xpose.msra.mxu0 0.0
        %1225 = vmatprep.subr.mxu0 0.0
        %1226 = vmatpush1.xpose.msra.mxu0 0.0
        %1227 = vmatprep.subr.mxu0 0.0
        %1228 = vmatpush1.xpose.msra.mxu0 0.0
        %1229 = vmatprep.subr.mxu0 0.0
        %1230 = vmatpush1.xpose.msra.mxu0 0.0
        %1231 = vmatprep.subr.mxu0 0.0
        %1232 = vmatpush1.xpose.msra.mxu0 0.0
        %1233 = vmatprep.subr.mxu0 0.0
        %1234 = vmatpush1.xpose.msra.mxu0 0.0
        %1235 = vmatprep.subr.mxu0 0.0
        %1236 = vmatpush1.xpose.msra.mxu0 0.0
        %1237 = vmatprep.subr.mxu0 0.0
        %1238 = vmatpush1.xpose.msra.mxu0 0.0
        %1239 = vmatprep.subr.mxu0 0.0
        %1240 = vmatpush1.xpose.msra.mxu0 0.0
        %1241 = vmatprep.subr.mxu0 0.0
        %1242 = vmatpush1.xpose.msra.mxu0 0.0
        %1243 = vmatprep.subr.mxu0 0.0
        %1244 = vmatpush1.xpose.msra.mxu0 0.0
        %1245 = vmatprep.subr.mxu0 0.0
        %1246 = vmatpush1.xpose.msra.mxu0 0.0
        %1247 = vmatprep.subr.mxu0 0.0
        %1248 = vmatpush1.xpose.msra.mxu0 0.0
        %1249 = vmatprep.subr.mxu0 0.0
        %1250 = vmatpush1.xpose.msra.mxu0 0.0
        %1251 = vmatprep.subr.mxu0 0.0
        %1252 = vmatpush1.xpose.msra.mxu0 0.0
        %1253 = vmatprep.subr.mxu0 0.0
        %1254 = vmatpush1.xpose.msra.mxu0 %v1221
        %1255 = vmatprep.subr.mxu0 0.0
        %1256 = vmatpush2.xpose.msra.mxu0 0.0
        %1257 = vmatprep.subr.mxu0 0.0
        %1258 = vmatpush2.xpose.msra.mxu0 0.0
        %1259 = vmatprep.subr.mxu0 0.0
        %1260 = vmatpush2.xpose.msra.mxu0 0.0
        %1261 = vmatprep.subr.mxu0 0.0
        %1262 = vmatpush2.xpose.msra.mxu0 0.0
        %1263 = vmatprep.subr.mxu0 0.0
        %1264 = vmatpush2.xpose.msra.mxu0 0.0
        %1265 = vmatprep.subr.mxu0 0.0
        %1266 = vmatpush2.xpose.msra.mxu0 0.0
        %1267 = vmatprep.subr.mxu0 0.0
        %1268 = vmatpush2.xpose.msra.mxu0 0.0
        %1269 = vmatprep.subr.mxu0 0.0
        %1270 = vmatpush2.xpose.msra.mxu0 0.0
        %1271 = vmatprep.subr.mxu0 0.0
        %1272 = vmatpush2.xpose.msra.mxu0 0.0
        %1273 = vmatprep.subr.mxu0 0.0
        %1274 = vmatpush2.xpose.msra.mxu0 0.0
        %1275 = vmatprep.subr.mxu0 0.0
        %1276 = vmatpush2.xpose.msra.mxu0 0.0
        %1277 = vmatprep.subr.mxu0 0.0
        %1278 = vmatpush2.xpose.msra.mxu0 0.0
        %1279 = vmatprep.subr.mxu0 0.0
        %1280 = vmatpush2.xpose.msra.mxu0 0.0
        %1281 = vmatprep.subr.mxu0 0.0
        %1282 = vmatpush2.xpose.msra.mxu0 0.0
        %1283 = vmatprep.subr.mxu0 0.0
        %1284 = vmatpush2.xpose.msra.mxu0 0.0
        %1285 = vmatprep.subr.mxu0 0.0
        %1286 = vmatpush2.xpose.msra.mxu0 0.0
        %1287 = vmatprep.mubr.f32.mxu0 0.0
        %1288 = vmatmul.mubr.f32.gmra.mxu0 %v1219
        %v1289 = vpop.f32.mrf.mxu0
        %v1290 = vadd.f32 0.0, %v1289
        %v1291 = vpop.f32.mrf.mxu0
        %1292 = vdwg.mxu0
        %v1293 = vmul.f32 %v1290, 0.35355338
        %v1294 = vsel %vm1126, -1e+10, %v1293
        %v1295 = vsel %vm1044, %v1294, -inf
        %1296 = vmax.xlane.f32.xlu0 %v1295
        %v1297 = vpop.xlane.xlu0 %1296
        %v1298 = vsub.f32 %v1294, %v1297
        %v1299 = vmul.f32 %v1298, 1.442695
        %v1300 = vpow.pop %v1299
        %v1301 = vsel %vm1044, %v1300, 0.0
        %1302 = vadd.xlane.f32.xlu0 %v1301
        %v1303 = vpop.xlane.xlu0 %1302
        %v1304 = vrcp.pop %v1303
        %v1305 = vmul.f32 %v1300, %v1304
        %1306 = vrot.lane.b32.xlu0 %v1038, 56
        %v1307 = vpop.permute.xlu0 %1306
        %v1310 = vsel %vm1044, %v1305, 0
        %1312 = vmatprep.subr.mxu0 0.0
        %1313 = vmatpush1.msra.mxu0 0.0
        %1314 = vmatprep.subr.mxu0 0.0
        %1315 = vmatpush1.msra.mxu0 0.0
        %1316 = vmatprep.subr.mxu0 0.0
        %1317 = vmatpush1.msra.mxu0 0.0
        %1318 = vmatprep.subr.mxu0 0.0
        %1319 = vmatpush1.msra.mxu0 0.0
        %1320 = vmatprep.subr.mxu0 0.0
        %1321 = vmatpush1.msra.mxu0 0.0
        %1322 = vmatprep.subr.mxu0 0.0
        %1323 = vmatpush1.msra.mxu0 0.0
        %1324 = vmatprep.subr.mxu0 0.0
        %1325 = vmatpush1.msra.mxu0 0.0
        %1326 = vmatprep.subr.mxu0 0.0
        %1327 = vmatpush1.msra.mxu0 0.0
        %1328 = vmatprep.subr.mxu0 0.0
        %1329 = vmatpush1.msra.mxu0 0.0
        %1330 = vmatprep.subr.mxu0 0.0
        %1331 = vmatpush1.msra.mxu0 0.0
        %1332 = vmatprep.subr.mxu0 0.0
        %1333 = vmatpush1.msra.mxu0 0.0
        %1334 = vmatprep.subr.mxu0 0.0
        %1335 = vmatpush1.msra.mxu0 0.0
        %1336 = vmatprep.subr.mxu0 0.0
        %1337 = vmatpush1.msra.mxu0 0.0
        %1338 = vmatprep.subr.mxu0 0.0
        %1339 = vmatpush1.msra.mxu0 0.0
        %1340 = vmatprep.subr.mxu0 0.0
        %1341 = vmatpush1.msra.mxu0 0.0
        %1342 = vmatprep.subr.mxu0 0.0
        %1343 = vmatpush1.msra.mxu0 %v1307
        %1344 = vmatprep.subr.mxu0 0.0
        %1345 = vmatpush2.msra.mxu0 0.0
        %1346 = vmatprep.subr.mxu0 0.0
        %1347 = vmatpush2.msra.mxu0 0.0
        %1348 = vmatprep.subr.mxu0 0.0
        %1349 = vmatpush2.msra.mxu0 0.0
        %1350 = vmatprep.subr.mxu0 0.0
        %1351 = vmatpush2.msra.mxu0 0.0
        %1352 = vmatprep.subr.mxu0 0.0
        %1353 = vmatpush2.msra.mxu0 0.0
        %1354 = vmatprep.subr.mxu0 0.0
        %1355 = vmatpush2.msra.mxu0 0.0
        %1356 = vmatprep.subr.mxu0 0.0
        %1357 = vmatpush2.msra.mxu0 0.0
        %1358 = vmatprep.subr.mxu0 0.0
        %1359 = vmatpush2.msra.mxu0 0.0
        %1360 = vmatprep.subr.mxu0 0.0
        %1361 = vmatpush2.msra.mxu0 0.0
        %1362 = vmatprep.subr.mxu0 0.0
        %1363 = vmatpush2.msra.mxu0 0.0
        %1364 = vmatprep.subr.mxu0 0.0
        %1365 = vmatpush2.msra.mxu0 0.0
        %1366 = vmatprep.subr.mxu0 0.0
        %1367 = vmatpush2.msra.mxu0 0.0
        %1368 = vmatprep.subr.mxu0 0.0
        %1369 = vmatpush2.msra.mxu0 0.0
        %1370 = vmatprep.subr.mxu0 0.0
        %1371 = vmatpush2.msra.mxu0 0.0
        %1372 = vmatprep.subr.mxu0 0.0
        %1373 = vmatpush2.msra.mxu0 0.0
        %1374 = vmatprep.subr.mxu0 0.0
        %1375 = vmatpush2.msra.mxu0 0.0
        %1376 = vmatprep.mubr.f32.mxu0 0.0
        %1377 = vmatmul.mubr.f32.gmra.mxu0 %v1310
        %v1378 = vpop.f32.mrf.mxu0
        %v1379 = vadd.f32 0.0, %v1378
        %v1380 = vpop.f32.mrf.mxu0
        %1381 = vdwg.mxu0
        %1382 = vrot.lane.b32.xlu0 %v1038, 112
        %v1383 = vpop.permute.xlu0 %1382
        %1384 = vrot.lane.b32.xlu0 %v1038, 80
        %v1385 = vpop.permute.xlu0 %1384
        %v1386 = vsel %vm1044, %v1383, 0
        %v1388 = vsel %vm1044, %v1385, 0
        %1390 = vmatprep.subr.mxu0 0.0
        %1391 = vmatpush1.xpose.msra.mxu0 0.0
        %1392 = vmatprep.subr.mxu0 0.0
        %1393 = vmatpush1.xpose.msra.mxu0 0.0
        %1394 = vmatprep.subr.mxu0 0.0
        %1395 = vmatpush1.xpose.msra.mxu0 0.0
        %1396 = vmatprep.subr.mxu0 0.0
        %1397 = vmatpush1.xpose.msra.mxu0 0.0
        %1398 = vmatprep.subr.mxu0 0.0
        %1399 = vmatpush1.xpose.msra.mxu0 0.0
        %1400 = vmatprep.subr.mxu0 0.0
        %1401 = vmatpush1.xpose.msra.mxu0 0.0
        %1402 = vmatprep.subr.mxu0 0.0
        %1403 = vmatpush1.xpose.msra.mxu0 0.0
        %1404 = vmatprep.subr.mxu0 0.0
        %1405 = vmatpush1.xpose.msra.mxu0 0.0
        %1406 = vmatprep.subr.mxu0 0.0
        %1407 = vmatpush1.xpose.msra.mxu0 0.0
        %1408 = vmatprep.subr.mxu0 0.0
        %1409 = vmatpush1.xpose.msra.mxu0 0.0
        %1410 = vmatprep.subr.mxu0 0.0
        %1411 = vmatpush1.xpose.msra.mxu0 0.0
        %1412 = vmatprep.subr.mxu0 0.0
        %1413 = vmatpush1.xpose.msra.mxu0 0.0
        %1414 = vmatprep.subr.mxu0 0.0
        %1415 = vmatpush1.xpose.msra.mxu0 0.0
        %1416 = vmatprep.subr.mxu0 0.0
        %1417 = vmatpush1.xpose.msra.mxu0 0.0
        %1418 = vmatprep.subr.mxu0 0.0
        %1419 = vmatpush1.xpose.msra.mxu0 0.0
        %1420 = vmatprep.subr.mxu0 0.0
        %1421 = vmatpush1.xpose.msra.mxu0 %v1388
        %1422 = vmatprep.subr.mxu0 0.0
        %1423 = vmatpush2.xpose.msra.mxu0 0.0
        %1424 = vmatprep.subr.mxu0 0.0
        %1425 = vmatpush2.xpose.msra.mxu0 0.0
        %1426 = vmatprep.subr.mxu0 0.0
        %1427 = vmatpush2.xpose.msra.mxu0 0.0
        %1428 = vmatprep.subr.mxu0 0.0
        %1429 = vmatpush2.xpose.msra.mxu0 0.0
        %1430 = vmatprep.subr.mxu0 0.0
        %1431 = vmatpush2.xpose.msra.mxu0 0.0
        %1432 = vmatprep.subr.mxu0 0.0
        %1433 = vmatpush2.xpose.msra.mxu0 0.0
        %1434 = vmatprep.subr.mxu0 0.0
        %1435 = vmatpush2.xpose.msra.mxu0 0.0
        %1436 = vmatprep.subr.mxu0 0.0
        %1437 = vmatpush2.xpose.msra.mxu0 0.0
        %1438 = vmatprep.subr.mxu0 0.0
        %1439 = vmatpush2.xpose.msra.mxu0 0.0
        %1440 = vmatprep.subr.mxu0 0.0
        %1441 = vmatpush2.xpose.msra.mxu0 0.0
        %1442 = vmatprep.subr.mxu0 0.0
        %1443 = vmatpush2.xpose.msra.mxu0 0.0
        %1444 = vmatprep.subr.mxu0 0.0
        %1445 = vmatpush2.xpose.msra.mxu0 0.0
        %1446 = vmatprep.subr.mxu0 0.0
        %1447 = vmatpush2.xpose.msra.mxu0 0.0
        %1448 = vmatprep.subr.mxu0 0.0
        %1449 = vmatpush2.xpose.msra.mxu0 0.0
        %1450 = vmatprep.subr.mxu0 0.0
        %1451 = vmatpush2.xpose.msra.mxu0 0.0
        %1452 = vmatprep.subr.mxu0 0.0
        %1453 = vmatpush2.xpose.msra.mxu0 0.0
        %1454 = vmatprep.mubr.f32.mxu0 0.0
        %1455 = vmatmul.mubr.f32.gmra.mxu0 %v1386
        %v1456 = vpop.f32.mrf.mxu0
        %v1457 = vadd.f32 0.0, %v1456
        %v1458 = vpop.f32.mrf.mxu0
        %1459 = vdwg.mxu0
        %v1460 = vmul.f32 %v1457, 0.35355338
        %v1461 = vsel %vm1126, -1e+10, %v1460
        %v1462 = vsel %vm1044, %v1461, -inf
        %1463 = vmax.xlane.f32.xlu0 %v1462
        %v1464 = vpop.xlane.xlu0 %1463
        %v1465 = vsub.f32 %v1461, %v1464
        %v1466 = vmul.f32 %v1465, 1.442695
        %v1467 = vpow.pop %v1466
        %v1468 = vsel %vm1044, %v1467, 0.0
        %1469 = vadd.xlane.f32.xlu0 %v1468
        %v1470 = vpop.xlane.xlu0 %1469
        %v1471 = vrcp.pop %v1470
        %v1472 = vmul.f32 %v1467, %v1471
        %1473 = vrot.lane.b32.xlu0 %v1038, 48
        %v1474 = vpop.permute.xlu0 %1473
        %v1477 = vsel %vm1044, %v1472, 0
        %1479 = vmatprep.subr.mxu0 0.0
        %1480 = vmatpush1.msra.mxu0 0.0
        %1481 = vmatprep.subr.mxu0 0.0
        %1482 = vmatpush1.msra.mxu0 0.0
        %1483 = vmatprep.subr.mxu0 0.0
        %1484 = vmatpush1.msra.mxu0 0.0
        %1485 = vmatprep.subr.mxu0 0.0
        %1486 = vmatpush1.msra.mxu0 0.0
        %1487 = vmatprep.subr.mxu0 0.0
        %1488 = vmatpush1.msra.mxu0 0.0
        %1489 = vmatprep.subr.mxu0 0.0
        %1490 = vmatpush1.msra.mxu0 0.0
        %1491 = vmatprep.subr.mxu0 0.0
        %1492 = vmatpush1.msra.mxu0 0.0
        %1493 = vmatprep.subr.mxu0 0.0
        %1494 = vmatpush1.msra.mxu0 0.0
        %1495 = vmatprep.subr.mxu0 0.0
        %1496 = vmatpush1.msra.mxu0 0.0
        %1497 = vmatprep.subr.mxu0 0.0
        %1498 = vmatpush1.msra.mxu0 0.0
        %1499 = vmatprep.subr.mxu0 0.0
        %1500 = vmatpush1.msra.mxu0 0.0
        %1501 = vmatprep.subr.mxu0 0.0
        %1502 = vmatpush1.msra.mxu0 0.0
        %1503 = vmatprep.subr.mxu0 0.0
        %1504 = vmatpush1.msra.mxu0 0.0
        %1505 = vmatprep.subr.mxu0 0.0
        %1506 = vmatpush1.msra.mxu0 0.0
        %1507 = vmatprep.subr.mxu0 0.0
        %1508 = vmatpush1.msra.mxu0 0.0
        %1509 = vmatprep.subr.mxu0 0.0
        %1510 = vmatpush1.msra.mxu0 %v1474
        %1511 = vmatprep.subr.mxu0 0.0
        %1512 = vmatpush2.msra.mxu0 0.0
        %1513 = vmatprep.subr.mxu0 0.0
        %1514 = vmatpush2.msra.mxu0 0.0
        %1515 = vmatprep.subr.mxu0 0.0
        %1516 = vmatpush2.msra.mxu0 0.0
        %1517 = vmatprep.subr.mxu0 0.0
        %1518 = vmatpush2.msra.mxu0 0.0
        %1519 = vmatprep.subr.mxu0 0.0
        %1520 = vmatpush2.msra.mxu0 0.0
        %1521 = vmatprep.subr.mxu0 0.0
        %1522 = vmatpush2.msra.mxu0 0.0
        %1523 = vmatprep.subr.mxu0 0.0
        %1524 = vmatpush2.msra.mxu0 0.0
        %1525 = vmatprep.subr.mxu0 0.0
        %1526 = vmatpush2.msra.mxu0 0.0
        %1527 = vmatprep.subr.mxu0 0.0
        %1528 = vmatpush2.msra.mxu0 0.0
        %1529 = vmatprep.subr.mxu0 0.0
        %1530 = vmatpush2.msra.mxu0 0.0
        %1531 = vmatprep.subr.mxu0 0.0
        %1532 = vmatpush2.msra.mxu0 0.0
        %1533 = vmatprep.subr.mxu0 0.0
        %1534 = vmatpush2.msra.mxu0 0.0
        %1535 = vmatprep.subr.mxu0 0.0
        %1536 = vmatpush2.msra.mxu0 0.0
        %1537 = vmatprep.subr.mxu0 0.0
        %1538 = vmatpush2.msra.mxu0 0.0
        %1539 = vmatprep.subr.mxu0 0.0
        %1540 = vmatpush2.msra.mxu0 0.0
        %1541 = vmatprep.subr.mxu0 0.0
        %1542 = vmatpush2.msra.mxu0 0.0
        %1543 = vmatprep.mubr.f32.mxu0 0.0
        %1544 = vmatmul.mubr.f32.gmra.mxu0 %v1477
        %v1545 = vpop.f32.mrf.mxu0
        %v1546 = vadd.f32 0.0, %v1545
        %v1547 = vpop.f32.mrf.mxu0
        %1548 = vdwg.mxu0
        %1549 = vrot.lane.b32.xlu0 %v1038, 104
        %v1550 = vpop.permute.xlu0 %1549
        %1551 = vrot.lane.b32.xlu0 %v1038, 72
        %v1552 = vpop.permute.xlu0 %1551
        %v1553 = vsel %vm1044, %v1550, 0
        %v1555 = vsel %vm1044, %v1552, 0
        %1557 = vmatprep.subr.mxu0 0.0
        %1558 = vmatpush1.xpose.msra.mxu0 0.0
        %1559 = vmatprep.subr.mxu0 0.0
        %1560 = vmatpush1.xpose.msra.mxu0 0.0
        %1561 = vmatprep.subr.mxu0 0.0
        %1562 = vmatpush1.xpose.msra.mxu0 0.0
        %1563 = vmatprep.subr.mxu0 0.0
        %1564 = vmatpush1.xpose.msra.mxu0 0.0
        %1565 = vmatprep.subr.mxu0 0.0
        %1566 = vmatpush1.xpose.msra.mxu0 0.0
        %1567 = vmatprep.subr.mxu0 0.0
        %1568 = vmatpush1.xpose.msra.mxu0 0.0
        %1569 = vmatprep.subr.mxu0 0.0
        %1570 = vmatpush1.xpose.msra.mxu0 0.0
        %1571 = vmatprep.subr.mxu0 0.0
        %1572 = vmatpush1.xpose.msra.mxu0 0.0
        %1573 = vmatprep.subr.mxu0 0.0
        %1574 = vmatpush1.xpose.msra.mxu0 0.0
        %1575 = vmatprep.subr.mxu0 0.0
        %1576 = vmatpush1.xpose.msra.mxu0 0.0
        %1577 = vmatprep.subr.mxu0 0.0
        %1578 = vmatpush1.xpose.msra.mxu0 0.0
        %1579 = vmatprep.subr.mxu0 0.0
        %1580 = vmatpush1.xpose.msra.mxu0 0.0
        %1581 = vmatprep.subr.mxu0 0.0
        %1582 = vmatpush1.xpose.msra.mxu0 0.0
        %1583 = vmatprep.subr.mxu0 0.0
        %1584 = vmatpush1.xpose.msra.mxu0 0.0
        %1585 = vmatprep.subr.mxu0 0.0
        %1586 = vmatpush1.xpose.msra.mxu0 0.0
        %1587 = vmatprep.subr.mxu0 0.0
        %1588 = vmatpush1.xpose.msra.mxu0 %v1555
        %1589 = vmatprep.subr.mxu0 0.0
        %1590 = vmatpush2.xpose.msra.mxu0 0.0
        %1591 = vmatprep.subr.mxu0 0.0
        %1592 = vmatpush2.xpose.msra.mxu0 0.0
        %1593 = vmatprep.subr.mxu0 0.0
        %1594 = vmatpush2.xpose.msra.mxu0 0.0
        %1595 = vmatprep.subr.mxu0 0.0
        %1596 = vmatpush2.xpose.msra.mxu0 0.0
        %1597 = vmatprep.subr.mxu0 0.0
        %1598 = vmatpush2.xpose.msra.mxu0 0.0
        %1599 = vmatprep.subr.mxu0 0.0
        %1600 = vmatpush2.xpose.msra.mxu0 0.0
        %1601 = vmatprep.subr.mxu0 0.0
        %1602 = vmatpush2.xpose.msra.mxu0 0.0
        %1603 = vmatprep.subr.mxu0 0.0
        %1604 = vmatpush2.xpose.msra.mxu0 0.0
        %1605 = vmatprep.subr.mxu0 0.0
        %1606 = vmatpush2.xpose.msra.mxu0 0.0
        %1607 = vmatprep.subr.mxu0 0.0
        %1608 = vmatpush2.xpose.msra.mxu0 0.0
        %1609 = vmatprep.subr.mxu0 0.0
        %1610 = vmatpush2.xpose.msra.mxu0 0.0
        %1611 = vmatprep.subr.mxu0 0.0
        %1612 = vmatpush2.xpose.msra.mxu0 0.0
        %1613 = vmatprep.subr.mxu0 0.0
        %1614 = vmatpush2.xpose.msra.mxu0 0.0
        %1615 = vmatprep.subr.mxu0 0.0
        %1616 = vmatpush2.xpose.msra.mxu0 0.0
        %1617 = vmatprep.subr.mxu0 0.0
        %1618 = vmatpush2.xpose.msra.mxu0 0.0
        %1619 = vmatprep.subr.mxu0 0.0
        %1620 = vmatpush2.xpose.msra.mxu0 0.0
        %1621 = vmatprep.mubr.f32.mxu0 0.0
        %1622 = vmatmul.mubr.f32.gmra.mxu0 %v1553
        %v1623 = vpop.f32.mrf.mxu0
        %v1624 = vadd.f32 0.0, %v1623
        %v1625 = vpop.f32.mrf.mxu0
        %1626 = vdwg.mxu0
        %v1627 = vmul.f32 %v1624, 0.35355338
        %v1628 = vsel %vm1126, -1e+10, %v1627
        %v1629 = vsel %vm1044, %v1628, -inf
        %1630 = vmax.xlane.f32.xlu0 %v1629
        %v1631 = vpop.xlane.xlu0 %1630
        %v1632 = vsub.f32 %v1628, %v1631
        %v1633 = vmul.f32 %v1632, 1.442695
        %v1634 = vpow.pop %v1633
        %v1635 = vsel %vm1044, %v1634, 0.0
        %1636 = vadd.xlane.f32.xlu0 %v1635
        %v1637 = vpop.xlane.xlu0 %1636
        %v1638 = vrcp.pop %v1637
        %v1639 = vmul.f32 %v1634, %v1638
        %1640 = vrot.lane.b32.xlu0 %v1038, 40
        %v1641 = vpop.permute.xlu0 %1640
        %v1644 = vsel %vm1044, %v1639, 0
        %1646 = vmatprep.subr.mxu0 0.0
        %1647 = vmatpush1.msra.mxu0 0.0
        %1648 = vmatprep.subr.mxu0 0.0
        %1649 = vmatpush1.msra.mxu0 0.0
        %1650 = vmatprep.subr.mxu0 0.0
        %1651 = vmatpush1.msra.mxu0 0.0
        %1652 = vmatprep.subr.mxu0 0.0
        %1653 = vmatpush1.msra.mxu0 0.0
        %1654 = vmatprep.subr.mxu0 0.0
        %1655 = vmatpush1.msra.mxu0 0.0
        %1656 = vmatprep.subr.mxu0 0.0
        %1657 = vmatpush1.msra.mxu0 0.0
        %1658 = vmatprep.subr.mxu0 0.0
        %1659 = vmatpush1.msra.mxu0 0.0
        %1660 = vmatprep.subr.mxu0 0.0
        %1661 = vmatpush1.msra.mxu0 0.0
        %1662 = vmatprep.subr.mxu0 0.0
        %1663 = vmatpush1.msra.mxu0 0.0
        %1664 = vmatprep.subr.mxu0 0.0
        %1665 = vmatpush1.msra.mxu0 0.0
        %1666 = vmatprep.subr.mxu0 0.0
        %1667 = vmatpush1.msra.mxu0 0.0
        %1668 = vmatprep.subr.mxu0 0.0
        %1669 = vmatpush1.msra.mxu0 0.0
        %1670 = vmatprep.subr.mxu0 0.0
        %1671 = vmatpush1.msra.mxu0 0.0
        %1672 = vmatprep.subr.mxu0 0.0
        %1673 = vmatpush1.msra.mxu0 0.0
        %1674 = vmatprep.subr.mxu0 0.0
        %1675 = vmatpush1.msra.mxu0 0.0
        %1676 = vmatprep.subr.mxu0 0.0
        %1677 = vmatpush1.msra.mxu0 %v1641
        %1678 = vmatprep.subr.mxu0 0.0
        %1679 = vmatpush2.msra.mxu0 0.0
        %1680 = vmatprep.subr.mxu0 0.0
        %1681 = vmatpush2.msra.mxu0 0.0
        %1682 = vmatprep.subr.mxu0 0.0
        %1683 = vmatpush2.msra.mxu0 0.0
        %1684 = vmatprep.subr.mxu0 0.0
        %1685 = vmatpush2.msra.mxu0 0.0
        %1686 = vmatprep.subr.mxu0 0.0
        %1687 = vmatpush2.msra.mxu0 0.0
        %1688 = vmatprep.subr.mxu0 0.0
        %1689 = vmatpush2.msra.mxu0 0.0
        %1690 = vmatprep.subr.mxu0 0.0
        %1691 = vmatpush2.msra.mxu0 0.0
        %1692 = vmatprep.subr.mxu0 0.0
        %1693 = vmatpush2.msra.mxu0 0.0
        %1694 = vmatprep.subr.mxu0 0.0
        %1695 = vmatpush2.msra.mxu0 0.0
        %1696 = vmatprep.subr.mxu0 0.0
        %1697 = vmatpush2.msra.mxu0 0.0
        %1698 = vmatprep.subr.mxu0 0.0
        %1699 = vmatpush2.msra.mxu0 0.0
        %1700 = vmatprep.subr.mxu0 0.0
        %1701 = vmatpush2.msra.mxu0 0.0
        %1702 = vmatprep.subr.mxu0 0.0
        %1703 = vmatpush2.msra.mxu0 0.0
        %1704 = vmatprep.subr.mxu0 0.0
        %1705 = vmatpush2.msra.mxu0 0.0
        %1706 = vmatprep.subr.mxu0 0.0
        %1707 = vmatpush2.msra.mxu0 0.0
        %1708 = vmatprep.subr.mxu0 0.0
        %1709 = vmatpush2.msra.mxu0 0.0
        %1710 = vmatprep.mubr.f32.mxu0 0.0
        %1711 = vmatmul.mubr.f32.gmra.mxu0 %v1644
        %v1712 = vpop.f32.mrf.mxu0
        %v1713 = vadd.f32 0.0, %v1712
        %v1714 = vpop.f32.mrf.mxu0
        %1715 = vdwg.mxu0
        %1717 = vrot.lane.b32.xlu0 %v1379, 8
        %v1718 = vpop.permute.xlu0 %1717
        %1721 = vrot.lane.b32.xlu0 %v1546, 16
        %v1722 = vpop.permute.xlu0 %1721
        %1725 = vrot.lane.b32.xlu0 %v1713, 24
        %v1726 = vpop.permute.xlu0 %1725
        %v1728 = vsel %vm1044, %v1212, %v1718
        %vm1729 = vcmask 130048
        %v1730 = vsel %vm1729, %v1728, %v1722
        %vm1731 = vcmask 195584
        %v1732 = vsel %vm1731, %v1730, %v1726
        %v1733 = vld [vmem:[%s8] sm:$0xff]
        %v1734 = vld [vmem:[%s8 + $0x8] sm:$0xff]
        %v1735 = vld [vmem:[%s8 + $0x10] sm:$0xff]
        %v1736 = vld [vmem:[%s8 + $0x18] sm:$0xff]
        %v1737 = vld [vmem:[%s9] sm:$0x1]
        %v1739 = vlaneseq
        %v1740 = vshrl.u32 %v1739, 7
        %v1741 = vsub.s32 0, %v1740
        %v1742 = vrot.slane %v1737, %v1741
        %v1745 = vsel %vm926, %v1732, 0
        %1747 = vmatprep.subr.mxu0 0.0
        %1748 = vmatpush1.msra.mxu0 0.0
        %1749 = vmatprep.subr.mxu0 0.0
        %1750 = vmatpush1.msra.mxu0 0.0
        %1751 = vmatprep.subr.mxu0 0.0
        %1752 = vmatpush1.msra.mxu0 0.0
        %1753 = vmatprep.subr.mxu0 0.0
        %1754 = vmatpush1.msra.mxu0 0.0
        %1755 = vmatprep.subr.mxu0 0.0
        %1756 = vmatpush1.msra.mxu0 0.0
        %1757 = vmatprep.subr.mxu0 0.0
        %1758 = vmatpush1.msra.mxu0 0.0
        %1759 = vmatprep.subr.mxu0 0.0
        %1760 = vmatpush1.msra.mxu0 0.0
        %1761 = vmatprep.subr.mxu0 0.0
        %1762 = vmatpush1.msra.mxu0 0.0
        %1763 = vmatprep.subr.mxu0 0.0
        %1764 = vmatpush1.msra.mxu0 0.0
        %1765 = vmatprep.subr.mxu0 0.0
        %1766 = vmatpush1.msra.mxu0 0.0
        %1767 = vmatprep.subr.mxu0 0.0
        %1768 = vmatpush1.msra.mxu0 0.0
        %1769 = vmatprep.subr.mxu0 0.0
        %1770 = vmatpush1.msra.mxu0 0.0
        %1771 = vmatprep.subr.mxu0 0.0
        %1772 = vmatpush1.msra.mxu0 %v1736
        %1773 = vmatprep.subr.mxu0 0.0
        %1774 = vmatpush1.msra.mxu0 %v1735
        %1775 = vmatprep.subr.mxu0 0.0
        %1776 = vmatpush1.msra.mxu0 %v1734
        %1777 = vmatprep.subr.mxu0 0.0
        %1778 = vmatpush1.msra.mxu0 %v1733
        %1779 = vmatprep.subr.mxu0 0.0
        %1780 = vmatpush2.msra.mxu0 0.0
        %1781 = vmatprep.subr.mxu0 0.0
        %1782 = vmatpush2.msra.mxu0 0.0
        %1783 = vmatprep.subr.mxu0 0.0
        %1784 = vmatpush2.msra.mxu0 0.0
        %1785 = vmatprep.subr.mxu0 0.0
        %1786 = vmatpush2.msra.mxu0 0.0
        %1787 = vmatprep.subr.mxu0 0.0
        %1788 = vmatpush2.msra.mxu0 0.0
        %1789 = vmatprep.subr.mxu0 0.0
        %1790 = vmatpush2.msra.mxu0 0.0
        %1791 = vmatprep.subr.mxu0 0.0
        %1792 = vmatpush2.msra.mxu0 0.0
        %1793 = vmatprep.subr.mxu0 0.0
        %1794 = vmatpush2.msra.mxu0 0.0
        %1795 = vmatprep.subr.mxu0 0.0
        %1796 = vmatpush2.msra.mxu0 0.0
        %1797 = vmatprep.subr.mxu0 0.0
        %1798 = vmatpush2.msra.mxu0 0.0
        %1799 = vmatprep.subr.mxu0 0.0
        %1800 = vmatpush2.msra.mxu0 0.0
        %1801 = vmatprep.subr.mxu0 0.0
        %1802 = vmatpush2.msra.mxu0 0.0
        %1803 = vmatprep.subr.mxu0 0.0
        %1804 = vmatpush2.msra.mxu0 0.0
        %1805 = vmatprep.subr.mxu0 0.0
        %1806 = vmatpush2.msra.mxu0 0.0
        %1807 = vmatprep.subr.mxu0 0.0
        %1808 = vmatpush2.msra.mxu0 0.0
        %1809 = vmatprep.subr.mxu0 0.0
        %1810 = vmatpush2.msra.mxu0 0.0
        %1811 = vmatprep.mubr.f32.mxu0 0.0
        %1812 = vmatmul.mubr.f32.gmra.mxu0 %v1745
        %v1813 = vpop.f32.mrf.mxu0
        %v1814 = vadd.f32 %v1742, %v1813
        %v1815 = vpop.f32.mrf.mxu0
        %1816 = vdwg.mxu0
        %v1817 = vadd.f32 %v924, %v1814
        %v1818 = vsel %vm926, %v1817, 0.0
        %1819 = vadd.xlane.f32.xlu0 %v1818
        %v1820 = vpop.xlane.xlu0 %1819
        %v1821 = vmul.f32 %v1820, %v930
        %v1822 = vsub.f32 %v1817, %v1821
        %v1823 = vmul.f32 %v1822, %v1822
        %v1824 = vsel %vm926, %v1823, 0.0
        %1825 = vadd.xlane.f32.xlu0 %v1824
        %v1826 = vpop.xlane.xlu0 %1825
        %v1827 = vmul.f32 %v1826, %v930
        %v1828 = vadd.f32 %v1827, 1e-05
        %v1829 = vrsqrt.pop %v1828
        %v1830 = vmul.f32 %v1822, %v1829
        %v1831 = vld [vmem:[#allocation4] sm:$0x1]
        %v1833 = vlaneseq
        %v1834 = vshrl.u32 %v1833, 7
        %v1835 = vsub.s32 0, %v1834
        %v1836 = vrot.slane %v1831, %v1835
        %v1838 = vmul.f32 %v1830, %v1836
        %v1839 = vld [vmem:[#allocation6] sm:$0x1]
        %v1841 = vlaneseq
        %v1842 = vshrl.u32 %v1841, 7
        %v1843 = vsub.s32 0, %v1842
        %v1844 = vrot.slane %v1839, %v1843
        %v1846 = vadd.f32 %v1838, %v1844
        %v1847 = vld [vmem:[%s12] sm:$0xff]
        %v1848 = vld [vmem:[%s12 + $0x8] sm:$0xff]
        %v1849 = vld [vmem:[%s12 + $0x10] sm:$0xff]
        %v1850 = vld [vmem:[%s12 + $0x18] sm:$0xff]
        %v1851 = vld [vmem:[#allocation7] sm:$0x1]
        %v1853 = vlaneseq
        %v1854 = vshrl.u32 %v1853, 7
        %v1855 = vsub.s32 0, %v1854
        %v1856 = vrot.slane %v1851, %v1855
        %v1859 = vsel %vm926, %v1846, 0
        %1861 = vmatprep.subr.mxu0 0.0
        %1862 = vmatpush1.msra.mxu0 0.0
        %1863 = vmatprep.subr.mxu0 0.0
        %1864 = vmatpush1.msra.mxu0 0.0
        %1865 = vmatprep.subr.mxu0 0.0
        %1866 = vmatpush1.msra.mxu0 0.0
        %1867 = vmatprep.subr.mxu0 0.0
        %1868 = vmatpush1.msra.mxu0 0.0
        %1869 = vmatprep.subr.mxu0 0.0
        %1870 = vmatpush1.msra.mxu0 0.0
        %1871 = vmatprep.subr.mxu0 0.0
        %1872 = vmatpush1.msra.mxu0 0.0
        %1873 = vmatprep.subr.mxu0 0.0
        %1874 = vmatpush1.msra.mxu0 0.0
        %1875 = vmatprep.subr.mxu0 0.0
        %1876 = vmatpush1.msra.mxu0 0.0
        %1877 = vmatprep.subr.mxu0 0.0
        %1878 = vmatpush1.msra.mxu0 0.0
        %1879 = vmatprep.subr.mxu0 0.0
        %1880 = vmatpush1.msra.mxu0 0.0
        %1881 = vmatprep.subr.mxu0 0.0
        %1882 = vmatpush1.msra.mxu0 0.0
        %1883 = vmatprep.subr.mxu0 0.0
        %1884 = vmatpush1.msra.mxu0 0.0
        %1885 = vmatprep.subr.mxu0 0.0
        %1886 = vmatpush1.msra.mxu0 %v1850
        %1887 = vmatprep.subr.mxu0 0.0
        %1888 = vmatpush1.msra.mxu0 %v1849
        %1889 = vmatprep.subr.mxu0 0.0
        %1890 = vmatpush1.msra.mxu0 %v1848
        %1891 = vmatprep.subr.mxu0 0.0
        %1892 = vmatpush1.msra.mxu0 %v1847
        %1893 = vmatprep.subr.mxu0 0.0
        %1894 = vmatpush2.msra.mxu0 0.0
        %1895 = vmatprep.subr.mxu0 0.0
        %1896 = vmatpush2.msra.mxu0 0.0
        %1897 = vmatprep.subr.mxu0 0.0
        %1898 = vmatpush2.msra.mxu0 0.0
        %1899 = vmatprep.subr.mxu0 0.0
        %1900 = vmatpush2.msra.mxu0 0.0
        %1901 = vmatprep.subr.mxu0 0.0
        %1902 = vmatpush2.msra.mxu0 0.0
        %1903 = vmatprep.subr.mxu0 0.0
        %1904 = vmatpush2.msra.mxu0 0.0
        %1905 = vmatprep.subr.mxu0 0.0
        %1906 = vmatpush2.msra.mxu0 0.0
        %1907 = vmatprep.subr.mxu0 0.0
        %1908 = vmatpush2.msra.mxu0 0.0
        %1909 = vmatprep.subr.mxu0 0.0
        %1910 = vmatpush2.msra.mxu0 0.0
        %1911 = vmatprep.subr.mxu0 0.0
        %1912 = vmatpush2.msra.mxu0 0.0
        %1913 = vmatprep.subr.mxu0 0.0
        %1914 = vmatpush2.msra.mxu0 0.0
        %1915 = vmatprep.subr.mxu0 0.0
        %1916 = vmatpush2.msra.mxu0 0.0
        %1917 = vmatprep.subr.mxu0 0.0
        %1918 = vmatpush2.msra.mxu0 0.0
        %1919 = vmatprep.subr.mxu0 0.0
        %1920 = vmatpush2.msra.mxu0 0.0
        %1921 = vmatprep.subr.mxu0 0.0
        %1922 = vmatpush2.msra.mxu0 0.0
        %1923 = vmatprep.subr.mxu0 0.0
        %1924 = vmatpush2.msra.mxu0 0.0
        %1925 = vmatprep.mubr.f32.mxu0 0.0
        %1926 = vmatmul.mubr.f32.gmra.mxu0 %v1859
        %v1927 = vpop.f32.mrf.mxu0
        %v1928 = vadd.f32 %v1856, %v1927
        %v1929 = vpop.f32.mrf.mxu0
        %1930 = vdwg.mxu0
        %v1931 = vld [vmem:[#allocation9] sm:$0xff]
        %v1932 = vld [vmem:[#allocation9 + $0x8] sm:$0xff]
        %v1933 = vld [vmem:[#allocation9 + $0x10] sm:$0xff]
        %v1934 = vld [vmem:[#allocation9 + $0x18] sm:$0xff]
        %v1935 = vld [vmem:[#allocation10] sm:$0x1]
        %v1937 = vlaneseq
        %v1938 = vshrl.u32 %v1937, 7
        %v1939 = vsub.s32 0, %v1938
        %v1940 = vrot.slane %v1935, %v1939
        %v1943 = vsel %vm926, %v923, 0
        %1945 = vmatprep.subr.mxu0 0.0
        %1946 = vmatpush1.msra.mxu0 0.0
        %1947 = vmatprep.subr.mxu0 0.0
        %1948 = vmatpush1.msra.mxu0 0.0
        %1949 = vmatprep.subr.mxu0 0.0
        %1950 = vmatpush1.msra.mxu0 0.0
        %1951 = vmatprep.subr.mxu0 0.0
        %1952 = vmatpush1.msra.mxu0 0.0
        %1953 = vmatprep.subr.mxu0 0.0
        %1954 = vmatpush1.msra.mxu0 0.0
        %1955 = vmatprep.subr.mxu0 0.0
        %1956 = vmatpush1.msra.mxu0 0.0
        %1957 = vmatprep.subr.mxu0 0.0
        %1958 = vmatpush1.msra.mxu0 0.0
        %1959 = vmatprep.subr.mxu0 0.0
        %1960 = vmatpush1.msra.mxu0 0.0
        %1961 = vmatprep.subr.mxu0 0.0
        %1962 = vmatpush1.msra.mxu0 0.0
        %1963 = vmatprep.subr.mxu0 0.0
        %1964 = vmatpush1.msra.mxu0 0.0
        %1965 = vmatprep.subr.mxu0 0.0
        %1966 = vmatpush1.msra.mxu0 0.0
        %1967 = vmatprep.subr.mxu0 0.0
        %1968 = vmatpush1.msra.mxu0 0.0
        %1969 = vmatprep.subr.mxu0 0.0
        %1970 = vmatpush1.msra.mxu0 %v1934
        %1971 = vmatprep.subr.mxu0 0.0
        %1972 = vmatpush1.msra.mxu0 %v1933
        %1973 = vmatprep.subr.mxu0 0.0
        %1974 = vmatpush1.msra.mxu0 %v1932
        %1975 = vmatprep.subr.mxu0 0.0
        %1976 = vmatpush1.msra.mxu0 %v1931
        %1977 = vmatprep.subr.mxu0 0.0
        %1978 = vmatpush2.msra.mxu0 0.0
        %1979 = vmatprep.subr.mxu0 0.0
        %1980 = vmatpush2.msra.mxu0 0.0
        %1981 = vmatprep.subr.mxu0 0.0
        %1982 = vmatpush2.msra.mxu0 0.0
        %1983 = vmatprep.subr.mxu0 0.0
        %1984 = vmatpush2.msra.mxu0 0.0
        %1985 = vmatprep.subr.mxu0 0.0
        %1986 = vmatpush2.msra.mxu0 0.0
        %1987 = vmatprep.subr.mxu0 0.0
        %1988 = vmatpush2.msra.mxu0 0.0
        %1989 = vmatprep.subr.mxu0 0.0
        %1990 = vmatpush2.msra.mxu0 0.0
        %1991 = vmatprep.subr.mxu0 0.0
        %1992 = vmatpush2.msra.mxu0 0.0
        %1993 = vmatprep.subr.mxu0 0.0
        %1994 = vmatpush2.msra.mxu0 0.0
        %1995 = vmatprep.subr.mxu0 0.0
        %1996 = vmatpush2.msra.mxu0 0.0
        %1997 = vmatprep.subr.mxu0 0.0
        %1998 = vmatpush2.msra.mxu0 0.0
        %1999 = vmatprep.subr.mxu0 0.0
        %2000 = vmatpush2.msra.mxu0 0.0
        %2001 = vmatprep.subr.mxu0 0.0
        %2002 = vmatpush2.msra.mxu0 0.0
        %2003 = vmatprep.subr.mxu0 0.0
        %2004 = vmatpush2.msra.mxu0 0.0
        %2005 = vmatprep.subr.mxu0 0.0
        %2006 = vmatpush2.msra.mxu0 0.0
        %2007 = vmatprep.subr.mxu0 0.0
        %2008 = vmatpush2.msra.mxu0 0.0
        %2009 = vmatprep.mubr.f32.mxu0 0.0
        %2010 = vmatmul.mubr.f32.gmra.mxu0 %v1943
        %v2011 = vpop.f32.mrf.mxu0
        %v2012 = vadd.f32 %v1940, %v2011
        %v2013 = vpop.f32.mrf.mxu0
        %2014 = vdwg.mxu0
        %v2016 = vsel %vm1044, %v1928, 0
        %v2019 = vsel %vm1044, %v2012, 0
        %2021 = vmatprep.subr.mxu0 0.0
        %2022 = vmatpush1.xpose.msra.mxu0 0.0
        %2023 = vmatprep.subr.mxu0 0.0
        %2024 = vmatpush1.xpose.msra.mxu0 0.0
        %2025 = vmatprep.subr.mxu0 0.0
        %2026 = vmatpush1.xpose.msra.mxu0 0.0
        %2027 = vmatprep.subr.mxu0 0.0
        %2028 = vmatpush1.xpose.msra.mxu0 0.0
        %2029 = vmatprep.subr.mxu0 0.0
        %2030 = vmatpush1.xpose.msra.mxu0 0.0
        %2031 = vmatprep.subr.mxu0 0.0
        %2032 = vmatpush1.xpose.msra.mxu0 0.0
        %2033 = vmatprep.subr.mxu0 0.0
        %2034 = vmatpush1.xpose.msra.mxu0 0.0
        %2035 = vmatprep.subr.mxu0 0.0
        %2036 = vmatpush1.xpose.msra.mxu0 0.0
        %2037 = vmatprep.subr.mxu0 0.0
        %2038 = vmatpush1.xpose.msra.mxu0 0.0
        %2039 = vmatprep.subr.mxu0 0.0
        %2040 = vmatpush1.xpose.msra.mxu0 0.0
        %2041 = vmatprep.subr.mxu0 0.0
        %2042 = vmatpush1.xpose.msra.mxu0 0.0
        %2043 = vmatprep.subr.mxu0 0.0
        %2044 = vmatpush1.xpose.msra.mxu0 0.0
        %2045 = vmatprep.subr.mxu0 0.0
        %2046 = vmatpush1.xpose.msra.mxu0 0.0
        %2047 = vmatprep.subr.mxu0 0.0
        %2048 = vmatpush1.xpose.msra.mxu0 0.0
        %2049 = vmatprep.subr.mxu0 0.0
        %2050 = vmatpush1.xpose.msra.mxu0 0.0
        %2051 = vmatprep.subr.mxu0 0.0
        %2052 = vmatpush1.xpose.msra.mxu0 %v2019
        %2053 = vmatprep.subr.mxu0 0.0
        %2054 = vmatpush2.xpose.msra.mxu0 0.0
        %2055 = vmatprep.subr.mxu0 0.0
        %2056 = vmatpush2.xpose.msra.mxu0 0.0
        %2057 = vmatprep.subr.mxu0 0.0
        %2058 = vmatpush2.xpose.msra.mxu0 0.0
        %2059 = vmatprep.subr.mxu0 0.0
        %2060 = vmatpush2.xpose.msra.mxu0 0.0
        %2061 = vmatprep.subr.mxu0 0.0
        %2062 = vmatpush2.xpose.msra.mxu0 0.0
        %2063 = vmatprep.subr.mxu0 0.0
        %2064 = vmatpush2.xpose.msra.mxu0 0.0
        %2065 = vmatprep.subr.mxu0 0.0
        %2066 = vmatpush2.xpose.msra.mxu0 0.0
        %2067 = vmatprep.subr.mxu0 0.0
        %2068 = vmatpush2.xpose.msra.mxu0 0.0
        %2069 = vmatprep.subr.mxu0 0.0
        %2070 = vmatpush2.xpose.msra.mxu0 0.0
        %2071 = vmatprep.subr.mxu0 0.0
        %2072 = vmatpush2.xpose.msra.mxu0 0.0
        %2073 = vmatprep.subr.mxu0 0.0
        %2074 = vmatpush2.xpose.msra.mxu0 0.0
        %2075 = vmatprep.subr.mxu0 0.0
        %2076 = vmatpush2.xpose.msra.mxu0 0.0
        %2077 = vmatprep.subr.mxu0 0.0
        %2078 = vmatpush2.xpose.msra.mxu0 0.0
        %2079 = vmatprep.subr.mxu0 0.0
        %2080 = vmatpush2.xpose.msra.mxu0 0.0
        %2081 = vmatprep.subr.mxu0 0.0
        %2082 = vmatpush2.xpose.msra.mxu0 0.0
        %2083 = vmatprep.subr.mxu0 0.0
        %2084 = vmatpush2.xpose.msra.mxu0 0.0
        %2085 = vmatprep.mubr.f32.mxu0 0.0
        %2086 = vmatmul.mubr.f32.gmra.mxu0 %v2016
        %v2087 = vpop.f32.mrf.mxu0
        %v2088 = vadd.f32 0.0, %v2087
        %v2089 = vpop.f32.mrf.mxu0
        %2090 = vdwg.mxu0
        %v2091 = vmul.f32 %v2088, 0.35355338
        %v2092 = vsel %vm1044, %v2091, -inf
        %2093 = vmax.xlane.f32.xlu0 %v2092
        %v2094 = vpop.xlane.xlu0 %2093
        %v2095 = vsub.f32 %v2091, %v2094
        %v2096 = vmul.f32 %v2095, 1.442695
        %v2097 = vpow.pop %v2096
        %v2098 = vsel %vm1044, %v2097, 0.0
        %2099 = vadd.xlane.f32.xlu0 %v2098
        %v2100 = vpop.xlane.xlu0 %2099
        %v2101 = vrcp.pop %v2100
        %v2102 = vmul.f32 %v2097, %v2101
        %2103 = vrot.lane.b32.xlu0 %v2012, 96
        %v2104 = vpop.permute.xlu0 %2103
        %v2107 = vsel %vm1044, %v2102, 0
        %2109 = vmatprep.subr.mxu0 0.0
        %2110 = vmatpush1.msra.mxu0 0.0
        %2111 = vmatprep.subr.mxu0 0.0
        %2112 = vmatpush1.msra.mxu0 0.0
        %2113 = vmatprep.subr.mxu0 0.0
        %2114 = vmatpush1.msra.mxu0 0.0
        %2115 = vmatprep.subr.mxu0 0.0
        %2116 = vmatpush1.msra.mxu0 0.0
        %2117 = vmatprep.subr.mxu0 0.0
        %2118 = vmatpush1.msra.mxu0 0.0
        %2119 = vmatprep.subr.mxu0 0.0
        %2120 = vmatpush1.msra.mxu0 0.0
        %2121 = vmatprep.subr.mxu0 0.0
        %2122 = vmatpush1.msra.mxu0 0.0
        %2123 = vmatprep.subr.mxu0 0.0
        %2124 = vmatpush1.msra.mxu0 0.0
        %2125 = vmatprep.subr.mxu0 0.0
        %2126 = vmatpush1.msra.mxu0 0.0
        %2127 = vmatprep.subr.mxu0 0.0
        %2128 = vmatpush1.msra.mxu0 0.0
        %2129 = vmatprep.subr.mxu0 0.0
        %2130 = vmatpush1.msra.mxu0 0.0
        %2131 = vmatprep.subr.mxu0 0.0
        %2132 = vmatpush1.msra.mxu0 0.0
        %2133 = vmatprep.subr.mxu0 0.0
        %2134 = vmatpush1.msra.mxu0 0.0
        %2135 = vmatprep.subr.mxu0 0.0
        %2136 = vmatpush1.msra.mxu0 0.0
        %2137 = vmatprep.subr.mxu0 0.0
        %2138 = vmatpush1.msra.mxu0 0.0
        %2139 = vmatprep.subr.mxu0 0.0
        %2140 = vmatpush1.msra.mxu0 %v2104
        %2141 = vmatprep.subr.mxu0 0.0
        %2142 = vmatpush2.msra.mxu0 0.0
        %2143 = vmatprep.subr.mxu0 0.0
        %2144 = vmatpush2.msra.mxu0 0.0
        %2145 = vmatprep.subr.mxu0 0.0
        %2146 = vmatpush2.msra.mxu0 0.0
        %2147 = vmatprep.subr.mxu0 0.0
        %2148 = vmatpush2.msra.mxu0 0.0
        %2149 = vmatprep.subr.mxu0 0.0
        %2150 = vmatpush2.msra.mxu0 0.0
        %2151 = vmatprep.subr.mxu0 0.0
        %2152 = vmatpush2.msra.mxu0 0.0
        %2153 = vmatprep.subr.mxu0 0.0
        %2154 = vmatpush2.msra.mxu0 0.0
        %2155 = vmatprep.subr.mxu0 0.0
        %2156 = vmatpush2.msra.mxu0 0.0
        %2157 = vmatprep.subr.mxu0 0.0
        %2158 = vmatpush2.msra.mxu0 0.0
        %2159 = vmatprep.subr.mxu0 0.0
        %2160 = vmatpush2.msra.mxu0 0.0
        %2161 = vmatprep.subr.mxu0 0.0
        %2162 = vmatpush2.msra.mxu0 0.0
        %2163 = vmatprep.subr.mxu0 0.0
        %2164 = vmatpush2.msra.mxu0 0.0
        %2165 = vmatprep.subr.mxu0 0.0
        %2166 = vmatpush2.msra.mxu0 0.0
        %2167 = vmatprep.subr.mxu0 0.0
        %2168 = vmatpush2.msra.mxu0 0.0
        %2169 = vmatprep.subr.mxu0 0.0
        %2170 = vmatpush2.msra.mxu0 0.0
        %2171 = vmatprep.subr.mxu0 0.0
        %2172 = vmatpush2.msra.mxu0 0.0
        %2173 = vmatprep.mubr.f32.mxu0 0.0
        %2174 = vmatmul.mubr.f32.gmra.mxu0 %v2107
        %v2175 = vpop.f32.mrf.mxu0
        %v2176 = vadd.f32 0.0, %v2175
        %v2177 = vpop.f32.mrf.mxu0
        %2178 = vdwg.mxu0
        %2179 = vrot.lane.b32.xlu0 %v1928, 120
        %v2180 = vpop.permute.xlu0 %2179
        %2181 = vrot.lane.b32.xlu0 %v2012, 120
        %v2182 = vpop.permute.xlu0 %2181
        %v2183 = vsel %vm1044, %v2180, 0
        %v2185 = vsel %vm1044, %v2182, 0
        %2187 = vmatprep.subr.mxu0 0.0
        %2188 = vmatpush1.xpose.msra.mxu0 0.0
        %2189 = vmatprep.subr.mxu0 0.0
        %2190 = vmatpush1.xpose.msra.mxu0 0.0
        %2191 = vmatprep.subr.mxu0 0.0
        %2192 = vmatpush1.xpose.msra.mxu0 0.0
        %2193 = vmatprep.subr.mxu0 0.0
        %2194 = vmatpush1.xpose.msra.mxu0 0.0
        %2195 = vmatprep.subr.mxu0 0.0
        %2196 = vmatpush1.xpose.msra.mxu0 0.0
        %2197 = vmatprep.subr.mxu0 0.0
        %2198 = vmatpush1.xpose.msra.mxu0 0.0
        %2199 = vmatprep.subr.mxu0 0.0
        %2200 = vmatpush1.xpose.msra.mxu0 0.0
        %2201 = vmatprep.subr.mxu0 0.0
        %2202 = vmatpush1.xpose.msra.mxu0 0.0
        %2203 = vmatprep.subr.mxu0 0.0
        %2204 = vmatpush1.xpose.msra.mxu0 0.0
        %2205 = vmatprep.subr.mxu0 0.0
        %2206 = vmatpush1.xpose.msra.mxu0 0.0
        %2207 = vmatprep.subr.mxu0 0.0
        %2208 = vmatpush1.xpose.msra.mxu0 0.0
        %2209 = vmatprep.subr.mxu0 0.0
        %2210 = vmatpush1.xpose.msra.mxu0 0.0
        %2211 = vmatprep.subr.mxu0 0.0
        %2212 = vmatpush1.xpose.msra.mxu0 0.0
        %2213 = vmatprep.subr.mxu0 0.0
        %2214 = vmatpush1.xpose.msra.mxu0 0.0
        %2215 = vmatprep.subr.mxu0 0.0
        %2216 = vmatpush1.xpose.msra.mxu0 0.0
        %2217 = vmatprep.subr.mxu0 0.0
        %2218 = vmatpush1.xpose.msra.mxu0 %v2185
        %2219 = vmatprep.subr.mxu0 0.0
        %2220 = vmatpush2.xpose.msra.mxu0 0.0
        %2221 = vmatprep.subr.mxu0 0.0
        %2222 = vmatpush2.xpose.msra.mxu0 0.0
        %2223 = vmatprep.subr.mxu0 0.0
        %2224 = vmatpush2.xpose.msra.mxu0 0.0
        %2225 = vmatprep.subr.mxu0 0.0
        %2226 = vmatpush2.xpose.msra.mxu0 0.0
        %2227 = vmatprep.subr.mxu0 0.0
        %2228 = vmatpush2.xpose.msra.mxu0 0.0
        %2229 = vmatprep.subr.mxu0 0.0
        %2230 = vmatpush2.xpose.msra.mxu0 0.0
        %2231 = vmatprep.subr.mxu0 0.0
        %2232 = vmatpush2.xpose.msra.mxu0 0.0
        %2233 = vmatprep.subr.mxu0 0.0
        %2234 = vmatpush2.xpose.msra.mxu0 0.0
        %2235 = vmatprep.subr.mxu0 0.0
        %2236 = vmatpush2.xpose.msra.mxu0 0.0
        %2237 = vmatprep.subr.mxu0 0.0
        %2238 = vmatpush2.xpose.msra.mxu0 0.0
        %2239 = vmatprep.subr.mxu0 0.0
        %2240 = vmatpush2.xpose.msra.mxu0 0.0
        %2241 = vmatprep.subr.mxu0 0.0
        %2242 = vmatpush2.xpose.msra.mxu0 0.0
        %2243 = vmatprep.subr.mxu0 0.0
        %2244 = vmatpush2.xpose.msra.mxu0 0.0
        %2245 = vmatprep.subr.mxu0 0.0
        %2246 = vmatpush2.xpose.msra.mxu0 0.0
        %2247 = vmatprep.subr.mxu0 0.0
        %2248 = vmatpush2.xpose.msra.mxu0 0.0
        %2249 = vmatprep.subr.mxu0 0.0
        %2250 = vmatpush2.xpose.msra.mxu0 0.0
        %2251 = vmatprep.mubr.f32.mxu0 0.0
        %2252 = vmatmul.mubr.f32.gmra.mxu0 %v2183
        %v2253 = vpop.f32.mrf.mxu0
        %v2254 = vadd.f32 0.0, %v2253
        %v2255 = vpop.f32.mrf.mxu0
        %2256 = vdwg.mxu0
        %v2257 = vmul.f32 %v2254, 0.35355338
        %v2258 = vsel %vm1044, %v2257, -inf
        %2259 = vmax.xlane.f32.xlu0 %v2258
        %v2260 = vpop.xlane.xlu0 %2259
        %v2261 = vsub.f32 %v2257, %v2260
        %v2262 = vmul.f32 %v2261, 1.442695
        %v2263 = vpow.pop %v2262
        %v2264 = vsel %vm1044, %v2263, 0.0
        %2265 = vadd.xlane.f32.xlu0 %v2264
        %v2266 = vpop.xlane.xlu0 %2265
        %v2267 = vrcp.pop %v2266
        %v2268 = vmul.f32 %v2263, %v2267
        %2269 = vrot.lane.b32.xlu0 %v2012, 88
        %v2270 = vpop.permute.xlu0 %2269
        %v2273 = vsel %vm1044, %v2268, 0
        %2275 = vmatprep.subr.mxu0 0.0
        %2276 = vmatpush1.msra.mxu0 0.0
        %2277 = vmatprep.subr.mxu0 0.0
        %2278 = vmatpush1.msra.mxu0 0.0
        %2279 = vmatprep.subr.mxu0 0.0
        %2280 = vmatpush1.msra.mxu0 0.0
        %2281 = vmatprep.subr.mxu0 0.0
        %2282 = vmatpush1.msra.mxu0 0.0
        %2283 = vmatprep.subr.mxu0 0.0
        %2284 = vmatpush1.msra.mxu0 0.0
        %2285 = vmatprep.subr.mxu0 0.0
        %2286 = vmatpush1.msra.mxu0 0.0
        %2287 = vmatprep.subr.mxu0 0.0
        %2288 = vmatpush1.msra.mxu0 0.0
        %2289 = vmatprep.subr.mxu0 0.0
        %2290 = vmatpush1.msra.mxu0 0.0
        %2291 = vmatprep.subr.mxu0 0.0
        %2292 = vmatpush1.msra.mxu0 0.0
        %2293 = vmatprep.subr.mxu0 0.0
        %2294 = vmatpush1.msra.mxu0 0.0
        %2295 = vmatprep.subr.mxu0 0.0
        %2296 = vmatpush1.msra.mxu0 0.0
        %2297 = vmatprep.subr.mxu0 0.0
        %2298 = vmatpush1.msra.mxu0 0.0
        %2299 = vmatprep.subr.mxu0 0.0
        %2300 = vmatpush1.msra.mxu0 0.0
        %2301 = vmatprep.subr.mxu0 0.0
        %2302 = vmatpush1.msra.mxu0 0.0
        %2303 = vmatprep.subr.mxu0 0.0
        %2304 = vmatpush1.msra.mxu0 0.0
        %2305 = vmatprep.subr.mxu0 0.0
        %2306 = vmatpush1.msra.mxu0 %v2270
        %2307 = vmatprep.subr.mxu0 0.0
        %2308 = vmatpush2.msra.mxu0 0.0
        %2309 = vmatprep.subr.mxu0 0.0
        %2310 = vmatpush2.msra.mxu0 0.0
        %2311 = vmatprep.subr.mxu0 0.0
        %2312 = vmatpush2.msra.mxu0 0.0
        %2313 = vmatprep.subr.mxu0 0.0
        %2314 = vmatpush2.msra.mxu0 0.0
        %2315 = vmatprep.subr.mxu0 0.0
        %2316 = vmatpush2.msra.mxu0 0.0
        %2317 = vmatprep.subr.mxu0 0.0
        %2318 = vmatpush2.msra.mxu0 0.0
        %2319 = vmatprep.subr.mxu0 0.0
        %2320 = vmatpush2.msra.mxu0 0.0
        %2321 = vmatprep.subr.mxu0 0.0
        %2322 = vmatpush2.msra.mxu0 0.0
        %2323 = vmatprep.subr.mxu0 0.0
        %2324 = vmatpush2.msra.mxu0 0.0
        %2325 = vmatprep.subr.mxu0 0.0
        %2326 = vmatpush2.msra.mxu0 0.0
        %2327 = vmatprep.subr.mxu0 0.0
        %2328 = vmatpush2.msra.mxu0 0.0
        %2329 = vmatprep.subr.mxu0 0.0
        %2330 = vmatpush2.msra.mxu0 0.0
        %2331 = vmatprep.subr.mxu0 0.0
        %2332 = vmatpush2.msra.mxu0 0.0
        %2333 = vmatprep.subr.mxu0 0.0
        %2334 = vmatpush2.msra.mxu0 0.0
        %2335 = vmatprep.subr.mxu0 0.0
        %2336 = vmatpush2.msra.mxu0 0.0
        %2337 = vmatprep.subr.mxu0 0.0
        %2338 = vmatpush2.msra.mxu0 0.0
        %2339 = vmatprep.mubr.f32.mxu0 0.0
        %2340 = vmatmul.mubr.f32.gmra.mxu0 %v2273
        %v2341 = vpop.f32.mrf.mxu0
        %v2342 = vadd.f32 0.0, %v2341
        %v2343 = vpop.f32.mrf.mxu0
        %2344 = vdwg.mxu0
        %2345 = vrot.lane.b32.xlu0 %v1928, 112
        %v2346 = vpop.permute.xlu0 %2345
        %2347 = vrot.lane.b32.xlu0 %v2012, 112
        %v2348 = vpop.permute.xlu0 %2347
        %v2349 = vsel %vm1044, %v2346, 0
        %v2351 = vsel %vm1044, %v2348, 0
        %2353 = vmatprep.subr.mxu0 0.0
        %2354 = vmatpush1.xpose.msra.mxu0 0.0
        %2355 = vmatprep.subr.mxu0 0.0
        %2356 = vmatpush1.xpose.msra.mxu0 0.0
        %2357 = vmatprep.subr.mxu0 0.0
        %2358 = vmatpush1.xpose.msra.mxu0 0.0
        %2359 = vmatprep.subr.mxu0 0.0
        %2360 = vmatpush1.xpose.msra.mxu0 0.0
        %2361 = vmatprep.subr.mxu0 0.0
        %2362 = vmatpush1.xpose.msra.mxu0 0.0
        %2363 = vmatprep.subr.mxu0 0.0
        %2364 = vmatpush1.xpose.msra.mxu0 0.0
        %2365 = vmatprep.subr.mxu0 0.0
        %2366 = vmatpush1.xpose.msra.mxu0 0.0
        %2367 = vmatprep.subr.mxu0 0.0
        %2368 = vmatpush1.xpose.msra.mxu0 0.0
        %2369 = vmatprep.subr.mxu0 0.0
        %2370 = vmatpush1.xpose.msra.mxu0 0.0
        %2371 = vmatprep.subr.mxu0 0.0
        %2372 = vmatpush1.xpose.msra.mxu0 0.0
        %2373 = vmatprep.subr.mxu0 0.0
        %2374 = vmatpush1.xpose.msra.mxu0 0.0
        %2375 = vmatprep.subr.mxu0 0.0
        %2376 = vmatpush1.xpose.msra.mxu0 0.0
        %2377 = vmatprep.subr.mxu0 0.0
        %2378 = vmatpush1.xpose.msra.mxu0 0.0
        %2379 = vmatprep.subr.mxu0 0.0
        %2380 = vmatpush1.xpose.msra.mxu0 0.0
        %2381 = vmatprep.subr.mxu0 0.0
        %2382 = vmatpush1.xpose.msra.mxu0 0.0
        %2383 = vmatprep.subr.mxu0 0.0
        %2384 = vmatpush1.xpose.msra.mxu0 %v2351
        %2385 = vmatprep.subr.mxu0 0.0
        %2386 = vmatpush2.xpose.msra.mxu0 0.0
        %2387 = vmatprep.subr.mxu0 0.0
        %2388 = vmatpush2.xpose.msra.mxu0 0.0
        %2389 = vmatprep.subr.mxu0 0.0
        %2390 = vmatpush2.xpose.msra.mxu0 0.0
        %2391 = vmatprep.subr.mxu0 0.0
        %2392 = vmatpush2.xpose.msra.mxu0 0.0
        %2393 = vmatprep.subr.mxu0 0.0
        %2394 = vmatpush2.xpose.msra.mxu0 0.0
        %2395 = vmatprep.subr.mxu0 0.0
        %2396 = vmatpush2.xpose.msra.mxu0 0.0
        %2397 = vmatprep.subr.mxu0 0.0
        %2398 = vmatpush2.xpose.msra.mxu0 0.0
        %2399 = vmatprep.subr.mxu0 0.0
        %2400 = vmatpush2.xpose.msra.mxu0 0.0
        %2401 = vmatprep.subr.mxu0 0.0
        %2402 = vmatpush2.xpose.msra.mxu0 0.0
        %2403 = vmatprep.subr.mxu0 0.0
        %2404 = vmatpush2.xpose.msra.mxu0 0.0
        %2405 = vmatprep.subr.mxu0 0.0
        %2406 = vmatpush2.xpose.msra.mxu0 0.0
        %2407 = vmatprep.subr.mxu0 0.0
        %2408 = vmatpush2.xpose.msra.mxu0 0.0
        %2409 = vmatprep.subr.mxu0 0.0
        %2410 = vmatpush2.xpose.msra.mxu0 0.0
        %2411 = vmatprep.subr.mxu0 0.0
        %2412 = vmatpush2.xpose.msra.mxu0 0.0
        %2413 = vmatprep.subr.mxu0 0.0
        %2414 = vmatpush2.xpose.msra.mxu0 0.0
        %2415 = vmatprep.subr.mxu0 0.0
        %2416 = vmatpush2.xpose.msra.mxu0 0.0
        %2417 = vmatprep.mubr.f32.mxu0 0.0
        %2418 = vmatmul.mubr.f32.gmra.mxu0 %v2349
        %v2419 = vpop.f32.mrf.mxu0
        %v2420 = vadd.f32 0.0, %v2419
        %v2421 = vpop.f32.mrf.mxu0
        %2422 = vdwg.mxu0
        %v2423 = vmul.f32 %v2420, 0.35355338
        %v2424 = vsel %vm1044, %v2423, -inf
        %2425 = vmax.xlane.f32.xlu0 %v2424
        %v2426 = vpop.xlane.xlu0 %2425
        %v2427 = vsub.f32 %v2423, %v2426
        %v2428 = vmul.f32 %v2427, 1.442695
        %v2429 = vpow.pop %v2428
        %v2430 = vsel %vm1044, %v2429, 0.0
        %2431 = vadd.xlane.f32.xlu0 %v2430
        %v2432 = vpop.xlane.xlu0 %2431
        %v2433 = vrcp.pop %v2432
        %v2434 = vmul.f32 %v2429, %v2433
        %2435 = vrot.lane.b32.xlu0 %v2012, 80
        %v2436 = vpop.permute.xlu0 %2435
        %v2439 = vsel %vm1044, %v2434, 0
        %2441 = vmatprep.subr.mxu0 0.0
        %2442 = vmatpush1.msra.mxu0 0.0
        %2443 = vmatprep.subr.mxu0 0.0
        %2444 = vmatpush1.msra.mxu0 0.0
        %2445 = vmatprep.subr.mxu0 0.0
        %2446 = vmatpush1.msra.mxu0 0.0
        %2447 = vmatprep.subr.mxu0 0.0
        %2448 = vmatpush1.msra.mxu0 0.0
        %2449 = vmatprep.subr.mxu0 0.0
        %2450 = vmatpush1.msra.mxu0 0.0
        %2451 = vmatprep.subr.mxu0 0.0
        %2452 = vmatpush1.msra.mxu0 0.0
        %2453 = vmatprep.subr.mxu0 0.0
        %2454 = vmatpush1.msra.mxu0 0.0
        %2455 = vmatprep.subr.mxu0 0.0
        %2456 = vmatpush1.msra.mxu0 0.0
        %2457 = vmatprep.subr.mxu0 0.0
        %2458 = vmatpush1.msra.mxu0 0.0
        %2459 = vmatprep.subr.mxu0 0.0
        %2460 = vmatpush1.msra.mxu0 0.0
        %2461 = vmatprep.subr.mxu0 0.0
        %2462 = vmatpush1.msra.mxu0 0.0
        %2463 = vmatprep.subr.mxu0 0.0
        %2464 = vmatpush1.msra.mxu0 0.0
        %2465 = vmatprep.subr.mxu0 0.0
        %2466 = vmatpush1.msra.mxu0 0.0
        %2467 = vmatprep.subr.mxu0 0.0
        %2468 = vmatpush1.msra.mxu0 0.0
        %2469 = vmatprep.subr.mxu0 0.0
        %2470 = vmatpush1.msra.mxu0 0.0
        %2471 = vmatprep.subr.mxu0 0.0
        %2472 = vmatpush1.msra.mxu0 %v2436
        %2473 = vmatprep.subr.mxu0 0.0
        %2474 = vmatpush2.msra.mxu0 0.0
        %2475 = vmatprep.subr.mxu0 0.0
        %2476 = vmatpush2.msra.mxu0 0.0
        %2477 = vmatprep.subr.mxu0 0.0
        %2478 = vmatpush2.msra.mxu0 0.0
        %2479 = vmatprep.subr.mxu0 0.0
        %2480 = vmatpush2.msra.mxu0 0.0
        %2481 = vmatprep.subr.mxu0 0.0
        %2482 = vmatpush2.msra.mxu0 0.0
        %2483 = vmatprep.subr.mxu0 0.0
        %2484 = vmatpush2.msra.mxu0 0.0
        %2485 = vmatprep.subr.mxu0 0.0
        %2486 = vmatpush2.msra.mxu0 0.0
        %2487 = vmatprep.subr.mxu0 0.0
        %2488 = vmatpush2.msra.mxu0 0.0
        %2489 = vmatprep.subr.mxu0 0.0
        %2490 = vmatpush2.msra.mxu0 0.0
        %2491 = vmatprep.subr.mxu0 0.0
        %2492 = vmatpush2.msra.mxu0 0.0
        %2493 = vmatprep.subr.mxu0 0.0
        %2494 = vmatpush2.msra.mxu0 0.0
        %2495 = vmatprep.subr.mxu0 0.0
        %2496 = vmatpush2.msra.mxu0 0.0
        %2497 = vmatprep.subr.mxu0 0.0
        %2498 = vmatpush2.msra.mxu0 0.0
        %2499 = vmatprep.subr.mxu0 0.0
        %2500 = vmatpush2.msra.mxu0 0.0
        %2501 = vmatprep.subr.mxu0 0.0
        %2502 = vmatpush2.msra.mxu0 0.0
        %2503 = vmatprep.subr.mxu0 0.0
        %2504 = vmatpush2.msra.mxu0 0.0
        %2505 = vmatprep.mubr.f32.mxu0 0.0
        %2506 = vmatmul.mubr.f32.gmra.mxu0 %v2439
        %v2507 = vpop.f32.mrf.mxu0
        %v2508 = vadd.f32 0.0, %v2507
        %v2509 = vpop.f32.mrf.mxu0
        %2510 = vdwg.mxu0
        %2511 = vrot.lane.b32.xlu0 %v1928, 104
        %v2512 = vpop.permute.xlu0 %2511
        %2513 = vrot.lane.b32.xlu0 %v2012, 104
        %v2514 = vpop.permute.xlu0 %2513
        %v2515 = vsel %vm1044, %v2512, 0
        %v2517 = vsel %vm1044, %v2514, 0
        %2519 = vmatprep.subr.mxu0 0.0
        %2520 = vmatpush1.xpose.msra.mxu0 0.0
        %2521 = vmatprep.subr.mxu0 0.0
        %2522 = vmatpush1.xpose.msra.mxu0 0.0
        %2523 = vmatprep.subr.mxu0 0.0
        %2524 = vmatpush1.xpose.msra.mxu0 0.0
        %2525 = vmatprep.subr.mxu0 0.0
        %2526 = vmatpush1.xpose.msra.mxu0 0.0
        %2527 = vmatprep.subr.mxu0 0.0
        %2528 = vmatpush1.xpose.msra.mxu0 0.0
        %2529 = vmatprep.subr.mxu0 0.0
        %2530 = vmatpush1.xpose.msra.mxu0 0.0
        %2531 = vmatprep.subr.mxu0 0.0
        %2532 = vmatpush1.xpose.msra.mxu0 0.0
        %2533 = vmatprep.subr.mxu0 0.0
        %2534 = vmatpush1.xpose.msra.mxu0 0.0
        %2535 = vmatprep.subr.mxu0 0.0
        %2536 = vmatpush1.xpose.msra.mxu0 0.0
        %2537 = vmatprep.subr.mxu0 0.0
        %2538 = vmatpush1.xpose.msra.mxu0 0.0
        %2539 = vmatprep.subr.mxu0 0.0
        %2540 = vmatpush1.xpose.msra.mxu0 0.0
        %2541 = vmatprep.subr.mxu0 0.0
        %2542 = vmatpush1.xpose.msra.mxu0 0.0
        %2543 = vmatprep.subr.mxu0 0.0
        %2544 = vmatpush1.xpose.msra.mxu0 0.0
        %2545 = vmatprep.subr.mxu0 0.0
        %2546 = vmatpush1.xpose.msra.mxu0 0.0
        %2547 = vmatprep.subr.mxu0 0.0
        %2548 = vmatpush1.xpose.msra.mxu0 0.0
        %2549 = vmatprep.subr.mxu0 0.0
        %2550 = vmatpush1.xpose.msra.mxu0 %v2517
        %2551 = vmatprep.subr.mxu0 0.0
        %2552 = vmatpush2.xpose.msra.mxu0 0.0
        %2553 = vmatprep.subr.mxu0 0.0
        %2554 = vmatpush2.xpose.msra.mxu0 0.0
        %2555 = vmatprep.subr.mxu0 0.0
        %2556 = vmatpush2.xpose.msra.mxu0 0.0
        %2557 = vmatprep.subr.mxu0 0.0
        %2558 = vmatpush2.xpose.msra.mxu0 0.0
        %2559 = vmatprep.subr.mxu0 0.0
        %2560 = vmatpush2.xpose.msra.mxu0 0.0
        %2561 = vmatprep.subr.mxu0 0.0
        %2562 = vmatpush2.xpose.msra.mxu0 0.0
        %2563 = vmatprep.subr.mxu0 0.0
        %2564 = vmatpush2.xpose.msra.mxu0 0.0
        %2565 = vmatprep.subr.mxu0 0.0
        %2566 = vmatpush2.xpose.msra.mxu0 0.0
        %2567 = vmatprep.subr.mxu0 0.0
        %2568 = vmatpush2.xpose.msra.mxu0 0.0
        %2569 = vmatprep.subr.mxu0 0.0
        %2570 = vmatpush2.xpose.msra.mxu0 0.0
        %2571 = vmatprep.subr.mxu0 0.0
        %2572 = vmatpush2.xpose.msra.mxu0 0.0
        %2573 = vmatprep.subr.mxu0 0.0
        %2574 = vmatpush2.xpose.msra.mxu0 0.0
        %2575 = vmatprep.subr.mxu0 0.0
        %2576 = vmatpush2.xpose.msra.mxu0 0.0
        %2577 = vmatprep.subr.mxu0 0.0
        %2578 = vmatpush2.xpose.msra.mxu0 0.0
        %2579 = vmatprep.subr.mxu0 0.0
        %2580 = vmatpush2.xpose.msra.mxu0 0.0
        %2581 = vmatprep.subr.mxu0 0.0
        %2582 = vmatpush2.xpose.msra.mxu0 0.0
        %2583 = vmatprep.mubr.f32.mxu0 0.0
        %2584 = vmatmul.mubr.f32.gmra.mxu0 %v2515
        %v2585 = vpop.f32.mrf.mxu0
        %v2586 = vadd.f32 0.0, %v2585
        %v2587 = vpop.f32.mrf.mxu0
        %2588 = vdwg.mxu0
        %v2589 = vmul.f32 %v2586, 0.35355338
        %v2590 = vsel %vm1044, %v2589, -inf
        %2591 = vmax.xlane.f32.xlu0 %v2590
        %v2592 = vpop.xlane.xlu0 %2591
        %v2593 = vsub.f32 %v2589, %v2592
        %v2594 = vmul.f32 %v2593, 1.442695
        %v2595 = vpow.pop %v2594
        %v2596 = vsel %vm1044, %v2595, 0.0
        %2597 = vadd.xlane.f32.xlu0 %v2596
        %v2598 = vpop.xlane.xlu0 %2597
        %v2599 = vrcp.pop %v2598
        %v2600 = vmul.f32 %v2595, %v2599
        %2601 = vrot.lane.b32.xlu0 %v2012, 72
        %v2602 = vpop.permute.xlu0 %2601
        %v2605 = vsel %vm1044, %v2600, 0
        %2607 = vmatprep.subr.mxu0 0.0
        %2608 = vmatpush1.msra.mxu0 0.0
        %2609 = vmatprep.subr.mxu0 0.0
        %2610 = vmatpush1.msra.mxu0 0.0
        %2611 = vmatprep.subr.mxu0 0.0
        %2612 = vmatpush1.msra.mxu0 0.0
        %2613 = vmatprep.subr.mxu0 0.0
        %2614 = vmatpush1.msra.mxu0 0.0
        %2615 = vmatprep.subr.mxu0 0.0
        %2616 = vmatpush1.msra.mxu0 0.0
        %2617 = vmatprep.subr.mxu0 0.0
        %2618 = vmatpush1.msra.mxu0 0.0
        %2619 = vmatprep.subr.mxu0 0.0
        %2620 = vmatpush1.msra.mxu0 0.0
        %2621 = vmatprep.subr.mxu0 0.0
        %2622 = vmatpush1.msra.mxu0 0.0
        %2623 = vmatprep.subr.mxu0 0.0
        %2624 = vmatpush1.msra.mxu0 0.0
        %2625 = vmatprep.subr.mxu0 0.0
        %2626 = vmatpush1.msra.mxu0 0.0
        %2627 = vmatprep.subr.mxu0 0.0
        %2628 = vmatpush1.msra.mxu0 0.0
        %2629 = vmatprep.subr.mxu0 0.0
        %2630 = vmatpush1.msra.mxu0 0.0
        %2631 = vmatprep.subr.mxu0 0.0
        %2632 = vmatpush1.msra.mxu0 0.0
        %2633 = vmatprep.subr.mxu0 0.0
        %2634 = vmatpush1.msra.mxu0 0.0
        %2635 = vmatprep.subr.mxu0 0.0
        %2636 = vmatpush1.msra.mxu0 0.0
        %2637 = vmatprep.subr.mxu0 0.0
        %2638 = vmatpush1.msra.mxu0 %v2602
        %2639 = vmatprep.subr.mxu0 0.0
        %2640 = vmatpush2.msra.mxu0 0.0
        %2641 = vmatprep.subr.mxu0 0.0
        %2642 = vmatpush2.msra.mxu0 0.0
        %2643 = vmatprep.subr.mxu0 0.0
        %2644 = vmatpush2.msra.mxu0 0.0
        %2645 = vmatprep.subr.mxu0 0.0
        %2646 = vmatpush2.msra.mxu0 0.0
        %2647 = vmatprep.subr.mxu0 0.0
        %2648 = vmatpush2.msra.mxu0 0.0
        %2649 = vmatprep.subr.mxu0 0.0
        %2650 = vmatpush2.msra.mxu0 0.0
        %2651 = vmatprep.subr.mxu0 0.0
        %2652 = vmatpush2.msra.mxu0 0.0
        %2653 = vmatprep.subr.mxu0 0.0
        %2654 = vmatpush2.msra.mxu0 0.0
        %2655 = vmatprep.subr.mxu0 0.0
        %2656 = vmatpush2.msra.mxu0 0.0
        %2657 = vmatprep.subr.mxu0 0.0
        %2658 = vmatpush2.msra.mxu0 0.0
        %2659 = vmatprep.subr.mxu0 0.0
        %2660 = vmatpush2.msra.mxu0 0.0
        %2661 = vmatprep.subr.mxu0 0.0
        %2662 = vmatpush2.msra.mxu0 0.0
        %2663 = vmatprep.subr.mxu0 0.0
        %2664 = vmatpush2.msra.mxu0 0.0
        %2665 = vmatprep.subr.mxu0 0.0
        %2666 = vmatpush2.msra.mxu0 0.0
        %2667 = vmatprep.subr.mxu0 0.0
        %2668 = vmatpush2.msra.mxu0 0.0
        %2669 = vmatprep.subr.mxu0 0.0
        %2670 = vmatpush2.msra.mxu0 0.0
        %2671 = vmatprep.mubr.f32.mxu0 0.0
        %2672 = vmatmul.mubr.f32.gmra.mxu0 %v2605
        %v2673 = vpop.f32.mrf.mxu0
        %v2674 = vadd.f32 0.0, %v2673
        %v2675 = vpop.f32.mrf.mxu0
        %2676 = vdwg.mxu0
        %2678 = vrot.lane.b32.xlu0 %v2342, 8
        %v2679 = vpop.permute.xlu0 %2678
        %2682 = vrot.lane.b32.xlu0 %v2508, 16
        %v2683 = vpop.permute.xlu0 %2682
        %2686 = vrot.lane.b32.xlu0 %v2674, 24
        %v2687 = vpop.permute.xlu0 %2686
        %v2689 = vsel %vm1044, %v2176, %v2679
        %v2690 = vsel %vm1729, %v2689, %v2683
        %v2691 = vsel %vm1731, %v2690, %v2687
        %v2692 = vld [vmem:[#allocation12] sm:$0xff]
        %v2693 = vld [vmem:[#allocation12 + $0x8] sm:$0xff]
        %v2694 = vld [vmem:[#allocation12 + $0x10] sm:$0xff]
        %v2695 = vld [vmem:[#allocation12 + $0x18] sm:$0xff]
        %v2696 = vld [vmem:[#allocation13] sm:$0x1]
        %v2698 = vlaneseq
        %v2699 = vshrl.u32 %v2698, 7
        %v2700 = vsub.s32 0, %v2699
        %v2701 = vrot.slane %v2696, %v2700
        %v2704 = vsel %vm926, %v2691, 0
        %2706 = vmatprep.subr.mxu0 0.0
        %2707 = vmatpush1.msra.mxu0 0.0
        %2708 = vmatprep.subr.mxu0 0.0
        %2709 = vmatpush1.msra.mxu0 0.0
        %2710 = vmatprep.subr.mxu0 0.0
        %2711 = vmatpush1.msra.mxu0 0.0
        %2712 = vmatprep.subr.mxu0 0.0
        %2713 = vmatpush1.msra.mxu0 0.0
        %2714 = vmatprep.subr.mxu0 0.0
        %2715 = vmatpush1.msra.mxu0 0.0
        %2716 = vmatprep.subr.mxu0 0.0
        %2717 = vmatpush1.msra.mxu0 0.0
        %2718 = vmatprep.subr.mxu0 0.0
        %2719 = vmatpush1.msra.mxu0 0.0
        %2720 = vmatprep.subr.mxu0 0.0
        %2721 = vmatpush1.msra.mxu0 0.0
        %2722 = vmatprep.subr.mxu0 0.0
        %2723 = vmatpush1.msra.mxu0 0.0
        %2724 = vmatprep.subr.mxu0 0.0
        %2725 = vmatpush1.msra.mxu0 0.0
        %2726 = vmatprep.subr.mxu0 0.0
        %2727 = vmatpush1.msra.mxu0 0.0
        %2728 = vmatprep.subr.mxu0 0.0
        %2729 = vmatpush1.msra.mxu0 0.0
        %2730 = vmatprep.subr.mxu0 0.0
        %2731 = vmatpush1.msra.mxu0 %v2695
        %2732 = vmatprep.subr.mxu0 0.0
        %2733 = vmatpush1.msra.mxu0 %v2694
        %2734 = vmatprep.subr.mxu0 0.0
        %2735 = vmatpush1.msra.mxu0 %v2693
        %2736 = vmatprep.subr.mxu0 0.0
        %2737 = vmatpush1.msra.mxu0 %v2692
        %2738 = vmatprep.subr.mxu0 0.0
        %2739 = vmatpush2.msra.mxu0 0.0
        %2740 = vmatprep.subr.mxu0 0.0
        %2741 = vmatpush2.msra.mxu0 0.0
        %2742 = vmatprep.subr.mxu0 0.0
        %2743 = vmatpush2.msra.mxu0 0.0
        %2744 = vmatprep.subr.mxu0 0.0
        %2745 = vmatpush2.msra.mxu0 0.0
        %2746 = vmatprep.subr.mxu0 0.0
        %2747 = vmatpush2.msra.mxu0 0.0
        %2748 = vmatprep.subr.mxu0 0.0
        %2749 = vmatpush2.msra.mxu0 0.0
        %2750 = vmatprep.subr.mxu0 0.0
        %2751 = vmatpush2.msra.mxu0 0.0
        %2752 = vmatprep.subr.mxu0 0.0
        %2753 = vmatpush2.msra.mxu0 0.0
        %2754 = vmatprep.subr.mxu0 0.0
        %2755 = vmatpush2.msra.mxu0 0.0
        %2756 = vmatprep.subr.mxu0 0.0
        %2757 = vmatpush2.msra.mxu0 0.0
        %2758 = vmatprep.subr.mxu0 0.0
        %2759 = vmatpush2.msra.mxu0 0.0
        %2760 = vmatprep.subr.mxu0 0.0
        %2761 = vmatpush2.msra.mxu0 0.0
        %2762 = vmatprep.subr.mxu0 0.0
        %2763 = vmatpush2.msra.mxu0 0.0
        %2764 = vmatprep.subr.mxu0 0.0
        %2765 = vmatpush2.msra.mxu0 0.0
        %2766 = vmatprep.subr.mxu0 0.0
        %2767 = vmatpush2.msra.mxu0 0.0
        %2768 = vmatprep.subr.mxu0 0.0
        %2769 = vmatpush2.msra.mxu0 0.0
        %2770 = vmatprep.mubr.f32.mxu0 0.0
        %2771 = vmatmul.mubr.f32.gmra.mxu0 %v2704
        %v2772 = vpop.f32.mrf.mxu0
        %v2773 = vadd.f32 %v2701, %v2772
        %v2774 = vpop.f32.mrf.mxu0
        %2775 = vdwg.mxu0
        %v2776 = vadd.f32 %v1817, %v2773
        %v2777 = vsel %vm926, %v2776, 0.0
        %2778 = vadd.xlane.f32.xlu0 %v2777
        %v2779 = vpop.xlane.xlu0 %2778
        %v2780 = vmul.f32 %v2779, %v930
        %v2781 = vsub.f32 %v2776, %v2780
        %v2782 = vmul.f32 %v2781, %v2781
        %v2783 = vsel %vm926, %v2782, 0.0
        %2784 = vadd.xlane.f32.xlu0 %v2783
        %v2785 = vpop.xlane.xlu0 %2784
        %v2786 = vmul.f32 %v2785, %v930
        %v2787 = vadd.f32 %v2786, 1e-05
        %v2788 = vrsqrt.pop %v2787
        %v2789 = vmul.f32 %v2781, %v2788
        %v2790 = vld [vmem:[%s18] sm:$0x1]
        %v2792 = vlaneseq
        %v2793 = vshrl.u32 %v2792, 7
        %v2794 = vsub.s32 0, %v2793
        %v2795 = vrot.slane %v2790, %v2794
        %v2797 = vmul.f32 %v2789, %v2795
        %v2798 = vld [vmem:[#allocation15] sm:$0x1]
        %v2800 = vlaneseq
        %v2801 = vshrl.u32 %v2800, 7
        %v2802 = vsub.s32 0, %v2801
        %v2803 = vrot.slane %v2798, %v2802
        %v2805 = vadd.f32 %v2797, %v2803
        %v2806 = vld [vmem:[#allocation16] sm:$0xff]
        %v2807 = vld [vmem:[#allocation16 + $0x8] sm:$0xff]
        %v2808 = vld [vmem:[#allocation16 + $0x10] sm:$0xff]
        %v2809 = vld [vmem:[#allocation16 + $0x18] sm:$0xff]
        %v2810 = vld [vmem:[#allocation18] sm:$0x1]
        %v2812 = vlaneseq
        %v2813 = vshrl.u32 %v2812, 7
        %v2814 = vsub.s32 0, %v2813
        %v2815 = vrot.slane %v2810, %v2814
        %v2818 = vsel %vm926, %v2805, 0
        %2820 = vmatprep.subr.mxu0 0.0
        %2821 = vmatpush1.msra.mxu0 0.0
        %2822 = vmatprep.subr.mxu0 0.0
        %2823 = vmatpush1.msra.mxu0 0.0
        %2824 = vmatprep.subr.mxu0 0.0
        %2825 = vmatpush1.msra.mxu0 0.0
        %2826 = vmatprep.subr.mxu0 0.0
        %2827 = vmatpush1.msra.mxu0 0.0
        %2828 = vmatprep.subr.mxu0 0.0
        %2829 = vmatpush1.msra.mxu0 0.0
        %2830 = vmatprep.subr.mxu0 0.0
        %2831 = vmatpush1.msra.mxu0 0.0
        %2832 = vmatprep.subr.mxu0 0.0
        %2833 = vmatpush1.msra.mxu0 0.0
        %2834 = vmatprep.subr.mxu0 0.0
        %2835 = vmatpush1.msra.mxu0 0.0
        %2836 = vmatprep.subr.mxu0 0.0
        %2837 = vmatpush1.msra.mxu0 0.0
        %2838 = vmatprep.subr.mxu0 0.0
        %2839 = vmatpush1.msra.mxu0 0.0
        %2840 = vmatprep.subr.mxu0 0.0
        %2841 = vmatpush1.msra.mxu0 0.0
        %2842 = vmatprep.subr.mxu0 0.0
        %2843 = vmatpush1.msra.mxu0 0.0
        %2844 = vmatprep.subr.mxu0 0.0
        %2845 = vmatpush1.msra.mxu0 %v2809
        %2846 = vmatprep.subr.mxu0 0.0
        %2847 = vmatpush1.msra.mxu0 %v2808
        %2848 = vmatprep.subr.mxu0 0.0
        %2849 = vmatpush1.msra.mxu0 %v2807
        %2850 = vmatprep.subr.mxu0 0.0
        %2851 = vmatpush1.msra.mxu0 %v2806
        %2852 = vmatprep.subr.mxu0 0.0
        %2853 = vmatpush2.msra.mxu0 0.0
        %2854 = vmatprep.subr.mxu0 0.0
        %2855 = vmatpush2.msra.mxu0 0.0
        %2856 = vmatprep.subr.mxu0 0.0
        %2857 = vmatpush2.msra.mxu0 0.0
        %2858 = vmatprep.subr.mxu0 0.0
        %2859 = vmatpush2.msra.mxu0 0.0
        %2860 = vmatprep.subr.mxu0 0.0
        %2861 = vmatpush2.msra.mxu0 0.0
        %2862 = vmatprep.subr.mxu0 0.0
        %2863 = vmatpush2.msra.mxu0 0.0
        %2864 = vmatprep.subr.mxu0 0.0
        %2865 = vmatpush2.msra.mxu0 0.0
        %2866 = vmatprep.subr.mxu0 0.0
        %2867 = vmatpush2.msra.mxu0 0.0
        %2868 = vmatprep.subr.mxu0 0.0
        %2869 = vmatpush2.msra.mxu0 0.0
        %2870 = vmatprep.subr.mxu0 0.0
        %2871 = vmatpush2.msra.mxu0 0.0
        %2872 = vmatprep.subr.mxu0 0.0
        %2873 = vmatpush2.msra.mxu0 0.0
        %2874 = vmatprep.subr.mxu0 0.0
        %2875 = vmatpush2.msra.mxu0 0.0
        %2876 = vmatprep.subr.mxu0 0.0
        %2877 = vmatpush2.msra.mxu0 0.0
        %2878 = vmatprep.subr.mxu0 0.0
        %2879 = vmatpush2.msra.mxu0 0.0
        %2880 = vmatprep.subr.mxu0 0.0
        %2881 = vmatpush2.msra.mxu0 0.0
        %2882 = vmatprep.subr.mxu0 0.0
        %2883 = vmatpush2.msra.mxu0 0.0
        %2884 = vmatprep.mubr.f32.mxu0 0.0
        %2885 = vmatmul.mubr.f32.gmra.mxu0 %v2818
        %v2886 = vpop.f32.mrf.mxu0
        %v2887 = vadd.f32 %v2815, %v2886
        %v2888 = vpop.f32.mrf.mxu0
        %2889 = vdwg.mxu0
        %v2890 = vmax.f32 %v2887, 0.0
        %v2891 = vld [vmem:[%s22] sm:$0xff]
        %v2892 = vld [vmem:[%s22 + $0x8] sm:$0xff]
        %v2893 = vld [vmem:[%s22 + $0x10] sm:$0xff]
        %v2894 = vld [vmem:[%s22 + $0x18] sm:$0xff]
        %v2895 = vld [vmem:[%s22 + $0x20] sm:$0xff]
        %v2896 = vld [vmem:[%s22 + $0x28] sm:$0xff]
        %v2897 = vld [vmem:[%s22 + $0x30] sm:$0xff]
        %v2898 = vld [vmem:[%s22 + $0x38] sm:$0xff]
        %v2899 = vld [vmem:[#allocation19] sm:$0x1]
        %v2901 = vlaneseq
        %v2902 = vshrl.u32 %v2901, 7
        %v2903 = vsub.s32 0, %v2902
        %v2904 = vrot.slane %v2899, %v2903
        %vm2906 = vcmask 523264
        %v2908 = vsel %vm2906, %v2890, 0
        %2910 = vmatprep.subr.mxu0 0.0
        %2911 = vmatpush1.msra.mxu0 0.0
        %2912 = vmatprep.subr.mxu0 0.0
        %2913 = vmatpush1.msra.mxu0 0.0
        %2914 = vmatprep.subr.mxu0 0.0
        %2915 = vmatpush1.msra.mxu0 0.0
        %2916 = vmatprep.subr.mxu0 0.0
        %2917 = vmatpush1.msra.mxu0 0.0
        %2918 = vmatprep.subr.mxu0 0.0
        %2919 = vmatpush1.msra.mxu0 0.0
        %2920 = vmatprep.subr.mxu0 0.0
        %2921 = vmatpush1.msra.mxu0 0.0
        %2922 = vmatprep.subr.mxu0 0.0
        %2923 = vmatpush1.msra.mxu0 0.0
        %2924 = vmatprep.subr.mxu0 0.0
        %2925 = vmatpush1.msra.mxu0 0.0
        %2926 = vmatprep.subr.mxu0 0.0
        %2927 = vmatpush1.msra.mxu0 %v2898
        %2928 = vmatprep.subr.mxu0 0.0
        %2929 = vmatpush1.msra.mxu0 %v2897
        %2930 = vmatprep.subr.mxu0 0.0
        %2931 = vmatpush1.msra.mxu0 %v2896
        %2932 = vmatprep.subr.mxu0 0.0
        %2933 = vmatpush1.msra.mxu0 %v2895
        %2934 = vmatprep.subr.mxu0 0.0
        %2935 = vmatpush1.msra.mxu0 %v2894
        %2936 = vmatprep.subr.mxu0 0.0
        %2937 = vmatpush1.msra.mxu0 %v2893
        %2938 = vmatprep.subr.mxu0 0.0
        %2939 = vmatpush1.msra.mxu0 %v2892
        %2940 = vmatprep.subr.mxu0 0.0
        %2941 = vmatpush1.msra.mxu0 %v2891
        %2942 = vmatprep.subr.mxu0 0.0
        %2943 = vmatpush2.msra.mxu0 0.0
        %2944 = vmatprep.subr.mxu0 0.0
        %2945 = vmatpush2.msra.mxu0 0.0
        %2946 = vmatprep.subr.mxu0 0.0
        %2947 = vmatpush2.msra.mxu0 0.0
        %2948 = vmatprep.subr.mxu0 0.0
        %2949 = vmatpush2.msra.mxu0 0.0
        %2950 = vmatprep.subr.mxu0 0.0
        %2951 = vmatpush2.msra.mxu0 0.0
        %2952 = vmatprep.subr.mxu0 0.0
        %2953 = vmatpush2.msra.mxu0 0.0
        %2954 = vmatprep.subr.mxu0 0.0
        %2955 = vmatpush2.msra.mxu0 0.0
        %2956 = vmatprep.subr.mxu0 0.0
        %2957 = vmatpush2.msra.mxu0 0.0
        %2958 = vmatprep.subr.mxu0 0.0
        %2959 = vmatpush2.msra.mxu0 0.0
        %2960 = vmatprep.subr.mxu0 0.0
        %2961 = vmatpush2.msra.mxu0 0.0
        %2962 = vmatprep.subr.mxu0 0.0
        %2963 = vmatpush2.msra.mxu0 0.0
        %2964 = vmatprep.subr.mxu0 0.0
        %2965 = vmatpush2.msra.mxu0 0.0
        %2966 = vmatprep.subr.mxu0 0.0
        %2967 = vmatpush2.msra.mxu0 0.0
        %2968 = vmatprep.subr.mxu0 0.0
        %2969 = vmatpush2.msra.mxu0 0.0
        %2970 = vmatprep.subr.mxu0 0.0
        %2971 = vmatpush2.msra.mxu0 0.0
        %2972 = vmatprep.subr.mxu0 0.0
        %2973 = vmatpush2.msra.mxu0 0.0
        %2974 = vmatprep.mubr.f32.mxu0 0.0
        %2975 = vmatmul.mubr.f32.gmra.mxu0 %v2908
        %v2976 = vpop.f32.mrf.mxu0
        %v2977 = vadd.f32 %v2904, %v2976
        %v2978 = vpop.f32.mrf.mxu0
        %2979 = vdwg.mxu0
        %v2980 = vadd.f32 %v2776, %v2977
        %2981 = vst.msk [vmem:[%s920] sm:$0xff] %vm926, %v2980
        %p2982 = scmp.lt.s32.totalorder %s42, 1
        %s2983 = scalar_select %p2982, %s42, 1
        %s2984 = smul.addr %s2983, 8
        %s2985 = scalar_lea.vmem %s24, %s2984
        // Predicated region
        $region165: #{encoder_forward.2} parent=115 // pred_check
          %p2986 = pneg %p579
        $region166: #{encoder_forward.2} parent=115 // pred_check_branch
          %2988 = sbr.rel (%p2986) target = $region168
        $region167: #{encoder_forward.2} parent=115 // pred_region
          _
        $region168: #{encoder_forward.2} parent=115 // pred_fallthru
          _
      $region116: #{encoder_forward.2} parent=5 // pred_fallthru
        _
      %p2989 = scmp.le.s32.totalorder 2, %s37
      // Predicated region
      $region169: #{encoder_forward.2} parent=5 // pred_check
        %p2990 = pneg %p2989
      $region170: #{encoder_forward.2} parent=5 // pred_check_branch
        %2992 = sbr.rel (%p2990) target = $region172
      $region171: #{encoder_forward.2} parent=5 // pred_region
        %s2993 = ssub.s32 %s37, 2
        // Predicated region
        $region173: #{encoder_forward.2} parent=171 // pred_check
          %p2994 = pneg %p585
        $region174: #{encoder_forward.2} parent=171 // pred_check_branch
          %2996 = sbr.rel (%p2994) target = $region176
        $region175: #{encoder_forward.2} parent=171 // pred_region
          %p2997 = scmp.lt.s32.totalorder %s43, 1
          %s2998 = scalar_select %p2997, %s43, 1
          %s2999 = smul.addr %s2998, 8
          %s3000 = scalar_lea.vmem %s24, %s2999
        $region176: #{encoder_forward.2} parent=171 // pred_fallthru
          _
      $region172: #{encoder_forward.2} parent=5 // pred_fallthru
        _
    $region6: #{encoder_forward.2} parent=1 // loop_footer
      %s41 = sadd.s32 1, %s37
    $region7: #{encoder_forward.2} parent=1 // loop_footer_branch
      %36 = sbr.rel target = $region3
    $region8: #{encoder_forward.2} parent=1 // loop_exit
      _
    %3001 = vsyncpa [#allocation3], 1
    %s3002 = scalar_lea.sflag [#allocation3], 1
    %3003 = vsyncpa %s3002, 1
    %3004 = vsyncpa [#allocation5], 1
    %3005 = vsyncpa [#allocation8], 1
    %3006 = vsyncpa [#allocation11], 1
    %3007 = vsyncpa [#allocation14], 1
    %3008 = vsyncpa [#allocation17], 1
    %3009 = vsyncpa [#allocation20], 1

</llo_original>
